<compile_context>
chip_gen: v7x
topology: tpu7x:2x2x1
jax: 0.10.0
libtpu: 0.0.40
codegen_flags: <defaults>
</compile_context>

<pallas_src>
import jax
import jax.numpy as jnp
from jax.experimental import pallas as pl
from jax.experimental.pallas import tpu as pltpu

BN_EPS = 1e-5

# Fixed architecture sizes (dictated by fc = Linear(5664, 128)).
H = W = 10                    # spatial patch of the 2-D branch
C_IN = 166                    # spectral bands
C1, C2 = 256, 128             # simple_cnn_branch channels
HP = H + 2                    # padded rows (conv padding=1)
WP = 16                       # padded row width (8-aligned kh shifts: 0/16/32)
M_CNN = H * WP                # 160 conv rows computed per image (i=m//16, j=m%16)
N_ROWS = HP * WP + 8          # 200 flat rows per image (extra zero tail rows)

L = 166                       # spectrum length of the 1-D branch
K1, K2 = 11, 3                # pixel_branch kernel sizes
K1P = 16                      # conv1 tap matrix padded to 16 lanes
P1, P2 = 64, 32               # pixel_branch channels
L1 = L - K1 + 1               # 156 valid conv1 rows
L2 = L1 - K2 + 1              # 154 valid conv2 rows
LPOOL = L2 // 2               # 77
M1 = 168                      # conv1 rows computed (mult of 8, >= L1)
M2 = 160                      # conv2 rows computed (mult of 8, >= L2; M2+K2-1<=M1)

FEAT_CNN = C2 * (H // 2) * (W // 2)   # 3200
FEAT_PIX = P2 * LPOOL                 # 2464
FC_OUT = 128
BATCH_TILE = 8                # images per grid step (8 is safe on v5e VMEM)


# ---------------------------------------------------------------------------
# Kernels
# ---------------------------------------------------------------------------
def _branches_kernel(x_ref, yt_ref, w1_ref, sh1_ref, w2_ref, sh2_ref,
                     pw1_ref, psh1_ref, pw2_ref, pb2_ref, xo_ref, yo_ref):
    """Fused simple_cnn_branch + pixel_branch for TB images.

    x_ref  : (TB, 200, 166) bf16  zero-padded images, flat row = r*16 + c
    yt_ref : (TB, 168, 16)  bf16  conv1 tap matrix, [t, j] = y[t + j] (j < 11)
    w1_ref : (9, 166, 256)  bf16  3x3 weights (BN1 scale folded), tap p=kh*3+kw
    sh1_ref: (1, 256) f32 ; w2_ref: (256,128) bf16 ; sh2_ref: (1,128) f32
    pw1_ref: (16, 64) bf16 ; psh1_ref: (1,64) f32
    pw2_ref: (3, 64, 32) bf16 ; pb2_ref: (1,32) f32
    xo_ref : (TB, 5, 16, 128) bf16  row-pair-pooled conv2 output (cols 0..9 valid)
    yo_ref : (TB, 154, 32)    bf16  pair-max of 1-D conv2 (even rows = pooled)
    """
    tb = x_ref.shape[0]

    # ---------------- 2-D simple_cnn_branch ----------------
    acc = jnp.zeros((tb * M_CNN, C1), jnp.float32)
    for kw in range(3):
        # one kw-shifted copy reused by three sublane-aligned kh slices
        xs = x_ref[:, kw:kw + HP * WP, :]                       # (tb,192,166)
        for kh in range(3):
            r0 = kh * WP                                        # 0,16,32
            lhs = xs[:, r0:r0 + M_CNN, :].reshape(tb * M_CNN, C_IN)
            acc = acc + jnp.dot(lhs, w1_ref[kh * 3 + kw],
                                preferred_element_type=jnp.float32)
    h1 = jnp.maximum(acc + sh1_ref[...], 0.0)                   # (tb*160,256)
    h2 = jnp.dot(h1.astype(jnp.bfloat16), w2_ref[...],
                 preferred_element_type=jnp.float32)
    h2 = jnp.maximum(h2 + sh2_ref[...], 0.0)                    # (tb*160,128)
    # fused MaxPool2d(2), row-pair stage: max over spatial rows (2ph, 2ph+1)
    h4 = h2.reshape(tb, H // 2, 2, WP, C2)
    xo_ref[...] = jnp.maximum(h4[:, :, 0], h4[:, :, 1]).astype(xo_ref.dtype)

    # ---------------- 1-D pixel_branch ----------------
    p1 = jnp.dot(yt_ref[...].reshape(tb * M1, K1P), pw1_ref[...],
                 preferred_element_type=jnp.float32)
    g1 = jnp.maximum(p1 + psh1_ref[...], 0.0)                   # (tb*168,64)
    g1 = g1.reshape(tb, M1, P1)
    acc2 = jnp.zeros((tb * M2, P2), jnp.float32)
    for j in range(K2):
        lhs = g1[:, j:j + M2, :].reshape(tb * M2, P1).astype(jnp.bfloat16)
        acc2 = acc2 + jnp.dot(lhs, pw2_ref[j],
                              preferred_element_type=jnp.float32)
    g2 = jnp.maximum(acc2 + pb2_ref[...], 0.0).reshape(tb, M2, P2)
    # fused MaxPool1d(2): pm[t] = max(g2[t], g2[t+1]); wrapper keeps even t
    pm = jnp.maximum(g2[:, 0:L2, :], g2[:, 1:L2 + 1, :])        # (tb,154,32)
    yo_ref[...] = pm.astype(yo_ref.dtype)


def _fc_kernel(xf_ref, yf_ref, wx_ref, wy_ref, b_ref, o_ref):
    """fc over the concatenated features, computed as a split matmul."""
    acc = jnp.dot(xf_ref[...], wx_ref[...], preferred_element_type=jnp.float32)
    acc = acc + jnp.dot(yf_ref[...], wy_ref[...],
                        preferred_element_type=jnp.float32)
    o_ref[...] = acc + b_ref[...]


# ---------------------------------------------------------------------------
# One-time weight preparation (outside jit): BN folding, permutes, bf16.
# ---------------------------------------------------------------------------
def bn_fold(gamma, beta, mean, var):
    scale = gamma / jnp.sqrt(var + BN_EPS)
    shift = beta - mean * scale
    return scale, shift


def prepare_params(p):
    s1, t1 = bn_fold(p["cnn_bn1_g"], p["cnn_bn1_b"], p["cnn_bn1_m"], p["cnn_bn1_v"])
    w1 = jnp.transpose(p["cnn_conv1_w"], (2, 3, 1, 0)).reshape(9, C_IN, C1)
    s2, t2 = bn_fold(p["cnn_bn2_g"], p["cnn_bn2_b"], p["cnn_bn2_m"], p["cnn_bn2_v"])
    w2 = p["cnn_conv2_w"][:, :, 0, 0].T                        # (256, 128)

    ps1, pt1 = bn_fold(p["pix_bn1_g"], p["pix_bn1_b"], p["pix_bn1_m"], p["pix_bn1_v"])
    pw1 = p["pix_conv1_w"][:, 0, :].T * ps1[None, :]           # (11, 64)
    pw1 = jnp.pad(pw1, ((0, K1P - K1), (0, 0)))                # (16, 64)
    pw2 = jnp.transpose(p["pix_conv2_w"], (2, 1, 0))           # (3, 64, 32)

    # fc weight rows permuted to the kernels' feature orders:
    #   cnn: (ph, pw, c)   (PyTorch order was c*25 + ph*5 + pw)
    #   pix: (l, c)        (PyTorch order was c*77 + l)
    fc_wT = p["fc_w"].T                                        # (5664, 128)
    wx = fc_wT[:FEAT_CNN].reshape(C2, H // 2, W // 2, FC_OUT)
    wx = jnp.transpose(wx, (1, 2, 0, 3)).reshape(FEAT_CNN, FC_OUT)
    wy = fc_wT[FEAT_CNN:].reshape(P2, LPOOL, FC_OUT)
    wy = jnp.transpose(wy, (1, 0, 2)).reshape(FEAT_PIX, FC_OUT)

    return {
        "cnn_w1": (w1 * s1[None, None, :]).astype(jnp.bfloat16),
        "cnn_sh1": (p["cnn_conv1_b"] * s1 + t1).reshape(1, C1).astype(jnp.float32),
        "cnn_w2": (w2 * s2[None, :]).astype(jnp.bfloat16),
        "cnn_sh2": (p["cnn_conv2_b"] * s2 + t2).reshape(1, C2).astype(jnp.float32),
        "pix_w1": pw1.astype(jnp.bfloat16),
        "pix_sh1": (p["pix_conv1_b"] * ps1 + pt1).reshape(1, P1).astype(jnp.float32),
        "pix_w2": pw2.astype(jnp.bfloat16),
        "pix_b2": p["pix_conv2_b"].reshape(1, P2).astype(jnp.float32),
        "fc_wx": wx.astype(jnp.bfloat16),
        "fc_wy": wy.astype(jnp.bfloat16),
        "fc_b": p["fc_b"].reshape(1, FC_OUT).astype(jnp.float32),
    }


# ---------------------------------------------------------------------------
# Forward pass
# ---------------------------------------------------------------------------
def fc_head(prep, xf, yf):
    B = xf.shape[0]
    BT = 256 if B > 256 else -(-B // 8) * 8
    Bp = -(-B // BT) * BT
    if Bp != B:
        xf = jnp.pad(xf, ((0, Bp - B), (0, 0)))
        yf = jnp.pad(yf, ((0, Bp - B), (0, 0)))
    out = pl.pallas_call(
        _fc_kernel,
        out_shape=jax.ShapeDtypeStruct((Bp, FC_OUT), jnp.float32),
        grid=(Bp // BT,),
        in_specs=[
            pl.BlockSpec((BT, FEAT_CNN), lambda i: (i, 0)),
            pl.BlockSpec((BT, FEAT_PIX), lambda i: (i, 0)),
            pl.BlockSpec((FEAT_CNN, FC_OUT), lambda i: (0, 0)),
            pl.BlockSpec((FEAT_PIX, FC_OUT), lambda i: (0, 0)),
            pl.BlockSpec((1, FC_OUT), lambda i: (0, 0)),
        ],
        out_specs=pl.BlockSpec((BT, FC_OUT), lambda i: (i, 0)),
        compiler_params=pltpu.CompilerParams(
            dimension_semantics=("parallel",),
            vmem_limit_bytes=32 * 1024 * 1024),
    )(xf, yf, prep["fc_wx"], prep["fc_wy"], prep["fc_b"])
    return out[:B]


def hsi_branch_forward(prep, x, y):
    B = x.shape[0]
    TB = BATCH_TILE if B >= BATCH_TILE else B
    Bp = -(-B // TB) * TB

    # CNN-branch input: NHWC, bf16, zero-padded, flattened rows (width WP=16).
    xh = jnp.transpose(x, (0, 2, 3, 1)).astype(jnp.bfloat16)           # (B,10,10,166)
    xp = jnp.pad(xh, ((0, Bp - B), (1, 1), (1, WP - 1 - W), (0, 0)))   # (Bp,12,16,166)
    xflat = xp.reshape(Bp, HP * WP, C_IN)
    xflat = jnp.pad(xflat, ((0, 0), (0, N_ROWS - HP * WP), (0, 0)))    # (Bp,200,166)

    # pixel-branch input: bf16 tap matrix [t, j] = y[t + j].
    ysp = y[:, 0, :].astype(jnp.bfloat16)                              # (B,166)
    ysp = jnp.pad(ysp, ((0, Bp - B), (0, M1 + K1 - 1 - L)))            # (Bp,178)
    ytaps = jnp.stack([ysp[:, j:j + M1] for j in range(K1)], axis=-1)  # (Bp,168,11)
    ytaps = jnp.pad(ytaps, ((0, 0), (0, 0), (0, K1P - K1)))            # (Bp,168,16)

    xo, yo = pl.pallas_call(
        _branches_kernel,
        out_shape=(jax.ShapeDtypeStruct((Bp, H // 2, WP, C2), jnp.bfloat16),
                   jax.ShapeDtypeStruct((Bp, L2, P2), jnp.bfloat16)),
        grid=(Bp // TB,),
        in_specs=[
            pl.BlockSpec((TB, N_ROWS, C_IN), lambda b: (b, 0, 0)),
            pl.BlockSpec((TB, M1, K1P), lambda b: (b, 0, 0)),
            pl.BlockSpec((9, C_IN, C1), lambda b: (0, 0, 0)),
            pl.BlockSpec((1, C1), lambda b: (0, 0)),
            pl.BlockSpec((C1, C2), lambda b: (0, 0)),
            pl.BlockSpec((1, C2), lambda b: (0, 0)),
            pl.BlockSpec((K1P, P1), lambda b: (0, 0)),
            pl.BlockSpec((1, P1), lambda b: (0, 0)),
            pl.BlockSpec((K2, P1, P2), lambda b: (0, 0, 0)),
            pl.BlockSpec((1, P2), lambda b: (0, 0)),
        ],
        out_specs=(pl.BlockSpec((TB, H // 2, WP, C2), lambda b: (b, 0, 0, 0)),
                   pl.BlockSpec((TB, L2, P2), lambda b: (b, 0, 0))),
        compiler_params=pltpu.CompilerParams(
            dimension_semantics=("parallel",),
            vmem_limit_bytes=32 * 1024 * 1024),
    )(xflat, ytaps, prep["cnn_w1"], prep["cnn_sh1"], prep["cnn_w2"],
      prep["cnn_sh2"], prep["pix_w1"], prep["pix_sh1"], prep["pix_w2"],
      prep["pix_b2"])

    # Remaining pool stages: even-column / even-row decimation (tiny XLA ops).
    cnn = jnp.maximum(xo[:B, :, 0:W:2, :], xo[:B, :, 1:W:2, :])        # (B,5,5,128)
    xfeat = cnn.reshape(B, FEAT_CNN)
    yfeat = yo[:B, 0:2 * LPOOL:2, :].reshape(B, FEAT_PIX)

    # torch.cat + Dropout(eval identity) + fc as a split matmul.
    return fc_head(prep, xfeat, yfeat)


# ---------------------------------------------------------------------------
# Pure-JAX reference (float32) for a tolerance check
# ---------------------------------------------------------------------------
def reference_forward(p, x, y):
    B = x.shape[0]
    # simple_cnn_branch
    xpad = jnp.pad(x, ((0, 0), (0, 0), (1, 1), (1, 1)))
    wins = jnp.stack([xpad[:, :, kh:kh + H, kw:kw + W]
                      for kh in range(3) for kw in range(3)], axis=-1)
    w1 = p["cnn_conv1_w"].reshape(C1, C_IN, 9)
    c1 = jnp.einsum("bcijp,ocp->boij", wins, w1) + p["cnn_conv1_b"][None, :, None, None]
    s1, t1 = bn_fold(p["cnn_bn1_g"], p["cnn_bn1_b"], p["cnn_bn1_m"], p["cnn_bn1_v"])
    c1 = jnp.maximum(c1 * s1[None, :, None, None] + t1[None, :, None, None], 0.0)
    c2 = jnp.einsum("bcij,oc->boij", c1, p["cnn_conv2_w"][:, :, 0, 0]) \
        + p["cnn_conv2_b"][None, :, None, None]
    s2, t2 = bn_fold(p["cnn_bn2_g"], p["cnn_bn2_b"], p["cnn_bn2_m"], p["cnn_bn2_v"])
    c2 = jnp.maximum(c2 * s2[None, :, None, None] + t2[None, :, None, None], 0.0)
    xf = c2.reshape(B, C2, 5, 2, 5, 2).max(axis=(3, 5)).reshape(B, -1)

    # pixel_branch
    ysp = y[:, 0, :]
    wins1 = jnp.stack([ysp[:, j:j + L1] for j in range(K1)], axis=-1)
    g1 = jnp.einsum("btj,oj->bot", wins1, p["pix_conv1_w"][:, 0, :]) \
        + p["pix_conv1_b"][None, :, None]
    ps1, pt1 = bn_fold(p["pix_bn1_g"], p["pix_bn1_b"], p["pix_bn1_m"], p["pix_bn1_v"])
    g1 = jnp.maximum(g1 * ps1[None, :, None] + pt1[None, :, None], 0.0)
    wins2 = jnp.stack([g1[:, :, j:j + L2] for j in range(K2)], axis=-1)
    g2 = jnp.einsum("bctj,ocj->bot", wins2, p["pix_conv2_w"]) \
        + p["pix_conv2_b"][None, :, None]
    g2 = jnp.maximum(g2, 0.0)
    yf = g2.reshape(B, P2, LPOOL, 2).max(axis=-1).reshape(B, -1)

    m = jnp.concatenate([xf, yf], axis=1)
    return m @ p["fc_w"].T + p["fc_b"][None, :]


# ---------------------------------------------------------------------------
# Deterministic parameter initialization (shapes from the PyTorch __init__)
# ---------------------------------------------------------------------------
def init_params(key):
    ks = jax.random.split(key, 20)
    n = lambda k, shape, s=0.05: s * jax.random.normal(k, shape, jnp.float32)
    p = {
        "cnn_conv1_w": n(ks[0], (256, 166, 3, 3)),
        "cnn_conv1_b": n(ks[1], (256,)),
        "cnn_bn1_g": 1.0 + n(ks[2], (256,)),
        "cnn_bn1_b": n(ks[3], (256,)),
        "cnn_bn1_m": n(ks[4], (256,)),
        "cnn_bn1_v": 1.0 + jnp.abs(n(ks[5], (256,))),
        "cnn_conv2_w": n(ks[6], (128, 256, 1, 1)),
        "cnn_conv2_b": n(ks[7], (128,)),
        "cnn_bn2_g": 1.0 + n(ks[8], (128,)),
        "cnn_bn2_b": n(ks[9], (128,)),
        "cnn_bn2_m": n(ks[10], (128,)),
        "cnn_bn2_v": 1.0 + jnp.abs(n(ks[11], (128,))),
        "pix_conv1_w": n(ks[12], (64, 1, 11)),
        "pix_conv1_b": n(ks[13], (64,)),
        "pix_bn1_g": 1.0 + n(ks[14], (64,)),
        "pix_bn1_b": n(ks[15], (64,)),
        "pix_bn1_m": n(ks[16], (64,)),
        "pix_bn1_v": 1.0 + jnp.abs(n(ks[17], (64,))),
        "pix_conv2_w": n(ks[18], (32, 64, 3)),
        "pix_conv2_b": n(ks[19], (32,)),
    }
    kf = jax.random.split(jax.random.PRNGKey(1234), 2)
    p["fc_w"] = 0.01 * jax.random.normal(kf[0], (128, 5664), jnp.float32)
    p["fc_b"] = 0.01 * jax.random.normal(kf[1], (128,), jnp.float32)
    return p


if __name__ == "__main__":
    key = jax.random.PRNGKey(0)
    kx, ky, kp = jax.random.split(key, 3)
    # Shapes dictated by fc = Linear(5664, 128):
    #   cnn branch 10x10 patch -> 128*5*5 = 3200 ; pixel branch 166 bands -> 32*77 = 2464
    x = jax.random.normal(kx, (2, C_IN, H, W), jnp.float32)   # NCHW, like PyTorch
    y = jax.random.normal(ky, (2, 1, L), jnp.float32)         # (B, C=1, L)
    params = init_params(kp)
    prep = prepare_params(params)        # one-time weight prep, outside jit

    fwd = jax.jit(hsi_branch_forward)
    out = jax.block_until_ready(fwd(prep, x, y))
    assert out.shape == (2, FC_OUT) and out.dtype == jnp.float32
    assert bool(jnp.all(jnp.isfinite(out)))

    # tolerance check vs. a float32 JAX reference (kernel uses bf16 MXU operands)
    ref = jax.block_until_ready(jax.jit(reference_forward)(params, x, y))
    err = float(jnp.max(jnp.abs(out - ref)))
    scale = float(jnp.max(jnp.abs(ref)))
    assert err <= 0.1 * max(1.0, scale), (err, scale)
    print("KERNEL_OK")
</pallas_src>

<mosaic_0001>
module attributes {stable_mosaic.version = 11 : i64} {
  func.func @_branches_kernel(%arg0: i32, %arg1: memref<2x200x166xbf16, #tpu.memory_space<vmem>>, %arg2: memref<2x168x16xbf16, #tpu.memory_space<vmem>>, %arg3: memref<9x166x256xbf16, #tpu.memory_space<vmem>>, %arg4: memref<1x256xf32, #tpu.memory_space<vmem>>, %arg5: memref<256x128xbf16, #tpu.memory_space<vmem>>, %arg6: memref<1x128xf32, #tpu.memory_space<vmem>>, %arg7: memref<16x64xbf16, #tpu.memory_space<vmem>>, %arg8: memref<1x64xf32, #tpu.memory_space<vmem>>, %arg9: memref<3x64x32xbf16, #tpu.memory_space<vmem>>, %arg10: memref<1x32xf32, #tpu.memory_space<vmem>>, %arg11: memref<2x5x16x128xbf16, #tpu.memory_space<vmem>>, %arg12: memref<2x154x32xbf16, #tpu.memory_space<vmem>>) attributes {dimension_semantics = [#tpu.dimension_semantics<parallel>], iteration_bounds = array<i64: 1>, scalar_prefetch = 0 : i64, scratch_operands = 0 : i64, tpu.core_type = #tpu.core_type<tc>, window_params = [{transform_indices = @transform_0, window_bounds = array<i64: 2, 200, 166>}, {transform_indices = @transform_1, window_bounds = array<i64: 2, 168, 16>}, {pipeline_mode = #tpu.pipeline_mode<synchronous>, transform_indices = @transform_2, window_bounds = array<i64: 9, 166, 256>}, {pipeline_mode = #tpu.pipeline_mode<synchronous>, transform_indices = @transform_3, window_bounds = array<i64: 1, 256>}, {pipeline_mode = #tpu.pipeline_mode<synchronous>, transform_indices = @transform_4, window_bounds = array<i64: 256, 128>}, {pipeline_mode = #tpu.pipeline_mode<synchronous>, transform_indices = @transform_5, window_bounds = array<i64: 1, 128>}, {pipeline_mode = #tpu.pipeline_mode<synchronous>, transform_indices = @transform_6, window_bounds = array<i64: 16, 64>}, {pipeline_mode = #tpu.pipeline_mode<synchronous>, transform_indices = @transform_7, window_bounds = array<i64: 1, 64>}, {pipeline_mode = #tpu.pipeline_mode<synchronous>, transform_indices = @transform_8, window_bounds = array<i64: 3, 64, 32>}, {pipeline_mode = #tpu.pipeline_mode<synchronous>, transform_indices = @transform_9, window_bounds = array<i64: 1, 32>}, {transform_indices = @transform_10, window_bounds = array<i64: 2, 5, 16, 128>}, {transform_indices = @transform_11, window_bounds = array<i64: 2, 154, 32>}]} {
    %cst = arith.constant 0.000000e+00 : f32
    %0 = vector.broadcast %cst : f32 to vector<320x256xf32>
    %c0 = arith.constant 0 : index
    %c0_0 = arith.constant 0 : index
    %c0_1 = arith.constant 0 : index
    %1 = vector.load %arg1[%c0, %c0_0, %c0_1] : memref<2x200x166xbf16, #tpu.memory_space<vmem>>, vector<2x192x166xbf16>
    %2 = vector.extract_strided_slice %1 {offsets = [0, 0, 0], sizes = [2, 160, 166], strides = [1, 1, 1]} : vector<2x192x166xbf16> to vector<2x160x166xbf16>
    %3 = vector.shape_cast %2 : vector<2x160x166xbf16> to vector<320x166xbf16>
    %c0_2 = arith.constant 0 : index
    %c0_3 = arith.constant 0 : index
    %c0_4 = arith.constant 0 : index
    %4 = vector.load %arg3[%c0_2, %c0_3, %c0_4] : memref<9x166x256xbf16, #tpu.memory_space<vmem>>, vector<1x166x256xbf16>
    %5 = vector.shape_cast %4 : vector<1x166x256xbf16> to vector<166x256xbf16>
    %cst_5 = arith.constant dense<0.000000e+00> : vector<320x256xf32>
    %6 = tpu.matmul %3, %5, %cst_5 {dimension_numbers = #tpu.dot_dimension_numbers<[1], [0], [0], [1], [0, 0, 1, 1], [], []>} : vector<320x166xbf16>, vector<166x256xbf16>, vector<320x256xf32> -> vector<320x256xf32>
    %7 = arith.addf %0, %6 : vector<320x256xf32>
    %8 = vector.extract_strided_slice %1 {offsets = [0, 16, 0], sizes = [2, 160, 166], strides = [1, 1, 1]} : vector<2x192x166xbf16> to vector<2x160x166xbf16>
    %9 = vector.shape_cast %8 : vector<2x160x166xbf16> to vector<320x166xbf16>
    %c3 = arith.constant 3 : index
    %c0_6 = arith.constant 0 : index
    %c0_7 = arith.constant 0 : index
    %10 = vector.load %arg3[%c3, %c0_6, %c0_7] : memref<9x166x256xbf16, #tpu.memory_space<vmem>>, vector<1x166x256xbf16>
    %11 = vector.shape_cast %10 : vector<1x166x256xbf16> to vector<166x256xbf16>
    %cst_8 = arith.constant dense<0.000000e+00> : vector<320x256xf32>
    %12 = tpu.matmul %9, %11, %cst_8 {dimension_numbers = #tpu.dot_dimension_numbers<[1], [0], [0], [1], [0, 0, 1, 1], [], []>} : vector<320x166xbf16>, vector<166x256xbf16>, vector<320x256xf32> -> vector<320x256xf32>
    %13 = arith.addf %7, %12 : vector<320x256xf32>
    %14 = vector.extract_strided_slice %1 {offsets = [0, 32, 0], sizes = [2, 160, 166], strides = [1, 1, 1]} : vector<2x192x166xbf16> to vector<2x160x166xbf16>
    %15 = vector.shape_cast %14 : vector<2x160x166xbf16> to vector<320x166xbf16>
    %c6 = arith.constant 6 : index
    %c0_9 = arith.constant 0 : index
    %c0_10 = arith.constant 0 : index
    %16 = vector.load %arg3[%c6, %c0_9, %c0_10] : memref<9x166x256xbf16, #tpu.memory_space<vmem>>, vector<1x166x256xbf16>
    %17 = vector.shape_cast %16 : vector<1x166x256xbf16> to vector<166x256xbf16>
    %cst_11 = arith.constant dense<0.000000e+00> : vector<320x256xf32>
    %18 = tpu.matmul %15, %17, %cst_11 {dimension_numbers = #tpu.dot_dimension_numbers<[1], [0], [0], [1], [0, 0, 1, 1], [], []>} : vector<320x166xbf16>, vector<166x256xbf16>, vector<320x256xf32> -> vector<320x256xf32>
    %19 = arith.addf %13, %18 : vector<320x256xf32>
    %c0_12 = arith.constant 0 : index
    %c1 = arith.constant 1 : index
    %c0_13 = arith.constant 0 : index
    %20 = vector.load %arg1[%c0_12, %c1, %c0_13] : memref<2x200x166xbf16, #tpu.memory_space<vmem>>, vector<2x192x166xbf16>
    %21 = vector.extract_strided_slice %20 {offsets = [0, 0, 0], sizes = [2, 160, 166], strides = [1, 1, 1]} : vector<2x192x166xbf16> to vector<2x160x166xbf16>
    %22 = vector.shape_cast %21 : vector<2x160x166xbf16> to vector<320x166xbf16>
    %c1_14 = arith.constant 1 : index
    %c0_15 = arith.constant 0 : index
    %c0_16 = arith.constant 0 : index
    %23 = vector.load %arg3[%c1_14, %c0_15, %c0_16] : memref<9x166x256xbf16, #tpu.memory_space<vmem>>, vector<1x166x256xbf16>
    %24 = vector.shape_cast %23 : vector<1x166x256xbf16> to vector<166x256xbf16>
    %cst_17 = arith.constant dense<0.000000e+00> : vector<320x256xf32>
    %25 = tpu.matmul %22, %24, %cst_17 {dimension_numbers = #tpu.dot_dimension_numbers<[1], [0], [0], [1], [0, 0, 1, 1], [], []>} : vector<320x166xbf16>, vector<166x256xbf16>, vector<320x256xf32> -> vector<320x256xf32>
    %26 = arith.addf %19, %25 : vector<320x256xf32>
    %27 = vector.extract_strided_slice %20 {offsets = [0, 16, 0], sizes = [2, 160, 166], strides = [1, 1, 1]} : vector<2x192x166xbf16> to vector<2x160x166xbf16>
    %28 = vector.shape_cast %27 : vector<2x160x166xbf16> to vector<320x166xbf16>
    %c4 = arith.constant 4 : index
    %c0_18 = arith.constant 0 : index
    %c0_19 = arith.constant 0 : index
    %29 = vector.load %arg3[%c4, %c0_18, %c0_19] : memref<9x166x256xbf16, #tpu.memory_space<vmem>>, vector<1x166x256xbf16>
    %30 = vector.shape_cast %29 : vector<1x166x256xbf16> to vector<166x256xbf16>
    %cst_20 = arith.constant dense<0.000000e+00> : vector<320x256xf32>
    %31 = tpu.matmul %28, %30, %cst_20 {dimension_numbers = #tpu.dot_dimension_numbers<[1], [0], [0], [1], [0, 0, 1, 1], [], []>} : vector<320x166xbf16>, vector<166x256xbf16>, vector<320x256xf32> -> vector<320x256xf32>
    %32 = arith.addf %26, %31 : vector<320x256xf32>
    %33 = vector.extract_strided_slice %20 {offsets = [0, 32, 0], sizes = [2, 160, 166], strides = [1, 1, 1]} : vector<2x192x166xbf16> to vector<2x160x166xbf16>
    %34 = vector.shape_cast %33 : vector<2x160x166xbf16> to vector<320x166xbf16>
    %c7 = arith.constant 7 : index
    %c0_21 = arith.constant 0 : index
    %c0_22 = arith.constant 0 : index
    %35 = vector.load %arg3[%c7, %c0_21, %c0_22] : memref<9x166x256xbf16, #tpu.memory_space<vmem>>, vector<1x166x256xbf16>
    %36 = vector.shape_cast %35 : vector<1x166x256xbf16> to vector<166x256xbf16>
    %cst_23 = arith.constant dense<0.000000e+00> : vector<320x256xf32>
    %37 = tpu.matmul %34, %36, %cst_23 {dimension_numbers = #tpu.dot_dimension_numbers<[1], [0], [0], [1], [0, 0, 1, 1], [], []>} : vector<320x166xbf16>, vector<166x256xbf16>, vector<320x256xf32> -> vector<320x256xf32>
    %38 = arith.addf %32, %37 : vector<320x256xf32>
    %c0_24 = arith.constant 0 : index
    %c2 = arith.constant 2 : index
    %c0_25 = arith.constant 0 : index
    %39 = vector.load %arg1[%c0_24, %c2, %c0_25] : memref<2x200x166xbf16, #tpu.memory_space<vmem>>, vector<2x192x166xbf16>
    %40 = vector.extract_strided_slice %39 {offsets = [0, 0, 0], sizes = [2, 160, 166], strides = [1, 1, 1]} : vector<2x192x166xbf16> to vector<2x160x166xbf16>
    %41 = vector.shape_cast %40 : vector<2x160x166xbf16> to vector<320x166xbf16>
    %c2_26 = arith.constant 2 : index
    %c0_27 = arith.constant 0 : index
    %c0_28 = arith.constant 0 : index
    %42 = vector.load %arg3[%c2_26, %c0_27, %c0_28] : memref<9x166x256xbf16, #tpu.memory_space<vmem>>, vector<1x166x256xbf16>
    %43 = vector.shape_cast %42 : vector<1x166x256xbf16> to vector<166x256xbf16>
    %cst_29 = arith.constant dense<0.000000e+00> : vector<320x256xf32>
    %44 = tpu.matmul %41, %43, %cst_29 {dimension_numbers = #tpu.dot_dimension_numbers<[1], [0], [0], [1], [0, 0, 1, 1], [], []>} : vector<320x166xbf16>, vector<166x256xbf16>, vector<320x256xf32> -> vector<320x256xf32>
    %45 = arith.addf %38, %44 : vector<320x256xf32>
    %46 = vector.extract_strided_slice %39 {offsets = [0, 16, 0], sizes = [2, 160, 166], strides = [1, 1, 1]} : vector<2x192x166xbf16> to vector<2x160x166xbf16>
    %47 = vector.shape_cast %46 : vector<2x160x166xbf16> to vector<320x166xbf16>
    %c5 = arith.constant 5 : index
    %c0_30 = arith.constant 0 : index
    %c0_31 = arith.constant 0 : index
    %48 = vector.load %arg3[%c5, %c0_30, %c0_31] : memref<9x166x256xbf16, #tpu.memory_space<vmem>>, vector<1x166x256xbf16>
    %49 = vector.shape_cast %48 : vector<1x166x256xbf16> to vector<166x256xbf16>
    %cst_32 = arith.constant dense<0.000000e+00> : vector<320x256xf32>
    %50 = tpu.matmul %47, %49, %cst_32 {dimension_numbers = #tpu.dot_dimension_numbers<[1], [0], [0], [1], [0, 0, 1, 1], [], []>} : vector<320x166xbf16>, vector<166x256xbf16>, vector<320x256xf32> -> vector<320x256xf32>
    %51 = arith.addf %45, %50 : vector<320x256xf32>
    %52 = vector.extract_strided_slice %39 {offsets = [0, 32, 0], sizes = [2, 160, 166], strides = [1, 1, 1]} : vector<2x192x166xbf16> to vector<2x160x166xbf16>
    %53 = vector.shape_cast %52 : vector<2x160x166xbf16> to vector<320x166xbf16>
    %c8 = arith.constant 8 : index
    %c0_33 = arith.constant 0 : index
    %c0_34 = arith.constant 0 : index
    %54 = vector.load %arg3[%c8, %c0_33, %c0_34] : memref<9x166x256xbf16, #tpu.memory_space<vmem>>, vector<1x166x256xbf16>
    %55 = vector.shape_cast %54 : vector<1x166x256xbf16> to vector<166x256xbf16>
    %cst_35 = arith.constant dense<0.000000e+00> : vector<320x256xf32>
    %56 = tpu.matmul %53, %55, %cst_35 {dimension_numbers = #tpu.dot_dimension_numbers<[1], [0], [0], [1], [0, 0, 1, 1], [], []>} : vector<320x166xbf16>, vector<166x256xbf16>, vector<320x256xf32> -> vector<320x256xf32>
    %57 = arith.addf %51, %56 : vector<320x256xf32>
    %c0_36 = arith.constant 0 : index
    %c0_37 = arith.constant 0 : index
    %58 = vector.load %arg4[%c0_36, %c0_37] : memref<1x256xf32, #tpu.memory_space<vmem>>, vector<1x256xf32>
    %59 = vector.broadcast %58 : vector<1x256xf32> to vector<320x256xf32>
    %60 = arith.addf %57, %59 : vector<320x256xf32>
    %cst_38 = arith.constant 0.000000e+00 : f32
    %61 = vector.broadcast %cst_38 : f32 to vector<320x256xf32>
    %62 = arith.maximumf %60, %61 : vector<320x256xf32>
    %63 = arith.truncf %62 : vector<320x256xf32> to vector<320x256xbf16>
    %c0_39 = arith.constant 0 : index
    %c0_40 = arith.constant 0 : index
    %64 = vector.load %arg5[%c0_39, %c0_40] : memref<256x128xbf16, #tpu.memory_space<vmem>>, vector<256x128xbf16>
    %cst_41 = arith.constant dense<0.000000e+00> : vector<320x128xf32>
    %65 = tpu.matmul %63, %64, %cst_41 {dimension_numbers = #tpu.dot_dimension_numbers<[1], [0], [0], [1], [0, 0, 1, 1], [], []>} : vector<320x256xbf16>, vector<256x128xbf16>, vector<320x128xf32> -> vector<320x128xf32>
    %c0_42 = arith.constant 0 : index
    %c0_43 = arith.constant 0 : index
    %66 = vector.load %arg6[%c0_42, %c0_43] : memref<1x128xf32, #tpu.memory_space<vmem>>, vector<1x128xf32>
    %67 = vector.broadcast %66 : vector<1x128xf32> to vector<320x128xf32>
    %68 = arith.addf %65, %67 : vector<320x128xf32>
    %cst_44 = arith.constant 0.000000e+00 : f32
    %69 = vector.broadcast %cst_44 : f32 to vector<320x128xf32>
    %70 = arith.maximumf %68, %69 : vector<320x128xf32>
    %71 = vector.shape_cast %70 : vector<320x128xf32> to vector<2x5x2x16x128xf32>
    %72 = vector.extract_strided_slice %71 {offsets = [0, 0, 0, 0, 0], sizes = [2, 5, 1, 16, 128], strides = [1, 1, 1, 1, 1]} : vector<2x5x2x16x128xf32> to vector<2x5x1x16x128xf32>
    %73 = vector.shape_cast %72 : vector<2x5x1x16x128xf32> to vector<2x5x16x128xf32>
    %74 = vector.extract_strided_slice %71 {offsets = [0, 0, 1, 0, 0], sizes = [2, 5, 1, 16, 128], strides = [1, 1, 1, 1, 1]} : vector<2x5x2x16x128xf32> to vector<2x5x1x16x128xf32>
    %75 = vector.shape_cast %74 : vector<2x5x1x16x128xf32> to vector<2x5x16x128xf32>
    %76 = arith.maximumf %73, %75 : vector<2x5x16x128xf32>
    %77 = arith.truncf %76 : vector<2x5x16x128xf32> to vector<2x5x16x128xbf16>
    %c0_45 = arith.constant 0 : index
    %c0_46 = arith.constant 0 : index
    %c0_47 = arith.constant 0 : index
    %c0_48 = arith.constant 0 : index
    %78 = vector.load %arg11[%c0_45, %c0_46, %c0_47, %c0_48] : memref<2x5x16x128xbf16, #tpu.memory_space<vmem>>, vector<2x5x16x128xbf16>
    tpu.vector_store %arg11[%c0_45, %c0_46, %c0_47, %c0_48], %77 {strides = array<i32>} : memref<2x5x16x128xbf16, #tpu.memory_space<vmem>>, vector<2x5x16x128xbf16>,
    %c0_49 = arith.constant 0 : index
    %c0_50 = arith.constant 0 : index
    %c0_51 = arith.constant 0 : index
    %79 = vector.load %arg2[%c0_49, %c0_50, %c0_51] : memref<2x168x16xbf16, #tpu.memory_space<vmem>>, vector<2x168x16xbf16>
    %80 = vector.shape_cast %79 : vector<2x168x16xbf16> to vector<336x16xbf16>
    %c0_52 = arith.constant 0 : index
    %c0_53 = arith.constant 0 : index
    %81 = vector.load %arg7[%c0_52, %c0_53] : memref<16x64xbf16, #tpu.memory_space<vmem>>, vector<16x64xbf16>
    %cst_54 = arith.constant dense<0.000000e+00> : vector<336x64xf32>
    %82 = tpu.matmul %80, %81, %cst_54 {dimension_numbers = #tpu.dot_dimension_numbers<[1], [0], [0], [1], [0, 0, 1, 1], [], []>} : vector<336x16xbf16>, vector<16x64xbf16>, vector<336x64xf32> -> vector<336x64xf32>
    %c0_55 = arith.constant 0 : index
    %c0_56 = arith.constant 0 : index
    %83 = vector.load %arg8[%c0_55, %c0_56] : memref<1x64xf32, #tpu.memory_space<vmem>>, vector<1x64xf32>
    %84 = vector.broadcast %83 : vector<1x64xf32> to vector<336x64xf32>
    %85 = arith.addf %82, %84 : vector<336x64xf32>
    %cst_57 = arith.constant 0.000000e+00 : f32
    %86 = vector.broadcast %cst_57 : f32 to vector<336x64xf32>
    %87 = arith.maximumf %85, %86 : vector<336x64xf32>
    %88 = vector.shape_cast %87 : vector<336x64xf32> to vector<2x168x64xf32>
    %cst_58 = arith.constant 0.000000e+00 : f32
    %89 = vector.broadcast %cst_58 : f32 to vector<320x32xf32>
    %90 = vector.extract_strided_slice %88 {offsets = [0, 0, 0], sizes = [2, 160, 64], strides = [1, 1, 1]} : vector<2x168x64xf32> to vector<2x160x64xf32>
    %91 = vector.shape_cast %90 : vector<2x160x64xf32> to vector<320x64xf32>
    %92 = arith.truncf %91 : vector<320x64xf32> to vector<320x64xbf16>
    %c0_59 = arith.constant 0 : index
    %c0_60 = arith.constant 0 : index
    %c0_61 = arith.constant 0 : index
    %93 = vector.load %arg9[%c0_59, %c0_60, %c0_61] : memref<3x64x32xbf16, #tpu.memory_space<vmem>>, vector<1x64x32xbf16>
    %94 = vector.shape_cast %93 : vector<1x64x32xbf16> to vector<64x32xbf16>
    %cst_62 = arith.constant dense<0.000000e+00> : vector<320x32xf32>
    %95 = tpu.matmul %92, %94, %cst_62 {dimension_numbers = #tpu.dot_dimension_numbers<[1], [0], [0], [1], [0, 0, 1, 1], [], []>} : vector<320x64xbf16>, vector<64x32xbf16>, vector<320x32xf32> -> vector<320x32xf32>
    %96 = arith.addf %89, %95 : vector<320x32xf32>
    %97 = vector.extract_strided_slice %88 {offsets = [0, 1, 0], sizes = [2, 160, 64], strides = [1, 1, 1]} : vector<2x168x64xf32> to vector<2x160x64xf32>
    %98 = vector.shape_cast %97 : vector<2x160x64xf32> to vector<320x64xf32>
    %99 = arith.truncf %98 : vector<320x64xf32> to vector<320x64xbf16>
    %c1_63 = arith.constant 1 : index
    %c0_64 = arith.constant 0 : index
    %c0_65 = arith.constant 0 : index
    %100 = vector.load %arg9[%c1_63, %c0_64, %c0_65] : memref<3x64x32xbf16, #tpu.memory_space<vmem>>, vector<1x64x32xbf16>
    %101 = vector.shape_cast %100 : vector<1x64x32xbf16> to vector<64x32xbf16>
    %cst_66 = arith.constant dense<0.000000e+00> : vector<320x32xf32>
    %102 = tpu.matmul %99, %101, %cst_66 {dimension_numbers = #tpu.dot_dimension_numbers<[1], [0], [0], [1], [0, 0, 1, 1], [], []>} : vector<320x64xbf16>, vector<64x32xbf16>, vector<320x32xf32> -> vector<320x32xf32>
    %103 = arith.addf %96, %102 : vector<320x32xf32>
    %104 = vector.extract_strided_slice %88 {offsets = [0, 2, 0], sizes = [2, 160, 64], strides = [1, 1, 1]} : vector<2x168x64xf32> to vector<2x160x64xf32>
    %105 = vector.shape_cast %104 : vector<2x160x64xf32> to vector<320x64xf32>
    %106 = arith.truncf %105 : vector<320x64xf32> to vector<320x64xbf16>
    %c2_67 = arith.constant 2 : index
    %c0_68 = arith.constant 0 : index
    %c0_69 = arith.constant 0 : index
    %107 = vector.load %arg9[%c2_67, %c0_68, %c0_69] : memref<3x64x32xbf16, #tpu.memory_space<vmem>>, vector<1x64x32xbf16>
    %108 = vector.shape_cast %107 : vector<1x64x32xbf16> to vector<64x32xbf16>
    %cst_70 = arith.constant dense<0.000000e+00> : vector<320x32xf32>
    %109 = tpu.matmul %106, %108, %cst_70 {dimension_numbers = #tpu.dot_dimension_numbers<[1], [0], [0], [1], [0, 0, 1, 1], [], []>} : vector<320x64xbf16>, vector<64x32xbf16>, vector<320x32xf32> -> vector<320x32xf32>
    %110 = arith.addf %103, %109 : vector<320x32xf32>
    %c0_71 = arith.constant 0 : index
    %c0_72 = arith.constant 0 : index
    %111 = vector.load %arg10[%c0_71, %c0_72] : memref<1x32xf32, #tpu.memory_space<vmem>>, vector<1x32xf32>
    %112 = vector.broadcast %111 : vector<1x32xf32> to vector<320x32xf32>
    %113 = arith.addf %110, %112 : vector<320x32xf32>
    %cst_73 = arith.constant 0.000000e+00 : f32
    %114 = vector.broadcast %cst_73 : f32 to vector<320x32xf32>
    %115 = arith.maximumf %113, %114 : vector<320x32xf32>
    %116 = vector.shape_cast %115 : vector<320x32xf32> to vector<2x160x32xf32>
    %117 = vector.extract_strided_slice %116 {offsets = [0, 0, 0], sizes = [2, 154, 32], strides = [1, 1, 1]} : vector<2x160x32xf32> to vector<2x154x32xf32>
    %118 = vector.extract_strided_slice %116 {offsets = [0, 1, 0], sizes = [2, 154, 32], strides = [1, 1, 1]} : vector<2x160x32xf32> to vector<2x154x32xf32>
    %119 = arith.maximumf %117, %118 : vector<2x154x32xf32>
    %120 = arith.truncf %119 : vector<2x154x32xf32> to vector<2x154x32xbf16>
    %c0_74 = arith.constant 0 : index
    %c0_75 = arith.constant 0 : index
    %c0_76 = arith.constant 0 : index
    %121 = vector.load %arg12[%c0_74, %c0_75, %c0_76] : memref<2x154x32xbf16, #tpu.memory_space<vmem>>, vector<2x154x32xbf16>
    tpu.vector_store %arg12[%c0_74, %c0_75, %c0_76], %120 {strides = array<i32>} : memref<2x154x32xbf16, #tpu.memory_space<vmem>>, vector<2x154x32xbf16>,
    return
  }
  func.func @transform_0(%arg0: i32) -> (i32, i32, i32) {
    %c0_i32 = arith.constant 0 : i32
    %c0_i32_0 = arith.constant 0 : i32
    %c0_i32_1 = arith.constant 0 : i32
    return %arg0, %c0_i32, %c0_i32_0 : i32, i32, i32
  }
  func.func @transform_1(%arg0: i32) -> (i32, i32, i32) {
    %c0_i32 = arith.constant 0 : i32
    %c0_i32_0 = arith.constant 0 : i32
    %c0_i32_1 = arith.constant 0 : i32
    return %arg0, %c0_i32, %c0_i32_0 : i32, i32, i32
  }
  func.func @transform_2(%arg0: i32) -> (i32, i32, i32) {
    %c0_i32 = arith.constant 0 : i32
    %c0_i32_0 = arith.constant 0 : i32
    %c0_i32_1 = arith.constant 0 : i32
    %c0_i32_2 = arith.constant 0 : i32
    return %c0_i32, %c0_i32_0, %c0_i32_1 : i32, i32, i32
  }
  func.func @transform_3(%arg0: i32) -> (i32, i32) {
    %c0_i32 = arith.constant 0 : i32
    %c0_i32_0 = arith.constant 0 : i32
    %c0_i32_1 = arith.constant 0 : i32
    return %c0_i32, %c0_i32_0 : i32, i32
  }
  func.func @transform_4(%arg0: i32) -> (i32, i32) {
    %c0_i32 = arith.constant 0 : i32
    %c0_i32_0 = arith.constant 0 : i32
    %c0_i32_1 = arith.constant 0 : i32
    return %c0_i32, %c0_i32_0 : i32, i32
  }
  func.func @transform_5(%arg0: i32) -> (i32, i32) {
    %c0_i32 = arith.constant 0 : i32
    %c0_i32_0 = arith.constant 0 : i32
    %c0_i32_1 = arith.constant 0 : i32
    return %c0_i32, %c0_i32_0 : i32, i32
  }
  func.func @transform_6(%arg0: i32) -> (i32, i32) {
    %c0_i32 = arith.constant 0 : i32
    %c0_i32_0 = arith.constant 0 : i32
    %c0_i32_1 = arith.constant 0 : i32
    return %c0_i32, %c0_i32_0 : i32, i32
  }
  func.func @transform_7(%arg0: i32) -> (i32, i32) {
    %c0_i32 = arith.constant 0 : i32
    %c0_i32_0 = arith.constant 0 : i32
    %c0_i32_1 = arith.constant 0 : i32
    return %c0_i32, %c0_i32_0 : i32, i32
  }
  func.func @transform_8(%arg0: i32) -> (i32, i32, i32) {
    %c0_i32 = arith.constant 0 : i32
    %c0_i32_0 = arith.constant 0 : i32
    %c0_i32_1 = arith.constant 0 : i32
    %c0_i32_2 = arith.constant 0 : i32
    return %c0_i32, %c0_i32_0, %c0_i32_1 : i32, i32, i32
  }
  func.func @transform_9(%arg0: i32) -> (i32, i32) {
    %c0_i32 = arith.constant 0 : i32
    %c0_i32_0 = arith.constant 0 : i32
    %c0_i32_1 = arith.constant 0 : i32
    return %c0_i32, %c0_i32_0 : i32, i32
  }
  func.func @transform_10(%arg0: i32) -> (i32, i32, i32, i32) {
    %c0_i32 = arith.constant 0 : i32
    %c0_i32_0 = arith.constant 0 : i32
    %c0_i32_1 = arith.constant 0 : i32
    %c0_i32_2 = arith.constant 0 : i32
    return %arg0, %c0_i32, %c0_i32_0, %c0_i32_1 : i32, i32, i32, i32
  }
  func.func @transform_11(%arg0: i32) -> (i32, i32, i32) {
    %c0_i32 = arith.constant 0 : i32
    %c0_i32_0 = arith.constant 0 : i32
    %c0_i32_1 = arith.constant 0 : i32
    return %arg0, %c0_i32, %c0_i32_0 : i32, i32, i32
  }
}

module attributes {stable_mosaic.version = 11 : i64} {
  func.func @_fc_kernel(%arg0: i32, %arg1: memref<8x3200xbf16, #tpu.memory_space<vmem>>, %arg2: memref<8x2464xbf16, #tpu.memory_space<vmem>>, %arg3: memref<3200x128xbf16, #tpu.memory_space<vmem>>, %arg4: memref<2464x128xbf16, #tpu.memory_space<vmem>>, %arg5: memref<1x128xf32, #tpu.memory_space<vmem>>, %arg6: memref<8x128xf32, #tpu.memory_space<vmem>>) attributes {dimension_semantics = [#tpu.dimension_semantics<parallel>], iteration_bounds = array<i64: 1>, scalar_prefetch = 0 : i64, scratch_operands = 0 : i64, tpu.core_type = #tpu.core_type<tc>, window_params = [{transform_indices = @transform_0, window_bounds = array<i64: 8, 3200>}, {transform_indices = @transform_1, window_bounds = array<i64: 8, 2464>}, {pipeline_mode = #tpu.pipeline_mode<synchronous>, transform_indices = @transform_2, window_bounds = array<i64: 3200, 128>}, {pipeline_mode = #tpu.pipeline_mode<synchronous>, transform_indices = @transform_3, window_bounds = array<i64: 2464, 128>}, {pipeline_mode = #tpu.pipeline_mode<synchronous>, transform_indices = @transform_4, window_bounds = array<i64: 1, 128>}, {transform_indices = @transform_5, window_bounds = array<i64: 8, 128>}]} {
    %c0 = arith.constant 0 : index
    %c0_0 = arith.constant 0 : index
    %0 = vector.load %arg1[%c0, %c0_0] : memref<8x3200xbf16, #tpu.memory_space<vmem>>, vector<8x3200xbf16>
    %c0_1 = arith.constant 0 : index
    %c0_2 = arith.constant 0 : index
    %1 = vector.load %arg3[%c0_1, %c0_2] : memref<3200x128xbf16, #tpu.memory_space<vmem>>, vector<3200x128xbf16>
    %cst = arith.constant dense<0.000000e+00> : vector<8x128xf32>
    %2 = tpu.matmul %0, %1, %cst {dimension_numbers = #tpu.dot_dimension_numbers<[1], [0], [0], [1], [0, 0, 1, 1], [], []>} : vector<8x3200xbf16>, vector<3200x128xbf16>, vector<8x128xf32> -> vector<8x128xf32>
    %c0_3 = arith.constant 0 : index
    %c0_4 = arith.constant 0 : index
    %3 = vector.load %arg2[%c0_3, %c0_4] : memref<8x2464xbf16, #tpu.memory_space<vmem>>, vector<8x2464xbf16>
    %c0_5 = arith.constant 0 : index
    %c0_6 = arith.constant 0 : index
    %4 = vector.load %arg4[%c0_5, %c0_6] : memref<2464x128xbf16, #tpu.memory_space<vmem>>, vector<2464x128xbf16>
    %cst_7 = arith.constant dense<0.000000e+00> : vector<8x128xf32>
    %5 = tpu.matmul %3, %4, %cst_7 {dimension_numbers = #tpu.dot_dimension_numbers<[1], [0], [0], [1], [0, 0, 1, 1], [], []>} : vector<8x2464xbf16>, vector<2464x128xbf16>, vector<8x128xf32> -> vector<8x128xf32>
    %6 = arith.addf %2, %5 : vector<8x128xf32>
    %c0_8 = arith.constant 0 : index
    %c0_9 = arith.constant 0 : index
    %7 = vector.load %arg5[%c0_8, %c0_9] : memref<1x128xf32, #tpu.memory_space<vmem>>, vector<1x128xf32>
    %8 = vector.broadcast %7 : vector<1x128xf32> to vector<8x128xf32>
    %9 = arith.addf %6, %8 : vector<8x128xf32>
    %c0_10 = arith.constant 0 : index
    %c0_11 = arith.constant 0 : index
    %10 = vector.load %arg6[%c0_10, %c0_11] : memref<8x128xf32, #tpu.memory_space<vmem>>, vector<8x128xf32>
    tpu.vector_store %arg6[%c0_10, %c0_11], %9 {strides = array<i32>} : memref<8x128xf32, #tpu.memory_space<vmem>>, vector<8x128xf32>,
    return
  }
  func.func @transform_0(%arg0: i32) -> (i32, i32) {
    %c0_i32 = arith.constant 0 : i32
    %c0_i32_0 = arith.constant 0 : i32
    return %arg0, %c0_i32 : i32, i32
  }
  func.func @transform_1(%arg0: i32) -> (i32, i32) {
    %c0_i32 = arith.constant 0 : i32
    %c0_i32_0 = arith.constant 0 : i32
    return %arg0, %c0_i32 : i32, i32
  }
  func.func @transform_2(%arg0: i32) -> (i32, i32) {
    %c0_i32 = arith.constant 0 : i32
    %c0_i32_0 = arith.constant 0 : i32
    %c0_i32_1 = arith.constant 0 : i32
    return %c0_i32, %c0_i32_0 : i32, i32
  }
  func.func @transform_3(%arg0: i32) -> (i32, i32) {
    %c0_i32 = arith.constant 0 : i32
    %c0_i32_0 = arith.constant 0 : i32
    %c0_i32_1 = arith.constant 0 : i32
    return %c0_i32, %c0_i32_0 : i32, i32
  }
  func.func @transform_4(%arg0: i32) -> (i32, i32) {
    %c0_i32 = arith.constant 0 : i32
    %c0_i32_0 = arith.constant 0 : i32
    %c0_i32_1 = arith.constant 0 : i32
    return %c0_i32, %c0_i32_0 : i32, i32
  }
  func.func @transform_5(%arg0: i32) -> (i32, i32) {
    %c0_i32 = arith.constant 0 : i32
    %c0_i32_0 = arith.constant 0 : i32
    return %arg0, %c0_i32 : i32, i32
  }
}

</mosaic_0001>

<llo_original>
// kernel: hsi_branch_forward.3
$region0: #{hsi_branch_forward.3}
  #allocation0 [shape = 'u32[]', space=smem, size = 0x4, offset = 0x4, fixed_abs, tag = 'smem constant byte address 0x4 - core index']
  #allocation1 [shape = 'u32[144,128]{1,0:T(1,128)}', space=vmem, size = 0x12000, scoped, tag = 'internal scratch']
  %s0 = inlined_call_operand.vmem [shape: bf16[8,3200], index: 0, kind: input, shape index: {}]
  %s1 = inlined_call_operand.vmem [shape: bf16[8,2464], index: 1, kind: input, shape index: {}]
  %s2 = inlined_call_operand.vmem [shape: bf16[3200,128], index: 2, kind: input, shape index: {}]
  %s3 = inlined_call_operand.vmem [shape: bf16[2464,128], index: 3, kind: input, shape index: {}]
  %s4 = inlined_call_operand.vmem [shape: f32[1,128], index: 4, kind: input, shape index: {}]
  %s5 = inlined_call_operand.vmem [shape: f32[8,128], index: 5, kind: output, shape index: {}]
  %s6 = sld [smem:[#allocation0]]
  $region30: #{hsi_branch_forward.3} parent=0
    _
  %s8 = ssub.s32 1, %s6
  %s9 = scalar_select 0, %s8, %s6
  // Predicated region
  $region2: #{hsi_branch_forward.3} parent=0 // pred_check
    _
  $region3: #{hsi_branch_forward.3} parent=0 // pred_check_branch
    %11 = sbr.rel (0) target = $region5
  $region4: #{hsi_branch_forward.3} parent=0 // pred_region
    _
  $region5: #{hsi_branch_forward.3} parent=0 // pred_fallthru
    _
  // Predicated region
  $region6: #{hsi_branch_forward.3} parent=0 // pred_check
    _
  $region7: #{hsi_branch_forward.3} parent=0 // pred_check_branch
    %13 = sbr.rel (0) target = $region9
  $region8: #{hsi_branch_forward.3} parent=0 // pred_region
    _
  $region9: #{hsi_branch_forward.3} parent=0 // pred_fallthru
    _
  // Predicated region
  $region10: #{hsi_branch_forward.3} parent=0 // pred_check
    _
  $region11: #{hsi_branch_forward.3} parent=0 // pred_check_branch
    %15 = sbr.rel (0) target = $region13
  $region12: #{hsi_branch_forward.3} parent=0 // pred_region
    _
  $region13: #{hsi_branch_forward.3} parent=0 // pred_fallthru
    _
  // Predicated region
  $region14: #{hsi_branch_forward.3} parent=0 // pred_check
    _
  $region15: #{hsi_branch_forward.3} parent=0 // pred_check_branch
    %17 = sbr.rel (0) target = $region17
  $region16: #{hsi_branch_forward.3} parent=0 // pred_region
    _
  $region17: #{hsi_branch_forward.3} parent=0 // pred_fallthru
    _
  // Predicated region
  $region18: #{hsi_branch_forward.3} parent=0 // pred_check
    _
  $region19: #{hsi_branch_forward.3} parent=0 // pred_check_branch
    %19 = sbr.rel (0) target = $region21
  $region20: #{hsi_branch_forward.3} parent=0 // pred_region
    _
  $region21: #{hsi_branch_forward.3} parent=0 // pred_fallthru
    _
  %v21 = vld [vmem:[%s0] sm:$0xff]
  %v22 = vld [vmem:[%s0 + $0x8] sm:$0xff]
  %v23 = vld [vmem:[%s0 + $0x10] sm:$0xff]
  %v24 = vld [vmem:[%s0 + $0x18] sm:$0xff]
  %v25 = vld [vmem:[%s0 + $0x20] sm:$0xff]
  %v26 = vld [vmem:[%s0 + $0x28] sm:$0xff]
  %v27 = vld [vmem:[%s0 + $0x30] sm:$0xff]
  %v28 = vld [vmem:[%s0 + $0x38] sm:$0xff]
  %v29 = vld [vmem:[%s0 + $0x40] sm:$0xff]
  %v30 = vld [vmem:[%s0 + $0x48] sm:$0xff]
  %v31 = vld [vmem:[%s0 + $0x50] sm:$0xff]
  %v32 = vld [vmem:[%s0 + $0x58] sm:$0xff]
  %v33 = vld [vmem:[%s0 + $0x60] sm:$0xf]
  %v34 = vld [vmem:[%s2] sm:$0xf]
  %v35 = vld [vmem:[%s2 + $0x4] sm:$0xf]
  %v36 = vld [vmem:[%s2 + $0x8] sm:$0xf]
  %v37 = vld [vmem:[%s2 + $0xc] sm:$0xf]
  %v38 = vld [vmem:[%s2 + $0x10] sm:$0xf]
  %v39 = vld [vmem:[%s2 + $0x14] sm:$0xf]
  %v40 = vld [vmem:[%s2 + $0x18] sm:$0xf]
  %v41 = vld [vmem:[%s2 + $0x1c] sm:$0xf]
  %v42 = vld [vmem:[%s2 + $0x20] sm:$0xf]
  %v43 = vld [vmem:[%s2 + $0x24] sm:$0xf]
  %v44 = vld [vmem:[%s2 + $0x28] sm:$0xf]
  %v45 = vld [vmem:[%s2 + $0x2c] sm:$0xf]
  %v46 = vld [vmem:[%s2 + $0x30] sm:$0xf]
  %v47 = vld [vmem:[%s2 + $0x34] sm:$0xf]
  %v48 = vld [vmem:[%s2 + $0x38] sm:$0xf]
  %v49 = vld [vmem:[%s2 + $0x3c] sm:$0xf]
  %v50 = vld [vmem:[%s2 + $0x40] sm:$0xf]
  %v51 = vld [vmem:[%s2 + $0x44] sm:$0xf]
  %v52 = vld [vmem:[%s2 + $0x48] sm:$0xf]
  %v53 = vld [vmem:[%s2 + $0x4c] sm:$0xf]
  %v54 = vld [vmem:[%s2 + $0x50] sm:$0xf]
  %v55 = vld [vmem:[%s2 + $0x54] sm:$0xf]
  %v56 = vld [vmem:[%s2 + $0x58] sm:$0xf]
  %v57 = vld [vmem:[%s2 + $0x5c] sm:$0xf]
  %v58 = vld [vmem:[%s2 + $0x60] sm:$0xf]
  %v59 = vld [vmem:[%s2 + $0x64] sm:$0xf]
  %v60 = vld [vmem:[%s2 + $0x68] sm:$0xf]
  %v61 = vld [vmem:[%s2 + $0x6c] sm:$0xf]
  %v62 = vld [vmem:[%s2 + $0x70] sm:$0xf]
  %v63 = vld [vmem:[%s2 + $0x74] sm:$0xf]
  %v64 = vld [vmem:[%s2 + $0x78] sm:$0xf]
  %v65 = vld [vmem:[%s2 + $0x7c] sm:$0xf]
  %v66 = vld [vmem:[%s2 + $0x80] sm:$0xf]
  %v67 = vld [vmem:[%s2 + $0x84] sm:$0xf]
  %v68 = vld [vmem:[%s2 + $0x88] sm:$0xf]
  %v69 = vld [vmem:[%s2 + $0x8c] sm:$0xf]
  %v70 = vld [vmem:[%s2 + $0x90] sm:$0xf]
  %v71 = vld [vmem:[%s2 + $0x94] sm:$0xf]
  %v72 = vld [vmem:[%s2 + $0x98] sm:$0xf]
  %v73 = vld [vmem:[%s2 + $0x9c] sm:$0xf]
  %v74 = vld [vmem:[%s2 + $0xa0] sm:$0xf]
  %v75 = vld [vmem:[%s2 + $0xa4] sm:$0xf]
  %v76 = vld [vmem:[%s2 + $0xa8] sm:$0xf]
  %v77 = vld [vmem:[%s2 + $0xac] sm:$0xf]
  %v78 = vld [vmem:[%s2 + $0xb0] sm:$0xf]
  %v79 = vld [vmem:[%s2 + $0xb4] sm:$0xf]
  %v80 = vld [vmem:[%s2 + $0xb8] sm:$0xf]
  %v81 = vld [vmem:[%s2 + $0xbc] sm:$0xf]
  %v82 = vld [vmem:[%s2 + $0xc0] sm:$0xf]
  %v83 = vld [vmem:[%s2 + $0xc4] sm:$0xf]
  %v84 = vld [vmem:[%s2 + $0xc8] sm:$0xf]
  %v85 = vld [vmem:[%s2 + $0xcc] sm:$0xf]
  %v86 = vld [vmem:[%s2 + $0xd0] sm:$0xf]
  %v87 = vld [vmem:[%s2 + $0xd4] sm:$0xf]
  %v88 = vld [vmem:[%s2 + $0xd8] sm:$0xf]
  %v89 = vld [vmem:[%s2 + $0xdc] sm:$0xf]
  %v90 = vld [vmem:[%s2 + $0xe0] sm:$0xf]
  %v91 = vld [vmem:[%s2 + $0xe4] sm:$0xf]
  %v92 = vld [vmem:[%s2 + $0xe8] sm:$0xf]
  %v93 = vld [vmem:[%s2 + $0xec] sm:$0xf]
  %v94 = vld [vmem:[%s2 + $0xf0] sm:$0xf]
  %v95 = vld [vmem:[%s2 + $0xf4] sm:$0xf]
  %v96 = vld [vmem:[%s2 + $0xf8] sm:$0xf]
  %v97 = vld [vmem:[%s2 + $0xfc] sm:$0xf]
  %v98 = vld [vmem:[%s2 + $0x100] sm:$0xf]
  %v99 = vld [vmem:[%s2 + $0x104] sm:$0xf]
  %v100 = vld [vmem:[%s2 + $0x108] sm:$0xf]
  %v101 = vld [vmem:[%s2 + $0x10c] sm:$0xf]
  %v102 = vld [vmem:[%s2 + $0x110] sm:$0xf]
  %v103 = vld [vmem:[%s2 + $0x114] sm:$0xf]
  %v104 = vld [vmem:[%s2 + $0x118] sm:$0xf]
  %v105 = vld [vmem:[%s2 + $0x11c] sm:$0xf]
  %v106 = vld [vmem:[%s2 + $0x120] sm:$0xf]
  %v107 = vld [vmem:[%s2 + $0x124] sm:$0xf]
  %v108 = vld [vmem:[%s2 + $0x128] sm:$0xf]
  %v109 = vld [vmem:[%s2 + $0x12c] sm:$0xf]
  %v110 = vld [vmem:[%s2 + $0x130] sm:$0xf]
  %v111 = vld [vmem:[%s2 + $0x134] sm:$0xf]
  %v112 = vld [vmem:[%s2 + $0x138] sm:$0xf]
  %v113 = vld [vmem:[%s2 + $0x13c] sm:$0xf]
  %v114 = vld [vmem:[%s2 + $0x140] sm:$0xf]
  %v115 = vld [vmem:[%s2 + $0x144] sm:$0xf]
  %v116 = vld [vmem:[%s2 + $0x148] sm:$0xf]
  %v117 = vld [vmem:[%s2 + $0x14c] sm:$0xf]
  %v118 = vld [vmem:[%s2 + $0x150] sm:$0xf]
  %v119 = vld [vmem:[%s2 + $0x154] sm:$0xf]
  %v120 = vld [vmem:[%s2 + $0x158] sm:$0xf]
  %v121 = vld [vmem:[%s2 + $0x15c] sm:$0xf]
  %v122 = vld [vmem:[%s2 + $0x160] sm:$0xf]
  %v123 = vld [vmem:[%s2 + $0x164] sm:$0xf]
  %v124 = vld [vmem:[%s2 + $0x168] sm:$0xf]
  %v125 = vld [vmem:[%s2 + $0x16c] sm:$0xf]
  %v126 = vld [vmem:[%s2 + $0x170] sm:$0xf]
  %v127 = vld [vmem:[%s2 + $0x174] sm:$0xf]
  %v128 = vld [vmem:[%s2 + $0x178] sm:$0xf]
  %v129 = vld [vmem:[%s2 + $0x17c] sm:$0xf]
  %v130 = vld [vmem:[%s2 + $0x180] sm:$0xf]
  %v131 = vld [vmem:[%s2 + $0x184] sm:$0xf]
  %v132 = vld [vmem:[%s2 + $0x188] sm:$0xf]
  %v133 = vld [vmem:[%s2 + $0x18c] sm:$0xf]
  %v134 = vld [vmem:[%s2 + $0x190] sm:$0xf]
  %v135 = vld [vmem:[%s2 + $0x194] sm:$0xf]
  %v136 = vld [vmem:[%s2 + $0x198] sm:$0xf]
  %v137 = vld [vmem:[%s2 + $0x19c] sm:$0xf]
  %v138 = vld [vmem:[%s2 + $0x1a0] sm:$0xf]
  %v139 = vld [vmem:[%s2 + $0x1a4] sm:$0xf]
  %v140 = vld [vmem:[%s2 + $0x1a8] sm:$0xf]
  %v141 = vld [vmem:[%s2 + $0x1ac] sm:$0xf]
  %v142 = vld [vmem:[%s2 + $0x1b0] sm:$0xf]
  %v143 = vld [vmem:[%s2 + $0x1b4] sm:$0xf]
  %v144 = vld [vmem:[%s2 + $0x1b8] sm:$0xf]
  %v145 = vld [vmem:[%s2 + $0x1bc] sm:$0xf]
  %v146 = vld [vmem:[%s2 + $0x1c0] sm:$0xf]
  %v147 = vld [vmem:[%s2 + $0x1c4] sm:$0xf]
  %v148 = vld [vmem:[%s2 + $0x1c8] sm:$0xf]
  %v149 = vld [vmem:[%s2 + $0x1cc] sm:$0xf]
  %v150 = vld [vmem:[%s2 + $0x1d0] sm:$0xf]
  %v151 = vld [vmem:[%s2 + $0x1d4] sm:$0xf]
  %v152 = vld [vmem:[%s2 + $0x1d8] sm:$0xf]
  %v153 = vld [vmem:[%s2 + $0x1dc] sm:$0xf]
  %v154 = vld [vmem:[%s2 + $0x1e0] sm:$0xf]
  %v155 = vld [vmem:[%s2 + $0x1e4] sm:$0xf]
  %v156 = vld [vmem:[%s2 + $0x1e8] sm:$0xf]
  %v157 = vld [vmem:[%s2 + $0x1ec] sm:$0xf]
  %v158 = vld [vmem:[%s2 + $0x1f0] sm:$0xf]
  %v159 = vld [vmem:[%s2 + $0x1f4] sm:$0xf]
  %v160 = vld [vmem:[%s2 + $0x1f8] sm:$0xf]
  %v161 = vld [vmem:[%s2 + $0x1fc] sm:$0xf]
  %v162 = vld [vmem:[%s2 + $0x200] sm:$0xf]
  %v163 = vld [vmem:[%s2 + $0x204] sm:$0xf]
  %v164 = vld [vmem:[%s2 + $0x208] sm:$0xf]
  %v165 = vld [vmem:[%s2 + $0x20c] sm:$0xf]
  %v166 = vld [vmem:[%s2 + $0x210] sm:$0xf]
  %v167 = vld [vmem:[%s2 + $0x214] sm:$0xf]
  %v168 = vld [vmem:[%s2 + $0x218] sm:$0xf]
  %v169 = vld [vmem:[%s2 + $0x21c] sm:$0xf]
  %v170 = vld [vmem:[%s2 + $0x220] sm:$0xf]
  %v171 = vld [vmem:[%s2 + $0x224] sm:$0xf]
  %v172 = vld [vmem:[%s2 + $0x228] sm:$0xf]
  %v173 = vld [vmem:[%s2 + $0x22c] sm:$0xf]
  %v174 = vld [vmem:[%s2 + $0x230] sm:$0xf]
  %v175 = vld [vmem:[%s2 + $0x234] sm:$0xf]
  %v176 = vld [vmem:[%s2 + $0x238] sm:$0xf]
  %v177 = vld [vmem:[%s2 + $0x23c] sm:$0xf]
  %v178 = vld [vmem:[%s2 + $0x240] sm:$0xf]
  %v179 = vld [vmem:[%s2 + $0x244] sm:$0xf]
  %v180 = vld [vmem:[%s2 + $0x248] sm:$0xf]
  %v181 = vld [vmem:[%s2 + $0x24c] sm:$0xf]
  %v182 = vld [vmem:[%s2 + $0x250] sm:$0xf]
  %v183 = vld [vmem:[%s2 + $0x254] sm:$0xf]
  %v184 = vld [vmem:[%s2 + $0x258] sm:$0xf]
  %v185 = vld [vmem:[%s2 + $0x25c] sm:$0xf]
  %v186 = vld [vmem:[%s2 + $0x260] sm:$0xf]
  %v187 = vld [vmem:[%s2 + $0x264] sm:$0xf]
  %v188 = vld [vmem:[%s2 + $0x268] sm:$0xf]
  %v189 = vld [vmem:[%s2 + $0x26c] sm:$0xf]
  %v190 = vld [vmem:[%s2 + $0x270] sm:$0xf]
  %v191 = vld [vmem:[%s2 + $0x274] sm:$0xf]
  %v192 = vld [vmem:[%s2 + $0x278] sm:$0xf]
  %v193 = vld [vmem:[%s2 + $0x27c] sm:$0xf]
  %v194 = vld [vmem:[%s2 + $0x280] sm:$0xf]
  %v195 = vld [vmem:[%s2 + $0x284] sm:$0xf]
  %v196 = vld [vmem:[%s2 + $0x288] sm:$0xf]
  %v197 = vld [vmem:[%s2 + $0x28c] sm:$0xf]
  %v198 = vld [vmem:[%s2 + $0x290] sm:$0xf]
  %v199 = vld [vmem:[%s2 + $0x294] sm:$0xf]
  %v200 = vld [vmem:[%s2 + $0x298] sm:$0xf]
  %v201 = vld [vmem:[%s2 + $0x29c] sm:$0xf]
  %v202 = vld [vmem:[%s2 + $0x2a0] sm:$0xf]
  %v203 = vld [vmem:[%s2 + $0x2a4] sm:$0xf]
  %v204 = vld [vmem:[%s2 + $0x2a8] sm:$0xf]
  %v205 = vld [vmem:[%s2 + $0x2ac] sm:$0xf]
  %v206 = vld [vmem:[%s2 + $0x2b0] sm:$0xf]
  %v207 = vld [vmem:[%s2 + $0x2b4] sm:$0xf]
  %v208 = vld [vmem:[%s2 + $0x2b8] sm:$0xf]
  %v209 = vld [vmem:[%s2 + $0x2bc] sm:$0xf]
  %v210 = vld [vmem:[%s2 + $0x2c0] sm:$0xf]
  %v211 = vld [vmem:[%s2 + $0x2c4] sm:$0xf]
  %v212 = vld [vmem:[%s2 + $0x2c8] sm:$0xf]
  %v213 = vld [vmem:[%s2 + $0x2cc] sm:$0xf]
  %v214 = vld [vmem:[%s2 + $0x2d0] sm:$0xf]
  %v215 = vld [vmem:[%s2 + $0x2d4] sm:$0xf]
  %v216 = vld [vmem:[%s2 + $0x2d8] sm:$0xf]
  %v217 = vld [vmem:[%s2 + $0x2dc] sm:$0xf]
  %v218 = vld [vmem:[%s2 + $0x2e0] sm:$0xf]
  %v219 = vld [vmem:[%s2 + $0x2e4] sm:$0xf]
  %v220 = vld [vmem:[%s2 + $0x2e8] sm:$0xf]
  %v221 = vld [vmem:[%s2 + $0x2ec] sm:$0xf]
  %v222 = vld [vmem:[%s2 + $0x2f0] sm:$0xf]
  %v223 = vld [vmem:[%s2 + $0x2f4] sm:$0xf]
  %v224 = vld [vmem:[%s2 + $0x2f8] sm:$0xf]
  %v225 = vld [vmem:[%s2 + $0x2fc] sm:$0xf]
  %v226 = vld [vmem:[%s2 + $0x300] sm:$0xf]
  %v227 = vld [vmem:[%s2 + $0x304] sm:$0xf]
  %v228 = vld [vmem:[%s2 + $0x308] sm:$0xf]
  %v229 = vld [vmem:[%s2 + $0x30c] sm:$0xf]
  %v230 = vld [vmem:[%s2 + $0x310] sm:$0xf]
  %v231 = vld [vmem:[%s2 + $0x314] sm:$0xf]
  %v232 = vld [vmem:[%s2 + $0x318] sm:$0xf]
  %v233 = vld [vmem:[%s2 + $0x31c] sm:$0xf]
  %v234 = vld [vmem:[%s2 + $0x320] sm:$0xf]
  %v235 = vld [vmem:[%s2 + $0x324] sm:$0xf]
  %v236 = vld [vmem:[%s2 + $0x328] sm:$0xf]
  %v237 = vld [vmem:[%s2 + $0x32c] sm:$0xf]
  %v238 = vld [vmem:[%s2 + $0x330] sm:$0xf]
  %v239 = vld [vmem:[%s2 + $0x334] sm:$0xf]
  %v240 = vld [vmem:[%s2 + $0x338] sm:$0xf]
  %v241 = vld [vmem:[%s2 + $0x33c] sm:$0xf]
  %v242 = vld [vmem:[%s2 + $0x340] sm:$0xf]
  %v243 = vld [vmem:[%s2 + $0x344] sm:$0xf]
  %v244 = vld [vmem:[%s2 + $0x348] sm:$0xf]
  %v245 = vld [vmem:[%s2 + $0x34c] sm:$0xf]
  %v246 = vld [vmem:[%s2 + $0x350] sm:$0xf]
  %v247 = vld [vmem:[%s2 + $0x354] sm:$0xf]
  %v248 = vld [vmem:[%s2 + $0x358] sm:$0xf]
  %v249 = vld [vmem:[%s2 + $0x35c] sm:$0xf]
  %v250 = vld [vmem:[%s2 + $0x360] sm:$0xf]
  %v251 = vld [vmem:[%s2 + $0x364] sm:$0xf]
  %v252 = vld [vmem:[%s2 + $0x368] sm:$0xf]
  %v253 = vld [vmem:[%s2 + $0x36c] sm:$0xf]
  %v254 = vld [vmem:[%s2 + $0x370] sm:$0xf]
  %v255 = vld [vmem:[%s2 + $0x374] sm:$0xf]
  %v256 = vld [vmem:[%s2 + $0x378] sm:$0xf]
  %v257 = vld [vmem:[%s2 + $0x37c] sm:$0xf]
  %v258 = vld [vmem:[%s2 + $0x380] sm:$0xf]
  %v259 = vld [vmem:[%s2 + $0x384] sm:$0xf]
  %v260 = vld [vmem:[%s2 + $0x388] sm:$0xf]
  %v261 = vld [vmem:[%s2 + $0x38c] sm:$0xf]
  %v262 = vld [vmem:[%s2 + $0x390] sm:$0xf]
  %v263 = vld [vmem:[%s2 + $0x394] sm:$0xf]
  %v264 = vld [vmem:[%s2 + $0x398] sm:$0xf]
  %v265 = vld [vmem:[%s2 + $0x39c] sm:$0xf]
  %v266 = vld [vmem:[%s2 + $0x3a0] sm:$0xf]
  %v267 = vld [vmem:[%s2 + $0x3a4] sm:$0xf]
  %v268 = vld [vmem:[%s2 + $0x3a8] sm:$0xf]
  %v269 = vld [vmem:[%s2 + $0x3ac] sm:$0xf]
  %v270 = vld [vmem:[%s2 + $0x3b0] sm:$0xf]
  %v271 = vld [vmem:[%s2 + $0x3b4] sm:$0xf]
  %v272 = vld [vmem:[%s2 + $0x3b8] sm:$0xf]
  %v273 = vld [vmem:[%s2 + $0x3bc] sm:$0xf]
  %v274 = vld [vmem:[%s2 + $0x3c0] sm:$0xf]
  %v275 = vld [vmem:[%s2 + $0x3c4] sm:$0xf]
  %v276 = vld [vmem:[%s2 + $0x3c8] sm:$0xf]
  %v277 = vld [vmem:[%s2 + $0x3cc] sm:$0xf]
  %v278 = vld [vmem:[%s2 + $0x3d0] sm:$0xf]
  %v279 = vld [vmem:[%s2 + $0x3d4] sm:$0xf]
  %v280 = vld [vmem:[%s2 + $0x3d8] sm:$0xf]
  %v281 = vld [vmem:[%s2 + $0x3dc] sm:$0xf]
  %v282 = vld [vmem:[%s2 + $0x3e0] sm:$0xf]
  %v283 = vld [vmem:[%s2 + $0x3e4] sm:$0xf]
  %v284 = vld [vmem:[%s2 + $0x3e8] sm:$0xf]
  %v285 = vld [vmem:[%s2 + $0x3ec] sm:$0xf]
  %v286 = vld [vmem:[%s2 + $0x3f0] sm:$0xf]
  %v287 = vld [vmem:[%s2 + $0x3f4] sm:$0xf]
  %v288 = vld [vmem:[%s2 + $0x3f8] sm:$0xf]
  %v289 = vld [vmem:[%s2 + $0x3fc] sm:$0xf]
  %v290 = vld [vmem:[%s2 + $0x400] sm:$0xf]
  %v291 = vld [vmem:[%s2 + $0x404] sm:$0xf]
  %v292 = vld [vmem:[%s2 + $0x408] sm:$0xf]
  %v293 = vld [vmem:[%s2 + $0x40c] sm:$0xf]
  %v294 = vld [vmem:[%s2 + $0x410] sm:$0xf]
  %v295 = vld [vmem:[%s2 + $0x414] sm:$0xf]
  %v296 = vld [vmem:[%s2 + $0x418] sm:$0xf]
  %v297 = vld [vmem:[%s2 + $0x41c] sm:$0xf]
  %v298 = vld [vmem:[%s2 + $0x420] sm:$0xf]
  %v299 = vld [vmem:[%s2 + $0x424] sm:$0xf]
  %v300 = vld [vmem:[%s2 + $0x428] sm:$0xf]
  %v301 = vld [vmem:[%s2 + $0x42c] sm:$0xf]
  %v302 = vld [vmem:[%s2 + $0x430] sm:$0xf]
  %v303 = vld [vmem:[%s2 + $0x434] sm:$0xf]
  %v304 = vld [vmem:[%s2 + $0x438] sm:$0xf]
  %v305 = vld [vmem:[%s2 + $0x43c] sm:$0xf]
  %v306 = vld [vmem:[%s2 + $0x440] sm:$0xf]
  %v307 = vld [vmem:[%s2 + $0x444] sm:$0xf]
  %v308 = vld [vmem:[%s2 + $0x448] sm:$0xf]
  %v309 = vld [vmem:[%s2 + $0x44c] sm:$0xf]
  %v310 = vld [vmem:[%s2 + $0x450] sm:$0xf]
  %v311 = vld [vmem:[%s2 + $0x454] sm:$0xf]
  %v312 = vld [vmem:[%s2 + $0x458] sm:$0xf]
  %v313 = vld [vmem:[%s2 + $0x45c] sm:$0xf]
  %v314 = vld [vmem:[%s2 + $0x460] sm:$0xf]
  %v315 = vld [vmem:[%s2 + $0x464] sm:$0xf]
  %v316 = vld [vmem:[%s2 + $0x468] sm:$0xf]
  %v317 = vld [vmem:[%s2 + $0x46c] sm:$0xf]
  %v318 = vld [vmem:[%s2 + $0x470] sm:$0xf]
  %v319 = vld [vmem:[%s2 + $0x474] sm:$0xf]
  %v320 = vld [vmem:[%s2 + $0x478] sm:$0xf]
  %v321 = vld [vmem:[%s2 + $0x47c] sm:$0xf]
  %v322 = vld [vmem:[%s2 + $0x480] sm:$0xf]
  %v323 = vld [vmem:[%s2 + $0x484] sm:$0xf]
  %v324 = vld [vmem:[%s2 + $0x488] sm:$0xf]
  %v325 = vld [vmem:[%s2 + $0x48c] sm:$0xf]
  %v326 = vld [vmem:[%s2 + $0x490] sm:$0xf]
  %v327 = vld [vmem:[%s2 + $0x494] sm:$0xf]
  %v328 = vld [vmem:[%s2 + $0x498] sm:$0xf]
  %v329 = vld [vmem:[%s2 + $0x49c] sm:$0xf]
  %v330 = vld [vmem:[%s2 + $0x4a0] sm:$0xf]
  %v331 = vld [vmem:[%s2 + $0x4a4] sm:$0xf]
  %v332 = vld [vmem:[%s2 + $0x4a8] sm:$0xf]
  %v333 = vld [vmem:[%s2 + $0x4ac] sm:$0xf]
  %v334 = vld [vmem:[%s2 + $0x4b0] sm:$0xf]
  %v335 = vld [vmem:[%s2 + $0x4b4] sm:$0xf]
  %v336 = vld [vmem:[%s2 + $0x4b8] sm:$0xf]
  %v337 = vld [vmem:[%s2 + $0x4bc] sm:$0xf]
  %v338 = vld [vmem:[%s2 + $0x4c0] sm:$0xf]
  %v339 = vld [vmem:[%s2 + $0x4c4] sm:$0xf]
  %v340 = vld [vmem:[%s2 + $0x4c8] sm:$0xf]
  %v341 = vld [vmem:[%s2 + $0x4cc] sm:$0xf]
  %v342 = vld [vmem:[%s2 + $0x4d0] sm:$0xf]
  %v343 = vld [vmem:[%s2 + $0x4d4] sm:$0xf]
  %v344 = vld [vmem:[%s2 + $0x4d8] sm:$0xf]
  %v345 = vld [vmem:[%s2 + $0x4dc] sm:$0xf]
  %v346 = vld [vmem:[%s2 + $0x4e0] sm:$0xf]
  %v347 = vld [vmem:[%s2 + $0x4e4] sm:$0xf]
  %v348 = vld [vmem:[%s2 + $0x4e8] sm:$0xf]
  %v349 = vld [vmem:[%s2 + $0x4ec] sm:$0xf]
  %v350 = vld [vmem:[%s2 + $0x4f0] sm:$0xf]
  %v351 = vld [vmem:[%s2 + $0x4f4] sm:$0xf]
  %v352 = vld [vmem:[%s2 + $0x4f8] sm:$0xf]
  %v353 = vld [vmem:[%s2 + $0x4fc] sm:$0xf]
  %v354 = vld [vmem:[%s2 + $0x500] sm:$0xf]
  %v355 = vld [vmem:[%s2 + $0x504] sm:$0xf]
  %v356 = vld [vmem:[%s2 + $0x508] sm:$0xf]
  %v357 = vld [vmem:[%s2 + $0x50c] sm:$0xf]
  %v358 = vld [vmem:[%s2 + $0x510] sm:$0xf]
  %v359 = vld [vmem:[%s2 + $0x514] sm:$0xf]
  %v360 = vld [vmem:[%s2 + $0x518] sm:$0xf]
  %v361 = vld [vmem:[%s2 + $0x51c] sm:$0xf]
  %v362 = vld [vmem:[%s2 + $0x520] sm:$0xf]
  %v363 = vld [vmem:[%s2 + $0x524] sm:$0xf]
  %v364 = vld [vmem:[%s2 + $0x528] sm:$0xf]
  %v365 = vld [vmem:[%s2 + $0x52c] sm:$0xf]
  %v366 = vld [vmem:[%s2 + $0x530] sm:$0xf]
  %v367 = vld [vmem:[%s2 + $0x534] sm:$0xf]
  %v368 = vld [vmem:[%s2 + $0x538] sm:$0xf]
  %v369 = vld [vmem:[%s2 + $0x53c] sm:$0xf]
  %v370 = vld [vmem:[%s2 + $0x540] sm:$0xf]
  %v371 = vld [vmem:[%s2 + $0x544] sm:$0xf]
  %v372 = vld [vmem:[%s2 + $0x548] sm:$0xf]
  %v373 = vld [vmem:[%s2 + $0x54c] sm:$0xf]
  %v374 = vld [vmem:[%s2 + $0x550] sm:$0xf]
  %v375 = vld [vmem:[%s2 + $0x554] sm:$0xf]
  %v376 = vld [vmem:[%s2 + $0x558] sm:$0xf]
  %v377 = vld [vmem:[%s2 + $0x55c] sm:$0xf]
  %v378 = vld [vmem:[%s2 + $0x560] sm:$0xf]
  %v379 = vld [vmem:[%s2 + $0x564] sm:$0xf]
  %v380 = vld [vmem:[%s2 + $0x568] sm:$0xf]
  %v381 = vld [vmem:[%s2 + $0x56c] sm:$0xf]
  %v382 = vld [vmem:[%s2 + $0x570] sm:$0xf]
  %v383 = vld [vmem:[%s2 + $0x574] sm:$0xf]
  %v384 = vld [vmem:[%s2 + $0x578] sm:$0xf]
  %v385 = vld [vmem:[%s2 + $0x57c] sm:$0xf]
  %v386 = vld [vmem:[%s2 + $0x580] sm:$0xf]
  %v387 = vld [vmem:[%s2 + $0x584] sm:$0xf]
  %v388 = vld [vmem:[%s2 + $0x588] sm:$0xf]
  %v389 = vld [vmem:[%s2 + $0x58c] sm:$0xf]
  %v390 = vld [vmem:[%s2 + $0x590] sm:$0xf]
  %v391 = vld [vmem:[%s2 + $0x594] sm:$0xf]
  %v392 = vld [vmem:[%s2 + $0x598] sm:$0xf]
  %v393 = vld [vmem:[%s2 + $0x59c] sm:$0xf]
  %v394 = vld [vmem:[%s2 + $0x5a0] sm:$0xf]
  %v395 = vld [vmem:[%s2 + $0x5a4] sm:$0xf]
  %v396 = vld [vmem:[%s2 + $0x5a8] sm:$0xf]
  %v397 = vld [vmem:[%s2 + $0x5ac] sm:$0xf]
  %v398 = vld [vmem:[%s2 + $0x5b0] sm:$0xf]
  %v399 = vld [vmem:[%s2 + $0x5b4] sm:$0xf]
  %v400 = vld [vmem:[%s2 + $0x5b8] sm:$0xf]
  %v401 = vld [vmem:[%s2 + $0x5bc] sm:$0xf]
  %v402 = vld [vmem:[%s2 + $0x5c0] sm:$0xf]
  %v403 = vld [vmem:[%s2 + $0x5c4] sm:$0xf]
  %v404 = vld [vmem:[%s2 + $0x5c8] sm:$0xf]
  %v405 = vld [vmem:[%s2 + $0x5cc] sm:$0xf]
  %v406 = vld [vmem:[%s2 + $0x5d0] sm:$0xf]
  %v407 = vld [vmem:[%s2 + $0x5d4] sm:$0xf]
  %v408 = vld [vmem:[%s2 + $0x5d8] sm:$0xf]
  %v409 = vld [vmem:[%s2 + $0x5dc] sm:$0xf]
  %v410 = vld [vmem:[%s2 + $0x5e0] sm:$0xf]
  %v411 = vld [vmem:[%s2 + $0x5e4] sm:$0xf]
  %v412 = vld [vmem:[%s2 + $0x5e8] sm:$0xf]
  %v413 = vld [vmem:[%s2 + $0x5ec] sm:$0xf]
  %v414 = vld [vmem:[%s2 + $0x5f0] sm:$0xf]
  %v415 = vld [vmem:[%s2 + $0x5f4] sm:$0xf]
  %v416 = vld [vmem:[%s2 + $0x5f8] sm:$0xf]
  %v417 = vld [vmem:[%s2 + $0x5fc] sm:$0xf]
  %v418 = vld [vmem:[%s2 + $0x600] sm:$0xf]
  %v419 = vld [vmem:[%s2 + $0x604] sm:$0xf]
  %v420 = vld [vmem:[%s2 + $0x608] sm:$0xf]
  %v421 = vld [vmem:[%s2 + $0x60c] sm:$0xf]
  %v422 = vld [vmem:[%s2 + $0x610] sm:$0xf]
  %v423 = vld [vmem:[%s2 + $0x614] sm:$0xf]
  %v424 = vld [vmem:[%s2 + $0x618] sm:$0xf]
  %v425 = vld [vmem:[%s2 + $0x61c] sm:$0xf]
  %v426 = vld [vmem:[%s2 + $0x620] sm:$0xf]
  %v427 = vld [vmem:[%s2 + $0x624] sm:$0xf]
  %v428 = vld [vmem:[%s2 + $0x628] sm:$0xf]
  %v429 = vld [vmem:[%s2 + $0x62c] sm:$0xf]
  %v430 = vld [vmem:[%s2 + $0x630] sm:$0xf]
  %v431 = vld [vmem:[%s2 + $0x634] sm:$0xf]
  %v432 = vld [vmem:[%s2 + $0x638] sm:$0xf]
  %v433 = vld [vmem:[%s2 + $0x63c] sm:$0xf]
  %v434 = vld [vmem:[%s1] sm:$0xff]
  %v435 = vld [vmem:[%s1 + $0x8] sm:$0xff]
  %v436 = vld [vmem:[%s1 + $0x10] sm:$0xff]
  %v437 = vld [vmem:[%s1 + $0x18] sm:$0xff]
  %v438 = vld [vmem:[%s1 + $0x20] sm:$0xff]
  %v439 = vld [vmem:[%s1 + $0x28] sm:$0xff]
  %v440 = vld [vmem:[%s1 + $0x30] sm:$0xff]
  %v441 = vld [vmem:[%s1 + $0x38] sm:$0xff]
  %v442 = vld [vmem:[%s1 + $0x40] sm:$0xff]
  %v443 = vld [vmem:[%s1 + $0x48] sm:$0xff]
  %v444 = vld [vmem:[%s3] sm:$0xf]
  %v445 = vld [vmem:[%s3 + $0x4] sm:$0xf]
  %v446 = vld [vmem:[%s3 + $0x8] sm:$0xf]
  %v447 = vld [vmem:[%s3 + $0xc] sm:$0xf]
  %v448 = vld [vmem:[%s3 + $0x10] sm:$0xf]
  %v449 = vld [vmem:[%s3 + $0x14] sm:$0xf]
  %v450 = vld [vmem:[%s3 + $0x18] sm:$0xf]
  %v451 = vld [vmem:[%s3 + $0x1c] sm:$0xf]
  %v452 = vld [vmem:[%s3 + $0x20] sm:$0xf]
  %v453 = vld [vmem:[%s3 + $0x24] sm:$0xf]
  %v454 = vld [vmem:[%s3 + $0x28] sm:$0xf]
  %v455 = vld [vmem:[%s3 + $0x2c] sm:$0xf]
  %v456 = vld [vmem:[%s3 + $0x30] sm:$0xf]
  %v457 = vld [vmem:[%s3 + $0x34] sm:$0xf]
  %v458 = vld [vmem:[%s3 + $0x38] sm:$0xf]
  %v459 = vld [vmem:[%s3 + $0x3c] sm:$0xf]
  %v460 = vld [vmem:[%s3 + $0x40] sm:$0xf]
  %v461 = vld [vmem:[%s3 + $0x44] sm:$0xf]
  %v462 = vld [vmem:[%s3 + $0x48] sm:$0xf]
  %v463 = vld [vmem:[%s3 + $0x4c] sm:$0xf]
  %v464 = vld [vmem:[%s3 + $0x50] sm:$0xf]
  %v465 = vld [vmem:[%s3 + $0x54] sm:$0xf]
  %v466 = vld [vmem:[%s3 + $0x58] sm:$0xf]
  %v467 = vld [vmem:[%s3 + $0x5c] sm:$0xf]
  %v468 = vld [vmem:[%s3 + $0x60] sm:$0xf]
  %v469 = vld [vmem:[%s3 + $0x64] sm:$0xf]
  %v470 = vld [vmem:[%s3 + $0x68] sm:$0xf]
  %v471 = vld [vmem:[%s3 + $0x6c] sm:$0xf]
  %v472 = vld [vmem:[%s3 + $0x70] sm:$0xf]
  %v473 = vld [vmem:[%s3 + $0x74] sm:$0xf]
  %v474 = vld [vmem:[%s3 + $0x78] sm:$0xf]
  %v475 = vld [vmem:[%s3 + $0x7c] sm:$0xf]
  %v476 = vld [vmem:[%s3 + $0x80] sm:$0xf]
  %v477 = vld [vmem:[%s3 + $0x84] sm:$0xf]
  %v478 = vld [vmem:[%s3 + $0x88] sm:$0xf]
  %v479 = vld [vmem:[%s3 + $0x8c] sm:$0xf]
  %v480 = vld [vmem:[%s3 + $0x90] sm:$0xf]
  %v481 = vld [vmem:[%s3 + $0x94] sm:$0xf]
  %v482 = vld [vmem:[%s3 + $0x98] sm:$0xf]
  %v483 = vld [vmem:[%s3 + $0x9c] sm:$0xf]
  %v484 = vld [vmem:[%s3 + $0xa0] sm:$0xf]
  %v485 = vld [vmem:[%s3 + $0xa4] sm:$0xf]
  %v486 = vld [vmem:[%s3 + $0xa8] sm:$0xf]
  %v487 = vld [vmem:[%s3 + $0xac] sm:$0xf]
  %v488 = vld [vmem:[%s3 + $0xb0] sm:$0xf]
  %v489 = vld [vmem:[%s3 + $0xb4] sm:$0xf]
  %v490 = vld [vmem:[%s3 + $0xb8] sm:$0xf]
  %v491 = vld [vmem:[%s3 + $0xbc] sm:$0xf]
  %v492 = vld [vmem:[%s3 + $0xc0] sm:$0xf]
  %v493 = vld [vmem:[%s3 + $0xc4] sm:$0xf]
  %v494 = vld [vmem:[%s3 + $0xc8] sm:$0xf]
  %v495 = vld [vmem:[%s3 + $0xcc] sm:$0xf]
  %v496 = vld [vmem:[%s3 + $0xd0] sm:$0xf]
  %v497 = vld [vmem:[%s3 + $0xd4] sm:$0xf]
  %v498 = vld [vmem:[%s3 + $0xd8] sm:$0xf]
  %v499 = vld [vmem:[%s3 + $0xdc] sm:$0xf]
  %v500 = vld [vmem:[%s3 + $0xe0] sm:$0xf]
  %v501 = vld [vmem:[%s3 + $0xe4] sm:$0xf]
  %v502 = vld [vmem:[%s3 + $0xe8] sm:$0xf]
  %v503 = vld [vmem:[%s3 + $0xec] sm:$0xf]
  %v504 = vld [vmem:[%s3 + $0xf0] sm:$0xf]
  %v505 = vld [vmem:[%s3 + $0xf4] sm:$0xf]
  %v506 = vld [vmem:[%s3 + $0xf8] sm:$0xf]
  %v507 = vld [vmem:[%s3 + $0xfc] sm:$0xf]
  %v508 = vld [vmem:[%s3 + $0x100] sm:$0xf]
  %v509 = vld [vmem:[%s3 + $0x104] sm:$0xf]
  %v510 = vld [vmem:[%s3 + $0x108] sm:$0xf]
  %v511 = vld [vmem:[%s3 + $0x10c] sm:$0xf]
  %v512 = vld [vmem:[%s3 + $0x110] sm:$0xf]
  %v513 = vld [vmem:[%s3 + $0x114] sm:$0xf]
  %v514 = vld [vmem:[%s3 + $0x118] sm:$0xf]
  %v515 = vld [vmem:[%s3 + $0x11c] sm:$0xf]
  %v516 = vld [vmem:[%s3 + $0x120] sm:$0xf]
  %v517 = vld [vmem:[%s3 + $0x124] sm:$0xf]
  %v518 = vld [vmem:[%s3 + $0x128] sm:$0xf]
  %v519 = vld [vmem:[%s3 + $0x12c] sm:$0xf]
  %v520 = vld [vmem:[%s3 + $0x130] sm:$0xf]
  %v521 = vld [vmem:[%s3 + $0x134] sm:$0xf]
  %v522 = vld [vmem:[%s3 + $0x138] sm:$0xf]
  %v523 = vld [vmem:[%s3 + $0x13c] sm:$0xf]
  %v524 = vld [vmem:[%s3 + $0x140] sm:$0xf]
  %v525 = vld [vmem:[%s3 + $0x144] sm:$0xf]
  %v526 = vld [vmem:[%s3 + $0x148] sm:$0xf]
  %v527 = vld [vmem:[%s3 + $0x14c] sm:$0xf]
  %v528 = vld [vmem:[%s3 + $0x150] sm:$0xf]
  %v529 = vld [vmem:[%s3 + $0x154] sm:$0xf]
  %v530 = vld [vmem:[%s3 + $0x158] sm:$0xf]
  %v531 = vld [vmem:[%s3 + $0x15c] sm:$0xf]
  %v532 = vld [vmem:[%s3 + $0x160] sm:$0xf]
  %v533 = vld [vmem:[%s3 + $0x164] sm:$0xf]
  %v534 = vld [vmem:[%s3 + $0x168] sm:$0xf]
  %v535 = vld [vmem:[%s3 + $0x16c] sm:$0xf]
  %v536 = vld [vmem:[%s3 + $0x170] sm:$0xf]
  %v537 = vld [vmem:[%s3 + $0x174] sm:$0xf]
  %v538 = vld [vmem:[%s3 + $0x178] sm:$0xf]
  %v539 = vld [vmem:[%s3 + $0x17c] sm:$0xf]
  %v540 = vld [vmem:[%s3 + $0x180] sm:$0xf]
  %v541 = vld [vmem:[%s3 + $0x184] sm:$0xf]
  %v542 = vld [vmem:[%s3 + $0x188] sm:$0xf]
  %v543 = vld [vmem:[%s3 + $0x18c] sm:$0xf]
  %v544 = vld [vmem:[%s3 + $0x190] sm:$0xf]
  %v545 = vld [vmem:[%s3 + $0x194] sm:$0xf]
  %v546 = vld [vmem:[%s3 + $0x198] sm:$0xf]
  %v547 = vld [vmem:[%s3 + $0x19c] sm:$0xf]
  %v548 = vld [vmem:[%s3 + $0x1a0] sm:$0xf]
  %v549 = vld [vmem:[%s3 + $0x1a4] sm:$0xf]
  %v550 = vld [vmem:[%s3 + $0x1a8] sm:$0xf]
  %v551 = vld [vmem:[%s3 + $0x1ac] sm:$0xf]
  %v552 = vld [vmem:[%s3 + $0x1b0] sm:$0xf]
  %v553 = vld [vmem:[%s3 + $0x1b4] sm:$0xf]
  %v554 = vld [vmem:[%s3 + $0x1b8] sm:$0xf]
  %v555 = vld [vmem:[%s3 + $0x1bc] sm:$0xf]
  %v556 = vld [vmem:[%s3 + $0x1c0] sm:$0xf]
  %v557 = vld [vmem:[%s3 + $0x1c4] sm:$0xf]
  %v558 = vld [vmem:[%s3 + $0x1c8] sm:$0xf]
  %v559 = vld [vmem:[%s3 + $0x1cc] sm:$0xf]
  %v560 = vld [vmem:[%s3 + $0x1d0] sm:$0xf]
  %v561 = vld [vmem:[%s3 + $0x1d4] sm:$0xf]
  %v562 = vld [vmem:[%s3 + $0x1d8] sm:$0xf]
  %v563 = vld [vmem:[%s3 + $0x1dc] sm:$0xf]
  %v564 = vld [vmem:[%s3 + $0x1e0] sm:$0xf]
  %v565 = vld [vmem:[%s3 + $0x1e4] sm:$0xf]
  %v566 = vld [vmem:[%s3 + $0x1e8] sm:$0xf]
  %v567 = vld [vmem:[%s3 + $0x1ec] sm:$0xf]
  %v568 = vld [vmem:[%s3 + $0x1f0] sm:$0xf]
  %v569 = vld [vmem:[%s3 + $0x1f4] sm:$0xf]
  %v570 = vld [vmem:[%s3 + $0x1f8] sm:$0xf]
  %v571 = vld [vmem:[%s3 + $0x1fc] sm:$0xf]
  %v572 = vld [vmem:[%s3 + $0x200] sm:$0xf]
  %v573 = vld [vmem:[%s3 + $0x204] sm:$0xf]
  %v574 = vld [vmem:[%s3 + $0x208] sm:$0xf]
  %v575 = vld [vmem:[%s3 + $0x20c] sm:$0xf]
  %v576 = vld [vmem:[%s3 + $0x210] sm:$0xf]
  %v577 = vld [vmem:[%s3 + $0x214] sm:$0xf]
  %v578 = vld [vmem:[%s3 + $0x218] sm:$0xf]
  %v579 = vld [vmem:[%s3 + $0x21c] sm:$0xf]
  %v580 = vld [vmem:[%s3 + $0x220] sm:$0xf]
  %v581 = vld [vmem:[%s3 + $0x224] sm:$0xf]
  %v582 = vld [vmem:[%s3 + $0x228] sm:$0xf]
  %v583 = vld [vmem:[%s3 + $0x22c] sm:$0xf]
  %v584 = vld [vmem:[%s3 + $0x230] sm:$0xf]
  %v585 = vld [vmem:[%s3 + $0x234] sm:$0xf]
  %v586 = vld [vmem:[%s3 + $0x238] sm:$0xf]
  %v587 = vld [vmem:[%s3 + $0x23c] sm:$0xf]
  %v588 = vld [vmem:[%s3 + $0x240] sm:$0xf]
  %v589 = vld [vmem:[%s3 + $0x244] sm:$0xf]
  %v590 = vld [vmem:[%s3 + $0x248] sm:$0xf]
  %v591 = vld [vmem:[%s3 + $0x24c] sm:$0xf]
  %v592 = vld [vmem:[%s3 + $0x250] sm:$0xf]
  %v593 = vld [vmem:[%s3 + $0x254] sm:$0xf]
  %v594 = vld [vmem:[%s3 + $0x258] sm:$0xf]
  %v595 = vld [vmem:[%s3 + $0x25c] sm:$0xf]
  %v596 = vld [vmem:[%s3 + $0x260] sm:$0xf]
  %v597 = vld [vmem:[%s3 + $0x264] sm:$0xf]
  %v598 = vld [vmem:[%s3 + $0x268] sm:$0xf]
  %v599 = vld [vmem:[%s3 + $0x26c] sm:$0xf]
  %v600 = vld [vmem:[%s3 + $0x270] sm:$0xf]
  %v601 = vld [vmem:[%s3 + $0x274] sm:$0xf]
  %v602 = vld [vmem:[%s3 + $0x278] sm:$0xf]
  %v603 = vld [vmem:[%s3 + $0x27c] sm:$0xf]
  %v604 = vld [vmem:[%s3 + $0x280] sm:$0xf]
  %v605 = vld [vmem:[%s3 + $0x284] sm:$0xf]
  %v606 = vld [vmem:[%s3 + $0x288] sm:$0xf]
  %v607 = vld [vmem:[%s3 + $0x28c] sm:$0xf]
  %v608 = vld [vmem:[%s3 + $0x290] sm:$0xf]
  %v609 = vld [vmem:[%s3 + $0x294] sm:$0xf]
  %v610 = vld [vmem:[%s3 + $0x298] sm:$0xf]
  %v611 = vld [vmem:[%s3 + $0x29c] sm:$0xf]
  %v612 = vld [vmem:[%s3 + $0x2a0] sm:$0xf]
  %v613 = vld [vmem:[%s3 + $0x2a4] sm:$0xf]
  %v614 = vld [vmem:[%s3 + $0x2a8] sm:$0xf]
  %v615 = vld [vmem:[%s3 + $0x2ac] sm:$0xf]
  %v616 = vld [vmem:[%s3 + $0x2b0] sm:$0xf]
  %v617 = vld [vmem:[%s3 + $0x2b4] sm:$0xf]
  %v618 = vld [vmem:[%s3 + $0x2b8] sm:$0xf]
  %v619 = vld [vmem:[%s3 + $0x2bc] sm:$0xf]
  %v620 = vld [vmem:[%s3 + $0x2c0] sm:$0xf]
  %v621 = vld [vmem:[%s3 + $0x2c4] sm:$0xf]
  %v622 = vld [vmem:[%s3 + $0x2c8] sm:$0xf]
  %v623 = vld [vmem:[%s3 + $0x2cc] sm:$0xf]
  %v624 = vld [vmem:[%s3 + $0x2d0] sm:$0xf]
  %v625 = vld [vmem:[%s3 + $0x2d4] sm:$0xf]
  %v626 = vld [vmem:[%s3 + $0x2d8] sm:$0xf]
  %v627 = vld [vmem:[%s3 + $0x2dc] sm:$0xf]
  %v628 = vld [vmem:[%s3 + $0x2e0] sm:$0xf]
  %v629 = vld [vmem:[%s3 + $0x2e4] sm:$0xf]
  %v630 = vld [vmem:[%s3 + $0x2e8] sm:$0xf]
  %v631 = vld [vmem:[%s3 + $0x2ec] sm:$0xf]
  %v632 = vld [vmem:[%s3 + $0x2f0] sm:$0xf]
  %v633 = vld [vmem:[%s3 + $0x2f4] sm:$0xf]
  %v634 = vld [vmem:[%s3 + $0x2f8] sm:$0xf]
  %v635 = vld [vmem:[%s3 + $0x2fc] sm:$0xf]
  %v636 = vld [vmem:[%s3 + $0x300] sm:$0xf]
  %v637 = vld [vmem:[%s3 + $0x304] sm:$0xf]
  %v638 = vld [vmem:[%s3 + $0x308] sm:$0xf]
  %v639 = vld [vmem:[%s3 + $0x30c] sm:$0xf]
  %v640 = vld [vmem:[%s3 + $0x310] sm:$0xf]
  %v641 = vld [vmem:[%s3 + $0x314] sm:$0xf]
  %v642 = vld [vmem:[%s3 + $0x318] sm:$0xf]
  %v643 = vld [vmem:[%s3 + $0x31c] sm:$0xf]
  %v644 = vld [vmem:[%s3 + $0x320] sm:$0xf]
  %v645 = vld [vmem:[%s3 + $0x324] sm:$0xf]
  %v646 = vld [vmem:[%s3 + $0x328] sm:$0xf]
  %v647 = vld [vmem:[%s3 + $0x32c] sm:$0xf]
  %v648 = vld [vmem:[%s3 + $0x330] sm:$0xf]
  %v649 = vld [vmem:[%s3 + $0x334] sm:$0xf]
  %v650 = vld [vmem:[%s3 + $0x338] sm:$0xf]
  %v651 = vld [vmem:[%s3 + $0x33c] sm:$0xf]
  %v652 = vld [vmem:[%s3 + $0x340] sm:$0xf]
  %v653 = vld [vmem:[%s3 + $0x344] sm:$0xf]
  %v654 = vld [vmem:[%s3 + $0x348] sm:$0xf]
  %v655 = vld [vmem:[%s3 + $0x34c] sm:$0xf]
  %v656 = vld [vmem:[%s3 + $0x350] sm:$0xf]
  %v657 = vld [vmem:[%s3 + $0x354] sm:$0xf]
  %v658 = vld [vmem:[%s3 + $0x358] sm:$0xf]
  %v659 = vld [vmem:[%s3 + $0x35c] sm:$0xf]
  %v660 = vld [vmem:[%s3 + $0x360] sm:$0xf]
  %v661 = vld [vmem:[%s3 + $0x364] sm:$0xf]
  %v662 = vld [vmem:[%s3 + $0x368] sm:$0xf]
  %v663 = vld [vmem:[%s3 + $0x36c] sm:$0xf]
  %v664 = vld [vmem:[%s3 + $0x370] sm:$0xf]
  %v665 = vld [vmem:[%s3 + $0x374] sm:$0xf]
  %v666 = vld [vmem:[%s3 + $0x378] sm:$0xf]
  %v667 = vld [vmem:[%s3 + $0x37c] sm:$0xf]
  %v668 = vld [vmem:[%s3 + $0x380] sm:$0xf]
  %v669 = vld [vmem:[%s3 + $0x384] sm:$0xf]
  %v670 = vld [vmem:[%s3 + $0x388] sm:$0xf]
  %v671 = vld [vmem:[%s3 + $0x38c] sm:$0xf]
  %v672 = vld [vmem:[%s3 + $0x390] sm:$0xf]
  %v673 = vld [vmem:[%s3 + $0x394] sm:$0xf]
  %v674 = vld [vmem:[%s3 + $0x398] sm:$0xf]
  %v675 = vld [vmem:[%s3 + $0x39c] sm:$0xf]
  %v676 = vld [vmem:[%s3 + $0x3a0] sm:$0xf]
  %v677 = vld [vmem:[%s3 + $0x3a4] sm:$0xf]
  %v678 = vld [vmem:[%s3 + $0x3a8] sm:$0xf]
  %v679 = vld [vmem:[%s3 + $0x3ac] sm:$0xf]
  %v680 = vld [vmem:[%s3 + $0x3b0] sm:$0xf]
  %v681 = vld [vmem:[%s3 + $0x3b4] sm:$0xf]
  %v682 = vld [vmem:[%s3 + $0x3b8] sm:$0xf]
  %v683 = vld [vmem:[%s3 + $0x3bc] sm:$0xf]
  %v684 = vld [vmem:[%s3 + $0x3c0] sm:$0xf]
  %v685 = vld [vmem:[%s3 + $0x3c4] sm:$0xf]
  %v686 = vld [vmem:[%s3 + $0x3c8] sm:$0xf]
  %v687 = vld [vmem:[%s3 + $0x3cc] sm:$0xf]
  %v688 = vld [vmem:[%s3 + $0x3d0] sm:$0xf]
  %v689 = vld [vmem:[%s3 + $0x3d4] sm:$0xf]
  %v690 = vld [vmem:[%s3 + $0x3d8] sm:$0xf]
  %v691 = vld [vmem:[%s3 + $0x3dc] sm:$0xf]
  %v692 = vld [vmem:[%s3 + $0x3e0] sm:$0xf]
  %v693 = vld [vmem:[%s3 + $0x3e4] sm:$0xf]
  %v694 = vld [vmem:[%s3 + $0x3e8] sm:$0xf]
  %v695 = vld [vmem:[%s3 + $0x3ec] sm:$0xf]
  %v696 = vld [vmem:[%s3 + $0x3f0] sm:$0xf]
  %v697 = vld [vmem:[%s3 + $0x3f4] sm:$0xf]
  %v698 = vld [vmem:[%s3 + $0x3f8] sm:$0xf]
  %v699 = vld [vmem:[%s3 + $0x3fc] sm:$0xf]
  %v700 = vld [vmem:[%s3 + $0x400] sm:$0xf]
  %v701 = vld [vmem:[%s3 + $0x404] sm:$0xf]
  %v702 = vld [vmem:[%s3 + $0x408] sm:$0xf]
  %v703 = vld [vmem:[%s3 + $0x40c] sm:$0xf]
  %v704 = vld [vmem:[%s3 + $0x410] sm:$0xf]
  %v705 = vld [vmem:[%s3 + $0x414] sm:$0xf]
  %v706 = vld [vmem:[%s3 + $0x418] sm:$0xf]
  %v707 = vld [vmem:[%s3 + $0x41c] sm:$0xf]
  %v708 = vld [vmem:[%s3 + $0x420] sm:$0xf]
  %v709 = vld [vmem:[%s3 + $0x424] sm:$0xf]
  %v710 = vld [vmem:[%s3 + $0x428] sm:$0xf]
  %v711 = vld [vmem:[%s3 + $0x42c] sm:$0xf]
  %v712 = vld [vmem:[%s3 + $0x430] sm:$0xf]
  %v713 = vld [vmem:[%s3 + $0x434] sm:$0xf]
  %v714 = vld [vmem:[%s3 + $0x438] sm:$0xf]
  %v715 = vld [vmem:[%s3 + $0x43c] sm:$0xf]
  %v716 = vld [vmem:[%s3 + $0x440] sm:$0xf]
  %v717 = vld [vmem:[%s3 + $0x444] sm:$0xf]
  %v718 = vld [vmem:[%s3 + $0x448] sm:$0xf]
  %v719 = vld [vmem:[%s3 + $0x44c] sm:$0xf]
  %v720 = vld [vmem:[%s3 + $0x450] sm:$0xf]
  %v721 = vld [vmem:[%s3 + $0x454] sm:$0xf]
  %v722 = vld [vmem:[%s3 + $0x458] sm:$0xf]
  %v723 = vld [vmem:[%s3 + $0x45c] sm:$0xf]
  %v724 = vld [vmem:[%s3 + $0x460] sm:$0xf]
  %v725 = vld [vmem:[%s3 + $0x464] sm:$0xf]
  %v726 = vld [vmem:[%s3 + $0x468] sm:$0xf]
  %v727 = vld [vmem:[%s3 + $0x46c] sm:$0xf]
  %v728 = vld [vmem:[%s3 + $0x470] sm:$0xf]
  %v729 = vld [vmem:[%s3 + $0x474] sm:$0xf]
  %v730 = vld [vmem:[%s3 + $0x478] sm:$0xf]
  %v731 = vld [vmem:[%s3 + $0x47c] sm:$0xf]
  %v732 = vld [vmem:[%s3 + $0x480] sm:$0xf]
  %v733 = vld [vmem:[%s3 + $0x484] sm:$0xf]
  %v734 = vld [vmem:[%s3 + $0x488] sm:$0xf]
  %v735 = vld [vmem:[%s3 + $0x48c] sm:$0xf]
  %v736 = vld [vmem:[%s3 + $0x490] sm:$0xf]
  %v737 = vld [vmem:[%s3 + $0x494] sm:$0xf]
  %v738 = vld [vmem:[%s3 + $0x498] sm:$0xf]
  %v739 = vld [vmem:[%s3 + $0x49c] sm:$0xf]
  %v740 = vld [vmem:[%s3 + $0x4a0] sm:$0xf]
  %v741 = vld [vmem:[%s3 + $0x4a4] sm:$0xf]
  %v742 = vld [vmem:[%s3 + $0x4a8] sm:$0xf]
  %v743 = vld [vmem:[%s3 + $0x4ac] sm:$0xf]
  %v744 = vld [vmem:[%s3 + $0x4b0] sm:$0xf]
  %v745 = vld [vmem:[%s3 + $0x4b4] sm:$0xf]
  %v746 = vld [vmem:[%s3 + $0x4b8] sm:$0xf]
  %v747 = vld [vmem:[%s3 + $0x4bc] sm:$0xf]
  %v748 = vld [vmem:[%s3 + $0x4c0] sm:$0xf]
  %v749 = vld [vmem:[%s3 + $0x4c4] sm:$0xf]
  %v750 = vld [vmem:[%s3 + $0x4c8] sm:$0xf]
  %v751 = vld [vmem:[%s3 + $0x4cc] sm:$0xf]
  %v762 = vunpack.c.l.b16 %v434
  %v763 = vunpack.c.h.b16 %v434
  %v764 = vunpack.c.l.b16 %v435
  %v765 = vunpack.c.h.b16 %v435
  %v766 = vunpack.c.l.b16 %v436
  %v767 = vunpack.c.h.b16 %v436
  %v768 = vunpack.c.l.b16 %v437
  %v769 = vunpack.c.h.b16 %v437
  %v770 = vunpack.c.l.b16 %v438
  %v771 = vunpack.c.h.b16 %v438
  %v772 = vunpack.c.l.b16 %v439
  %v773 = vunpack.c.h.b16 %v439
  %v774 = vunpack.c.l.b16 %v440
  %v775 = vunpack.c.h.b16 %v440
  %v776 = vunpack.c.l.b16 %v441
  %v777 = vunpack.c.h.b16 %v441
  %v778 = vunpack.c.l.b16 %v442
  %v779 = vunpack.c.h.b16 %v442
  %v780 = vunpack.c.l.b16 %v443
  %v781 = vunpack.c.h.b16 %v443
  %v782 = vpack.c.b16 %v762, %v762
  %v783 = vpack.c.b16 %v763, %v763
  %v784 = vpack.c.b16 %v764, %v764
  %v785 = vpack.c.b16 %v765, %v765
  %v786 = vpack.c.b16 %v766, %v766
  %v787 = vpack.c.b16 %v767, %v767
  %v788 = vpack.c.b16 %v768, %v768
  %v789 = vpack.c.b16 %v769, %v769
  %v790 = vpack.c.b16 %v770, %v770
  %v791 = vpack.c.b16 %v771, %v771
  %v792 = vpack.c.b16 %v772, %v772
  %v793 = vpack.c.b16 %v773, %v773
  %v794 = vpack.c.b16 %v774, %v774
  %v795 = vpack.c.b16 %v775, %v775
  %v796 = vpack.c.b16 %v776, %v776
  %v797 = vpack.c.b16 %v777, %v777
  %v798 = vpack.c.b16 %v778, %v778
  %v799 = vpack.c.b16 %v779, %v779
  %v800 = vpack.c.b16 %v780, %v780
  %v801 = vpack.c.b16 %v781, %v781
  %v1129 = vunpack.c.l.b16 %v444
  %v1130 = vunpack.c.l.b16 %v445
  %v1131 = vunpack.c.l.b16 %v446
  %v1132 = vunpack.c.l.b16 %v447
  %v1133 = vunpack.c.l.b16 %v448
  %v1134 = vunpack.c.l.b16 %v449
  %v1135 = vunpack.c.l.b16 %v450
  %v1136 = vunpack.c.l.b16 %v451
  %v1137 = vunpack.c.l.b16 %v452
  %v1138 = vunpack.c.l.b16 %v453
  %v1139 = vunpack.c.l.b16 %v454
  %v1140 = vunpack.c.l.b16 %v455
  %v1141 = vunpack.c.l.b16 %v456
  %v1142 = vunpack.c.l.b16 %v457
  %v1143 = vunpack.c.l.b16 %v458
  %v1144 = vunpack.c.l.b16 %v459
  %v1145 = vunpack.c.l.b16 %v460
  %v1146 = vunpack.c.l.b16 %v461
  %v1147 = vunpack.c.l.b16 %v462
  %v1148 = vunpack.c.l.b16 %v463
  %v1149 = vunpack.c.l.b16 %v464
  %v1150 = vunpack.c.l.b16 %v465
  %v1151 = vunpack.c.l.b16 %v466
  %v1152 = vunpack.c.l.b16 %v467
  %v1153 = vunpack.c.l.b16 %v468
  %v1154 = vunpack.c.l.b16 %v469
  %v1155 = vunpack.c.l.b16 %v470
  %v1156 = vunpack.c.l.b16 %v471
  %v1157 = vunpack.c.l.b16 %v472
  %v1158 = vunpack.c.l.b16 %v473
  %v1159 = vunpack.c.l.b16 %v474
  %v1160 = vunpack.c.l.b16 %v475
  %v1161 = vunpack.c.l.b16 %v476
  %v1162 = vunpack.c.l.b16 %v477
  %v1163 = vunpack.c.l.b16 %v478
  %v1164 = vunpack.c.l.b16 %v479
  %v1165 = vunpack.c.l.b16 %v480
  %v1166 = vunpack.c.l.b16 %v481
  %v1167 = vunpack.c.l.b16 %v482
  %v1168 = vunpack.c.l.b16 %v483
  %v1169 = vunpack.c.l.b16 %v484
  %v1170 = vunpack.c.l.b16 %v485
  %v1171 = vunpack.c.l.b16 %v486
  %v1172 = vunpack.c.l.b16 %v487
  %v1173 = vunpack.c.l.b16 %v488
  %v1174 = vunpack.c.l.b16 %v489
  %v1175 = vunpack.c.l.b16 %v490
  %v1176 = vunpack.c.l.b16 %v491
  %v1177 = vunpack.c.l.b16 %v492
  %v1178 = vunpack.c.l.b16 %v493
  %v1179 = vunpack.c.l.b16 %v494
  %v1180 = vunpack.c.l.b16 %v495
  %v1181 = vunpack.c.l.b16 %v496
  %v1182 = vunpack.c.l.b16 %v497
  %v1183 = vunpack.c.l.b16 %v498
  %v1184 = vunpack.c.l.b16 %v499
  %v1185 = vunpack.c.l.b16 %v500
  %v1186 = vunpack.c.l.b16 %v501
  %v1187 = vunpack.c.l.b16 %v502
  %v1188 = vunpack.c.l.b16 %v503
  %v1189 = vunpack.c.l.b16 %v504
  %v1190 = vunpack.c.l.b16 %v505
  %v1191 = vunpack.c.l.b16 %v506
  %v1192 = vunpack.c.l.b16 %v507
  %v1193 = vunpack.c.l.b16 %v508
  %v1194 = vunpack.c.l.b16 %v509
  %v1195 = vunpack.c.l.b16 %v510
  %v1196 = vunpack.c.l.b16 %v511
  %v1197 = vunpack.c.l.b16 %v512
  %v1198 = vunpack.c.l.b16 %v513
  %v1199 = vunpack.c.l.b16 %v514
  %v1200 = vunpack.c.l.b16 %v515
  %v1201 = vunpack.c.l.b16 %v516
  %v1202 = vunpack.c.l.b16 %v517
  %v1203 = vunpack.c.l.b16 %v518
  %v1204 = vunpack.c.l.b16 %v519
  %v1205 = vunpack.c.l.b16 %v520
  %v1206 = vunpack.c.l.b16 %v521
  %v1207 = vunpack.c.l.b16 %v522
  %v1208 = vunpack.c.l.b16 %v523
  %v1209 = vunpack.c.l.b16 %v524
  %v1210 = vunpack.c.l.b16 %v525
  %v1211 = vunpack.c.l.b16 %v526
  %v1212 = vunpack.c.l.b16 %v527
  %v1213 = vunpack.c.l.b16 %v528
  %v1214 = vunpack.c.l.b16 %v529
  %v1215 = vunpack.c.l.b16 %v530
  %v1216 = vunpack.c.l.b16 %v531
  %v1217 = vunpack.c.l.b16 %v532
  %v1218 = vunpack.c.l.b16 %v533
  %v1219 = vunpack.c.l.b16 %v534
  %v1220 = vunpack.c.l.b16 %v535
  %v1221 = vunpack.c.l.b16 %v536
  %v1222 = vunpack.c.l.b16 %v537
  %v1223 = vunpack.c.l.b16 %v538
  %v1224 = vunpack.c.l.b16 %v539
  %v1225 = vunpack.c.l.b16 %v540
  %v1226 = vunpack.c.l.b16 %v541
  %v1227 = vunpack.c.l.b16 %v542
  %v1228 = vunpack.c.l.b16 %v543
  %v1229 = vunpack.c.l.b16 %v544
  %v1230 = vunpack.c.l.b16 %v545
  %v1231 = vunpack.c.l.b16 %v546
  %v1232 = vunpack.c.l.b16 %v547
  %v1233 = vunpack.c.l.b16 %v548
  %v1234 = vunpack.c.l.b16 %v549
  %v1235 = vunpack.c.l.b16 %v550
  %v1236 = vunpack.c.l.b16 %v551
  %v1237 = vunpack.c.l.b16 %v552
  %v1238 = vunpack.c.l.b16 %v553
  %v1239 = vunpack.c.l.b16 %v554
  %v1240 = vunpack.c.l.b16 %v555
  %v1241 = vunpack.c.l.b16 %v556
  %v1242 = vunpack.c.l.b16 %v557
  %v1243 = vunpack.c.l.b16 %v558
  %v1244 = vunpack.c.l.b16 %v559
  %v1245 = vunpack.c.l.b16 %v560
  %v1246 = vunpack.c.l.b16 %v561
  %v1247 = vunpack.c.l.b16 %v562
  %v1248 = vunpack.c.l.b16 %v563
  %v1249 = vunpack.c.l.b16 %v564
  %v1250 = vunpack.c.l.b16 %v565
  %v1251 = vunpack.c.l.b16 %v566
  %v1252 = vunpack.c.l.b16 %v567
  %v1253 = vunpack.c.l.b16 %v568
  %v1254 = vunpack.c.l.b16 %v569
  %v1255 = vunpack.c.l.b16 %v570
  %v1256 = vunpack.c.l.b16 %v571
  %v1257 = vunpack.c.l.b16 %v572
  %v1258 = vunpack.c.l.b16 %v573
  %v1259 = vunpack.c.l.b16 %v574
  %v1260 = vunpack.c.l.b16 %v575
  %v1261 = vunpack.c.l.b16 %v576
  %v1262 = vunpack.c.l.b16 %v577
  %v1263 = vunpack.c.l.b16 %v578
  %v1264 = vunpack.c.l.b16 %v579
  %v1265 = vunpack.c.l.b16 %v580
  %v1266 = vunpack.c.l.b16 %v581
  %v1267 = vunpack.c.l.b16 %v582
  %v1268 = vunpack.c.l.b16 %v583
  %v1269 = vunpack.c.l.b16 %v584
  %v1270 = vunpack.c.l.b16 %v585
  %v1271 = vunpack.c.l.b16 %v586
  %v1272 = vunpack.c.l.b16 %v587
  %v1273 = vunpack.c.l.b16 %v588
  %v1274 = vunpack.c.l.b16 %v589
  %v1275 = vunpack.c.l.b16 %v590
  %v1276 = vunpack.c.l.b16 %v591
  %v1277 = vunpack.c.l.b16 %v592
  %v1278 = vunpack.c.l.b16 %v593
  %v1279 = vunpack.c.l.b16 %v594
  %v1280 = vunpack.c.l.b16 %v595
  %v1281 = vunpack.c.l.b16 %v596
  %v1282 = vunpack.c.l.b16 %v597
  %v1283 = vunpack.c.l.b16 %v598
  %v1284 = vunpack.c.l.b16 %v599
  %v1285 = vunpack.c.l.b16 %v600
  %v1286 = vunpack.c.l.b16 %v601
  %v1287 = vunpack.c.l.b16 %v602
  %v1288 = vunpack.c.l.b16 %v603
  %v1289 = vunpack.c.l.b16 %v604
  %v1290 = vunpack.c.l.b16 %v605
  %v1291 = vunpack.c.l.b16 %v606
  %v1292 = vunpack.c.l.b16 %v607
  %v1293 = vunpack.c.l.b16 %v608
  %v1294 = vunpack.c.l.b16 %v609
  %v1295 = vunpack.c.l.b16 %v610
  %v1296 = vunpack.c.l.b16 %v611
  %v1297 = vunpack.c.l.b16 %v612
  %v1298 = vunpack.c.l.b16 %v613
  %v1299 = vunpack.c.l.b16 %v614
  %v1300 = vunpack.c.l.b16 %v615
  %v1301 = vunpack.c.l.b16 %v616
  %v1302 = vunpack.c.l.b16 %v617
  %v1303 = vunpack.c.l.b16 %v618
  %v1304 = vunpack.c.l.b16 %v619
  %v1305 = vunpack.c.l.b16 %v620
  %v1306 = vunpack.c.l.b16 %v621
  %v1307 = vunpack.c.l.b16 %v622
  %v1308 = vunpack.c.l.b16 %v623
  %v1309 = vunpack.c.l.b16 %v624
  %v1310 = vunpack.c.l.b16 %v625
  %v1311 = vunpack.c.l.b16 %v626
  %v1312 = vunpack.c.l.b16 %v627
  %v1313 = vunpack.c.l.b16 %v628
  %v1314 = vunpack.c.l.b16 %v629
  %v1315 = vunpack.c.l.b16 %v630
  %v1316 = vunpack.c.l.b16 %v631
  %v1317 = vunpack.c.l.b16 %v632
  %v1318 = vunpack.c.l.b16 %v633
  %v1319 = vunpack.c.l.b16 %v634
  %v1320 = vunpack.c.l.b16 %v635
  %v1321 = vunpack.c.l.b16 %v636
  %v1322 = vunpack.c.l.b16 %v637
  %v1323 = vunpack.c.l.b16 %v638
  %v1324 = vunpack.c.l.b16 %v639
  %v1325 = vunpack.c.l.b16 %v640
  %v1326 = vunpack.c.l.b16 %v641
  %v1327 = vunpack.c.l.b16 %v642
  %v1328 = vunpack.c.l.b16 %v643
  %v1329 = vunpack.c.l.b16 %v644
  %v1330 = vunpack.c.l.b16 %v645
  %v1331 = vunpack.c.l.b16 %v646
  %v1332 = vunpack.c.l.b16 %v647
  %v1333 = vunpack.c.l.b16 %v648
  %v1334 = vunpack.c.l.b16 %v649
  %v1335 = vunpack.c.l.b16 %v650
  %v1336 = vunpack.c.l.b16 %v651
  %v1337 = vunpack.c.l.b16 %v652
  %v1338 = vunpack.c.l.b16 %v653
  %v1339 = vunpack.c.l.b16 %v654
  %v1340 = vunpack.c.l.b16 %v655
  %v1341 = vunpack.c.l.b16 %v656
  %v1342 = vunpack.c.l.b16 %v657
  %v1343 = vunpack.c.l.b16 %v658
  %v1344 = vunpack.c.l.b16 %v659
  %v1345 = vunpack.c.l.b16 %v660
  %v1346 = vunpack.c.l.b16 %v661
  %v1347 = vunpack.c.l.b16 %v662
  %v1348 = vunpack.c.l.b16 %v663
  %v1349 = vunpack.c.l.b16 %v664
  %v1350 = vunpack.c.l.b16 %v665
  %v1351 = vunpack.c.l.b16 %v666
  %v1352 = vunpack.c.l.b16 %v667
  %v1353 = vunpack.c.l.b16 %v668
  %v1354 = vunpack.c.l.b16 %v669
  %v1355 = vunpack.c.l.b16 %v670
  %v1356 = vunpack.c.l.b16 %v671
  %v1357 = vunpack.c.l.b16 %v672
  %v1358 = vunpack.c.l.b16 %v673
  %v1359 = vunpack.c.l.b16 %v674
  %v1360 = vunpack.c.l.b16 %v675
  %v1361 = vunpack.c.l.b16 %v676
  %v1362 = vunpack.c.l.b16 %v677
  %v1363 = vunpack.c.l.b16 %v678
  %v1364 = vunpack.c.l.b16 %v679
  %v1365 = vunpack.c.l.b16 %v680
  %v1366 = vunpack.c.l.b16 %v681
  %v1367 = vunpack.c.l.b16 %v682
  %v1368 = vunpack.c.l.b16 %v683
  %v1369 = vunpack.c.l.b16 %v684
  %v1370 = vunpack.c.l.b16 %v685
  %v1371 = vunpack.c.l.b16 %v686
  %v1372 = vunpack.c.l.b16 %v687
  %v1373 = vunpack.c.l.b16 %v688
  %v1374 = vunpack.c.l.b16 %v689
  %v1375 = vunpack.c.l.b16 %v690
  %v1376 = vunpack.c.l.b16 %v691
  %v1377 = vunpack.c.l.b16 %v692
  %v1378 = vunpack.c.l.b16 %v693
  %v1379 = vunpack.c.l.b16 %v694
  %v1380 = vunpack.c.l.b16 %v695
  %v1381 = vunpack.c.l.b16 %v696
  %v1382 = vunpack.c.l.b16 %v697
  %v1383 = vunpack.c.l.b16 %v698
  %v1384 = vunpack.c.l.b16 %v699
  %v1385 = vunpack.c.l.b16 %v700
  %v1386 = vunpack.c.l.b16 %v701
  %v1387 = vunpack.c.l.b16 %v702
  %v1388 = vunpack.c.l.b16 %v703
  %v1389 = vunpack.c.l.b16 %v704
  %v1390 = vunpack.c.l.b16 %v705
  %v1391 = vunpack.c.l.b16 %v706
  %v1392 = vunpack.c.l.b16 %v707
  %v1393 = vunpack.c.l.b16 %v708
  %v1394 = vunpack.c.l.b16 %v709
  %v1395 = vunpack.c.l.b16 %v710
  %v1396 = vunpack.c.l.b16 %v711
  %v1397 = vunpack.c.l.b16 %v712
  %v1398 = vunpack.c.l.b16 %v713
  %v1399 = vunpack.c.l.b16 %v714
  %v1400 = vunpack.c.l.b16 %v715
  %v1401 = vunpack.c.l.b16 %v716
  %v1402 = vunpack.c.l.b16 %v717
  %v1403 = vunpack.c.l.b16 %v718
  %v1404 = vunpack.c.l.b16 %v719
  %v1405 = vunpack.c.l.b16 %v720
  %v1406 = vunpack.c.l.b16 %v721
  %v1407 = vunpack.c.l.b16 %v722
  %v1408 = vunpack.c.l.b16 %v723
  %v1409 = vunpack.c.l.b16 %v724
  %v1410 = vunpack.c.l.b16 %v725
  %v1411 = vunpack.c.l.b16 %v726
  %v1412 = vunpack.c.l.b16 %v727
  %v1413 = vunpack.c.l.b16 %v728
  %v1414 = vunpack.c.l.b16 %v729
  %v1415 = vunpack.c.l.b16 %v730
  %v1416 = vunpack.c.l.b16 %v731
  %v1417 = vunpack.c.l.b16 %v732
  %v1418 = vunpack.c.l.b16 %v733
  %v1419 = vunpack.c.l.b16 %v734
  %v1420 = vunpack.c.l.b16 %v735
  %v1421 = vunpack.c.l.b16 %v736
  %v1422 = vunpack.c.l.b16 %v737
  %v1423 = vunpack.c.l.b16 %v738
  %v1424 = vunpack.c.l.b16 %v739
  %v1425 = vunpack.c.l.b16 %v740
  %v1426 = vunpack.c.l.b16 %v741
  %v1427 = vunpack.c.l.b16 %v742
  %v1428 = vunpack.c.l.b16 %v743
  %v1429 = vunpack.c.l.b16 %v744
  %v1430 = vunpack.c.l.b16 %v745
  %v1431 = vunpack.c.l.b16 %v746
  %v1432 = vunpack.c.l.b16 %v747
  %v1433 = vunpack.c.l.b16 %v748
  %v1434 = vunpack.c.l.b16 %v749
  %v1435 = vunpack.c.l.b16 %v750
  %v1436 = vunpack.c.l.b16 %v751
  %v1437 = vpack.c.b16 %v1130, %v1129
  %v1438 = vpack.c.b16 %v1132, %v1131
  %v1439 = vpack.c.b16 %v1134, %v1133
  %v1440 = vpack.c.b16 %v1136, %v1135
  %v1441 = vpack.c.b16 %v1138, %v1137
  %v1442 = vpack.c.b16 %v1140, %v1139
  %v1443 = vpack.c.b16 %v1142, %v1141
  %v1444 = vpack.c.b16 %v1144, %v1143
  %v1445 = vpack.c.b16 %v1146, %v1145
  %v1446 = vpack.c.b16 %v1148, %v1147
  %v1447 = vpack.c.b16 %v1150, %v1149
  %v1448 = vpack.c.b16 %v1152, %v1151
  %v1449 = vpack.c.b16 %v1154, %v1153
  %v1450 = vpack.c.b16 %v1156, %v1155
  %v1451 = vpack.c.b16 %v1158, %v1157
  %v1452 = vpack.c.b16 %v1160, %v1159
  %v1453 = vpack.c.b16 %v1162, %v1161
  %v1454 = vpack.c.b16 %v1164, %v1163
  %v1455 = vpack.c.b16 %v1166, %v1165
  %v1456 = vpack.c.b16 %v1168, %v1167
  %v1457 = vpack.c.b16 %v1170, %v1169
  %v1458 = vpack.c.b16 %v1172, %v1171
  %v1459 = vpack.c.b16 %v1174, %v1173
  %v1460 = vpack.c.b16 %v1176, %v1175
  %v1461 = vpack.c.b16 %v1178, %v1177
  %v1462 = vpack.c.b16 %v1180, %v1179
  %v1463 = vpack.c.b16 %v1182, %v1181
  %v1464 = vpack.c.b16 %v1184, %v1183
  %v1465 = vpack.c.b16 %v1186, %v1185
  %v1466 = vpack.c.b16 %v1188, %v1187
  %v1467 = vpack.c.b16 %v1190, %v1189
  %v1468 = vpack.c.b16 %v1192, %v1191
  %v1469 = vpack.c.b16 %v1194, %v1193
  %v1470 = vpack.c.b16 %v1196, %v1195
  %v1471 = vpack.c.b16 %v1198, %v1197
  %v1472 = vpack.c.b16 %v1200, %v1199
  %v1473 = vpack.c.b16 %v1202, %v1201
  %v1474 = vpack.c.b16 %v1204, %v1203
  %v1475 = vpack.c.b16 %v1206, %v1205
  %v1476 = vpack.c.b16 %v1208, %v1207
  %v1477 = vpack.c.b16 %v1210, %v1209
  %v1478 = vpack.c.b16 %v1212, %v1211
  %v1479 = vpack.c.b16 %v1214, %v1213
  %v1480 = vpack.c.b16 %v1216, %v1215
  %v1481 = vpack.c.b16 %v1218, %v1217
  %v1482 = vpack.c.b16 %v1220, %v1219
  %v1483 = vpack.c.b16 %v1222, %v1221
  %v1484 = vpack.c.b16 %v1224, %v1223
  %v1485 = vpack.c.b16 %v1226, %v1225
  %v1486 = vpack.c.b16 %v1228, %v1227
  %v1487 = vpack.c.b16 %v1230, %v1229
  %v1488 = vpack.c.b16 %v1232, %v1231
  %v1489 = vpack.c.b16 %v1234, %v1233
  %v1490 = vpack.c.b16 %v1236, %v1235
  %v1491 = vpack.c.b16 %v1238, %v1237
  %v1492 = vpack.c.b16 %v1240, %v1239
  %v1493 = vpack.c.b16 %v1242, %v1241
  %v1494 = vpack.c.b16 %v1244, %v1243
  %v1495 = vpack.c.b16 %v1246, %v1245
  %v1496 = vpack.c.b16 %v1248, %v1247
  %v1497 = vpack.c.b16 %v1250, %v1249
  %v1498 = vpack.c.b16 %v1252, %v1251
  %v1499 = vpack.c.b16 %v1254, %v1253
  %v1500 = vpack.c.b16 %v1256, %v1255
  %v1501 = vpack.c.b16 %v1258, %v1257
  %v1502 = vpack.c.b16 %v1260, %v1259
  %v1503 = vpack.c.b16 %v1262, %v1261
  %v1504 = vpack.c.b16 %v1264, %v1263
  %v1505 = vpack.c.b16 %v1266, %v1265
  %v1506 = vpack.c.b16 %v1268, %v1267
  %v1507 = vpack.c.b16 %v1270, %v1269
  %v1508 = vpack.c.b16 %v1272, %v1271
  %v1509 = vpack.c.b16 %v1274, %v1273
  %v1510 = vpack.c.b16 %v1276, %v1275
  %v1511 = vpack.c.b16 %v1278, %v1277
  %v1512 = vpack.c.b16 %v1280, %v1279
  %v1513 = vpack.c.b16 %v1282, %v1281
  %v1514 = vpack.c.b16 %v1284, %v1283
  %v1515 = vpack.c.b16 %v1286, %v1285
  %v1516 = vpack.c.b16 %v1288, %v1287
  %v1517 = vpack.c.b16 %v1290, %v1289
  %v1518 = vpack.c.b16 %v1292, %v1291
  %v1519 = vpack.c.b16 %v1294, %v1293
  %v1520 = vpack.c.b16 %v1296, %v1295
  %v1521 = vpack.c.b16 %v1298, %v1297
  %v1522 = vpack.c.b16 %v1300, %v1299
  %v1523 = vpack.c.b16 %v1302, %v1301
  %v1524 = vpack.c.b16 %v1304, %v1303
  %v1525 = vpack.c.b16 %v1306, %v1305
  %v1526 = vpack.c.b16 %v1308, %v1307
  %v1527 = vpack.c.b16 %v1310, %v1309
  %v1528 = vpack.c.b16 %v1312, %v1311
  %v1529 = vpack.c.b16 %v1314, %v1313
  %v1530 = vpack.c.b16 %v1316, %v1315
  %v1531 = vpack.c.b16 %v1318, %v1317
  %v1532 = vpack.c.b16 %v1320, %v1319
  %v1533 = vpack.c.b16 %v1322, %v1321
  %v1534 = vpack.c.b16 %v1324, %v1323
  %v1535 = vpack.c.b16 %v1326, %v1325
  %v1536 = vpack.c.b16 %v1328, %v1327
  %v1537 = vpack.c.b16 %v1330, %v1329
  %v1538 = vpack.c.b16 %v1332, %v1331
  %v1539 = vpack.c.b16 %v1334, %v1333
  %v1540 = vpack.c.b16 %v1336, %v1335
  %v1541 = vpack.c.b16 %v1338, %v1337
  %v1542 = vpack.c.b16 %v1340, %v1339
  %v1543 = vpack.c.b16 %v1342, %v1341
  %v1544 = vpack.c.b16 %v1344, %v1343
  %v1545 = vpack.c.b16 %v1346, %v1345
  %v1546 = vpack.c.b16 %v1348, %v1347
  %v1547 = vpack.c.b16 %v1350, %v1349
  %v1548 = vpack.c.b16 %v1352, %v1351
  %v1549 = vpack.c.b16 %v1354, %v1353
  %v1550 = vpack.c.b16 %v1356, %v1355
  %v1551 = vpack.c.b16 %v1358, %v1357
  %v1552 = vpack.c.b16 %v1360, %v1359
  %v1553 = vpack.c.b16 %v1362, %v1361
  %v1554 = vpack.c.b16 %v1364, %v1363
  %v1555 = vpack.c.b16 %v1366, %v1365
  %v1556 = vpack.c.b16 %v1368, %v1367
  %v1557 = vpack.c.b16 %v1370, %v1369
  %v1558 = vpack.c.b16 %v1372, %v1371
  %v1559 = vpack.c.b16 %v1374, %v1373
  %v1560 = vpack.c.b16 %v1376, %v1375
  %v1561 = vpack.c.b16 %v1378, %v1377
  %v1562 = vpack.c.b16 %v1380, %v1379
  %v1563 = vpack.c.b16 %v1382, %v1381
  %v1564 = vpack.c.b16 %v1384, %v1383
  %v1565 = vpack.c.b16 %v1386, %v1385
  %v1566 = vpack.c.b16 %v1388, %v1387
  %v1567 = vpack.c.b16 %v1390, %v1389
  %v1568 = vpack.c.b16 %v1392, %v1391
  %v1569 = vpack.c.b16 %v1394, %v1393
  %v1570 = vpack.c.b16 %v1396, %v1395
  %v1571 = vpack.c.b16 %v1398, %v1397
  %v1572 = vpack.c.b16 %v1400, %v1399
  %v1573 = vpack.c.b16 %v1402, %v1401
  %v1574 = vpack.c.b16 %v1404, %v1403
  %v1575 = vpack.c.b16 %v1406, %v1405
  %v1576 = vpack.c.b16 %v1408, %v1407
  %v1577 = vpack.c.b16 %v1410, %v1409
  %v1578 = vpack.c.b16 %v1412, %v1411
  %v1579 = vpack.c.b16 %v1414, %v1413
  %v1580 = vpack.c.b16 %v1416, %v1415
  %v1581 = vpack.c.b16 %v1418, %v1417
  %v1582 = vpack.c.b16 %v1420, %v1419
  %v1583 = vpack.c.b16 %v1422, %v1421
  %v1584 = vpack.c.b16 %v1424, %v1423
  %v1585 = vpack.c.b16 %v1426, %v1425
  %v1586 = vpack.c.b16 %v1428, %v1427
  %v1587 = vpack.c.b16 %v1430, %v1429
  %v1588 = vpack.c.b16 %v1432, %v1431
  %v1589 = vpack.c.b16 %v1434, %v1433
  %v1590 = vpack.c.b16 %v1436, %v1435
  %vm1745 = vcmask 261120
  %v1747 = vsel %vm1745, %v801, 0
  %1749 = vmatprep.subr.bf16.mxu0 0
  %1750 = vmatpush1.bf16.msra.mxu0 %v1437
  %1751 = vmatprep.subr.bf16.mxu0 0
  %1752 = vmatpush1.bf16.msra.mxu0 %v1438
  %1753 = vmatprep.subr.bf16.mxu0 0
  %1754 = vmatpush1.bf16.msra.mxu0 %v1439
  %1755 = vmatprep.subr.bf16.mxu0 0
  %1756 = vmatpush1.bf16.msra.mxu0 %v1440
  %1757 = vmatprep.subr.bf16.mxu0 0
  %1758 = vmatpush1.bf16.msra.mxu0 %v1441
  %1759 = vmatprep.subr.bf16.mxu0 0
  %1760 = vmatpush1.bf16.msra.mxu0 %v1442
  %1761 = vmatprep.subr.bf16.mxu0 0
  %1762 = vmatpush1.bf16.msra.mxu0 %v1443
  %1763 = vmatprep.subr.bf16.mxu0 0
  %1764 = vmatpush1.bf16.msra.mxu0 %v1444
  %1765 = vmatprep.subr.bf16.mxu0 0
  %1766 = vmatpush1.bf16.msra.mxu0 %v1445
  %1767 = vmatprep.subr.bf16.mxu0 0
  %1768 = vmatpush1.bf16.msra.mxu0 %v1446
  %1769 = vmatprep.subr.bf16.mxu0 0
  %1770 = vmatpush1.bf16.msra.mxu0 %v1447
  %1771 = vmatprep.subr.bf16.mxu0 0
  %1772 = vmatpush1.bf16.msra.mxu0 %v1448
  %1773 = vmatprep.subr.bf16.mxu0 0
  %1774 = vmatpush1.bf16.msra.mxu0 %v1449
  %1775 = vmatprep.subr.bf16.mxu0 0
  %1776 = vmatpush1.bf16.msra.mxu0 %v1450
  %1777 = vmatprep.subr.bf16.mxu0 0
  %1778 = vmatpush1.bf16.msra.mxu0 %v1451
  %1779 = vmatprep.subr.bf16.mxu0 0
  %1780 = vmatpush1.bf16.msra.mxu0 %v1452
  %1781 = vmatprep.mubr.bf16.mxu0 %v783
  %1782 = vmatmul.mubr.bf16.gmra.mrb[0].mxu0 %v782
  %v1783 = vpop.f32.mrb[0].mxu0
  %v1784 = vadd.f32 0.0, %v1783
  %v1785 = vpop.f32.mrb[0].mxu0
  %v1786 = vpop.f32.mrb[0].mxu0
  %v1787 = vpop.f32.mrb[0].mxu0
  %1788 = vdwg.mxu0
  %1789 = vmatprep.subr.bf16.mxu0 0
  %1790 = vmatpush1.bf16.msra.mxu0 %v1453
  %1791 = vmatprep.subr.bf16.mxu0 0
  %1792 = vmatpush1.bf16.msra.mxu0 %v1454
  %1793 = vmatprep.subr.bf16.mxu0 0
  %1794 = vmatpush1.bf16.msra.mxu0 %v1455
  %1795 = vmatprep.subr.bf16.mxu0 0
  %1796 = vmatpush1.bf16.msra.mxu0 %v1456
  %1797 = vmatprep.subr.bf16.mxu0 0
  %1798 = vmatpush1.bf16.msra.mxu0 %v1457
  %1799 = vmatprep.subr.bf16.mxu0 0
  %1800 = vmatpush1.bf16.msra.mxu0 %v1458
  %1801 = vmatprep.subr.bf16.mxu0 0
  %1802 = vmatpush1.bf16.msra.mxu0 %v1459
  %1803 = vmatprep.subr.bf16.mxu0 0
  %1804 = vmatpush1.bf16.msra.mxu0 %v1460
  %1805 = vmatprep.subr.bf16.mxu0 0
  %1806 = vmatpush1.bf16.msra.mxu0 %v1461
  %1807 = vmatprep.subr.bf16.mxu0 0
  %1808 = vmatpush1.bf16.msra.mxu0 %v1462
  %1809 = vmatprep.subr.bf16.mxu0 0
  %1810 = vmatpush1.bf16.msra.mxu0 %v1463
  %1811 = vmatprep.subr.bf16.mxu0 0
  %1812 = vmatpush1.bf16.msra.mxu0 %v1464
  %1813 = vmatprep.subr.bf16.mxu0 0
  %1814 = vmatpush1.bf16.msra.mxu0 %v1465
  %1815 = vmatprep.subr.bf16.mxu0 0
  %1816 = vmatpush1.bf16.msra.mxu0 %v1466
  %1817 = vmatprep.subr.bf16.mxu0 0
  %1818 = vmatpush1.bf16.msra.mxu0 %v1467
  %1819 = vmatprep.subr.bf16.mxu0 0
  %1820 = vmatpush1.bf16.msra.mxu0 %v1468
  %1821 = vmatprep.mubr.bf16.mxu0 %v785
  %1822 = vmatmul.mubr.bf16.gmra.mrb[0].mxu0 %v784
  %v1823 = vpop.f32.mrb[0].mxu0
  %v1824 = vadd.f32 %v1784, %v1823
  %v1825 = vpop.f32.mrb[0].mxu0
  %v1826 = vpop.f32.mrb[0].mxu0
  %v1827 = vpop.f32.mrb[0].mxu0
  %1828 = vdwg.mxu0
  %1829 = vmatprep.subr.bf16.mxu0 0
  %1830 = vmatpush1.bf16.msra.mxu0 %v1469
  %1831 = vmatprep.subr.bf16.mxu0 0
  %1832 = vmatpush1.bf16.msra.mxu0 %v1470
  %1833 = vmatprep.subr.bf16.mxu0 0
  %1834 = vmatpush1.bf16.msra.mxu0 %v1471
  %1835 = vmatprep.subr.bf16.mxu0 0
  %1836 = vmatpush1.bf16.msra.mxu0 %v1472
  %1837 = vmatprep.subr.bf16.mxu0 0
  %1838 = vmatpush1.bf16.msra.mxu0 %v1473
  %1839 = vmatprep.subr.bf16.mxu0 0
  %1840 = vmatpush1.bf16.msra.mxu0 %v1474
  %1841 = vmatprep.subr.bf16.mxu0 0
  %1842 = vmatpush1.bf16.msra.mxu0 %v1475
  %1843 = vmatprep.subr.bf16.mxu0 0
  %1844 = vmatpush1.bf16.msra.mxu0 %v1476
  %1845 = vmatprep.subr.bf16.mxu0 0
  %1846 = vmatpush1.bf16.msra.mxu0 %v1477
  %1847 = vmatprep.subr.bf16.mxu0 0
  %1848 = vmatpush1.bf16.msra.mxu0 %v1478
  %1849 = vmatprep.subr.bf16.mxu0 0
  %1850 = vmatpush1.bf16.msra.mxu0 %v1479
  %1851 = vmatprep.subr.bf16.mxu0 0
  %1852 = vmatpush1.bf16.msra.mxu0 %v1480
  %1853 = vmatprep.subr.bf16.mxu0 0
  %1854 = vmatpush1.bf16.msra.mxu0 %v1481
  %1855 = vmatprep.subr.bf16.mxu0 0
  %1856 = vmatpush1.bf16.msra.mxu0 %v1482
  %1857 = vmatprep.subr.bf16.mxu0 0
  %1858 = vmatpush1.bf16.msra.mxu0 %v1483
  %1859 = vmatprep.subr.bf16.mxu0 0
  %1860 = vmatpush1.bf16.msra.mxu0 %v1484
  %1861 = vmatprep.mubr.bf16.mxu0 %v787
  %1862 = vmatmul.mubr.bf16.gmra.mrb[0].mxu0 %v786
  %v1863 = vpop.f32.mrb[0].mxu0
  %v1864 = vadd.f32 %v1824, %v1863
  %v1865 = vpop.f32.mrb[0].mxu0
  %v1866 = vpop.f32.mrb[0].mxu0
  %v1867 = vpop.f32.mrb[0].mxu0
  %1868 = vdwg.mxu0
  %1869 = vmatprep.subr.bf16.mxu0 0
  %1870 = vmatpush1.bf16.msra.mxu0 %v1485
  %1871 = vmatprep.subr.bf16.mxu0 0
  %1872 = vmatpush1.bf16.msra.mxu0 %v1486
  %1873 = vmatprep.subr.bf16.mxu0 0
  %1874 = vmatpush1.bf16.msra.mxu0 %v1487
  %1875 = vmatprep.subr.bf16.mxu0 0
  %1876 = vmatpush1.bf16.msra.mxu0 %v1488
  %1877 = vmatprep.subr.bf16.mxu0 0
  %1878 = vmatpush1.bf16.msra.mxu0 %v1489
  %1879 = vmatprep.subr.bf16.mxu0 0
  %1880 = vmatpush1.bf16.msra.mxu0 %v1490
  %1881 = vmatprep.subr.bf16.mxu0 0
  %1882 = vmatpush1.bf16.msra.mxu0 %v1491
  %1883 = vmatprep.subr.bf16.mxu0 0
  %1884 = vmatpush1.bf16.msra.mxu0 %v1492
  %1885 = vmatprep.subr.bf16.mxu0 0
  %1886 = vmatpush1.bf16.msra.mxu0 %v1493
  %1887 = vmatprep.subr.bf16.mxu0 0
  %1888 = vmatpush1.bf16.msra.mxu0 %v1494
  %1889 = vmatprep.subr.bf16.mxu0 0
  %1890 = vmatpush1.bf16.msra.mxu0 %v1495
  %1891 = vmatprep.subr.bf16.mxu0 0
  %1892 = vmatpush1.bf16.msra.mxu0 %v1496
  %1893 = vmatprep.subr.bf16.mxu0 0
  %1894 = vmatpush1.bf16.msra.mxu0 %v1497
  %1895 = vmatprep.subr.bf16.mxu0 0
  %1896 = vmatpush1.bf16.msra.mxu0 %v1498
  %1897 = vmatprep.subr.bf16.mxu0 0
  %1898 = vmatpush1.bf16.msra.mxu0 %v1499
  %1899 = vmatprep.subr.bf16.mxu0 0
  %1900 = vmatpush1.bf16.msra.mxu0 %v1500
  %1901 = vmatprep.mubr.bf16.mxu0 %v789
  %1902 = vmatmul.mubr.bf16.gmra.mrb[0].mxu0 %v788
  %v1903 = vpop.f32.mrb[0].mxu0
  %v1904 = vadd.f32 %v1864, %v1903
  %v1905 = vpop.f32.mrb[0].mxu0
  %v1906 = vpop.f32.mrb[0].mxu0
  %v1907 = vpop.f32.mrb[0].mxu0
  %1908 = vdwg.mxu0
  %1909 = vmatprep.subr.bf16.mxu0 0
  %1910 = vmatpush1.bf16.msra.mxu0 %v1501
  %1911 = vmatprep.subr.bf16.mxu0 0
  %1912 = vmatpush1.bf16.msra.mxu0 %v1502
  %1913 = vmatprep.subr.bf16.mxu0 0
  %1914 = vmatpush1.bf16.msra.mxu0 %v1503
  %1915 = vmatprep.subr.bf16.mxu0 0
  %1916 = vmatpush1.bf16.msra.mxu0 %v1504
  %1917 = vmatprep.subr.bf16.mxu0 0
  %1918 = vmatpush1.bf16.msra.mxu0 %v1505
  %1919 = vmatprep.subr.bf16.mxu0 0
  %1920 = vmatpush1.bf16.msra.mxu0 %v1506
  %1921 = vmatprep.subr.bf16.mxu0 0
  %1922 = vmatpush1.bf16.msra.mxu0 %v1507
  %1923 = vmatprep.subr.bf16.mxu0 0
  %1924 = vmatpush1.bf16.msra.mxu0 %v1508
  %1925 = vmatprep.subr.bf16.mxu0 0
  %1926 = vmatpush1.bf16.msra.mxu0 %v1509
  %1927 = vmatprep.subr.bf16.mxu0 0
  %1928 = vmatpush1.bf16.msra.mxu0 %v1510
  %1929 = vmatprep.subr.bf16.mxu0 0
  %1930 = vmatpush1.bf16.msra.mxu0 %v1511
  %1931 = vmatprep.subr.bf16.mxu0 0
  %1932 = vmatpush1.bf16.msra.mxu0 %v1512
  %1933 = vmatprep.subr.bf16.mxu0 0
  %1934 = vmatpush1.bf16.msra.mxu0 %v1513
  %1935 = vmatprep.subr.bf16.mxu0 0
  %1936 = vmatpush1.bf16.msra.mxu0 %v1514
  %1937 = vmatprep.subr.bf16.mxu0 0
  %1938 = vmatpush1.bf16.msra.mxu0 %v1515
  %1939 = vmatprep.subr.bf16.mxu0 0
  %1940 = vmatpush1.bf16.msra.mxu0 %v1516
  %1941 = vmatprep.mubr.bf16.mxu0 %v791
  %1942 = vmatmul.mubr.bf16.gmra.mrb[0].mxu0 %v790
  %v1943 = vpop.f32.mrb[0].mxu0
  %v1944 = vadd.f32 %v1904, %v1943
  %v1945 = vpop.f32.mrb[0].mxu0
  %v1946 = vpop.f32.mrb[0].mxu0
  %v1947 = vpop.f32.mrb[0].mxu0
  %1948 = vdwg.mxu0
  %1949 = vmatprep.subr.bf16.mxu0 0
  %1950 = vmatpush1.bf16.msra.mxu0 %v1517
  %1951 = vmatprep.subr.bf16.mxu0 0
  %1952 = vmatpush1.bf16.msra.mxu0 %v1518
  %1953 = vmatprep.subr.bf16.mxu0 0
  %1954 = vmatpush1.bf16.msra.mxu0 %v1519
  %1955 = vmatprep.subr.bf16.mxu0 0
  %1956 = vmatpush1.bf16.msra.mxu0 %v1520
  %1957 = vmatprep.subr.bf16.mxu0 0
  %1958 = vmatpush1.bf16.msra.mxu0 %v1521
  %1959 = vmatprep.subr.bf16.mxu0 0
  %1960 = vmatpush1.bf16.msra.mxu0 %v1522
  %1961 = vmatprep.subr.bf16.mxu0 0
  %1962 = vmatpush1.bf16.msra.mxu0 %v1523
  %1963 = vmatprep.subr.bf16.mxu0 0
  %1964 = vmatpush1.bf16.msra.mxu0 %v1524
  %1965 = vmatprep.subr.bf16.mxu0 0
  %1966 = vmatpush1.bf16.msra.mxu0 %v1525
  %1967 = vmatprep.subr.bf16.mxu0 0
  %1968 = vmatpush1.bf16.msra.mxu0 %v1526
  %1969 = vmatprep.subr.bf16.mxu0 0
  %1970 = vmatpush1.bf16.msra.mxu0 %v1527
  %1971 = vmatprep.subr.bf16.mxu0 0
  %1972 = vmatpush1.bf16.msra.mxu0 %v1528
  %1973 = vmatprep.subr.bf16.mxu0 0
  %1974 = vmatpush1.bf16.msra.mxu0 %v1529
  %1975 = vmatprep.subr.bf16.mxu0 0
  %1976 = vmatpush1.bf16.msra.mxu0 %v1530
  %1977 = vmatprep.subr.bf16.mxu0 0
  %1978 = vmatpush1.bf16.msra.mxu0 %v1531
  %1979 = vmatprep.subr.bf16.mxu0 0
  %1980 = vmatpush1.bf16.msra.mxu0 %v1532
  %1981 = vmatprep.mubr.bf16.mxu0 %v793
  %1982 = vmatmul.mubr.bf16.gmra.mrb[0].mxu0 %v792
  %v1983 = vpop.f32.mrb[0].mxu0
  %v1984 = vadd.f32 %v1944, %v1983
  %v1985 = vpop.f32.mrb[0].mxu0
  %v1986 = vpop.f32.mrb[0].mxu0
  %v1987 = vpop.f32.mrb[0].mxu0
  %1988 = vdwg.mxu0
  %1989 = vmatprep.subr.bf16.mxu0 0
  %1990 = vmatpush1.bf16.msra.mxu0 %v1533
  %1991 = vmatprep.subr.bf16.mxu0 0
  %1992 = vmatpush1.bf16.msra.mxu0 %v1534
  %1993 = vmatprep.subr.bf16.mxu0 0
  %1994 = vmatpush1.bf16.msra.mxu0 %v1535
  %1995 = vmatprep.subr.bf16.mxu0 0
  %1996 = vmatpush1.bf16.msra.mxu0 %v1536
  %1997 = vmatprep.subr.bf16.mxu0 0
  %1998 = vmatpush1.bf16.msra.mxu0 %v1537
  %1999 = vmatprep.subr.bf16.mxu0 0
  %2000 = vmatpush1.bf16.msra.mxu0 %v1538
  %2001 = vmatprep.subr.bf16.mxu0 0
  %2002 = vmatpush1.bf16.msra.mxu0 %v1539
  %2003 = vmatprep.subr.bf16.mxu0 0
  %2004 = vmatpush1.bf16.msra.mxu0 %v1540
  %2005 = vmatprep.subr.bf16.mxu0 0
  %2006 = vmatpush1.bf16.msra.mxu0 %v1541
  %2007 = vmatprep.subr.bf16.mxu0 0
  %2008 = vmatpush1.bf16.msra.mxu0 %v1542
  %2009 = vmatprep.subr.bf16.mxu0 0
  %2010 = vmatpush1.bf16.msra.mxu0 %v1543
  %2011 = vmatprep.subr.bf16.mxu0 0
  %2012 = vmatpush1.bf16.msra.mxu0 %v1544
  %2013 = vmatprep.subr.bf16.mxu0 0
  %2014 = vmatpush1.bf16.msra.mxu0 %v1545
  %2015 = vmatprep.subr.bf16.mxu0 0
  %2016 = vmatpush1.bf16.msra.mxu0 %v1546
  %2017 = vmatprep.subr.bf16.mxu0 0
  %2018 = vmatpush1.bf16.msra.mxu0 %v1547
  %2019 = vmatprep.subr.bf16.mxu0 0
  %2020 = vmatpush1.bf16.msra.mxu0 %v1548
  %2021 = vmatprep.mubr.bf16.mxu0 %v795
  %2022 = vmatmul.mubr.bf16.gmra.mrb[0].mxu0 %v794
  %v2023 = vpop.f32.mrb[0].mxu0
  %v2024 = vadd.f32 %v1984, %v2023
  %v2025 = vpop.f32.mrb[0].mxu0
  %v2026 = vpop.f32.mrb[0].mxu0
  %v2027 = vpop.f32.mrb[0].mxu0
  %2028 = vdwg.mxu0
  %2029 = vmatprep.subr.bf16.mxu0 0
  %2030 = vmatpush1.bf16.msra.mxu0 %v1549
  %2031 = vmatprep.subr.bf16.mxu0 0
  %2032 = vmatpush1.bf16.msra.mxu0 %v1550
  %2033 = vmatprep.subr.bf16.mxu0 0
  %2034 = vmatpush1.bf16.msra.mxu0 %v1551
  %2035 = vmatprep.subr.bf16.mxu0 0
  %2036 = vmatpush1.bf16.msra.mxu0 %v1552
  %2037 = vmatprep.subr.bf16.mxu0 0
  %2038 = vmatpush1.bf16.msra.mxu0 %v1553
  %2039 = vmatprep.subr.bf16.mxu0 0
  %2040 = vmatpush1.bf16.msra.mxu0 %v1554
  %2041 = vmatprep.subr.bf16.mxu0 0
  %2042 = vmatpush1.bf16.msra.mxu0 %v1555
  %2043 = vmatprep.subr.bf16.mxu0 0
  %2044 = vmatpush1.bf16.msra.mxu0 %v1556
  %2045 = vmatprep.subr.bf16.mxu0 0
  %2046 = vmatpush1.bf16.msra.mxu0 %v1557
  %2047 = vmatprep.subr.bf16.mxu0 0
  %2048 = vmatpush1.bf16.msra.mxu0 %v1558
  %2049 = vmatprep.subr.bf16.mxu0 0
  %2050 = vmatpush1.bf16.msra.mxu0 %v1559
  %2051 = vmatprep.subr.bf16.mxu0 0
  %2052 = vmatpush1.bf16.msra.mxu0 %v1560
  %2053 = vmatprep.subr.bf16.mxu0 0
  %2054 = vmatpush1.bf16.msra.mxu0 %v1561
  %2055 = vmatprep.subr.bf16.mxu0 0
  %2056 = vmatpush1.bf16.msra.mxu0 %v1562
  %2057 = vmatprep.subr.bf16.mxu0 0
  %2058 = vmatpush1.bf16.msra.mxu0 %v1563
  %2059 = vmatprep.subr.bf16.mxu0 0
  %2060 = vmatpush1.bf16.msra.mxu0 %v1564
  %2061 = vmatprep.mubr.bf16.mxu0 %v797
  %2062 = vmatmul.mubr.bf16.gmra.mrb[0].mxu0 %v796
  %v2063 = vpop.f32.mrb[0].mxu0
  %v2064 = vadd.f32 %v2024, %v2063
  %v2065 = vpop.f32.mrb[0].mxu0
  %v2066 = vpop.f32.mrb[0].mxu0
  %v2067 = vpop.f32.mrb[0].mxu0
  %2068 = vdwg.mxu0
  %2069 = vmatprep.subr.bf16.mxu0 0
  %2070 = vmatpush1.bf16.msra.mxu0 %v1565
  %2071 = vmatprep.subr.bf16.mxu0 0
  %2072 = vmatpush1.bf16.msra.mxu0 %v1566
  %2073 = vmatprep.subr.bf16.mxu0 0
  %2074 = vmatpush1.bf16.msra.mxu0 %v1567
  %2075 = vmatprep.subr.bf16.mxu0 0
  %2076 = vmatpush1.bf16.msra.mxu0 %v1568
  %2077 = vmatprep.subr.bf16.mxu0 0
  %2078 = vmatpush1.bf16.msra.mxu0 %v1569
  %2079 = vmatprep.subr.bf16.mxu0 0
  %2080 = vmatpush1.bf16.msra.mxu0 %v1570
  %2081 = vmatprep.subr.bf16.mxu0 0
  %2082 = vmatpush1.bf16.msra.mxu0 %v1571
  %2083 = vmatprep.subr.bf16.mxu0 0
  %2084 = vmatpush1.bf16.msra.mxu0 %v1572
  %2085 = vmatprep.subr.bf16.mxu0 0
  %2086 = vmatpush1.bf16.msra.mxu0 %v1573
  %2087 = vmatprep.subr.bf16.mxu0 0
  %2088 = vmatpush1.bf16.msra.mxu0 %v1574
  %2089 = vmatprep.subr.bf16.mxu0 0
  %2090 = vmatpush1.bf16.msra.mxu0 %v1575
  %2091 = vmatprep.subr.bf16.mxu0 0
  %2092 = vmatpush1.bf16.msra.mxu0 %v1576
  %2093 = vmatprep.subr.bf16.mxu0 0
  %2094 = vmatpush1.bf16.msra.mxu0 %v1577
  %2095 = vmatprep.subr.bf16.mxu0 0
  %2096 = vmatpush1.bf16.msra.mxu0 %v1578
  %2097 = vmatprep.subr.bf16.mxu0 0
  %2098 = vmatpush1.bf16.msra.mxu0 %v1579
  %2099 = vmatprep.subr.bf16.mxu0 0
  %2100 = vmatpush1.bf16.msra.mxu0 %v1580
  %2101 = vmatprep.mubr.bf16.mxu0 %v799
  %2102 = vmatmul.mubr.bf16.gmra.mrb[0].mxu0 %v798
  %v2103 = vpop.f32.mrb[0].mxu0
  %v2104 = vadd.f32 %v2064, %v2103
  %v2105 = vpop.f32.mrb[0].mxu0
  %v2106 = vpop.f32.mrb[0].mxu0
  %v2107 = vpop.f32.mrb[0].mxu0
  %2108 = vdwg.mxu0
  %2109 = vmatprep.subr.bf16.mxu0 0
  %2110 = vmatpush1.bf16.msra.mxu0 %v1581
  %2111 = vmatprep.subr.bf16.mxu0 0
  %2112 = vmatpush1.bf16.msra.mxu0 %v1582
  %2113 = vmatprep.subr.bf16.mxu0 0
  %2114 = vmatpush1.bf16.msra.mxu0 %v1583
  %2115 = vmatprep.subr.bf16.mxu0 0
  %2116 = vmatpush1.bf16.msra.mxu0 %v1584
  %2117 = vmatprep.subr.bf16.mxu0 0
  %2118 = vmatpush1.bf16.msra.mxu0 %v1585
  %2119 = vmatprep.subr.bf16.mxu0 0
  %2120 = vmatpush1.bf16.msra.mxu0 %v1586
  %2121 = vmatprep.subr.bf16.mxu0 0
  %2122 = vmatpush1.bf16.msra.mxu0 %v1587
  %2123 = vmatprep.subr.bf16.mxu0 0
  %2124 = vmatpush1.bf16.msra.mxu0 %v1588
  %2125 = vmatprep.subr.bf16.mxu0 0
  %2126 = vmatpush1.bf16.msra.mxu0 %v1589
  %2127 = vmatprep.subr.bf16.mxu0 0
  %2128 = vmatpush1.bf16.msra.mxu0 %v1590
  %2129 = vmatprep.subr.bf16.mxu0 0
  %2130 = vmatpush1.bf16.msra.mxu0 0
  %2131 = vmatprep.subr.bf16.mxu0 0
  %2132 = vmatpush1.bf16.msra.mxu0 0
  %2133 = vmatprep.subr.bf16.mxu0 0
  %2134 = vmatpush1.bf16.msra.mxu0 0
  %2135 = vmatprep.subr.bf16.mxu0 0
  %2136 = vmatpush1.bf16.msra.mxu0 0
  %2137 = vmatprep.subr.bf16.mxu0 0
  %2138 = vmatpush1.bf16.msra.mxu0 0
  %2139 = vmatprep.subr.bf16.mxu0 0
  %2140 = vmatpush1.bf16.msra.mxu0 0
  %2141 = vmatprep.mubr.bf16.mxu0 %v1747
  %2142 = vmatmul.mubr.bf16.gmra.mrb[0].mxu0 %v800
  %v2143 = vpop.f32.mrb[0].mxu0
  %v2144 = vadd.f32 %v2104, %v2143
  %v2145 = vpop.f32.mrb[0].mxu0
  %v2146 = vpop.f32.mrb[0].mxu0
  %v2147 = vpop.f32.mrb[0].mxu0
  %2148 = vdwg.mxu0
  %v2162 = vunpack.c.l.b16 %v21
  %v2163 = vunpack.c.h.b16 %v21
  %v2164 = vunpack.c.l.b16 %v22
  %v2165 = vunpack.c.h.b16 %v22
  %v2166 = vunpack.c.l.b16 %v23
  %v2167 = vunpack.c.h.b16 %v23
  %v2168 = vunpack.c.l.b16 %v24
  %v2169 = vunpack.c.h.b16 %v24
  %v2170 = vunpack.c.l.b16 %v25
  %v2171 = vunpack.c.h.b16 %v25
  %v2172 = vunpack.c.l.b16 %v26
  %v2173 = vunpack.c.h.b16 %v26
  %v2174 = vunpack.c.l.b16 %v27
  %v2175 = vunpack.c.h.b16 %v27
  %v2176 = vunpack.c.l.b16 %v28
  %v2177 = vunpack.c.h.b16 %v28
  %v2178 = vunpack.c.l.b16 %v29
  %v2179 = vunpack.c.h.b16 %v29
  %v2180 = vunpack.c.l.b16 %v30
  %v2181 = vunpack.c.h.b16 %v30
  %v2182 = vunpack.c.l.b16 %v31
  %v2183 = vunpack.c.h.b16 %v31
  %v2184 = vunpack.c.l.b16 %v32
  %v2185 = vunpack.c.h.b16 %v32
  %v2186 = vunpack.c.l.b16 %v33
  %v2187 = vpack.c.b16 %v2162, %v2162
  %v2188 = vpack.c.b16 %v2163, %v2163
  %v2189 = vpack.c.b16 %v2164, %v2164
  %v2190 = vpack.c.b16 %v2165, %v2165
  %v2191 = vpack.c.b16 %v2166, %v2166
  %v2192 = vpack.c.b16 %v2167, %v2167
  %v2193 = vpack.c.b16 %v2168, %v2168
  %v2194 = vpack.c.b16 %v2169, %v2169
  %v2195 = vpack.c.b16 %v2170, %v2170
  %v2196 = vpack.c.b16 %v2171, %v2171
  %v2197 = vpack.c.b16 %v2172, %v2172
  %v2198 = vpack.c.b16 %v2173, %v2173
  %v2199 = vpack.c.b16 %v2174, %v2174
  %v2200 = vpack.c.b16 %v2175, %v2175
  %v2201 = vpack.c.b16 %v2176, %v2176
  %v2202 = vpack.c.b16 %v2177, %v2177
  %v2203 = vpack.c.b16 %v2178, %v2178
  %v2204 = vpack.c.b16 %v2179, %v2179
  %v2205 = vpack.c.b16 %v2180, %v2180
  %v2206 = vpack.c.b16 %v2181, %v2181
  %v2207 = vpack.c.b16 %v2182, %v2182
  %v2208 = vpack.c.b16 %v2183, %v2183
  %v2209 = vpack.c.b16 %v2184, %v2184
  %v2210 = vpack.c.b16 %v2185, %v2185
  %v2211 = vpack.c.b16 %v2186, %v2186
  %v2637 = vunpack.c.l.b16 %v34
  %v2638 = vunpack.c.l.b16 %v35
  %v2639 = vunpack.c.l.b16 %v36
  %v2640 = vunpack.c.l.b16 %v37
  %v2641 = vunpack.c.l.b16 %v38
  %v2642 = vunpack.c.l.b16 %v39
  %v2643 = vunpack.c.l.b16 %v40
  %v2644 = vunpack.c.l.b16 %v41
  %v2645 = vunpack.c.l.b16 %v42
  %v2646 = vunpack.c.l.b16 %v43
  %v2647 = vunpack.c.l.b16 %v44
  %v2648 = vunpack.c.l.b16 %v45
  %v2649 = vunpack.c.l.b16 %v46
  %v2650 = vunpack.c.l.b16 %v47
  %v2651 = vunpack.c.l.b16 %v48
  %v2652 = vunpack.c.l.b16 %v49
  %v2653 = vunpack.c.l.b16 %v50
  %v2654 = vunpack.c.l.b16 %v51
  %v2655 = vunpack.c.l.b16 %v52
  %v2656 = vunpack.c.l.b16 %v53
  %v2657 = vunpack.c.l.b16 %v54
  %v2658 = vunpack.c.l.b16 %v55
  %v2659 = vunpack.c.l.b16 %v56
  %v2660 = vunpack.c.l.b16 %v57
  %v2661 = vunpack.c.l.b16 %v58
  %v2662 = vunpack.c.l.b16 %v59
  %v2663 = vunpack.c.l.b16 %v60
  %v2664 = vunpack.c.l.b16 %v61
  %v2665 = vunpack.c.l.b16 %v62
  %v2666 = vunpack.c.l.b16 %v63
  %v2667 = vunpack.c.l.b16 %v64
  %v2668 = vunpack.c.l.b16 %v65
  %v2669 = vunpack.c.l.b16 %v66
  %v2670 = vunpack.c.l.b16 %v67
  %v2671 = vunpack.c.l.b16 %v68
  %v2672 = vunpack.c.l.b16 %v69
  %v2673 = vunpack.c.l.b16 %v70
  %v2674 = vunpack.c.l.b16 %v71
  %v2675 = vunpack.c.l.b16 %v72
  %v2676 = vunpack.c.l.b16 %v73
  %v2677 = vunpack.c.l.b16 %v74
  %v2678 = vunpack.c.l.b16 %v75
  %v2679 = vunpack.c.l.b16 %v76
  %v2680 = vunpack.c.l.b16 %v77
  %v2681 = vunpack.c.l.b16 %v78
  %v2682 = vunpack.c.l.b16 %v79
  %v2683 = vunpack.c.l.b16 %v80
  %v2684 = vunpack.c.l.b16 %v81
  %v2685 = vunpack.c.l.b16 %v82
  %v2686 = vunpack.c.l.b16 %v83
  %v2687 = vunpack.c.l.b16 %v84
  %v2688 = vunpack.c.l.b16 %v85
  %v2689 = vunpack.c.l.b16 %v86
  %v2690 = vunpack.c.l.b16 %v87
  %v2691 = vunpack.c.l.b16 %v88
  %v2692 = vunpack.c.l.b16 %v89
  %v2693 = vunpack.c.l.b16 %v90
  %v2694 = vunpack.c.l.b16 %v91
  %v2695 = vunpack.c.l.b16 %v92
  %v2696 = vunpack.c.l.b16 %v93
  %v2697 = vunpack.c.l.b16 %v94
  %v2698 = vunpack.c.l.b16 %v95
  %v2699 = vunpack.c.l.b16 %v96
  %v2700 = vunpack.c.l.b16 %v97
  %v2701 = vunpack.c.l.b16 %v98
  %v2702 = vunpack.c.l.b16 %v99
  %v2703 = vunpack.c.l.b16 %v100
  %v2704 = vunpack.c.l.b16 %v101
  %v2705 = vunpack.c.l.b16 %v102
  %v2706 = vunpack.c.l.b16 %v103
  %v2707 = vunpack.c.l.b16 %v104
  %v2708 = vunpack.c.l.b16 %v105
  %v2709 = vunpack.c.l.b16 %v106
  %v2710 = vunpack.c.l.b16 %v107
  %v2711 = vunpack.c.l.b16 %v108
  %v2712 = vunpack.c.l.b16 %v109
  %v2713 = vunpack.c.l.b16 %v110
  %v2714 = vunpack.c.l.b16 %v111
  %v2715 = vunpack.c.l.b16 %v112
  %v2716 = vunpack.c.l.b16 %v113
  %v2717 = vunpack.c.l.b16 %v114
  %v2718 = vunpack.c.l.b16 %v115
  %v2719 = vunpack.c.l.b16 %v116
  %v2720 = vunpack.c.l.b16 %v117
  %v2721 = vunpack.c.l.b16 %v118
  %v2722 = vunpack.c.l.b16 %v119
  %v2723 = vunpack.c.l.b16 %v120
  %v2724 = vunpack.c.l.b16 %v121
  %v2725 = vunpack.c.l.b16 %v122
  %v2726 = vunpack.c.l.b16 %v123
  %v2727 = vunpack.c.l.b16 %v124
  %v2728 = vunpack.c.l.b16 %v125
  %v2729 = vunpack.c.l.b16 %v126
  %v2730 = vunpack.c.l.b16 %v127
  %v2731 = vunpack.c.l.b16 %v128
  %v2732 = vunpack.c.l.b16 %v129
  %v2733 = vunpack.c.l.b16 %v130
  %v2734 = vunpack.c.l.b16 %v131
  %v2735 = vunpack.c.l.b16 %v132
  %v2736 = vunpack.c.l.b16 %v133
  %v2737 = vunpack.c.l.b16 %v134
  %v2738 = vunpack.c.l.b16 %v135
  %v2739 = vunpack.c.l.b16 %v136
  %v2740 = vunpack.c.l.b16 %v137
  %v2741 = vunpack.c.l.b16 %v138
  %v2742 = vunpack.c.l.b16 %v139
  %v2743 = vunpack.c.l.b16 %v140
  %v2744 = vunpack.c.l.b16 %v141
  %v2745 = vunpack.c.l.b16 %v142
  %v2746 = vunpack.c.l.b16 %v143
  %v2747 = vunpack.c.l.b16 %v144
  %v2748 = vunpack.c.l.b16 %v145
  %v2749 = vunpack.c.l.b16 %v146
  %v2750 = vunpack.c.l.b16 %v147
  %v2751 = vunpack.c.l.b16 %v148
  %v2752 = vunpack.c.l.b16 %v149
  %v2753 = vunpack.c.l.b16 %v150
  %v2754 = vunpack.c.l.b16 %v151
  %v2755 = vunpack.c.l.b16 %v152
  %v2756 = vunpack.c.l.b16 %v153
  %v2757 = vunpack.c.l.b16 %v154
  %v2758 = vunpack.c.l.b16 %v155
  %v2759 = vunpack.c.l.b16 %v156
  %v2760 = vunpack.c.l.b16 %v157
  %v2761 = vunpack.c.l.b16 %v158
  %v2762 = vunpack.c.l.b16 %v159
  %v2763 = vunpack.c.l.b16 %v160
  %v2764 = vunpack.c.l.b16 %v161
  %v2765 = vunpack.c.l.b16 %v162
  %v2766 = vunpack.c.l.b16 %v163
  %v2767 = vunpack.c.l.b16 %v164
  %v2768 = vunpack.c.l.b16 %v165
  %v2769 = vunpack.c.l.b16 %v166
  %v2770 = vunpack.c.l.b16 %v167
  %v2771 = vunpack.c.l.b16 %v168
  %v2772 = vunpack.c.l.b16 %v169
  %v2773 = vunpack.c.l.b16 %v170
  %v2774 = vunpack.c.l.b16 %v171
  %v2775 = vunpack.c.l.b16 %v172
  %v2776 = vunpack.c.l.b16 %v173
  %v2777 = vunpack.c.l.b16 %v174
  %v2778 = vunpack.c.l.b16 %v175
  %v2779 = vunpack.c.l.b16 %v176
  %v2780 = vunpack.c.l.b16 %v177
  %v2781 = vunpack.c.l.b16 %v178
  %v2782 = vunpack.c.l.b16 %v179
  %v2783 = vunpack.c.l.b16 %v180
  %v2784 = vunpack.c.l.b16 %v181
  %v2785 = vunpack.c.l.b16 %v182
  %v2786 = vunpack.c.l.b16 %v183
  %v2787 = vunpack.c.l.b16 %v184
  %v2788 = vunpack.c.l.b16 %v185
  %v2789 = vunpack.c.l.b16 %v186
  %v2790 = vunpack.c.l.b16 %v187
  %v2791 = vunpack.c.l.b16 %v188
  %v2792 = vunpack.c.l.b16 %v189
  %v2793 = vunpack.c.l.b16 %v190
  %v2794 = vunpack.c.l.b16 %v191
  %v2795 = vunpack.c.l.b16 %v192
  %v2796 = vunpack.c.l.b16 %v193
  %v2797 = vunpack.c.l.b16 %v194
  %v2798 = vunpack.c.l.b16 %v195
  %v2799 = vunpack.c.l.b16 %v196
  %v2800 = vunpack.c.l.b16 %v197
  %v2801 = vunpack.c.l.b16 %v198
  %v2802 = vunpack.c.l.b16 %v199
  %v2803 = vunpack.c.l.b16 %v200
  %v2804 = vunpack.c.l.b16 %v201
  %v2805 = vunpack.c.l.b16 %v202
  %v2806 = vunpack.c.l.b16 %v203
  %v2807 = vunpack.c.l.b16 %v204
  %v2808 = vunpack.c.l.b16 %v205
  %v2809 = vunpack.c.l.b16 %v206
  %v2810 = vunpack.c.l.b16 %v207
  %v2811 = vunpack.c.l.b16 %v208
  %v2812 = vunpack.c.l.b16 %v209
  %v2813 = vunpack.c.l.b16 %v210
  %v2814 = vunpack.c.l.b16 %v211
  %v2815 = vunpack.c.l.b16 %v212
  %v2816 = vunpack.c.l.b16 %v213
  %v2817 = vunpack.c.l.b16 %v214
  %v2818 = vunpack.c.l.b16 %v215
  %v2819 = vunpack.c.l.b16 %v216
  %v2820 = vunpack.c.l.b16 %v217
  %v2821 = vunpack.c.l.b16 %v218
  %v2822 = vunpack.c.l.b16 %v219
  %v2823 = vunpack.c.l.b16 %v220
  %v2824 = vunpack.c.l.b16 %v221
  %v2825 = vunpack.c.l.b16 %v222
  %v2826 = vunpack.c.l.b16 %v223
  %v2827 = vunpack.c.l.b16 %v224
  %v2828 = vunpack.c.l.b16 %v225
  %v2829 = vunpack.c.l.b16 %v226
  %v2830 = vunpack.c.l.b16 %v227
  %v2831 = vunpack.c.l.b16 %v228
  %v2832 = vunpack.c.l.b16 %v229
  %v2833 = vunpack.c.l.b16 %v230
  %v2834 = vunpack.c.l.b16 %v231
  %v2835 = vunpack.c.l.b16 %v232
  %v2836 = vunpack.c.l.b16 %v233
  %v2837 = vunpack.c.l.b16 %v234
  %v2838 = vunpack.c.l.b16 %v235
  %v2839 = vunpack.c.l.b16 %v236
  %v2840 = vunpack.c.l.b16 %v237
  %v2841 = vunpack.c.l.b16 %v238
  %v2842 = vunpack.c.l.b16 %v239
  %v2843 = vunpack.c.l.b16 %v240
  %v2844 = vunpack.c.l.b16 %v241
  %v2845 = vunpack.c.l.b16 %v242
  %v2846 = vunpack.c.l.b16 %v243
  %v2847 = vunpack.c.l.b16 %v244
  %v2848 = vunpack.c.l.b16 %v245
  %v2849 = vunpack.c.l.b16 %v246
  %v2850 = vunpack.c.l.b16 %v247
  %v2851 = vunpack.c.l.b16 %v248
  %v2852 = vunpack.c.l.b16 %v249
  %v2853 = vunpack.c.l.b16 %v250
  %v2854 = vunpack.c.l.b16 %v251
  %v2855 = vunpack.c.l.b16 %v252
  %v2856 = vunpack.c.l.b16 %v253
  %v2857 = vunpack.c.l.b16 %v254
  %v2858 = vunpack.c.l.b16 %v255
  %v2859 = vunpack.c.l.b16 %v256
  %v2860 = vunpack.c.l.b16 %v257
  %v2861 = vunpack.c.l.b16 %v258
  %v2862 = vunpack.c.l.b16 %v259
  %v2863 = vunpack.c.l.b16 %v260
  %v2864 = vunpack.c.l.b16 %v261
  %v2865 = vunpack.c.l.b16 %v262
  %v2866 = vunpack.c.l.b16 %v263
  %v2867 = vunpack.c.l.b16 %v264
  %v2868 = vunpack.c.l.b16 %v265
  %v2869 = vunpack.c.l.b16 %v266
  %v2870 = vunpack.c.l.b16 %v267
  %v2871 = vunpack.c.l.b16 %v268
  %v2872 = vunpack.c.l.b16 %v269
  %v2873 = vunpack.c.l.b16 %v270
  %v2874 = vunpack.c.l.b16 %v271
  %v2875 = vunpack.c.l.b16 %v272
  %v2876 = vunpack.c.l.b16 %v273
  %v2877 = vunpack.c.l.b16 %v274
  %v2878 = vunpack.c.l.b16 %v275
  %v2879 = vunpack.c.l.b16 %v276
  %v2880 = vunpack.c.l.b16 %v277
  %v2881 = vunpack.c.l.b16 %v278
  %v2882 = vunpack.c.l.b16 %v279
  %v2883 = vunpack.c.l.b16 %v280
  %v2884 = vunpack.c.l.b16 %v281
  %v2885 = vunpack.c.l.b16 %v282
  %v2886 = vunpack.c.l.b16 %v283
  %v2887 = vunpack.c.l.b16 %v284
  %v2888 = vunpack.c.l.b16 %v285
  %v2889 = vunpack.c.l.b16 %v286
  %v2890 = vunpack.c.l.b16 %v287
  %v2891 = vunpack.c.l.b16 %v288
  %v2892 = vunpack.c.l.b16 %v289
  %v2893 = vunpack.c.l.b16 %v290
  %v2894 = vunpack.c.l.b16 %v291
  %v2895 = vunpack.c.l.b16 %v292
  %v2896 = vunpack.c.l.b16 %v293
  %v2897 = vunpack.c.l.b16 %v294
  %v2898 = vunpack.c.l.b16 %v295
  %v2899 = vunpack.c.l.b16 %v296
  %v2900 = vunpack.c.l.b16 %v297
  %v2901 = vunpack.c.l.b16 %v298
  %v2902 = vunpack.c.l.b16 %v299
  %v2903 = vunpack.c.l.b16 %v300
  %v2904 = vunpack.c.l.b16 %v301
  %v2905 = vunpack.c.l.b16 %v302
  %v2906 = vunpack.c.l.b16 %v303
  %v2907 = vunpack.c.l.b16 %v304
  %v2908 = vunpack.c.l.b16 %v305
  %v2909 = vunpack.c.l.b16 %v306
  %v2910 = vunpack.c.l.b16 %v307
  %v2911 = vunpack.c.l.b16 %v308
  %v2912 = vunpack.c.l.b16 %v309
  %v2913 = vunpack.c.l.b16 %v310
  %v2914 = vunpack.c.l.b16 %v311
  %v2915 = vunpack.c.l.b16 %v312
  %v2916 = vunpack.c.l.b16 %v313
  %v2917 = vunpack.c.l.b16 %v314
  %v2918 = vunpack.c.l.b16 %v315
  %v2919 = vunpack.c.l.b16 %v316
  %v2920 = vunpack.c.l.b16 %v317
  %v2921 = vunpack.c.l.b16 %v318
  %v2922 = vunpack.c.l.b16 %v319
  %v2923 = vunpack.c.l.b16 %v320
  %v2924 = vunpack.c.l.b16 %v321
  %v2925 = vunpack.c.l.b16 %v322
  %v2926 = vunpack.c.l.b16 %v323
  %v2927 = vunpack.c.l.b16 %v324
  %v2928 = vunpack.c.l.b16 %v325
  %v2929 = vunpack.c.l.b16 %v326
  %v2930 = vunpack.c.l.b16 %v327
  %v2931 = vunpack.c.l.b16 %v328
  %v2932 = vunpack.c.l.b16 %v329
  %v2933 = vunpack.c.l.b16 %v330
  %v2934 = vunpack.c.l.b16 %v331
  %v2935 = vunpack.c.l.b16 %v332
  %v2936 = vunpack.c.l.b16 %v333
  %v2937 = vunpack.c.l.b16 %v334
  %v2938 = vunpack.c.l.b16 %v335
  %v2939 = vunpack.c.l.b16 %v336
  %v2940 = vunpack.c.l.b16 %v337
  %v2941 = vunpack.c.l.b16 %v338
  %v2942 = vunpack.c.l.b16 %v339
  %v2943 = vunpack.c.l.b16 %v340
  %v2944 = vunpack.c.l.b16 %v341
  %v2945 = vunpack.c.l.b16 %v342
  %v2946 = vunpack.c.l.b16 %v343
  %v2947 = vunpack.c.l.b16 %v344
  %v2948 = vunpack.c.l.b16 %v345
  %v2949 = vunpack.c.l.b16 %v346
  %v2950 = vunpack.c.l.b16 %v347
  %v2951 = vunpack.c.l.b16 %v348
  %v2952 = vunpack.c.l.b16 %v349
  %v2953 = vunpack.c.l.b16 %v350
  %v2954 = vunpack.c.l.b16 %v351
  %v2955 = vunpack.c.l.b16 %v352
  %v2956 = vunpack.c.l.b16 %v353
  %v2957 = vunpack.c.l.b16 %v354
  %v2958 = vunpack.c.l.b16 %v355
  %v2959 = vunpack.c.l.b16 %v356
  %v2960 = vunpack.c.l.b16 %v357
  %v2961 = vunpack.c.l.b16 %v358
  %v2962 = vunpack.c.l.b16 %v359
  %v2963 = vunpack.c.l.b16 %v360
  %v2964 = vunpack.c.l.b16 %v361
  %v2965 = vunpack.c.l.b16 %v362
  %v2966 = vunpack.c.l.b16 %v363
  %v2967 = vunpack.c.l.b16 %v364
  %v2968 = vunpack.c.l.b16 %v365
  %v2969 = vunpack.c.l.b16 %v366
  %v2970 = vunpack.c.l.b16 %v367
  %v2971 = vunpack.c.l.b16 %v368
  %v2972 = vunpack.c.l.b16 %v369
  %v2973 = vunpack.c.l.b16 %v370
  %v2974 = vunpack.c.l.b16 %v371
  %v2975 = vunpack.c.l.b16 %v372
  %v2976 = vunpack.c.l.b16 %v373
  %v2977 = vunpack.c.l.b16 %v374
  %v2978 = vunpack.c.l.b16 %v375
  %v2979 = vunpack.c.l.b16 %v376
  %v2980 = vunpack.c.l.b16 %v377
  %v2981 = vunpack.c.l.b16 %v378
  %v2982 = vunpack.c.l.b16 %v379
  %v2983 = vunpack.c.l.b16 %v380
  %v2984 = vunpack.c.l.b16 %v381
  %v2985 = vunpack.c.l.b16 %v382
  %v2986 = vunpack.c.l.b16 %v383
  %v2987 = vunpack.c.l.b16 %v384
  %v2988 = vunpack.c.l.b16 %v385
  %v2989 = vunpack.c.l.b16 %v386
  %v2990 = vunpack.c.l.b16 %v387
  %v2991 = vunpack.c.l.b16 %v388
  %v2992 = vunpack.c.l.b16 %v389
  %v2993 = vunpack.c.l.b16 %v390
  %v2994 = vunpack.c.l.b16 %v391
  %v2995 = vunpack.c.l.b16 %v392
  %v2996 = vunpack.c.l.b16 %v393
  %v2997 = vunpack.c.l.b16 %v394
  %v2998 = vunpack.c.l.b16 %v395
  %v2999 = vunpack.c.l.b16 %v396
  %v3000 = vunpack.c.l.b16 %v397
  %v3001 = vunpack.c.l.b16 %v398
  %v3002 = vunpack.c.l.b16 %v399
  %v3003 = vunpack.c.l.b16 %v400
  %v3004 = vunpack.c.l.b16 %v401
  %v3005 = vunpack.c.l.b16 %v402
  %v3006 = vunpack.c.l.b16 %v403
  %v3007 = vunpack.c.l.b16 %v404
  %v3008 = vunpack.c.l.b16 %v405
  %v3009 = vunpack.c.l.b16 %v406
  %v3010 = vunpack.c.l.b16 %v407
  %v3011 = vunpack.c.l.b16 %v408
  %v3012 = vunpack.c.l.b16 %v409
  %v3013 = vunpack.c.l.b16 %v410
  %v3014 = vunpack.c.l.b16 %v411
  %v3015 = vunpack.c.l.b16 %v412
  %v3016 = vunpack.c.l.b16 %v413
  %v3017 = vunpack.c.l.b16 %v414
  %v3018 = vunpack.c.l.b16 %v415
  %v3019 = vunpack.c.l.b16 %v416
  %v3020 = vunpack.c.l.b16 %v417
  %v3021 = vunpack.c.l.b16 %v418
  %v3022 = vunpack.c.l.b16 %v419
  %v3023 = vunpack.c.l.b16 %v420
  %v3024 = vunpack.c.l.b16 %v421
  %v3025 = vunpack.c.l.b16 %v422
  %v3026 = vunpack.c.l.b16 %v423
  %v3027 = vunpack.c.l.b16 %v424
  %v3028 = vunpack.c.l.b16 %v425
  %v3029 = vunpack.c.l.b16 %v426
  %v3030 = vunpack.c.l.b16 %v427
  %v3031 = vunpack.c.l.b16 %v428
  %v3032 = vunpack.c.l.b16 %v429
  %v3033 = vunpack.c.l.b16 %v430
  %v3034 = vunpack.c.l.b16 %v431
  %v3035 = vunpack.c.l.b16 %v432
  %v3036 = vunpack.c.l.b16 %v433
  %v3037 = vpack.c.b16 %v2638, %v2637
  %v3038 = vpack.c.b16 %v2640, %v2639
  %v3039 = vpack.c.b16 %v2642, %v2641
  %v3040 = vpack.c.b16 %v2644, %v2643
  %v3041 = vpack.c.b16 %v2646, %v2645
  %v3042 = vpack.c.b16 %v2648, %v2647
  %v3043 = vpack.c.b16 %v2650, %v2649
  %v3044 = vpack.c.b16 %v2652, %v2651
  %v3045 = vpack.c.b16 %v2654, %v2653
  %v3046 = vpack.c.b16 %v2656, %v2655
  %v3047 = vpack.c.b16 %v2658, %v2657
  %v3048 = vpack.c.b16 %v2660, %v2659
  %v3049 = vpack.c.b16 %v2662, %v2661
  %v3050 = vpack.c.b16 %v2664, %v2663
  %v3051 = vpack.c.b16 %v2666, %v2665
  %v3052 = vpack.c.b16 %v2668, %v2667
  %v3053 = vpack.c.b16 %v2670, %v2669
  %v3054 = vpack.c.b16 %v2672, %v2671
  %v3055 = vpack.c.b16 %v2674, %v2673
  %v3056 = vpack.c.b16 %v2676, %v2675
  %v3057 = vpack.c.b16 %v2678, %v2677
  %v3058 = vpack.c.b16 %v2680, %v2679
  %v3059 = vpack.c.b16 %v2682, %v2681
  %v3060 = vpack.c.b16 %v2684, %v2683
  %v3061 = vpack.c.b16 %v2686, %v2685
  %v3062 = vpack.c.b16 %v2688, %v2687
  %v3063 = vpack.c.b16 %v2690, %v2689
  %v3064 = vpack.c.b16 %v2692, %v2691
  %v3065 = vpack.c.b16 %v2694, %v2693
  %v3066 = vpack.c.b16 %v2696, %v2695
  %v3067 = vpack.c.b16 %v2698, %v2697
  %v3068 = vpack.c.b16 %v2700, %v2699
  %v3069 = vpack.c.b16 %v2702, %v2701
  %v3070 = vpack.c.b16 %v2704, %v2703
  %v3071 = vpack.c.b16 %v2706, %v2705
  %v3072 = vpack.c.b16 %v2708, %v2707
  %v3073 = vpack.c.b16 %v2710, %v2709
  %v3074 = vpack.c.b16 %v2712, %v2711
  %v3075 = vpack.c.b16 %v2714, %v2713
  %v3076 = vpack.c.b16 %v2716, %v2715
  %v3077 = vpack.c.b16 %v2718, %v2717
  %v3078 = vpack.c.b16 %v2720, %v2719
  %v3079 = vpack.c.b16 %v2722, %v2721
  %v3080 = vpack.c.b16 %v2724, %v2723
  %v3081 = vpack.c.b16 %v2726, %v2725
  %v3082 = vpack.c.b16 %v2728, %v2727
  %v3083 = vpack.c.b16 %v2730, %v2729
  %v3084 = vpack.c.b16 %v2732, %v2731
  %v3085 = vpack.c.b16 %v2734, %v2733
  %v3086 = vpack.c.b16 %v2736, %v2735
  %v3087 = vpack.c.b16 %v2738, %v2737
  %v3088 = vpack.c.b16 %v2740, %v2739
  %v3089 = vpack.c.b16 %v2742, %v2741
  %v3090 = vpack.c.b16 %v2744, %v2743
  %v3091 = vpack.c.b16 %v2746, %v2745
  %v3092 = vpack.c.b16 %v2748, %v2747
  %v3093 = vpack.c.b16 %v2750, %v2749
  %v3094 = vpack.c.b16 %v2752, %v2751
  %v3095 = vpack.c.b16 %v2754, %v2753
  %v3096 = vpack.c.b16 %v2756, %v2755
  %v3097 = vpack.c.b16 %v2758, %v2757
  %v3098 = vpack.c.b16 %v2760, %v2759
  %v3099 = vpack.c.b16 %v2762, %v2761
  %v3100 = vpack.c.b16 %v2764, %v2763
  %v3101 = vpack.c.b16 %v2766, %v2765
  %v3102 = vpack.c.b16 %v2768, %v2767
  %v3103 = vpack.c.b16 %v2770, %v2769
  %v3104 = vpack.c.b16 %v2772, %v2771
  %v3105 = vpack.c.b16 %v2774, %v2773
  %v3106 = vpack.c.b16 %v2776, %v2775
  %v3107 = vpack.c.b16 %v2778, %v2777
  %v3108 = vpack.c.b16 %v2780, %v2779
  %v3109 = vpack.c.b16 %v2782, %v2781
  %v3110 = vpack.c.b16 %v2784, %v2783
  %v3111 = vpack.c.b16 %v2786, %v2785
  %v3112 = vpack.c.b16 %v2788, %v2787
  %v3113 = vpack.c.b16 %v2790, %v2789
  %v3114 = vpack.c.b16 %v2792, %v2791
  %v3115 = vpack.c.b16 %v2794, %v2793
  %v3116 = vpack.c.b16 %v2796, %v2795
  %v3117 = vpack.c.b16 %v2798, %v2797
  %v3118 = vpack.c.b16 %v2800, %v2799
  %v3119 = vpack.c.b16 %v2802, %v2801
  %v3120 = vpack.c.b16 %v2804, %v2803
  %v3121 = vpack.c.b16 %v2806, %v2805
  %v3122 = vpack.c.b16 %v2808, %v2807
  %v3123 = vpack.c.b16 %v2810, %v2809
  %v3124 = vpack.c.b16 %v2812, %v2811
  %v3125 = vpack.c.b16 %v2814, %v2813
  %v3126 = vpack.c.b16 %v2816, %v2815
  %v3127 = vpack.c.b16 %v2818, %v2817
  %v3128 = vpack.c.b16 %v2820, %v2819
  %v3129 = vpack.c.b16 %v2822, %v2821
  %v3130 = vpack.c.b16 %v2824, %v2823
  %v3131 = vpack.c.b16 %v2826, %v2825
  %v3132 = vpack.c.b16 %v2828, %v2827
  %v3133 = vpack.c.b16 %v2830, %v2829
  %v3134 = vpack.c.b16 %v2832, %v2831
  %v3135 = vpack.c.b16 %v2834, %v2833
  %v3136 = vpack.c.b16 %v2836, %v2835
  %v3137 = vpack.c.b16 %v2838, %v2837
  %v3138 = vpack.c.b16 %v2840, %v2839
  %v3139 = vpack.c.b16 %v2842, %v2841
  %v3140 = vpack.c.b16 %v2844, %v2843
  %v3141 = vpack.c.b16 %v2846, %v2845
  %v3142 = vpack.c.b16 %v2848, %v2847
  %v3143 = vpack.c.b16 %v2850, %v2849
  %v3144 = vpack.c.b16 %v2852, %v2851
  %v3145 = vpack.c.b16 %v2854, %v2853
  %v3146 = vpack.c.b16 %v2856, %v2855
  %v3147 = vpack.c.b16 %v2858, %v2857
  %v3148 = vpack.c.b16 %v2860, %v2859
  %v3149 = vpack.c.b16 %v2862, %v2861
  %v3150 = vpack.c.b16 %v2864, %v2863
  %v3151 = vpack.c.b16 %v2866, %v2865
  %v3152 = vpack.c.b16 %v2868, %v2867
  %v3153 = vpack.c.b16 %v2870, %v2869
  %v3154 = vpack.c.b16 %v2872, %v2871
  %v3155 = vpack.c.b16 %v2874, %v2873
  %v3156 = vpack.c.b16 %v2876, %v2875
  %v3157 = vpack.c.b16 %v2878, %v2877
  %v3158 = vpack.c.b16 %v2880, %v2879
  %v3159 = vpack.c.b16 %v2882, %v2881
  %v3160 = vpack.c.b16 %v2884, %v2883
  %v3161 = vpack.c.b16 %v2886, %v2885
  %v3162 = vpack.c.b16 %v2888, %v2887
  %v3163 = vpack.c.b16 %v2890, %v2889
  %v3164 = vpack.c.b16 %v2892, %v2891
  %v3165 = vpack.c.b16 %v2894, %v2893
  %v3166 = vpack.c.b16 %v2896, %v2895
  %v3167 = vpack.c.b16 %v2898, %v2897
  %v3168 = vpack.c.b16 %v2900, %v2899
  %v3169 = vpack.c.b16 %v2902, %v2901
  %v3170 = vpack.c.b16 %v2904, %v2903
  %v3171 = vpack.c.b16 %v2906, %v2905
  %v3172 = vpack.c.b16 %v2908, %v2907
  %v3173 = vpack.c.b16 %v2910, %v2909
  %v3174 = vpack.c.b16 %v2912, %v2911
  %v3175 = vpack.c.b16 %v2914, %v2913
  %v3176 = vpack.c.b16 %v2916, %v2915
  %v3177 = vpack.c.b16 %v2918, %v2917
  %v3178 = vpack.c.b16 %v2920, %v2919
  %v3179 = vpack.c.b16 %v2922, %v2921
  %v3180 = vpack.c.b16 %v2924, %v2923
  %v3181 = vpack.c.b16 %v2926, %v2925
  %v3182 = vpack.c.b16 %v2928, %v2927
  %v3183 = vpack.c.b16 %v2930, %v2929
  %v3184 = vpack.c.b16 %v2932, %v2931
  %v3185 = vpack.c.b16 %v2934, %v2933
  %v3186 = vpack.c.b16 %v2936, %v2935
  %v3187 = vpack.c.b16 %v2938, %v2937
  %v3188 = vpack.c.b16 %v2940, %v2939
  %v3189 = vpack.c.b16 %v2942, %v2941
  %v3190 = vpack.c.b16 %v2944, %v2943
  %v3191 = vpack.c.b16 %v2946, %v2945
  %v3192 = vpack.c.b16 %v2948, %v2947
  %v3193 = vpack.c.b16 %v2950, %v2949
  %v3194 = vpack.c.b16 %v2952, %v2951
  %v3195 = vpack.c.b16 %v2954, %v2953
  %v3196 = vpack.c.b16 %v2956, %v2955
  %v3197 = vpack.c.b16 %v2958, %v2957
  %v3198 = vpack.c.b16 %v2960, %v2959
  %v3199 = vpack.c.b16 %v2962, %v2961
  %v3200 = vpack.c.b16 %v2964, %v2963
  %v3201 = vpack.c.b16 %v2966, %v2965
  %v3202 = vpack.c.b16 %v2968, %v2967
  %v3203 = vpack.c.b16 %v2970, %v2969
  %v3204 = vpack.c.b16 %v2972, %v2971
  %v3205 = vpack.c.b16 %v2974, %v2973
  %v3206 = vpack.c.b16 %v2976, %v2975
  %v3207 = vpack.c.b16 %v2978, %v2977
  %v3208 = vpack.c.b16 %v2980, %v2979
  %v3209 = vpack.c.b16 %v2982, %v2981
  %v3210 = vpack.c.b16 %v2984, %v2983
  %v3211 = vpack.c.b16 %v2986, %v2985
  %v3212 = vpack.c.b16 %v2988, %v2987
  %v3213 = vpack.c.b16 %v2990, %v2989
  %v3214 = vpack.c.b16 %v2992, %v2991
  %v3215 = vpack.c.b16 %v2994, %v2993
  %v3216 = vpack.c.b16 %v2996, %v2995
  %v3217 = vpack.c.b16 %v2998, %v2997
  %v3218 = vpack.c.b16 %v3000, %v2999
  %v3219 = vpack.c.b16 %v3002, %v3001
  %v3220 = vpack.c.b16 %v3004, %v3003
  %v3221 = vpack.c.b16 %v3006, %v3005
  %v3222 = vpack.c.b16 %v3008, %v3007
  %v3223 = vpack.c.b16 %v3010, %v3009
  %v3224 = vpack.c.b16 %v3012, %v3011
  %v3225 = vpack.c.b16 %v3014, %v3013
  %v3226 = vpack.c.b16 %v3016, %v3015
  %v3227 = vpack.c.b16 %v3018, %v3017
  %v3228 = vpack.c.b16 %v3020, %v3019
  %v3229 = vpack.c.b16 %v3022, %v3021
  %v3230 = vpack.c.b16 %v3024, %v3023
  %v3231 = vpack.c.b16 %v3026, %v3025
  %v3232 = vpack.c.b16 %v3028, %v3027
  %v3233 = vpack.c.b16 %v3030, %v3029
  %v3234 = vpack.c.b16 %v3032, %v3031
  %v3235 = vpack.c.b16 %v3034, %v3033
  %v3236 = vpack.c.b16 %v3036, %v3035
  %3437 = vmatprep.subr.bf16.mxu0 0
  %3438 = vmatpush1.bf16.msra.mxu0 %v3037
  %3439 = vmatprep.subr.bf16.mxu0 0
  %3440 = vmatpush1.bf16.msra.mxu0 %v3038
  %3441 = vmatprep.subr.bf16.mxu0 0
  %3442 = vmatpush1.bf16.msra.mxu0 %v3039
  %3443 = vmatprep.subr.bf16.mxu0 0
  %3444 = vmatpush1.bf16.msra.mxu0 %v3040
  %3445 = vmatprep.subr.bf16.mxu0 0
  %3446 = vmatpush1.bf16.msra.mxu0 %v3041
  %3447 = vmatprep.subr.bf16.mxu0 0
  %3448 = vmatpush1.bf16.msra.mxu0 %v3042
  %3449 = vmatprep.subr.bf16.mxu0 0
  %3450 = vmatpush1.bf16.msra.mxu0 %v3043
  %3451 = vmatprep.subr.bf16.mxu0 0
  %3452 = vmatpush1.bf16.msra.mxu0 %v3044
  %3453 = vmatprep.subr.bf16.mxu0 0
  %3454 = vmatpush1.bf16.msra.mxu0 %v3045
  %3455 = vmatprep.subr.bf16.mxu0 0
  %3456 = vmatpush1.bf16.msra.mxu0 %v3046
  %3457 = vmatprep.subr.bf16.mxu0 0
  %3458 = vmatpush1.bf16.msra.mxu0 %v3047
  %3459 = vmatprep.subr.bf16.mxu0 0
  %3460 = vmatpush1.bf16.msra.mxu0 %v3048
  %3461 = vmatprep.subr.bf16.mxu0 0
  %3462 = vmatpush1.bf16.msra.mxu0 %v3049
  %3463 = vmatprep.subr.bf16.mxu0 0
  %3464 = vmatpush1.bf16.msra.mxu0 %v3050
  %3465 = vmatprep.subr.bf16.mxu0 0
  %3466 = vmatpush1.bf16.msra.mxu0 %v3051
  %3467 = vmatprep.subr.bf16.mxu0 0
  %3468 = vmatpush1.bf16.msra.mxu0 %v3052
  %3469 = vmatprep.mubr.bf16.mxu0 %v2188
  %3470 = vmatmul.mubr.bf16.gmra.mrb[0].mxu0 %v2187
  %v3471 = vpop.f32.mrb[0].mxu0
  %v3472 = vadd.f32 %v2144, %v3471
  %v3473 = vpop.f32.mrb[0].mxu0
  %v3474 = vpop.f32.mrb[0].mxu0
  %v3475 = vpop.f32.mrb[0].mxu0
  %3476 = vdwg.mxu0
  %3477 = vmatprep.subr.bf16.mxu0 0
  %3478 = vmatpush1.bf16.msra.mxu0 %v3053
  %3479 = vmatprep.subr.bf16.mxu0 0
  %3480 = vmatpush1.bf16.msra.mxu0 %v3054
  %3481 = vmatprep.subr.bf16.mxu0 0
  %3482 = vmatpush1.bf16.msra.mxu0 %v3055
  %3483 = vmatprep.subr.bf16.mxu0 0
  %3484 = vmatpush1.bf16.msra.mxu0 %v3056
  %3485 = vmatprep.subr.bf16.mxu0 0
  %3486 = vmatpush1.bf16.msra.mxu0 %v3057
  %3487 = vmatprep.subr.bf16.mxu0 0
  %3488 = vmatpush1.bf16.msra.mxu0 %v3058
  %3489 = vmatprep.subr.bf16.mxu0 0
  %3490 = vmatpush1.bf16.msra.mxu0 %v3059
  %3491 = vmatprep.subr.bf16.mxu0 0
  %3492 = vmatpush1.bf16.msra.mxu0 %v3060
  %3493 = vmatprep.subr.bf16.mxu0 0
  %3494 = vmatpush1.bf16.msra.mxu0 %v3061
  %3495 = vmatprep.subr.bf16.mxu0 0
  %3496 = vmatpush1.bf16.msra.mxu0 %v3062
  %3497 = vmatprep.subr.bf16.mxu0 0
  %3498 = vmatpush1.bf16.msra.mxu0 %v3063
  %3499 = vmatprep.subr.bf16.mxu0 0
  %3500 = vmatpush1.bf16.msra.mxu0 %v3064
  %3501 = vmatprep.subr.bf16.mxu0 0
  %3502 = vmatpush1.bf16.msra.mxu0 %v3065
  %3503 = vmatprep.subr.bf16.mxu0 0
  %3504 = vmatpush1.bf16.msra.mxu0 %v3066
  %3505 = vmatprep.subr.bf16.mxu0 0
  %3506 = vmatpush1.bf16.msra.mxu0 %v3067
  %3507 = vmatprep.subr.bf16.mxu0 0
  %3508 = vmatpush1.bf16.msra.mxu0 %v3068
  %3509 = vmatprep.mubr.bf16.mxu0 %v2190
  %3510 = vmatmul.mubr.bf16.gmra.mrb[0].mxu0 %v2189
  %v3511 = vpop.f32.mrb[0].mxu0
  %v3512 = vadd.f32 %v3472, %v3511
  %v3513 = vpop.f32.mrb[0].mxu0
  %v3514 = vpop.f32.mrb[0].mxu0
  %v3515 = vpop.f32.mrb[0].mxu0
  %3516 = vdwg.mxu0
  %3517 = vmatprep.subr.bf16.mxu0 0
  %3518 = vmatpush1.bf16.msra.mxu0 %v3069
  %3519 = vmatprep.subr.bf16.mxu0 0
  %3520 = vmatpush1.bf16.msra.mxu0 %v3070
  %3521 = vmatprep.subr.bf16.mxu0 0
  %3522 = vmatpush1.bf16.msra.mxu0 %v3071
  %3523 = vmatprep.subr.bf16.mxu0 0
  %3524 = vmatpush1.bf16.msra.mxu0 %v3072
  %3525 = vmatprep.subr.bf16.mxu0 0
  %3526 = vmatpush1.bf16.msra.mxu0 %v3073
  %3527 = vmatprep.subr.bf16.mxu0 0
  %3528 = vmatpush1.bf16.msra.mxu0 %v3074
  %3529 = vmatprep.subr.bf16.mxu0 0
  %3530 = vmatpush1.bf16.msra.mxu0 %v3075
  %3531 = vmatprep.subr.bf16.mxu0 0
  %3532 = vmatpush1.bf16.msra.mxu0 %v3076
  %3533 = vmatprep.subr.bf16.mxu0 0
  %3534 = vmatpush1.bf16.msra.mxu0 %v3077
  %3535 = vmatprep.subr.bf16.mxu0 0
  %3536 = vmatpush1.bf16.msra.mxu0 %v3078
  %3537 = vmatprep.subr.bf16.mxu0 0
  %3538 = vmatpush1.bf16.msra.mxu0 %v3079
  %3539 = vmatprep.subr.bf16.mxu0 0
  %3540 = vmatpush1.bf16.msra.mxu0 %v3080
  %3541 = vmatprep.subr.bf16.mxu0 0
  %3542 = vmatpush1.bf16.msra.mxu0 %v3081
  %3543 = vmatprep.subr.bf16.mxu0 0
  %3544 = vmatpush1.bf16.msra.mxu0 %v3082
  %3545 = vmatprep.subr.bf16.mxu0 0
  %3546 = vmatpush1.bf16.msra.mxu0 %v3083
  %3547 = vmatprep.subr.bf16.mxu0 0
  %3548 = vmatpush1.bf16.msra.mxu0 %v3084
  %3549 = vmatprep.mubr.bf16.mxu0 %v2192
  %3550 = vmatmul.mubr.bf16.gmra.mrb[0].mxu0 %v2191
  %v3551 = vpop.f32.mrb[0].mxu0
  %v3552 = vadd.f32 %v3512, %v3551
  %v3553 = vpop.f32.mrb[0].mxu0
  %v3554 = vpop.f32.mrb[0].mxu0
  %v3555 = vpop.f32.mrb[0].mxu0
  %3556 = vdwg.mxu0
  %3557 = vmatprep.subr.bf16.mxu0 0
  %3558 = vmatpush1.bf16.msra.mxu0 %v3085
  %3559 = vmatprep.subr.bf16.mxu0 0
  %3560 = vmatpush1.bf16.msra.mxu0 %v3086
  %3561 = vmatprep.subr.bf16.mxu0 0
  %3562 = vmatpush1.bf16.msra.mxu0 %v3087
  %3563 = vmatprep.subr.bf16.mxu0 0
  %3564 = vmatpush1.bf16.msra.mxu0 %v3088
  %3565 = vmatprep.subr.bf16.mxu0 0
  %3566 = vmatpush1.bf16.msra.mxu0 %v3089
  %3567 = vmatprep.subr.bf16.mxu0 0
  %3568 = vmatpush1.bf16.msra.mxu0 %v3090
  %3569 = vmatprep.subr.bf16.mxu0 0
  %3570 = vmatpush1.bf16.msra.mxu0 %v3091
  %3571 = vmatprep.subr.bf16.mxu0 0
  %3572 = vmatpush1.bf16.msra.mxu0 %v3092
  %3573 = vmatprep.subr.bf16.mxu0 0
  %3574 = vmatpush1.bf16.msra.mxu0 %v3093
  %3575 = vmatprep.subr.bf16.mxu0 0
  %3576 = vmatpush1.bf16.msra.mxu0 %v3094
  %3577 = vmatprep.subr.bf16.mxu0 0
  %3578 = vmatpush1.bf16.msra.mxu0 %v3095
  %3579 = vmatprep.subr.bf16.mxu0 0
  %3580 = vmatpush1.bf16.msra.mxu0 %v3096
  %3581 = vmatprep.subr.bf16.mxu0 0
  %3582 = vmatpush1.bf16.msra.mxu0 %v3097
  %3583 = vmatprep.subr.bf16.mxu0 0
  %3584 = vmatpush1.bf16.msra.mxu0 %v3098
  %3585 = vmatprep.subr.bf16.mxu0 0
  %3586 = vmatpush1.bf16.msra.mxu0 %v3099
  %3587 = vmatprep.subr.bf16.mxu0 0
  %3588 = vmatpush1.bf16.msra.mxu0 %v3100
  %3589 = vmatprep.mubr.bf16.mxu0 %v2194
  %3590 = vmatmul.mubr.bf16.gmra.mrb[0].mxu0 %v2193
  %v3591 = vpop.f32.mrb[0].mxu0
  %v3592 = vadd.f32 %v3552, %v3591
  %v3593 = vpop.f32.mrb[0].mxu0
  %v3594 = vpop.f32.mrb[0].mxu0
  %v3595 = vpop.f32.mrb[0].mxu0
  %3596 = vdwg.mxu0
  %3597 = vmatprep.subr.bf16.mxu0 0
  %3598 = vmatpush1.bf16.msra.mxu0 %v3101
  %3599 = vmatprep.subr.bf16.mxu0 0
  %3600 = vmatpush1.bf16.msra.mxu0 %v3102
  %3601 = vmatprep.subr.bf16.mxu0 0
  %3602 = vmatpush1.bf16.msra.mxu0 %v3103
  %3603 = vmatprep.subr.bf16.mxu0 0
  %3604 = vmatpush1.bf16.msra.mxu0 %v3104
  %3605 = vmatprep.subr.bf16.mxu0 0
  %3606 = vmatpush1.bf16.msra.mxu0 %v3105
  %3607 = vmatprep.subr.bf16.mxu0 0
  %3608 = vmatpush1.bf16.msra.mxu0 %v3106
  %3609 = vmatprep.subr.bf16.mxu0 0
  %3610 = vmatpush1.bf16.msra.mxu0 %v3107
  %3611 = vmatprep.subr.bf16.mxu0 0
  %3612 = vmatpush1.bf16.msra.mxu0 %v3108
  %3613 = vmatprep.subr.bf16.mxu0 0
  %3614 = vmatpush1.bf16.msra.mxu0 %v3109
  %3615 = vmatprep.subr.bf16.mxu0 0
  %3616 = vmatpush1.bf16.msra.mxu0 %v3110
  %3617 = vmatprep.subr.bf16.mxu0 0
  %3618 = vmatpush1.bf16.msra.mxu0 %v3111
  %3619 = vmatprep.subr.bf16.mxu0 0
  %3620 = vmatpush1.bf16.msra.mxu0 %v3112
  %3621 = vmatprep.subr.bf16.mxu0 0
  %3622 = vmatpush1.bf16.msra.mxu0 %v3113
  %3623 = vmatprep.subr.bf16.mxu0 0
  %3624 = vmatpush1.bf16.msra.mxu0 %v3114
  %3625 = vmatprep.subr.bf16.mxu0 0
  %3626 = vmatpush1.bf16.msra.mxu0 %v3115
  %3627 = vmatprep.subr.bf16.mxu0 0
  %3628 = vmatpush1.bf16.msra.mxu0 %v3116
  %3629 = vmatprep.mubr.bf16.mxu0 %v2196
  %3630 = vmatmul.mubr.bf16.gmra.mrb[0].mxu0 %v2195
  %v3631 = vpop.f32.mrb[0].mxu0
  %v3632 = vadd.f32 %v3592, %v3631
  %v3633 = vpop.f32.mrb[0].mxu0
  %v3634 = vpop.f32.mrb[0].mxu0
  %v3635 = vpop.f32.mrb[0].mxu0
  %3636 = vdwg.mxu0
  %3637 = vmatprep.subr.bf16.mxu0 0
  %3638 = vmatpush1.bf16.msra.mxu0 %v3117
  %3639 = vmatprep.subr.bf16.mxu0 0
  %3640 = vmatpush1.bf16.msra.mxu0 %v3118
  %3641 = vmatprep.subr.bf16.mxu0 0
  %3642 = vmatpush1.bf16.msra.mxu0 %v3119
  %3643 = vmatprep.subr.bf16.mxu0 0
  %3644 = vmatpush1.bf16.msra.mxu0 %v3120
  %3645 = vmatprep.subr.bf16.mxu0 0
  %3646 = vmatpush1.bf16.msra.mxu0 %v3121
  %3647 = vmatprep.subr.bf16.mxu0 0
  %3648 = vmatpush1.bf16.msra.mxu0 %v3122
  %3649 = vmatprep.subr.bf16.mxu0 0
  %3650 = vmatpush1.bf16.msra.mxu0 %v3123
  %3651 = vmatprep.subr.bf16.mxu0 0
  %3652 = vmatpush1.bf16.msra.mxu0 %v3124
  %3653 = vmatprep.subr.bf16.mxu0 0
  %3654 = vmatpush1.bf16.msra.mxu0 %v3125
  %3655 = vmatprep.subr.bf16.mxu0 0
  %3656 = vmatpush1.bf16.msra.mxu0 %v3126
  %3657 = vmatprep.subr.bf16.mxu0 0
  %3658 = vmatpush1.bf16.msra.mxu0 %v3127
  %3659 = vmatprep.subr.bf16.mxu0 0
  %3660 = vmatpush1.bf16.msra.mxu0 %v3128
  %3661 = vmatprep.subr.bf16.mxu0 0
  %3662 = vmatpush1.bf16.msra.mxu0 %v3129
  %3663 = vmatprep.subr.bf16.mxu0 0
  %3664 = vmatpush1.bf16.msra.mxu0 %v3130
  %3665 = vmatprep.subr.bf16.mxu0 0
  %3666 = vmatpush1.bf16.msra.mxu0 %v3131
  %3667 = vmatprep.subr.bf16.mxu0 0
  %3668 = vmatpush1.bf16.msra.mxu0 %v3132
  %3669 = vmatprep.mubr.bf16.mxu0 %v2198
  %3670 = vmatmul.mubr.bf16.gmra.mrb[0].mxu0 %v2197
  %v3671 = vpop.f32.mrb[0].mxu0
  %v3672 = vadd.f32 %v3632, %v3671
  %v3673 = vpop.f32.mrb[0].mxu0
  %v3674 = vpop.f32.mrb[0].mxu0
  %v3675 = vpop.f32.mrb[0].mxu0
  %3676 = vdwg.mxu0
  %3677 = vmatprep.subr.bf16.mxu0 0
  %3678 = vmatpush1.bf16.msra.mxu0 %v3133
  %3679 = vmatprep.subr.bf16.mxu0 0
  %3680 = vmatpush1.bf16.msra.mxu0 %v3134
  %3681 = vmatprep.subr.bf16.mxu0 0
  %3682 = vmatpush1.bf16.msra.mxu0 %v3135
  %3683 = vmatprep.subr.bf16.mxu0 0
  %3684 = vmatpush1.bf16.msra.mxu0 %v3136
  %3685 = vmatprep.subr.bf16.mxu0 0
  %3686 = vmatpush1.bf16.msra.mxu0 %v3137
  %3687 = vmatprep.subr.bf16.mxu0 0
  %3688 = vmatpush1.bf16.msra.mxu0 %v3138
  %3689 = vmatprep.subr.bf16.mxu0 0
  %3690 = vmatpush1.bf16.msra.mxu0 %v3139
  %3691 = vmatprep.subr.bf16.mxu0 0
  %3692 = vmatpush1.bf16.msra.mxu0 %v3140
  %3693 = vmatprep.subr.bf16.mxu0 0
  %3694 = vmatpush1.bf16.msra.mxu0 %v3141
  %3695 = vmatprep.subr.bf16.mxu0 0
  %3696 = vmatpush1.bf16.msra.mxu0 %v3142
  %3697 = vmatprep.subr.bf16.mxu0 0
  %3698 = vmatpush1.bf16.msra.mxu0 %v3143
  %3699 = vmatprep.subr.bf16.mxu0 0
  %3700 = vmatpush1.bf16.msra.mxu0 %v3144
  %3701 = vmatprep.subr.bf16.mxu0 0
  %3702 = vmatpush1.bf16.msra.mxu0 %v3145
  %3703 = vmatprep.subr.bf16.mxu0 0
  %3704 = vmatpush1.bf16.msra.mxu0 %v3146
  %3705 = vmatprep.subr.bf16.mxu0 0
  %3706 = vmatpush1.bf16.msra.mxu0 %v3147
  %3707 = vmatprep.subr.bf16.mxu0 0
  %3708 = vmatpush1.bf16.msra.mxu0 %v3148
  %3709 = vmatprep.mubr.bf16.mxu0 %v2200
  %3710 = vmatmul.mubr.bf16.gmra.mrb[0].mxu0 %v2199
  %v3711 = vpop.f32.mrb[0].mxu0
  %v3712 = vadd.f32 %v3672, %v3711
  %v3713 = vpop.f32.mrb[0].mxu0
  %v3714 = vpop.f32.mrb[0].mxu0
  %v3715 = vpop.f32.mrb[0].mxu0
  %3716 = vdwg.mxu0
  %3717 = vmatprep.subr.bf16.mxu0 0
  %3718 = vmatpush1.bf16.msra.mxu0 %v3149
  %3719 = vmatprep.subr.bf16.mxu0 0
  %3720 = vmatpush1.bf16.msra.mxu0 %v3150
  %3721 = vmatprep.subr.bf16.mxu0 0
  %3722 = vmatpush1.bf16.msra.mxu0 %v3151
  %3723 = vmatprep.subr.bf16.mxu0 0
  %3724 = vmatpush1.bf16.msra.mxu0 %v3152
  %3725 = vmatprep.subr.bf16.mxu0 0
  %3726 = vmatpush1.bf16.msra.mxu0 %v3153
  %3727 = vmatprep.subr.bf16.mxu0 0
  %3728 = vmatpush1.bf16.msra.mxu0 %v3154
  %3729 = vmatprep.subr.bf16.mxu0 0
  %3730 = vmatpush1.bf16.msra.mxu0 %v3155
  %3731 = vmatprep.subr.bf16.mxu0 0
  %3732 = vmatpush1.bf16.msra.mxu0 %v3156
  %3733 = vmatprep.subr.bf16.mxu0 0
  %3734 = vmatpush1.bf16.msra.mxu0 %v3157
  %3735 = vmatprep.subr.bf16.mxu0 0
  %3736 = vmatpush1.bf16.msra.mxu0 %v3158
  %3737 = vmatprep.subr.bf16.mxu0 0
  %3738 = vmatpush1.bf16.msra.mxu0 %v3159
  %3739 = vmatprep.subr.bf16.mxu0 0
  %3740 = vmatpush1.bf16.msra.mxu0 %v3160
  %3741 = vmatprep.subr.bf16.mxu0 0
  %3742 = vmatpush1.bf16.msra.mxu0 %v3161
  %3743 = vmatprep.subr.bf16.mxu0 0
  %3744 = vmatpush1.bf16.msra.mxu0 %v3162
  %3745 = vmatprep.subr.bf16.mxu0 0
  %3746 = vmatpush1.bf16.msra.mxu0 %v3163
  %3747 = vmatprep.subr.bf16.mxu0 0
  %3748 = vmatpush1.bf16.msra.mxu0 %v3164
  %3749 = vmatprep.mubr.bf16.mxu0 %v2202
  %3750 = vmatmul.mubr.bf16.gmra.mrb[0].mxu0 %v2201
  %v3751 = vpop.f32.mrb[0].mxu0
  %v3752 = vadd.f32 %v3712, %v3751
  %v3753 = vpop.f32.mrb[0].mxu0
  %v3754 = vpop.f32.mrb[0].mxu0
  %v3755 = vpop.f32.mrb[0].mxu0
  %3756 = vdwg.mxu0
  %3757 = vmatprep.subr.bf16.mxu0 0
  %3758 = vmatpush1.bf16.msra.mxu0 %v3165
  %3759 = vmatprep.subr.bf16.mxu0 0
  %3760 = vmatpush1.bf16.msra.mxu0 %v3166
  %3761 = vmatprep.subr.bf16.mxu0 0
  %3762 = vmatpush1.bf16.msra.mxu0 %v3167
  %3763 = vmatprep.subr.bf16.mxu0 0
  %3764 = vmatpush1.bf16.msra.mxu0 %v3168
  %3765 = vmatprep.subr.bf16.mxu0 0
  %3766 = vmatpush1.bf16.msra.mxu0 %v3169
  %3767 = vmatprep.subr.bf16.mxu0 0
  %3768 = vmatpush1.bf16.msra.mxu0 %v3170
  %3769 = vmatprep.subr.bf16.mxu0 0
  %3770 = vmatpush1.bf16.msra.mxu0 %v3171
  %3771 = vmatprep.subr.bf16.mxu0 0
  %3772 = vmatpush1.bf16.msra.mxu0 %v3172
  %3773 = vmatprep.subr.bf16.mxu0 0
  %3774 = vmatpush1.bf16.msra.mxu0 %v3173
  %3775 = vmatprep.subr.bf16.mxu0 0
  %3776 = vmatpush1.bf16.msra.mxu0 %v3174
  %3777 = vmatprep.subr.bf16.mxu0 0
  %3778 = vmatpush1.bf16.msra.mxu0 %v3175
  %3779 = vmatprep.subr.bf16.mxu0 0
  %3780 = vmatpush1.bf16.msra.mxu0 %v3176
  %3781 = vmatprep.subr.bf16.mxu0 0
  %3782 = vmatpush1.bf16.msra.mxu0 %v3177
  %3783 = vmatprep.subr.bf16.mxu0 0
  %3784 = vmatpush1.bf16.msra.mxu0 %v3178
  %3785 = vmatprep.subr.bf16.mxu0 0
  %3786 = vmatpush1.bf16.msra.mxu0 %v3179
  %3787 = vmatprep.subr.bf16.mxu0 0
  %3788 = vmatpush1.bf16.msra.mxu0 %v3180
  %3789 = vmatprep.mubr.bf16.mxu0 %v2204
  %3790 = vmatmul.mubr.bf16.gmra.mrb[0].mxu0 %v2203
  %v3791 = vpop.f32.mrb[0].mxu0
  %v3792 = vadd.f32 %v3752, %v3791
  %v3793 = vpop.f32.mrb[0].mxu0
  %v3794 = vpop.f32.mrb[0].mxu0
  %v3795 = vpop.f32.mrb[0].mxu0
  %3796 = vdwg.mxu0
  %3797 = vmatprep.subr.bf16.mxu0 0
  %3798 = vmatpush1.bf16.msra.mxu0 %v3181
  %3799 = vmatprep.subr.bf16.mxu0 0
  %3800 = vmatpush1.bf16.msra.mxu0 %v3182
  %3801 = vmatprep.subr.bf16.mxu0 0
  %3802 = vmatpush1.bf16.msra.mxu0 %v3183
  %3803 = vmatprep.subr.bf16.mxu0 0
  %3804 = vmatpush1.bf16.msra.mxu0 %v3184
  %3805 = vmatprep.subr.bf16.mxu0 0
  %3806 = vmatpush1.bf16.msra.mxu0 %v3185
  %3807 = vmatprep.subr.bf16.mxu0 0
  %3808 = vmatpush1.bf16.msra.mxu0 %v3186
  %3809 = vmatprep.subr.bf16.mxu0 0
  %3810 = vmatpush1.bf16.msra.mxu0 %v3187
  %3811 = vmatprep.subr.bf16.mxu0 0
  %3812 = vmatpush1.bf16.msra.mxu0 %v3188
  %3813 = vmatprep.subr.bf16.mxu0 0
  %3814 = vmatpush1.bf16.msra.mxu0 %v3189
  %3815 = vmatprep.subr.bf16.mxu0 0
  %3816 = vmatpush1.bf16.msra.mxu0 %v3190
  %3817 = vmatprep.subr.bf16.mxu0 0
  %3818 = vmatpush1.bf16.msra.mxu0 %v3191
  %3819 = vmatprep.subr.bf16.mxu0 0
  %3820 = vmatpush1.bf16.msra.mxu0 %v3192
  %3821 = vmatprep.subr.bf16.mxu0 0
  %3822 = vmatpush1.bf16.msra.mxu0 %v3193
  %3823 = vmatprep.subr.bf16.mxu0 0
  %3824 = vmatpush1.bf16.msra.mxu0 %v3194
  %3825 = vmatprep.subr.bf16.mxu0 0
  %3826 = vmatpush1.bf16.msra.mxu0 %v3195
  %3827 = vmatprep.subr.bf16.mxu0 0
  %3828 = vmatpush1.bf16.msra.mxu0 %v3196
  %3829 = vmatprep.mubr.bf16.mxu0 %v2206
  %3830 = vmatmul.mubr.bf16.gmra.mrb[0].mxu0 %v2205
  %v3831 = vpop.f32.mrb[0].mxu0
  %v3832 = vadd.f32 %v3792, %v3831
  %v3833 = vpop.f32.mrb[0].mxu0
  %v3834 = vpop.f32.mrb[0].mxu0
  %v3835 = vpop.f32.mrb[0].mxu0
  %3836 = vdwg.mxu0
  %3837 = vmatprep.subr.bf16.mxu0 0
  %3838 = vmatpush1.bf16.msra.mxu0 %v3197
  %3839 = vmatprep.subr.bf16.mxu0 0
  %3840 = vmatpush1.bf16.msra.mxu0 %v3198
  %3841 = vmatprep.subr.bf16.mxu0 0
  %3842 = vmatpush1.bf16.msra.mxu0 %v3199
  %3843 = vmatprep.subr.bf16.mxu0 0
  %3844 = vmatpush1.bf16.msra.mxu0 %v3200
  %3845 = vmatprep.subr.bf16.mxu0 0
  %3846 = vmatpush1.bf16.msra.mxu0 %v3201
  %3847 = vmatprep.subr.bf16.mxu0 0
  %3848 = vmatpush1.bf16.msra.mxu0 %v3202
  %3849 = vmatprep.subr.bf16.mxu0 0
  %3850 = vmatpush1.bf16.msra.mxu0 %v3203
  %3851 = vmatprep.subr.bf16.mxu0 0
  %3852 = vmatpush1.bf16.msra.mxu0 %v3204
  %3853 = vmatprep.subr.bf16.mxu0 0
  %3854 = vmatpush1.bf16.msra.mxu0 %v3205
  %3855 = vmatprep.subr.bf16.mxu0 0
  %3856 = vmatpush1.bf16.msra.mxu0 %v3206
  %3857 = vmatprep.subr.bf16.mxu0 0
  %3858 = vmatpush1.bf16.msra.mxu0 %v3207
  %3859 = vmatprep.subr.bf16.mxu0 0
  %3860 = vmatpush1.bf16.msra.mxu0 %v3208
  %3861 = vmatprep.subr.bf16.mxu0 0
  %3862 = vmatpush1.bf16.msra.mxu0 %v3209
  %3863 = vmatprep.subr.bf16.mxu0 0
  %3864 = vmatpush1.bf16.msra.mxu0 %v3210
  %3865 = vmatprep.subr.bf16.mxu0 0
  %3866 = vmatpush1.bf16.msra.mxu0 %v3211
  %3867 = vmatprep.subr.bf16.mxu0 0
  %3868 = vmatpush1.bf16.msra.mxu0 %v3212
  %3869 = vmatprep.mubr.bf16.mxu0 %v2208
  %3870 = vmatmul.mubr.bf16.gmra.mrb[0].mxu0 %v2207
  %v3871 = vpop.f32.mrb[0].mxu0
  %v3872 = vadd.f32 %v3832, %v3871
  %v3873 = vpop.f32.mrb[0].mxu0
  %v3874 = vpop.f32.mrb[0].mxu0
  %v3875 = vpop.f32.mrb[0].mxu0
  %3876 = vdwg.mxu0
  %3877 = vmatprep.subr.bf16.mxu0 0
  %3878 = vmatpush1.bf16.msra.mxu0 %v3213
  %3879 = vmatprep.subr.bf16.mxu0 0
  %3880 = vmatpush1.bf16.msra.mxu0 %v3214
  %3881 = vmatprep.subr.bf16.mxu0 0
  %3882 = vmatpush1.bf16.msra.mxu0 %v3215
  %3883 = vmatprep.subr.bf16.mxu0 0
  %3884 = vmatpush1.bf16.msra.mxu0 %v3216
  %3885 = vmatprep.subr.bf16.mxu0 0
  %3886 = vmatpush1.bf16.msra.mxu0 %v3217
  %3887 = vmatprep.subr.bf16.mxu0 0
  %3888 = vmatpush1.bf16.msra.mxu0 %v3218
  %3889 = vmatprep.subr.bf16.mxu0 0
  %3890 = vmatpush1.bf16.msra.mxu0 %v3219
  %3891 = vmatprep.subr.bf16.mxu0 0
  %3892 = vmatpush1.bf16.msra.mxu0 %v3220
  %3893 = vmatprep.subr.bf16.mxu0 0
  %3894 = vmatpush1.bf16.msra.mxu0 %v3221
  %3895 = vmatprep.subr.bf16.mxu0 0
  %3896 = vmatpush1.bf16.msra.mxu0 %v3222
  %3897 = vmatprep.subr.bf16.mxu0 0
  %3898 = vmatpush1.bf16.msra.mxu0 %v3223
  %3899 = vmatprep.subr.bf16.mxu0 0
  %3900 = vmatpush1.bf16.msra.mxu0 %v3224
  %3901 = vmatprep.subr.bf16.mxu0 0
  %3902 = vmatpush1.bf16.msra.mxu0 %v3225
  %3903 = vmatprep.subr.bf16.mxu0 0
  %3904 = vmatpush1.bf16.msra.mxu0 %v3226
  %3905 = vmatprep.subr.bf16.mxu0 0
  %3906 = vmatpush1.bf16.msra.mxu0 %v3227
  %3907 = vmatprep.subr.bf16.mxu0 0
  %3908 = vmatpush1.bf16.msra.mxu0 %v3228
  %3909 = vmatprep.mubr.bf16.mxu0 %v2210
  %3910 = vmatmul.mubr.bf16.gmra.mrb[0].mxu0 %v2209
  %v3911 = vpop.f32.mrb[0].mxu0
  %v3912 = vadd.f32 %v3872, %v3911
  %v3913 = vpop.f32.mrb[0].mxu0
  %v3914 = vpop.f32.mrb[0].mxu0
  %v3915 = vpop.f32.mrb[0].mxu0
  %3916 = vdwg.mxu0
  %3917 = vmatprep.subr.bf16.mxu0 0
  %3918 = vmatpush1.bf16.msra.mxu0 %v3229
  %3919 = vmatprep.subr.bf16.mxu0 0
  %3920 = vmatpush1.bf16.msra.mxu0 %v3230
  %3921 = vmatprep.subr.bf16.mxu0 0
  %3922 = vmatpush1.bf16.msra.mxu0 %v3231
  %3923 = vmatprep.subr.bf16.mxu0 0
  %3924 = vmatpush1.bf16.msra.mxu0 %v3232
  %3925 = vmatprep.subr.bf16.mxu0 0
  %3926 = vmatpush1.bf16.msra.mxu0 %v3233
  %3927 = vmatprep.subr.bf16.mxu0 0
  %3928 = vmatpush1.bf16.msra.mxu0 %v3234
  %3929 = vmatprep.subr.bf16.mxu0 0
  %3930 = vmatpush1.bf16.msra.mxu0 %v3235
  %3931 = vmatprep.subr.bf16.mxu0 0
  %3932 = vmatpush1.bf16.msra.mxu0 %v3236
  %3933 = vmatprep.subr.bf16.mxu0 0
  %3934 = vmatpush1.bf16.msra.mxu0 0
  %3935 = vmatprep.subr.bf16.mxu0 0
  %3936 = vmatpush1.bf16.msra.mxu0 0
  %3937 = vmatprep.subr.bf16.mxu0 0
  %3938 = vmatpush1.bf16.msra.mxu0 0
  %3939 = vmatprep.subr.bf16.mxu0 0
  %3940 = vmatpush1.bf16.msra.mxu0 0
  %3941 = vmatprep.subr.bf16.mxu0 0
  %3942 = vmatpush1.bf16.msra.mxu0 0
  %3943 = vmatprep.subr.bf16.mxu0 0
  %3944 = vmatpush1.bf16.msra.mxu0 0
  %3945 = vmatprep.subr.bf16.mxu0 0
  %3946 = vmatpush1.bf16.msra.mxu0 0
  %3947 = vmatprep.subr.bf16.mxu0 0
  %3948 = vmatpush1.bf16.msra.mxu0 0
  %3949 = vmatprep.mubr.bf16.mxu0 0
  %3950 = vmatmul.mubr.bf16.gmra.mrb[0].mxu0 %v2211
  %v3951 = vpop.f32.mrb[0].mxu0
  %v3952 = vadd.f32 %v3912, %v3951
  %v3953 = vpop.f32.mrb[0].mxu0
  %v3954 = vpop.f32.mrb[0].mxu0
  %v3955 = vpop.f32.mrb[0].mxu0
  %3956 = vdwg.mxu0
  %v3957 = vld [vmem:[%s4] sm:$0x1]
  %v3959 = vlaneseq
  %v3960 = vshrl.u32 %v3959, 7
  %v3961 = vsub.s32 0, %v3960
  %v3962 = vrot.slane %v3957, %v3961
  %v3964 = vadd.f32 %v3952, %v3962
  %3965 = vst [vmem:[%s5] sm:$0xff] %v3964
  // Predicated region
  $region22: #{hsi_branch_forward.3} parent=0 // pred_check
    _
  $region23: #{hsi_branch_forward.3} parent=0 // pred_check_branch
    %3967 = sbr.rel (0) target = $region25
  $region24: #{hsi_branch_forward.3} parent=0 // pred_region
    _
  $region25: #{hsi_branch_forward.3} parent=0 // pred_fallthru
    _
  // Predicated region
  $region26: #{hsi_branch_forward.3} parent=0 // pred_check
    _
  $region27: #{hsi_branch_forward.3} parent=0 // pred_check_branch
    %3969 = sbr.rel (0) target = $region29
  $region28: #{hsi_branch_forward.3} parent=0 // pred_region
    _
  $region29: #{hsi_branch_forward.3} parent=0 // pred_fallthru
    _

// kernel: hsi_branch_forward.2
$region0: #{hsi_branch_forward.2}
  #allocation0 [shape = 'u32[]', space=smem, size = 0x4, offset = 0x4, fixed_abs, tag = 'smem constant byte address 0x4 - core index']
  #allocation1 [shape = 'u32[144,128]{1,0:T(1,128)}', space=vmem, size = 0x12000, scoped, tag = 'internal scratch']
  %s0 = inlined_call_operand.vmem [shape: bf16[2,200,166], index: 0, kind: input, shape index: {}]
  %s1 = inlined_call_operand.vmem [shape: bf16[2,168,16], index: 1, kind: input, shape index: {}]
  %s2 = inlined_call_operand.vmem [shape: bf16[9,166,256], index: 2, kind: input, shape index: {}]
  %s3 = inlined_call_operand.vmem [shape: f32[1,256], index: 3, kind: input, shape index: {}]
  %s4 = inlined_call_operand.vmem [shape: bf16[256,128], index: 4, kind: input, shape index: {}]
  %s5 = inlined_call_operand.vmem [shape: f32[1,128], index: 5, kind: input, shape index: {}]
  %s6 = inlined_call_operand.vmem [shape: bf16[16,64], index: 6, kind: input, shape index: {}]
  %s7 = inlined_call_operand.vmem [shape: f32[1,64], index: 7, kind: input, shape index: {}]
  %s8 = inlined_call_operand.vmem [shape: bf16[3,64,32], index: 8, kind: input, shape index: {}]
  %s9 = inlined_call_operand.vmem [shape: f32[1,32], index: 9, kind: input, shape index: {}]
  %s10 = inlined_call_operand.vmem [shape: bf16[2,5,16,128], index: 10, kind: output, shape index: {0}]
  %s11 = inlined_call_operand.vmem [shape: bf16[2,154,32], index: 11, kind: output, shape index: {1}]
  %12 = xla_tuple %s10, %s11
  %s13 = sld [smem:[#allocation0]]
  $region58: #{hsi_branch_forward.2} parent=0
    _
  %s15 = ssub.s32 1, %s13
  %s16 = scalar_select 0, %s15, %s13
  // Predicated region
  $region2: #{hsi_branch_forward.2} parent=0 // pred_check
    _
  $region3: #{hsi_branch_forward.2} parent=0 // pred_check_branch
    %18 = sbr.rel (0) target = $region5
  $region4: #{hsi_branch_forward.2} parent=0 // pred_region
    _
  $region5: #{hsi_branch_forward.2} parent=0 // pred_fallthru
    _
  // Predicated region
  $region6: #{hsi_branch_forward.2} parent=0 // pred_check
    _
  $region7: #{hsi_branch_forward.2} parent=0 // pred_check_branch
    %20 = sbr.rel (0) target = $region9
  $region8: #{hsi_branch_forward.2} parent=0 // pred_region
    _
  $region9: #{hsi_branch_forward.2} parent=0 // pred_fallthru
    _
  // Predicated region
  $region10: #{hsi_branch_forward.2} parent=0 // pred_check
    _
  $region11: #{hsi_branch_forward.2} parent=0 // pred_check_branch
    %22 = sbr.rel (0) target = $region13
  $region12: #{hsi_branch_forward.2} parent=0 // pred_region
    _
  $region13: #{hsi_branch_forward.2} parent=0 // pred_fallthru
    _
  // Predicated region
  $region14: #{hsi_branch_forward.2} parent=0 // pred_check
    _
  $region15: #{hsi_branch_forward.2} parent=0 // pred_check_branch
    %24 = sbr.rel (0) target = $region17
  $region16: #{hsi_branch_forward.2} parent=0 // pred_region
    _
  $region17: #{hsi_branch_forward.2} parent=0 // pred_fallthru
    _
  // Predicated region
  $region18: #{hsi_branch_forward.2} parent=0 // pred_check
    _
  $region19: #{hsi_branch_forward.2} parent=0 // pred_check_branch
    %26 = sbr.rel (0) target = $region21
  $region20: #{hsi_branch_forward.2} parent=0 // pred_region
    _
  $region21: #{hsi_branch_forward.2} parent=0 // pred_fallthru
    _
  // Predicated region
  $region22: #{hsi_branch_forward.2} parent=0 // pred_check
    _
  $region23: #{hsi_branch_forward.2} parent=0 // pred_check_branch
    %28 = sbr.rel (0) target = $region25
  $region24: #{hsi_branch_forward.2} parent=0 // pred_region
    _
  $region25: #{hsi_branch_forward.2} parent=0 // pred_fallthru
    _
  // Predicated region
  $region26: #{hsi_branch_forward.2} parent=0 // pred_check
    _
  $region27: #{hsi_branch_forward.2} parent=0 // pred_check_branch
    %30 = sbr.rel (0) target = $region29
  $region28: #{hsi_branch_forward.2} parent=0 // pred_region
    _
  $region29: #{hsi_branch_forward.2} parent=0 // pred_fallthru
    _
  // Predicated region
  $region30: #{hsi_branch_forward.2} parent=0 // pred_check
    _
  $region31: #{hsi_branch_forward.2} parent=0 // pred_check_branch
    %32 = sbr.rel (0) target = $region33
  $region32: #{hsi_branch_forward.2} parent=0 // pred_region
    _
  $region33: #{hsi_branch_forward.2} parent=0 // pred_fallthru
    _
  // Predicated region
  $region34: #{hsi_branch_forward.2} parent=0 // pred_check
    _
  $region35: #{hsi_branch_forward.2} parent=0 // pred_check_branch
    %34 = sbr.rel (0) target = $region37
  $region36: #{hsi_branch_forward.2} parent=0 // pred_region
    _
  $region37: #{hsi_branch_forward.2} parent=0 // pred_fallthru
    _
  // Predicated region
  $region38: #{hsi_branch_forward.2} parent=0 // pred_check
    _
  $region39: #{hsi_branch_forward.2} parent=0 // pred_check_branch
    %36 = sbr.rel (0) target = $region41
  $region40: #{hsi_branch_forward.2} parent=0 // pred_region
    _
  $region41: #{hsi_branch_forward.2} parent=0 // pred_fallthru
    _
  %v38 = vld [vmem:[%s0] sm:$0xff]
  %v39 = vld [vmem:[%s0 + $0x8] sm:$0xff]
  %v40 = vld [vmem:[%s0 + $0x10] sm:$0xff]
  %v41 = vld [vmem:[%s0 + $0x18] sm:$0xff]
  %v42 = vld [vmem:[%s0 + $0x20] sm:$0xff]
  %v43 = vld [vmem:[%s0 + $0x28] sm:$0xff]
  %v44 = vld [vmem:[%s0 + $0x30] sm:$0xff]
  %v45 = vld [vmem:[%s0 + $0x38] sm:$0xff]
  %v46 = vld [vmem:[%s0 + $0x40] sm:$0xff]
  %v47 = vld [vmem:[%s0 + $0x48] sm:$0xff]
  %v48 = vld [vmem:[%s0 + $0x50] sm:$0xff]
  %v49 = vld [vmem:[%s0 + $0x58] sm:$0xff]
  %v50 = vld [vmem:[%s0 + $0x60] sm:$0xff]
  %v51 = vld [vmem:[%s0 + $0x68] sm:$0xff]
  %v52 = vld [vmem:[%s0 + $0x70] sm:$0xff]
  %v53 = vld [vmem:[%s0 + $0x78] sm:$0xff]
  %v54 = vld [vmem:[%s0 + $0x80] sm:$0xff]
  %v55 = vld [vmem:[%s0 + $0x88] sm:$0xff]
  %v56 = vld [vmem:[%s0 + $0x90] sm:$0xff]
  %v57 = vld [vmem:[%s0 + $0x98] sm:$0xff]
  %v58 = vld [vmem:[%s0 + $0xa0] sm:$0xff]
  %v59 = vld [vmem:[%s0 + $0xa8] sm:$0xff]
  %v60 = vld [vmem:[%s0 + $0xb0] sm:$0xff]
  %v61 = vld [vmem:[%s0 + $0xb8] sm:$0xff]
  %v62 = vld [vmem:[%s0 + $0xc8] sm:$0xff]
  %v63 = vld [vmem:[%s0 + $0xd0] sm:$0xff]
  %v64 = vld [vmem:[%s0 + $0xd8] sm:$0xff]
  %v65 = vld [vmem:[%s0 + $0xe0] sm:$0xff]
  %v66 = vld [vmem:[%s0 + $0xe8] sm:$0xff]
  %v67 = vld [vmem:[%s0 + $0xf0] sm:$0xff]
  %v68 = vld [vmem:[%s0 + $0xf8] sm:$0xff]
  %v69 = vld [vmem:[%s0 + $0x100] sm:$0xff]
  %v70 = vld [vmem:[%s0 + $0x108] sm:$0xff]
  %v71 = vld [vmem:[%s0 + $0x110] sm:$0xff]
  %v72 = vld [vmem:[%s0 + $0x118] sm:$0xff]
  %v73 = vld [vmem:[%s0 + $0x120] sm:$0xff]
  %v74 = vld [vmem:[%s0 + $0x128] sm:$0xff]
  %v75 = vld [vmem:[%s0 + $0x130] sm:$0xff]
  %v76 = vld [vmem:[%s0 + $0x138] sm:$0xff]
  %v77 = vld [vmem:[%s0 + $0x140] sm:$0xff]
  %v78 = vld [vmem:[%s0 + $0x148] sm:$0xff]
  %v79 = vld [vmem:[%s0 + $0x150] sm:$0xff]
  %v80 = vld [vmem:[%s0 + $0x158] sm:$0xff]
  %v81 = vld [vmem:[%s0 + $0x160] sm:$0xff]
  %v82 = vld [vmem:[%s0 + $0x168] sm:$0xff]
  %v83 = vld [vmem:[%s0 + $0x170] sm:$0xff]
  %v84 = vld [vmem:[%s0 + $0x178] sm:$0xff]
  %v85 = vld [vmem:[%s0 + $0x180] sm:$0xff]
  %v86 = vld [vmem:[%s2] sm:$0xff]
  %v87 = vld [vmem:[%s2 + $0x8] sm:$0xff]
  %v88 = vld [vmem:[%s2 + $0x10] sm:$0xff]
  %v89 = vld [vmem:[%s2 + $0x18] sm:$0xff]
  %v90 = vld [vmem:[%s2 + $0x20] sm:$0xff]
  %v91 = vld [vmem:[%s2 + $0x28] sm:$0xff]
  %v92 = vld [vmem:[%s2 + $0x30] sm:$0xff]
  %v93 = vld [vmem:[%s2 + $0x38] sm:$0xff]
  %v94 = vld [vmem:[%s2 + $0x40] sm:$0xff]
  %v95 = vld [vmem:[%s2 + $0x48] sm:$0xff]
  %v96 = vld [vmem:[%s2 + $0x50] sm:$0xff]
  %v97 = vld [vmem:[%s2 + $0x58] sm:$0xff]
  %v98 = vld [vmem:[%s2 + $0x60] sm:$0xff]
  %v99 = vld [vmem:[%s2 + $0x68] sm:$0xff]
  %v100 = vld [vmem:[%s2 + $0x70] sm:$0xff]
  %v101 = vld [vmem:[%s2 + $0x78] sm:$0xff]
  %v102 = vld [vmem:[%s2 + $0x80] sm:$0xff]
  %v103 = vld [vmem:[%s2 + $0x88] sm:$0xff]
  %v104 = vld [vmem:[%s2 + $0x90] sm:$0xff]
  %v105 = vld [vmem:[%s2 + $0x98] sm:$0xff]
  %v106 = vld [vmem:[%s2 + $0xa0] sm:$0x77]
  %s107 = scalar_lea.vmem %s2, 504
  %v108 = vld [vmem:[%s107] sm:$0xff]
  %v109 = vld [vmem:[%s107 + $0x8] sm:$0xff]
  %v110 = vld [vmem:[%s107 + $0x10] sm:$0xff]
  %v111 = vld [vmem:[%s107 + $0x18] sm:$0xff]
  %v112 = vld [vmem:[%s107 + $0x20] sm:$0xff]
  %v113 = vld [vmem:[%s107 + $0x28] sm:$0xff]
  %v114 = vld [vmem:[%s107 + $0x30] sm:$0xff]
  %v115 = vld [vmem:[%s107 + $0x38] sm:$0xff]
  %v116 = vld [vmem:[%s107 + $0x40] sm:$0xff]
  %v117 = vld [vmem:[%s107 + $0x48] sm:$0xff]
  %v118 = vld [vmem:[%s107 + $0x50] sm:$0xff]
  %v119 = vld [vmem:[%s107 + $0x58] sm:$0xff]
  %v120 = vld [vmem:[%s107 + $0x60] sm:$0xff]
  %v121 = vld [vmem:[%s107 + $0x68] sm:$0xff]
  %v122 = vld [vmem:[%s107 + $0x70] sm:$0xff]
  %v123 = vld [vmem:[%s107 + $0x78] sm:$0xff]
  %v124 = vld [vmem:[%s107 + $0x80] sm:$0xff]
  %v125 = vld [vmem:[%s107 + $0x88] sm:$0xff]
  %v126 = vld [vmem:[%s107 + $0x90] sm:$0xff]
  %v127 = vld [vmem:[%s107 + $0x98] sm:$0xff]
  %v128 = vld [vmem:[%s107 + $0xa0] sm:$0x77]
  %v169 = vunpack.c.l.b16 %v40
  %v170 = vunpack.c.h.b16 %v40
  %v171 = vunpack.c.l.b16 %v41
  %v172 = vunpack.c.h.b16 %v41
  %v173 = vunpack.c.l.b16 %v42
  %v174 = vunpack.c.h.b16 %v42
  %v175 = vunpack.c.l.b16 %v43
  %v176 = vunpack.c.h.b16 %v43
  %v177 = vunpack.c.l.b16 %v44
  %v178 = vunpack.c.h.b16 %v44
  %v179 = vunpack.c.l.b16 %v45
  %v180 = vunpack.c.h.b16 %v45
  %v181 = vunpack.c.l.b16 %v46
  %v182 = vunpack.c.h.b16 %v46
  %v183 = vunpack.c.l.b16 %v47
  %v184 = vunpack.c.h.b16 %v47
  %v185 = vunpack.c.l.b16 %v48
  %v186 = vunpack.c.h.b16 %v48
  %v187 = vunpack.c.l.b16 %v49
  %v188 = vunpack.c.h.b16 %v49
  %v189 = vunpack.c.l.b16 %v50
  %v190 = vunpack.c.h.b16 %v50
  %v191 = vunpack.c.l.b16 %v51
  %v192 = vunpack.c.h.b16 %v51
  %v193 = vunpack.c.l.b16 %v52
  %v194 = vunpack.c.h.b16 %v52
  %v195 = vunpack.c.l.b16 %v53
  %v196 = vunpack.c.h.b16 %v53
  %v197 = vunpack.c.l.b16 %v54
  %v198 = vunpack.c.h.b16 %v54
  %v199 = vunpack.c.l.b16 %v55
  %v200 = vunpack.c.h.b16 %v55
  %v201 = vunpack.c.l.b16 %v56
  %v202 = vunpack.c.h.b16 %v56
  %v203 = vunpack.c.l.b16 %v57
  %v204 = vunpack.c.h.b16 %v57
  %v205 = vunpack.c.l.b16 %v58
  %v206 = vunpack.c.h.b16 %v58
  %v207 = vunpack.c.l.b16 %v59
  %v208 = vunpack.c.h.b16 %v59
  %v209 = vunpack.c.l.b16 %v64
  %v210 = vunpack.c.h.b16 %v64
  %v211 = vunpack.c.l.b16 %v65
  %v212 = vunpack.c.h.b16 %v65
  %v213 = vunpack.c.l.b16 %v66
  %v214 = vunpack.c.h.b16 %v66
  %v215 = vunpack.c.l.b16 %v67
  %v216 = vunpack.c.h.b16 %v67
  %v217 = vunpack.c.l.b16 %v68
  %v218 = vunpack.c.h.b16 %v68
  %v219 = vunpack.c.l.b16 %v69
  %v220 = vunpack.c.h.b16 %v69
  %v221 = vunpack.c.l.b16 %v70
  %v222 = vunpack.c.h.b16 %v70
  %v223 = vunpack.c.l.b16 %v71
  %v224 = vunpack.c.h.b16 %v71
  %v225 = vunpack.c.l.b16 %v72
  %v226 = vunpack.c.h.b16 %v72
  %v227 = vunpack.c.l.b16 %v73
  %v228 = vunpack.c.h.b16 %v73
  %v229 = vunpack.c.l.b16 %v74
  %v230 = vunpack.c.h.b16 %v74
  %v231 = vunpack.c.l.b16 %v75
  %v232 = vunpack.c.h.b16 %v75
  %v233 = vunpack.c.l.b16 %v76
  %v234 = vunpack.c.h.b16 %v76
  %v235 = vunpack.c.l.b16 %v77
  %v236 = vunpack.c.h.b16 %v77
  %v237 = vunpack.c.l.b16 %v78
  %v238 = vunpack.c.h.b16 %v78
  %v239 = vunpack.c.l.b16 %v79
  %v240 = vunpack.c.h.b16 %v79
  %v241 = vunpack.c.l.b16 %v80
  %v242 = vunpack.c.h.b16 %v80
  %v243 = vunpack.c.l.b16 %v81
  %v244 = vunpack.c.h.b16 %v81
  %v245 = vunpack.c.l.b16 %v82
  %v246 = vunpack.c.h.b16 %v82
  %v247 = vunpack.c.l.b16 %v83
  %v248 = vunpack.c.h.b16 %v83
  %v249 = vpack.c.b16 %v171, %v169
  %v250 = vpack.c.b16 %v172, %v170
  %v251 = vpack.c.b16 %v175, %v173
  %v252 = vpack.c.b16 %v176, %v174
  %v253 = vpack.c.b16 %v179, %v177
  %v254 = vpack.c.b16 %v180, %v178
  %v255 = vpack.c.b16 %v183, %v181
  %v256 = vpack.c.b16 %v184, %v182
  %v257 = vpack.c.b16 %v187, %v185
  %v258 = vpack.c.b16 %v188, %v186
  %v259 = vpack.c.b16 %v191, %v189
  %v260 = vpack.c.b16 %v192, %v190
  %v261 = vpack.c.b16 %v195, %v193
  %v262 = vpack.c.b16 %v196, %v194
  %v263 = vpack.c.b16 %v199, %v197
  %v264 = vpack.c.b16 %v200, %v198
  %v265 = vpack.c.b16 %v203, %v201
  %v266 = vpack.c.b16 %v204, %v202
  %v267 = vpack.c.b16 %v207, %v205
  %v268 = vpack.c.b16 %v208, %v206
  %v269 = vpack.c.b16 %v211, %v209
  %v270 = vpack.c.b16 %v212, %v210
  %v271 = vpack.c.b16 %v215, %v213
  %v272 = vpack.c.b16 %v216, %v214
  %v273 = vpack.c.b16 %v219, %v217
  %v274 = vpack.c.b16 %v220, %v218
  %v275 = vpack.c.b16 %v223, %v221
  %v276 = vpack.c.b16 %v224, %v222
  %v277 = vpack.c.b16 %v227, %v225
  %v278 = vpack.c.b16 %v228, %v226
  %v279 = vpack.c.b16 %v231, %v229
  %v280 = vpack.c.b16 %v232, %v230
  %v281 = vpack.c.b16 %v235, %v233
  %v282 = vpack.c.b16 %v236, %v234
  %v283 = vpack.c.b16 %v239, %v237
  %v284 = vpack.c.b16 %v240, %v238
  %v285 = vpack.c.b16 %v243, %v241
  %v286 = vpack.c.b16 %v244, %v242
  %v287 = vpack.c.b16 %v247, %v245
  %v288 = vpack.c.b16 %v248, %v246
  %v330 = vunpack.c.l.b16 %v108
  %v331 = vunpack.c.h.b16 %v108
  %v332 = vunpack.c.l.b16 %v109
  %v333 = vunpack.c.h.b16 %v109
  %v334 = vunpack.c.l.b16 %v110
  %v335 = vunpack.c.h.b16 %v110
  %v336 = vunpack.c.l.b16 %v111
  %v337 = vunpack.c.h.b16 %v111
  %v338 = vunpack.c.l.b16 %v112
  %v339 = vunpack.c.h.b16 %v112
  %v340 = vunpack.c.l.b16 %v113
  %v341 = vunpack.c.h.b16 %v113
  %v342 = vunpack.c.l.b16 %v114
  %v343 = vunpack.c.h.b16 %v114
  %v344 = vunpack.c.l.b16 %v115
  %v345 = vunpack.c.h.b16 %v115
  %v346 = vunpack.c.l.b16 %v116
  %v347 = vunpack.c.h.b16 %v116
  %v348 = vunpack.c.l.b16 %v117
  %v349 = vunpack.c.h.b16 %v117
  %v350 = vunpack.c.l.b16 %v118
  %v351 = vunpack.c.h.b16 %v118
  %v352 = vunpack.c.l.b16 %v119
  %v353 = vunpack.c.h.b16 %v119
  %v354 = vunpack.c.l.b16 %v120
  %v355 = vunpack.c.h.b16 %v120
  %v356 = vunpack.c.l.b16 %v121
  %v357 = vunpack.c.h.b16 %v121
  %v358 = vunpack.c.l.b16 %v122
  %v359 = vunpack.c.h.b16 %v122
  %v360 = vunpack.c.l.b16 %v123
  %v361 = vunpack.c.h.b16 %v123
  %v362 = vunpack.c.l.b16 %v124
  %v363 = vunpack.c.h.b16 %v124
  %v364 = vunpack.c.l.b16 %v125
  %v365 = vunpack.c.h.b16 %v125
  %v366 = vunpack.c.l.b16 %v126
  %v367 = vunpack.c.h.b16 %v126
  %v368 = vunpack.c.l.b16 %v127
  %v369 = vunpack.c.h.b16 %v127
  %v370 = vunpack.c.l.b16 %v128
  %v371 = vunpack.c.h.b16 %v128
  %v372 = vpack.c.b16 %v332, %v330
  %v373 = vpack.c.b16 %v333, %v331
  %v374 = vpack.c.b16 %v336, %v334
  %v375 = vpack.c.b16 %v337, %v335
  %v376 = vpack.c.b16 %v340, %v338
  %v377 = vpack.c.b16 %v341, %v339
  %v378 = vpack.c.b16 %v344, %v342
  %v379 = vpack.c.b16 %v345, %v343
  %v380 = vpack.c.b16 %v348, %v346
  %v381 = vpack.c.b16 %v349, %v347
  %v382 = vpack.c.b16 %v352, %v350
  %v383 = vpack.c.b16 %v353, %v351
  %v384 = vpack.c.b16 %v356, %v354
  %v385 = vpack.c.b16 %v357, %v355
  %v386 = vpack.c.b16 %v360, %v358
  %v387 = vpack.c.b16 %v361, %v359
  %v388 = vpack.c.b16 %v364, %v362
  %v389 = vpack.c.b16 %v365, %v363
  %v390 = vpack.c.b16 %v368, %v366
  %v391 = vpack.c.b16 %v369, %v367
  %v392 = vpack.c.b16 %v370, %v370
  %v393 = vpack.c.b16 %v371, %v371
  %vm414 = vcmask 310272
  %v416 = vsel %vm414, %v250, 0
  %v419 = vsel %vm414, %v252, 0
  %v422 = vsel %vm414, %v254, 0
  %v425 = vsel %vm414, %v256, 0
  %v428 = vsel %vm414, %v258, 0
  %v431 = vsel %vm414, %v260, 0
  %v434 = vsel %vm414, %v262, 0
  %v437 = vsel %vm414, %v264, 0
  %v440 = vsel %vm414, %v266, 0
  %v443 = vsel %vm414, %v268, 0
  %v446 = vsel %vm414, %v270, 0
  %v449 = vsel %vm414, %v272, 0
  %v452 = vsel %vm414, %v274, 0
  %v455 = vsel %vm414, %v276, 0
  %v458 = vsel %vm414, %v278, 0
  %v461 = vsel %vm414, %v280, 0
  %v464 = vsel %vm414, %v282, 0
  %v467 = vsel %vm414, %v284, 0
  %v470 = vsel %vm414, %v286, 0
  %v473 = vsel %vm414, %v288, 0
  %vm475 = vcmask 1042432
  %v477 = vsel %vm475, %v392, 0
  %v480 = vsel %vm475, %v393, 0
  %482 = vmatprep.subr.bf16.mxu0 %v373
  %483 = vmatpush1.bf16.msra.mxu0 %v372
  %484 = vmatprep.subr.bf16.mxu0 %v375
  %485 = vmatpush1.bf16.msra.mxu0 %v374
  %486 = vmatprep.subr.bf16.mxu0 %v377
  %487 = vmatpush1.bf16.msra.mxu0 %v376
  %488 = vmatprep.subr.bf16.mxu0 %v379
  %489 = vmatpush1.bf16.msra.mxu0 %v378
  %490 = vmatprep.subr.bf16.mxu0 %v381
  %491 = vmatpush1.bf16.msra.mxu0 %v380
  %492 = vmatprep.subr.bf16.mxu0 %v383
  %493 = vmatpush1.bf16.msra.mxu0 %v382
  %494 = vmatprep.subr.bf16.mxu0 %v385
  %495 = vmatpush1.bf16.msra.mxu0 %v384
  %496 = vmatprep.subr.bf16.mxu0 %v387
  %497 = vmatpush1.bf16.msra.mxu0 %v386
  %498 = vmatprep.subr.bf16.mxu0 %v389
  %499 = vmatpush1.bf16.msra.mxu0 %v388
  %500 = vmatprep.subr.bf16.mxu0 %v391
  %501 = vmatpush1.bf16.msra.mxu0 %v390
  %502 = vmatprep.subr.bf16.mxu0 %v480
  %503 = vmatpush1.bf16.msra.mxu0 %v477
  %504 = vmatprep.subr.bf16.mxu0 0
  %505 = vmatpush1.bf16.msra.mxu0 0
  %506 = vmatprep.subr.bf16.mxu0 0
  %507 = vmatpush1.bf16.msra.mxu0 0
  %508 = vmatprep.subr.bf16.mxu0 0
  %509 = vmatpush1.bf16.msra.mxu0 0
  %510 = vmatprep.subr.bf16.mxu0 0
  %511 = vmatpush1.bf16.msra.mxu0 0
  %512 = vmatprep.subr.bf16.mxu0 0
  %513 = vmatpush1.bf16.msra.mxu0 0
  %514 = vmatprep.mubr.bf16.mxu0 %v416
  %515 = vmatmul.mubr.bf16.gmra.mrb[0].mxu0 %v249
  %v516 = vpop.f32.mrb[0].mxu0
  %v517 = vadd.f32 0.0, %v516
  %v518 = vpop.f32.mrb[0].mxu0
  %v519 = vadd.f32 0.0, %v518
  %v520 = vpop.f32.mrb[0].mxu0
  %v521 = vadd.f32 0.0, %v520
  %v522 = vpop.f32.mrb[0].mxu0
  %v523 = vadd.f32 0.0, %v522
  %524 = vmatprep.mubr.bf16.mxu0 %v419
  %525 = vmatmul.mubr.bf16.gmra.mrb[0].mxu0 %v251
  %v526 = vpop.f32.mrb[0].mxu0
  %v527 = vadd.f32 0.0, %v526
  %v528 = vpop.f32.mrb[0].mxu0
  %v529 = vadd.f32 0.0, %v528
  %v530 = vpop.f32.mrb[0].mxu0
  %v531 = vadd.f32 0.0, %v530
  %v532 = vpop.f32.mrb[0].mxu0
  %v533 = vadd.f32 0.0, %v532
  %534 = vmatprep.mubr.bf16.mxu0 %v422
  %535 = vmatmul.mubr.bf16.gmra.mrb[0].mxu0 %v253
  %v536 = vpop.f32.mrb[0].mxu0
  %v537 = vadd.f32 0.0, %v536
  %v538 = vpop.f32.mrb[0].mxu0
  %v539 = vadd.f32 0.0, %v538
  %v540 = vpop.f32.mrb[0].mxu0
  %v541 = vadd.f32 0.0, %v540
  %v542 = vpop.f32.mrb[0].mxu0
  %v543 = vadd.f32 0.0, %v542
  %544 = vmatprep.mubr.bf16.mxu0 %v425
  %545 = vmatmul.mubr.bf16.gmra.mrb[0].mxu0 %v255
  %v546 = vpop.f32.mrb[0].mxu0
  %v547 = vadd.f32 0.0, %v546
  %v548 = vpop.f32.mrb[0].mxu0
  %v549 = vadd.f32 0.0, %v548
  %v550 = vpop.f32.mrb[0].mxu0
  %v551 = vadd.f32 0.0, %v550
  %v552 = vpop.f32.mrb[0].mxu0
  %v553 = vadd.f32 0.0, %v552
  %554 = vmatprep.mubr.bf16.mxu0 %v428
  %555 = vmatmul.mubr.bf16.gmra.mrb[0].mxu0 %v257
  %v556 = vpop.f32.mrb[0].mxu0
  %v557 = vadd.f32 0.0, %v556
  %v558 = vpop.f32.mrb[0].mxu0
  %v559 = vadd.f32 0.0, %v558
  %v560 = vpop.f32.mrb[0].mxu0
  %v561 = vadd.f32 0.0, %v560
  %v562 = vpop.f32.mrb[0].mxu0
  %v563 = vadd.f32 0.0, %v562
  %564 = vmatprep.mubr.bf16.mxu0 %v431
  %565 = vmatmul.mubr.bf16.gmra.mrb[0].mxu0 %v259
  %v566 = vpop.f32.mrb[0].mxu0
  %v567 = vadd.f32 0.0, %v566
  %v568 = vpop.f32.mrb[0].mxu0
  %v569 = vadd.f32 0.0, %v568
  %v570 = vpop.f32.mrb[0].mxu0
  %v571 = vadd.f32 0.0, %v570
  %v572 = vpop.f32.mrb[0].mxu0
  %v573 = vadd.f32 0.0, %v572
  %574 = vmatprep.mubr.bf16.mxu0 %v434
  %575 = vmatmul.mubr.bf16.gmra.mrb[0].mxu0 %v261
  %v576 = vpop.f32.mrb[0].mxu0
  %v577 = vadd.f32 0.0, %v576
  %v578 = vpop.f32.mrb[0].mxu0
  %v579 = vadd.f32 0.0, %v578
  %v580 = vpop.f32.mrb[0].mxu0
  %v581 = vadd.f32 0.0, %v580
  %v582 = vpop.f32.mrb[0].mxu0
  %v583 = vadd.f32 0.0, %v582
  %584 = vmatprep.mubr.bf16.mxu0 %v437
  %585 = vmatmul.mubr.bf16.gmra.mrb[0].mxu0 %v263
  %v586 = vpop.f32.mrb[0].mxu0
  %v587 = vadd.f32 0.0, %v586
  %v588 = vpop.f32.mrb[0].mxu0
  %v589 = vadd.f32 0.0, %v588
  %v590 = vpop.f32.mrb[0].mxu0
  %v591 = vadd.f32 0.0, %v590
  %v592 = vpop.f32.mrb[0].mxu0
  %v593 = vadd.f32 0.0, %v592
  %594 = vmatprep.mubr.bf16.mxu0 %v440
  %595 = vmatmul.mubr.bf16.gmra.mrb[0].mxu0 %v265
  %v596 = vpop.f32.mrb[0].mxu0
  %v597 = vadd.f32 0.0, %v596
  %v598 = vpop.f32.mrb[0].mxu0
  %v599 = vadd.f32 0.0, %v598
  %v600 = vpop.f32.mrb[0].mxu0
  %v601 = vadd.f32 0.0, %v600
  %v602 = vpop.f32.mrb[0].mxu0
  %v603 = vadd.f32 0.0, %v602
  %604 = vmatprep.mubr.bf16.mxu0 %v443
  %605 = vmatmul.mubr.bf16.gmra.mrb[0].mxu0 %v267
  %v606 = vpop.f32.mrb[0].mxu0
  %v607 = vadd.f32 0.0, %v606
  %v608 = vpop.f32.mrb[0].mxu0
  %v609 = vadd.f32 0.0, %v608
  %v610 = vpop.f32.mrb[0].mxu0
  %v611 = vadd.f32 0.0, %v610
  %v612 = vpop.f32.mrb[0].mxu0
  %v613 = vadd.f32 0.0, %v612
  %614 = vmatprep.mubr.bf16.mxu0 %v446
  %615 = vmatmul.mubr.bf16.gmra.mrb[0].mxu0 %v269
  %v616 = vpop.f32.mrb[0].mxu0
  %v617 = vadd.f32 0.0, %v616
  %v618 = vpop.f32.mrb[0].mxu0
  %v619 = vadd.f32 0.0, %v618
  %v620 = vpop.f32.mrb[0].mxu0
  %v621 = vadd.f32 0.0, %v620
  %v622 = vpop.f32.mrb[0].mxu0
  %v623 = vadd.f32 0.0, %v622
  %624 = vmatprep.mubr.bf16.mxu0 %v449
  %625 = vmatmul.mubr.bf16.gmra.mrb[0].mxu0 %v271
  %v626 = vpop.f32.mrb[0].mxu0
  %v627 = vadd.f32 0.0, %v626
  %v628 = vpop.f32.mrb[0].mxu0
  %v629 = vadd.f32 0.0, %v628
  %v630 = vpop.f32.mrb[0].mxu0
  %v631 = vadd.f32 0.0, %v630
  %v632 = vpop.f32.mrb[0].mxu0
  %v633 = vadd.f32 0.0, %v632
  %634 = vmatprep.mubr.bf16.mxu0 %v452
  %635 = vmatmul.mubr.bf16.gmra.mrb[0].mxu0 %v273
  %v636 = vpop.f32.mrb[0].mxu0
  %v637 = vadd.f32 0.0, %v636
  %v638 = vpop.f32.mrb[0].mxu0
  %v639 = vadd.f32 0.0, %v638
  %v640 = vpop.f32.mrb[0].mxu0
  %v641 = vadd.f32 0.0, %v640
  %v642 = vpop.f32.mrb[0].mxu0
  %v643 = vadd.f32 0.0, %v642
  %644 = vmatprep.mubr.bf16.mxu0 %v455
  %645 = vmatmul.mubr.bf16.gmra.mrb[0].mxu0 %v275
  %v646 = vpop.f32.mrb[0].mxu0
  %v647 = vadd.f32 0.0, %v646
  %v648 = vpop.f32.mrb[0].mxu0
  %v649 = vadd.f32 0.0, %v648
  %v650 = vpop.f32.mrb[0].mxu0
  %v651 = vadd.f32 0.0, %v650
  %v652 = vpop.f32.mrb[0].mxu0
  %v653 = vadd.f32 0.0, %v652
  %654 = vmatprep.mubr.bf16.mxu0 %v458
  %655 = vmatmul.mubr.bf16.gmra.mrb[0].mxu0 %v277
  %v656 = vpop.f32.mrb[0].mxu0
  %v657 = vadd.f32 0.0, %v656
  %v658 = vpop.f32.mrb[0].mxu0
  %v659 = vadd.f32 0.0, %v658
  %v660 = vpop.f32.mrb[0].mxu0
  %v661 = vadd.f32 0.0, %v660
  %v662 = vpop.f32.mrb[0].mxu0
  %v663 = vadd.f32 0.0, %v662
  %664 = vmatprep.mubr.bf16.mxu0 %v461
  %665 = vmatmul.mubr.bf16.gmra.mrb[0].mxu0 %v279
  %v666 = vpop.f32.mrb[0].mxu0
  %v667 = vadd.f32 0.0, %v666
  %v668 = vpop.f32.mrb[0].mxu0
  %v669 = vadd.f32 0.0, %v668
  %v670 = vpop.f32.mrb[0].mxu0
  %v671 = vadd.f32 0.0, %v670
  %v672 = vpop.f32.mrb[0].mxu0
  %v673 = vadd.f32 0.0, %v672
  %674 = vmatprep.mubr.bf16.mxu0 %v464
  %675 = vmatmul.mubr.bf16.gmra.mrb[0].mxu0 %v281
  %v676 = vpop.f32.mrb[0].mxu0
  %v677 = vadd.f32 0.0, %v676
  %v678 = vpop.f32.mrb[0].mxu0
  %v679 = vadd.f32 0.0, %v678
  %v680 = vpop.f32.mrb[0].mxu0
  %v681 = vadd.f32 0.0, %v680
  %v682 = vpop.f32.mrb[0].mxu0
  %v683 = vadd.f32 0.0, %v682
  %684 = vmatprep.mubr.bf16.mxu0 %v467
  %685 = vmatmul.mubr.bf16.gmra.mrb[0].mxu0 %v283
  %v686 = vpop.f32.mrb[0].mxu0
  %v687 = vadd.f32 0.0, %v686
  %v688 = vpop.f32.mrb[0].mxu0
  %v689 = vadd.f32 0.0, %v688
  %v690 = vpop.f32.mrb[0].mxu0
  %v691 = vadd.f32 0.0, %v690
  %v692 = vpop.f32.mrb[0].mxu0
  %v693 = vadd.f32 0.0, %v692
  %694 = vmatprep.mubr.bf16.mxu0 %v470
  %695 = vmatmul.mubr.bf16.gmra.mrb[0].mxu0 %v285
  %v696 = vpop.f32.mrb[0].mxu0
  %v697 = vadd.f32 0.0, %v696
  %v698 = vpop.f32.mrb[0].mxu0
  %v699 = vadd.f32 0.0, %v698
  %v700 = vpop.f32.mrb[0].mxu0
  %v701 = vadd.f32 0.0, %v700
  %v702 = vpop.f32.mrb[0].mxu0
  %v703 = vadd.f32 0.0, %v702
  %704 = vmatprep.mubr.bf16.mxu0 %v473
  %705 = vmatmul.mubr.bf16.gmra.mrb[0].mxu0 %v287
  %v706 = vpop.f32.mrb[0].mxu0
  %v707 = vadd.f32 0.0, %v706
  %v708 = vpop.f32.mrb[0].mxu0
  %v709 = vadd.f32 0.0, %v708
  %v710 = vpop.f32.mrb[0].mxu0
  %v711 = vadd.f32 0.0, %v710
  %v712 = vpop.f32.mrb[0].mxu0
  %v713 = vadd.f32 0.0, %v712
  %714 = vdwg.mxu0
  %v719 = vunpack.c.l.b16 %v38
  %v720 = vunpack.c.h.b16 %v38
  %v721 = vunpack.c.l.b16 %v39
  %v722 = vunpack.c.h.b16 %v39
  %v723 = vunpack.c.l.b16 %v62
  %v724 = vunpack.c.h.b16 %v62
  %v725 = vunpack.c.l.b16 %v63
  %v726 = vunpack.c.h.b16 %v63
  %v727 = vpack.c.b16 %v721, %v719
  %v728 = vpack.c.b16 %v722, %v720
  %v729 = vpack.c.b16 %v725, %v723
  %v730 = vpack.c.b16 %v726, %v724
  %v754 = vunpack.c.l.b16 %v86
  %v755 = vunpack.c.h.b16 %v86
  %v756 = vunpack.c.l.b16 %v87
  %v757 = vunpack.c.h.b16 %v87
  %v758 = vunpack.c.l.b16 %v88
  %v759 = vunpack.c.h.b16 %v88
  %v760 = vunpack.c.l.b16 %v89
  %v761 = vunpack.c.h.b16 %v89
  %v762 = vunpack.c.l.b16 %v90
  %v763 = vunpack.c.h.b16 %v90
  %v764 = vunpack.c.l.b16 %v91
  %v765 = vunpack.c.h.b16 %v91
  %v766 = vunpack.c.l.b16 %v92
  %v767 = vunpack.c.h.b16 %v92
  %v768 = vunpack.c.l.b16 %v93
  %v769 = vunpack.c.h.b16 %v93
  %v770 = vunpack.c.l.b16 %v94
  %v771 = vunpack.c.h.b16 %v94
  %v772 = vunpack.c.l.b16 %v95
  %v773 = vunpack.c.h.b16 %v95
  %v774 = vunpack.c.l.b16 %v96
  %v775 = vunpack.c.h.b16 %v96
  %v776 = vunpack.c.l.b16 %v97
  %v777 = vunpack.c.h.b16 %v97
  %v778 = vunpack.c.l.b16 %v98
  %v779 = vunpack.c.h.b16 %v98
  %v780 = vunpack.c.l.b16 %v99
  %v781 = vunpack.c.h.b16 %v99
  %v782 = vunpack.c.l.b16 %v100
  %v783 = vunpack.c.h.b16 %v100
  %v784 = vunpack.c.l.b16 %v101
  %v785 = vunpack.c.h.b16 %v101
  %v786 = vunpack.c.l.b16 %v102
  %v787 = vunpack.c.h.b16 %v102
  %v788 = vunpack.c.l.b16 %v103
  %v789 = vunpack.c.h.b16 %v103
  %v790 = vunpack.c.l.b16 %v104
  %v791 = vunpack.c.h.b16 %v104
  %v792 = vunpack.c.l.b16 %v105
  %v793 = vunpack.c.h.b16 %v105
  %v794 = vunpack.c.l.b16 %v106
  %v795 = vunpack.c.h.b16 %v106
  %v796 = vpack.c.b16 %v756, %v754
  %v797 = vpack.c.b16 %v757, %v755
  %v798 = vpack.c.b16 %v760, %v758
  %v799 = vpack.c.b16 %v761, %v759
  %v800 = vpack.c.b16 %v764, %v762
  %v801 = vpack.c.b16 %v765, %v763
  %v802 = vpack.c.b16 %v768, %v766
  %v803 = vpack.c.b16 %v769, %v767
  %v804 = vpack.c.b16 %v772, %v770
  %v805 = vpack.c.b16 %v773, %v771
  %v806 = vpack.c.b16 %v776, %v774
  %v807 = vpack.c.b16 %v777, %v775
  %v808 = vpack.c.b16 %v780, %v778
  %v809 = vpack.c.b16 %v781, %v779
  %v810 = vpack.c.b16 %v784, %v782
  %v811 = vpack.c.b16 %v785, %v783
  %v812 = vpack.c.b16 %v788, %v786
  %v813 = vpack.c.b16 %v789, %v787
  %v814 = vpack.c.b16 %v792, %v790
  %v815 = vpack.c.b16 %v793, %v791
  %v816 = vpack.c.b16 %v794, %v794
  %v817 = vpack.c.b16 %v795, %v795
  %v839 = vsel %vm414, %v728, 0
  %v842 = vsel %vm414, %v730, 0
  %v845 = vsel %vm475, %v816, 0
  %v848 = vsel %vm475, %v817, 0
  %850 = vmatprep.subr.bf16.mxu0 %v797
  %851 = vmatpush1.bf16.msra.mxu0 %v796
  %852 = vmatprep.subr.bf16.mxu0 %v799
  %853 = vmatpush1.bf16.msra.mxu0 %v798
  %854 = vmatprep.subr.bf16.mxu0 %v801
  %855 = vmatpush1.bf16.msra.mxu0 %v800
  %856 = vmatprep.subr.bf16.mxu0 %v803
  %857 = vmatpush1.bf16.msra.mxu0 %v802
  %858 = vmatprep.subr.bf16.mxu0 %v805
  %859 = vmatpush1.bf16.msra.mxu0 %v804
  %860 = vmatprep.subr.bf16.mxu0 %v807
  %861 = vmatpush1.bf16.msra.mxu0 %v806
  %862 = vmatprep.subr.bf16.mxu0 %v809
  %863 = vmatpush1.bf16.msra.mxu0 %v808
  %864 = vmatprep.subr.bf16.mxu0 %v811
  %865 = vmatpush1.bf16.msra.mxu0 %v810
  %866 = vmatprep.subr.bf16.mxu0 %v813
  %867 = vmatpush1.bf16.msra.mxu0 %v812
  %868 = vmatprep.subr.bf16.mxu0 %v815
  %869 = vmatpush1.bf16.msra.mxu0 %v814
  %870 = vmatprep.subr.bf16.mxu0 %v848
  %871 = vmatpush1.bf16.msra.mxu0 %v845
  %872 = vmatprep.subr.bf16.mxu0 0
  %873 = vmatpush1.bf16.msra.mxu0 0
  %874 = vmatprep.subr.bf16.mxu0 0
  %875 = vmatpush1.bf16.msra.mxu0 0
  %876 = vmatprep.subr.bf16.mxu0 0
  %877 = vmatpush1.bf16.msra.mxu0 0
  %878 = vmatprep.subr.bf16.mxu0 0
  %879 = vmatpush1.bf16.msra.mxu0 0
  %880 = vmatprep.subr.bf16.mxu0 0
  %881 = vmatpush1.bf16.msra.mxu0 0
  %882 = vmatprep.mubr.bf16.mxu0 %v839
  %883 = vmatmul.mubr.bf16.gmra.mrb[0].mxu0 %v727
  %v884 = vpop.f32.mrb[0].mxu0
  %v885 = vadd.f32 %v517, %v884
  %v886 = vpop.f32.mrb[0].mxu0
  %v887 = vadd.f32 %v519, %v886
  %v888 = vpop.f32.mrb[0].mxu0
  %v889 = vadd.f32 %v521, %v888
  %v890 = vpop.f32.mrb[0].mxu0
  %v891 = vadd.f32 %v523, %v890
  %892 = vmatprep.mubr.bf16.mxu0 %v416
  %893 = vmatmul.mubr.bf16.gmra.mrb[0].mxu0 %v249
  %v894 = vpop.f32.mrb[0].mxu0
  %v895 = vadd.f32 %v527, %v894
  %v896 = vpop.f32.mrb[0].mxu0
  %v897 = vadd.f32 %v529, %v896
  %v898 = vpop.f32.mrb[0].mxu0
  %v899 = vadd.f32 %v531, %v898
  %v900 = vpop.f32.mrb[0].mxu0
  %v901 = vadd.f32 %v533, %v900
  %902 = vmatprep.mubr.bf16.mxu0 %v419
  %903 = vmatmul.mubr.bf16.gmra.mrb[0].mxu0 %v251
  %v904 = vpop.f32.mrb[0].mxu0
  %v905 = vadd.f32 %v537, %v904
  %v906 = vpop.f32.mrb[0].mxu0
  %v907 = vadd.f32 %v539, %v906
  %v908 = vpop.f32.mrb[0].mxu0
  %v909 = vadd.f32 %v541, %v908
  %v910 = vpop.f32.mrb[0].mxu0
  %v911 = vadd.f32 %v543, %v910
  %912 = vmatprep.mubr.bf16.mxu0 %v422
  %913 = vmatmul.mubr.bf16.gmra.mrb[0].mxu0 %v253
  %v914 = vpop.f32.mrb[0].mxu0
  %v915 = vadd.f32 %v547, %v914
  %v916 = vpop.f32.mrb[0].mxu0
  %v917 = vadd.f32 %v549, %v916
  %v918 = vpop.f32.mrb[0].mxu0
  %v919 = vadd.f32 %v551, %v918
  %v920 = vpop.f32.mrb[0].mxu0
  %v921 = vadd.f32 %v553, %v920
  %922 = vmatprep.mubr.bf16.mxu0 %v425
  %923 = vmatmul.mubr.bf16.gmra.mrb[0].mxu0 %v255
  %v924 = vpop.f32.mrb[0].mxu0
  %v925 = vadd.f32 %v557, %v924
  %v926 = vpop.f32.mrb[0].mxu0
  %v927 = vadd.f32 %v559, %v926
  %v928 = vpop.f32.mrb[0].mxu0
  %v929 = vadd.f32 %v561, %v928
  %v930 = vpop.f32.mrb[0].mxu0
  %v931 = vadd.f32 %v563, %v930
  %932 = vmatprep.mubr.bf16.mxu0 %v428
  %933 = vmatmul.mubr.bf16.gmra.mrb[0].mxu0 %v257
  %v934 = vpop.f32.mrb[0].mxu0
  %v935 = vadd.f32 %v567, %v934
  %v936 = vpop.f32.mrb[0].mxu0
  %v937 = vadd.f32 %v569, %v936
  %v938 = vpop.f32.mrb[0].mxu0
  %v939 = vadd.f32 %v571, %v938
  %v940 = vpop.f32.mrb[0].mxu0
  %v941 = vadd.f32 %v573, %v940
  %942 = vmatprep.mubr.bf16.mxu0 %v431
  %943 = vmatmul.mubr.bf16.gmra.mrb[0].mxu0 %v259
  %v944 = vpop.f32.mrb[0].mxu0
  %v945 = vadd.f32 %v577, %v944
  %v946 = vpop.f32.mrb[0].mxu0
  %v947 = vadd.f32 %v579, %v946
  %v948 = vpop.f32.mrb[0].mxu0
  %v949 = vadd.f32 %v581, %v948
  %v950 = vpop.f32.mrb[0].mxu0
  %v951 = vadd.f32 %v583, %v950
  %952 = vmatprep.mubr.bf16.mxu0 %v434
  %953 = vmatmul.mubr.bf16.gmra.mrb[0].mxu0 %v261
  %v954 = vpop.f32.mrb[0].mxu0
  %v955 = vadd.f32 %v587, %v954
  %v956 = vpop.f32.mrb[0].mxu0
  %v957 = vadd.f32 %v589, %v956
  %v958 = vpop.f32.mrb[0].mxu0
  %v959 = vadd.f32 %v591, %v958
  %v960 = vpop.f32.mrb[0].mxu0
  %v961 = vadd.f32 %v593, %v960
  %962 = vmatprep.mubr.bf16.mxu0 %v437
  %963 = vmatmul.mubr.bf16.gmra.mrb[0].mxu0 %v263
  %v964 = vpop.f32.mrb[0].mxu0
  %v965 = vadd.f32 %v597, %v964
  %v966 = vpop.f32.mrb[0].mxu0
  %v967 = vadd.f32 %v599, %v966
  %v968 = vpop.f32.mrb[0].mxu0
  %v969 = vadd.f32 %v601, %v968
  %v970 = vpop.f32.mrb[0].mxu0
  %v971 = vadd.f32 %v603, %v970
  %972 = vmatprep.mubr.bf16.mxu0 %v440
  %973 = vmatmul.mubr.bf16.gmra.mrb[0].mxu0 %v265
  %v974 = vpop.f32.mrb[0].mxu0
  %v975 = vadd.f32 %v607, %v974
  %v976 = vpop.f32.mrb[0].mxu0
  %v977 = vadd.f32 %v609, %v976
  %v978 = vpop.f32.mrb[0].mxu0
  %v979 = vadd.f32 %v611, %v978
  %v980 = vpop.f32.mrb[0].mxu0
  %v981 = vadd.f32 %v613, %v980
  %982 = vmatprep.mubr.bf16.mxu0 %v842
  %983 = vmatmul.mubr.bf16.gmra.mrb[0].mxu0 %v729
  %v984 = vpop.f32.mrb[0].mxu0
  %v985 = vadd.f32 %v617, %v984
  %v986 = vpop.f32.mrb[0].mxu0
  %v987 = vadd.f32 %v619, %v986
  %v988 = vpop.f32.mrb[0].mxu0
  %v989 = vadd.f32 %v621, %v988
  %v990 = vpop.f32.mrb[0].mxu0
  %v991 = vadd.f32 %v623, %v990
  %992 = vmatprep.mubr.bf16.mxu0 %v446
  %993 = vmatmul.mubr.bf16.gmra.mrb[0].mxu0 %v269
  %v994 = vpop.f32.mrb[0].mxu0
  %v995 = vadd.f32 %v627, %v994
  %v996 = vpop.f32.mrb[0].mxu0
  %v997 = vadd.f32 %v629, %v996
  %v998 = vpop.f32.mrb[0].mxu0
  %v999 = vadd.f32 %v631, %v998
  %v1000 = vpop.f32.mrb[0].mxu0
  %v1001 = vadd.f32 %v633, %v1000
  %1002 = vmatprep.mubr.bf16.mxu0 %v449
  %1003 = vmatmul.mubr.bf16.gmra.mrb[0].mxu0 %v271
  %v1004 = vpop.f32.mrb[0].mxu0
  %v1005 = vadd.f32 %v637, %v1004
  %v1006 = vpop.f32.mrb[0].mxu0
  %v1007 = vadd.f32 %v639, %v1006
  %v1008 = vpop.f32.mrb[0].mxu0
  %v1009 = vadd.f32 %v641, %v1008
  %v1010 = vpop.f32.mrb[0].mxu0
  %v1011 = vadd.f32 %v643, %v1010
  %1012 = vmatprep.mubr.bf16.mxu0 %v452
  %1013 = vmatmul.mubr.bf16.gmra.mrb[0].mxu0 %v273
  %v1014 = vpop.f32.mrb[0].mxu0
  %v1015 = vadd.f32 %v647, %v1014
  %v1016 = vpop.f32.mrb[0].mxu0
  %v1017 = vadd.f32 %v649, %v1016
  %v1018 = vpop.f32.mrb[0].mxu0
  %v1019 = vadd.f32 %v651, %v1018
  %v1020 = vpop.f32.mrb[0].mxu0
  %v1021 = vadd.f32 %v653, %v1020
  %1022 = vmatprep.mubr.bf16.mxu0 %v455
  %1023 = vmatmul.mubr.bf16.gmra.mrb[0].mxu0 %v275
  %v1024 = vpop.f32.mrb[0].mxu0
  %v1025 = vadd.f32 %v657, %v1024
  %v1026 = vpop.f32.mrb[0].mxu0
  %v1027 = vadd.f32 %v659, %v1026
  %v1028 = vpop.f32.mrb[0].mxu0
  %v1029 = vadd.f32 %v661, %v1028
  %v1030 = vpop.f32.mrb[0].mxu0
  %v1031 = vadd.f32 %v663, %v1030
  %1032 = vmatprep.mubr.bf16.mxu0 %v458
  %1033 = vmatmul.mubr.bf16.gmra.mrb[0].mxu0 %v277
  %v1034 = vpop.f32.mrb[0].mxu0
  %v1035 = vadd.f32 %v667, %v1034
  %v1036 = vpop.f32.mrb[0].mxu0
  %v1037 = vadd.f32 %v669, %v1036
  %v1038 = vpop.f32.mrb[0].mxu0
  %v1039 = vadd.f32 %v671, %v1038
  %v1040 = vpop.f32.mrb[0].mxu0
  %v1041 = vadd.f32 %v673, %v1040
  %1042 = vmatprep.mubr.bf16.mxu0 %v461
  %1043 = vmatmul.mubr.bf16.gmra.mrb[0].mxu0 %v279
  %v1044 = vpop.f32.mrb[0].mxu0
  %v1045 = vadd.f32 %v677, %v1044
  %v1046 = vpop.f32.mrb[0].mxu0
  %v1047 = vadd.f32 %v679, %v1046
  %v1048 = vpop.f32.mrb[0].mxu0
  %v1049 = vadd.f32 %v681, %v1048
  %v1050 = vpop.f32.mrb[0].mxu0
  %v1051 = vadd.f32 %v683, %v1050
  %1052 = vmatprep.mubr.bf16.mxu0 %v464
  %1053 = vmatmul.mubr.bf16.gmra.mrb[0].mxu0 %v281
  %v1054 = vpop.f32.mrb[0].mxu0
  %v1055 = vadd.f32 %v687, %v1054
  %v1056 = vpop.f32.mrb[0].mxu0
  %v1057 = vadd.f32 %v689, %v1056
  %v1058 = vpop.f32.mrb[0].mxu0
  %v1059 = vadd.f32 %v691, %v1058
  %v1060 = vpop.f32.mrb[0].mxu0
  %v1061 = vadd.f32 %v693, %v1060
  %1062 = vmatprep.mubr.bf16.mxu0 %v467
  %1063 = vmatmul.mubr.bf16.gmra.mrb[0].mxu0 %v283
  %v1064 = vpop.f32.mrb[0].mxu0
  %v1065 = vadd.f32 %v697, %v1064
  %v1066 = vpop.f32.mrb[0].mxu0
  %v1067 = vadd.f32 %v699, %v1066
  %v1068 = vpop.f32.mrb[0].mxu0
  %v1069 = vadd.f32 %v701, %v1068
  %v1070 = vpop.f32.mrb[0].mxu0
  %v1071 = vadd.f32 %v703, %v1070
  %1072 = vmatprep.mubr.bf16.mxu0 %v470
  %1073 = vmatmul.mubr.bf16.gmra.mrb[0].mxu0 %v285
  %v1074 = vpop.f32.mrb[0].mxu0
  %v1075 = vadd.f32 %v707, %v1074
  %v1076 = vpop.f32.mrb[0].mxu0
  %v1077 = vadd.f32 %v709, %v1076
  %v1078 = vpop.f32.mrb[0].mxu0
  %v1079 = vadd.f32 %v711, %v1078
  %v1080 = vpop.f32.mrb[0].mxu0
  %v1081 = vadd.f32 %v713, %v1080
  %1082 = vdwg.mxu0
  %s1083 = scalar_lea.vmem %s2, 1008
  %v1084 = vld [vmem:[%s1083] sm:$0xff]
  %v1085 = vld [vmem:[%s1083 + $0x8] sm:$0xff]
  %v1086 = vld [vmem:[%s1083 + $0x10] sm:$0xff]
  %v1087 = vld [vmem:[%s1083 + $0x18] sm:$0xff]
  %v1088 = vld [vmem:[%s1083 + $0x20] sm:$0xff]
  %v1089 = vld [vmem:[%s1083 + $0x28] sm:$0xff]
  %v1090 = vld [vmem:[%s1083 + $0x30] sm:$0xff]
  %v1091 = vld [vmem:[%s1083 + $0x38] sm:$0xff]
  %v1092 = vld [vmem:[%s1083 + $0x40] sm:$0xff]
  %v1093 = vld [vmem:[%s1083 + $0x48] sm:$0xff]
  %v1094 = vld [vmem:[%s1083 + $0x50] sm:$0xff]
  %v1095 = vld [vmem:[%s1083 + $0x58] sm:$0xff]
  %v1096 = vld [vmem:[%s1083 + $0x60] sm:$0xff]
  %v1097 = vld [vmem:[%s1083 + $0x68] sm:$0xff]
  %v1098 = vld [vmem:[%s1083 + $0x70] sm:$0xff]
  %v1099 = vld [vmem:[%s1083 + $0x78] sm:$0xff]
  %v1100 = vld [vmem:[%s1083 + $0x80] sm:$0xff]
  %v1101 = vld [vmem:[%s1083 + $0x88] sm:$0xff]
  %v1102 = vld [vmem:[%s1083 + $0x90] sm:$0xff]
  %v1103 = vld [vmem:[%s1083 + $0x98] sm:$0xff]
  %v1104 = vld [vmem:[%s1083 + $0xa0] sm:$0x77]
  %v1109 = vunpack.c.l.b16 %v60
  %v1110 = vunpack.c.h.b16 %v60
  %v1111 = vunpack.c.l.b16 %v61
  %v1112 = vunpack.c.h.b16 %v61
  %v1113 = vunpack.c.l.b16 %v84
  %v1114 = vunpack.c.h.b16 %v84
  %v1115 = vunpack.c.l.b16 %v85
  %v1116 = vunpack.c.h.b16 %v85
  %v1117 = vpack.c.b16 %v1111, %v1109
  %v1118 = vpack.c.b16 %v1112, %v1110
  %v1119 = vpack.c.b16 %v1115, %v1113
  %v1120 = vpack.c.b16 %v1116, %v1114
  %v1144 = vunpack.c.l.b16 %v1084
  %v1145 = vunpack.c.h.b16 %v1084
  %v1146 = vunpack.c.l.b16 %v1085
  %v1147 = vunpack.c.h.b16 %v1085
  %v1148 = vunpack.c.l.b16 %v1086
  %v1149 = vunpack.c.h.b16 %v1086
  %v1150 = vunpack.c.l.b16 %v1087
  %v1151 = vunpack.c.h.b16 %v1087
  %v1152 = vunpack.c.l.b16 %v1088
  %v1153 = vunpack.c.h.b16 %v1088
  %v1154 = vunpack.c.l.b16 %v1089
  %v1155 = vunpack.c.h.b16 %v1089
  %v1156 = vunpack.c.l.b16 %v1090
  %v1157 = vunpack.c.h.b16 %v1090
  %v1158 = vunpack.c.l.b16 %v1091
  %v1159 = vunpack.c.h.b16 %v1091
  %v1160 = vunpack.c.l.b16 %v1092
  %v1161 = vunpack.c.h.b16 %v1092
  %v1162 = vunpack.c.l.b16 %v1093
  %v1163 = vunpack.c.h.b16 %v1093
  %v1164 = vunpack.c.l.b16 %v1094
  %v1165 = vunpack.c.h.b16 %v1094
  %v1166 = vunpack.c.l.b16 %v1095
  %v1167 = vunpack.c.h.b16 %v1095
  %v1168 = vunpack.c.l.b16 %v1096
  %v1169 = vunpack.c.h.b16 %v1096
  %v1170 = vunpack.c.l.b16 %v1097
  %v1171 = vunpack.c.h.b16 %v1097
  %v1172 = vunpack.c.l.b16 %v1098
  %v1173 = vunpack.c.h.b16 %v1098
  %v1174 = vunpack.c.l.b16 %v1099
  %v1175 = vunpack.c.h.b16 %v1099
  %v1176 = vunpack.c.l.b16 %v1100
  %v1177 = vunpack.c.h.b16 %v1100
  %v1178 = vunpack.c.l.b16 %v1101
  %v1179 = vunpack.c.h.b16 %v1101
  %v1180 = vunpack.c.l.b16 %v1102
  %v1181 = vunpack.c.h.b16 %v1102
  %v1182 = vunpack.c.l.b16 %v1103
  %v1183 = vunpack.c.h.b16 %v1103
  %v1184 = vunpack.c.l.b16 %v1104
  %v1185 = vunpack.c.h.b16 %v1104
  %v1186 = vpack.c.b16 %v1146, %v1144
  %v1187 = vpack.c.b16 %v1147, %v1145
  %v1188 = vpack.c.b16 %v1150, %v1148
  %v1189 = vpack.c.b16 %v1151, %v1149
  %v1190 = vpack.c.b16 %v1154, %v1152
  %v1191 = vpack.c.b16 %v1155, %v1153
  %v1192 = vpack.c.b16 %v1158, %v1156
  %v1193 = vpack.c.b16 %v1159, %v1157
  %v1194 = vpack.c.b16 %v1162, %v1160
  %v1195 = vpack.c.b16 %v1163, %v1161
  %v1196 = vpack.c.b16 %v1166, %v1164
  %v1197 = vpack.c.b16 %v1167, %v1165
  %v1198 = vpack.c.b16 %v1170, %v1168
  %v1199 = vpack.c.b16 %v1171, %v1169
  %v1200 = vpack.c.b16 %v1174, %v1172
  %v1201 = vpack.c.b16 %v1175, %v1173
  %v1202 = vpack.c.b16 %v1178, %v1176
  %v1203 = vpack.c.b16 %v1179, %v1177
  %v1204 = vpack.c.b16 %v1182, %v1180
  %v1205 = vpack.c.b16 %v1183, %v1181
  %v1206 = vpack.c.b16 %v1184, %v1184
  %v1207 = vpack.c.b16 %v1185, %v1185
  %v1229 = vsel %vm414, %v1118, 0
  %v1232 = vsel %vm414, %v1120, 0
  %v1235 = vsel %vm475, %v1206, 0
  %v1238 = vsel %vm475, %v1207, 0
  %1240 = vmatprep.subr.bf16.mxu0 %v1187
  %1241 = vmatpush1.bf16.msra.mxu0 %v1186
  %1242 = vmatprep.subr.bf16.mxu0 %v1189
  %1243 = vmatpush1.bf16.msra.mxu0 %v1188
  %1244 = vmatprep.subr.bf16.mxu0 %v1191
  %1245 = vmatpush1.bf16.msra.mxu0 %v1190
  %1246 = vmatprep.subr.bf16.mxu0 %v1193
  %1247 = vmatpush1.bf16.msra.mxu0 %v1192
  %1248 = vmatprep.subr.bf16.mxu0 %v1195
  %1249 = vmatpush1.bf16.msra.mxu0 %v1194
  %1250 = vmatprep.subr.bf16.mxu0 %v1197
  %1251 = vmatpush1.bf16.msra.mxu0 %v1196
  %1252 = vmatprep.subr.bf16.mxu0 %v1199
  %1253 = vmatpush1.bf16.msra.mxu0 %v1198
  %1254 = vmatprep.subr.bf16.mxu0 %v1201
  %1255 = vmatpush1.bf16.msra.mxu0 %v1200
  %1256 = vmatprep.subr.bf16.mxu0 %v1203
  %1257 = vmatpush1.bf16.msra.mxu0 %v1202
  %1258 = vmatprep.subr.bf16.mxu0 %v1205
  %1259 = vmatpush1.bf16.msra.mxu0 %v1204
  %1260 = vmatprep.subr.bf16.mxu0 %v1238
  %1261 = vmatpush1.bf16.msra.mxu0 %v1235
  %1262 = vmatprep.subr.bf16.mxu0 0
  %1263 = vmatpush1.bf16.msra.mxu0 0
  %1264 = vmatprep.subr.bf16.mxu0 0
  %1265 = vmatpush1.bf16.msra.mxu0 0
  %1266 = vmatprep.subr.bf16.mxu0 0
  %1267 = vmatpush1.bf16.msra.mxu0 0
  %1268 = vmatprep.subr.bf16.mxu0 0
  %1269 = vmatpush1.bf16.msra.mxu0 0
  %1270 = vmatprep.subr.bf16.mxu0 0
  %1271 = vmatpush1.bf16.msra.mxu0 0
  %1272 = vmatprep.mubr.bf16.mxu0 %v419
  %1273 = vmatmul.mubr.bf16.gmra.mrb[0].mxu0 %v251
  %v1274 = vpop.f32.mrb[0].mxu0
  %v1275 = vadd.f32 0.0, %v1274
  %v1276 = vpop.f32.mrb[0].mxu0
  %v1277 = vadd.f32 0.0, %v1276
  %v1278 = vpop.f32.mrb[0].mxu0
  %v1279 = vadd.f32 0.0, %v1278
  %v1280 = vpop.f32.mrb[0].mxu0
  %v1281 = vadd.f32 0.0, %v1280
  %1282 = vmatprep.mubr.bf16.mxu0 %v422
  %1283 = vmatmul.mubr.bf16.gmra.mrb[0].mxu0 %v253
  %v1284 = vpop.f32.mrb[0].mxu0
  %v1285 = vadd.f32 0.0, %v1284
  %v1286 = vpop.f32.mrb[0].mxu0
  %v1287 = vadd.f32 0.0, %v1286
  %v1288 = vpop.f32.mrb[0].mxu0
  %v1289 = vadd.f32 0.0, %v1288
  %v1290 = vpop.f32.mrb[0].mxu0
  %v1291 = vadd.f32 0.0, %v1290
  %1292 = vmatprep.mubr.bf16.mxu0 %v425
  %1293 = vmatmul.mubr.bf16.gmra.mrb[0].mxu0 %v255
  %v1294 = vpop.f32.mrb[0].mxu0
  %v1295 = vadd.f32 0.0, %v1294
  %v1296 = vpop.f32.mrb[0].mxu0
  %v1297 = vadd.f32 0.0, %v1296
  %v1298 = vpop.f32.mrb[0].mxu0
  %v1299 = vadd.f32 0.0, %v1298
  %v1300 = vpop.f32.mrb[0].mxu0
  %v1301 = vadd.f32 0.0, %v1300
  %1302 = vmatprep.mubr.bf16.mxu0 %v428
  %1303 = vmatmul.mubr.bf16.gmra.mrb[0].mxu0 %v257
  %v1304 = vpop.f32.mrb[0].mxu0
  %v1305 = vadd.f32 0.0, %v1304
  %v1306 = vpop.f32.mrb[0].mxu0
  %v1307 = vadd.f32 0.0, %v1306
  %v1308 = vpop.f32.mrb[0].mxu0
  %v1309 = vadd.f32 0.0, %v1308
  %v1310 = vpop.f32.mrb[0].mxu0
  %v1311 = vadd.f32 0.0, %v1310
  %1312 = vmatprep.mubr.bf16.mxu0 %v431
  %1313 = vmatmul.mubr.bf16.gmra.mrb[0].mxu0 %v259
  %v1314 = vpop.f32.mrb[0].mxu0
  %v1315 = vadd.f32 0.0, %v1314
  %v1316 = vpop.f32.mrb[0].mxu0
  %v1317 = vadd.f32 0.0, %v1316
  %v1318 = vpop.f32.mrb[0].mxu0
  %v1319 = vadd.f32 0.0, %v1318
  %v1320 = vpop.f32.mrb[0].mxu0
  %v1321 = vadd.f32 0.0, %v1320
  %1322 = vmatprep.mubr.bf16.mxu0 %v434
  %1323 = vmatmul.mubr.bf16.gmra.mrb[0].mxu0 %v261
  %v1324 = vpop.f32.mrb[0].mxu0
  %v1325 = vadd.f32 0.0, %v1324
  %v1326 = vpop.f32.mrb[0].mxu0
  %v1327 = vadd.f32 0.0, %v1326
  %v1328 = vpop.f32.mrb[0].mxu0
  %v1329 = vadd.f32 0.0, %v1328
  %v1330 = vpop.f32.mrb[0].mxu0
  %v1331 = vadd.f32 0.0, %v1330
  %1332 = vmatprep.mubr.bf16.mxu0 %v437
  %1333 = vmatmul.mubr.bf16.gmra.mrb[0].mxu0 %v263
  %v1334 = vpop.f32.mrb[0].mxu0
  %v1335 = vadd.f32 0.0, %v1334
  %v1336 = vpop.f32.mrb[0].mxu0
  %v1337 = vadd.f32 0.0, %v1336
  %v1338 = vpop.f32.mrb[0].mxu0
  %v1339 = vadd.f32 0.0, %v1338
  %v1340 = vpop.f32.mrb[0].mxu0
  %v1341 = vadd.f32 0.0, %v1340
  %1342 = vmatprep.mubr.bf16.mxu0 %v440
  %1343 = vmatmul.mubr.bf16.gmra.mrb[0].mxu0 %v265
  %v1344 = vpop.f32.mrb[0].mxu0
  %v1345 = vadd.f32 0.0, %v1344
  %v1346 = vpop.f32.mrb[0].mxu0
  %v1347 = vadd.f32 0.0, %v1346
  %v1348 = vpop.f32.mrb[0].mxu0
  %v1349 = vadd.f32 0.0, %v1348
  %v1350 = vpop.f32.mrb[0].mxu0
  %v1351 = vadd.f32 0.0, %v1350
  %1352 = vmatprep.mubr.bf16.mxu0 %v443
  %1353 = vmatmul.mubr.bf16.gmra.mrb[0].mxu0 %v267
  %v1354 = vpop.f32.mrb[0].mxu0
  %v1355 = vadd.f32 0.0, %v1354
  %v1356 = vpop.f32.mrb[0].mxu0
  %v1357 = vadd.f32 0.0, %v1356
  %v1358 = vpop.f32.mrb[0].mxu0
  %v1359 = vadd.f32 0.0, %v1358
  %v1360 = vpop.f32.mrb[0].mxu0
  %v1361 = vadd.f32 0.0, %v1360
  %1362 = vmatprep.mubr.bf16.mxu0 %v1229
  %1363 = vmatmul.mubr.bf16.gmra.mrb[0].mxu0 %v1117
  %v1364 = vpop.f32.mrb[0].mxu0
  %v1365 = vadd.f32 0.0, %v1364
  %v1366 = vpop.f32.mrb[0].mxu0
  %v1367 = vadd.f32 0.0, %v1366
  %v1368 = vpop.f32.mrb[0].mxu0
  %v1369 = vadd.f32 0.0, %v1368
  %v1370 = vpop.f32.mrb[0].mxu0
  %v1371 = vadd.f32 0.0, %v1370
  %1372 = vmatprep.mubr.bf16.mxu0 %v449
  %1373 = vmatmul.mubr.bf16.gmra.mrb[0].mxu0 %v271
  %v1374 = vpop.f32.mrb[0].mxu0
  %v1375 = vadd.f32 0.0, %v1374
  %v1376 = vpop.f32.mrb[0].mxu0
  %v1377 = vadd.f32 0.0, %v1376
  %v1378 = vpop.f32.mrb[0].mxu0
  %v1379 = vadd.f32 0.0, %v1378
  %v1380 = vpop.f32.mrb[0].mxu0
  %v1381 = vadd.f32 0.0, %v1380
  %1382 = vmatprep.mubr.bf16.mxu0 %v452
  %1383 = vmatmul.mubr.bf16.gmra.mrb[0].mxu0 %v273
  %v1384 = vpop.f32.mrb[0].mxu0
  %v1385 = vadd.f32 0.0, %v1384
  %v1386 = vpop.f32.mrb[0].mxu0
  %v1387 = vadd.f32 0.0, %v1386
  %v1388 = vpop.f32.mrb[0].mxu0
  %v1389 = vadd.f32 0.0, %v1388
  %v1390 = vpop.f32.mrb[0].mxu0
  %v1391 = vadd.f32 0.0, %v1390
  %1392 = vmatprep.mubr.bf16.mxu0 %v455
  %1393 = vmatmul.mubr.bf16.gmra.mrb[0].mxu0 %v275
  %v1394 = vpop.f32.mrb[0].mxu0
  %v1395 = vadd.f32 0.0, %v1394
  %v1396 = vpop.f32.mrb[0].mxu0
  %v1397 = vadd.f32 0.0, %v1396
  %v1398 = vpop.f32.mrb[0].mxu0
  %v1399 = vadd.f32 0.0, %v1398
  %v1400 = vpop.f32.mrb[0].mxu0
  %v1401 = vadd.f32 0.0, %v1400
  %1402 = vmatprep.mubr.bf16.mxu0 %v458
  %1403 = vmatmul.mubr.bf16.gmra.mrb[0].mxu0 %v277
  %v1404 = vpop.f32.mrb[0].mxu0
  %v1405 = vadd.f32 0.0, %v1404
  %v1406 = vpop.f32.mrb[0].mxu0
  %v1407 = vadd.f32 0.0, %v1406
  %v1408 = vpop.f32.mrb[0].mxu0
  %v1409 = vadd.f32 0.0, %v1408
  %v1410 = vpop.f32.mrb[0].mxu0
  %v1411 = vadd.f32 0.0, %v1410
  %1412 = vmatprep.mubr.bf16.mxu0 %v461
  %1413 = vmatmul.mubr.bf16.gmra.mrb[0].mxu0 %v279
  %v1414 = vpop.f32.mrb[0].mxu0
  %v1415 = vadd.f32 0.0, %v1414
  %v1416 = vpop.f32.mrb[0].mxu0
  %v1417 = vadd.f32 0.0, %v1416
  %v1418 = vpop.f32.mrb[0].mxu0
  %v1419 = vadd.f32 0.0, %v1418
  %v1420 = vpop.f32.mrb[0].mxu0
  %v1421 = vadd.f32 0.0, %v1420
  %1422 = vmatprep.mubr.bf16.mxu0 %v464
  %1423 = vmatmul.mubr.bf16.gmra.mrb[0].mxu0 %v281
  %v1424 = vpop.f32.mrb[0].mxu0
  %v1425 = vadd.f32 0.0, %v1424
  %v1426 = vpop.f32.mrb[0].mxu0
  %v1427 = vadd.f32 0.0, %v1426
  %v1428 = vpop.f32.mrb[0].mxu0
  %v1429 = vadd.f32 0.0, %v1428
  %v1430 = vpop.f32.mrb[0].mxu0
  %v1431 = vadd.f32 0.0, %v1430
  %1432 = vmatprep.mubr.bf16.mxu0 %v467
  %1433 = vmatmul.mubr.bf16.gmra.mrb[0].mxu0 %v283
  %v1434 = vpop.f32.mrb[0].mxu0
  %v1435 = vadd.f32 0.0, %v1434
  %v1436 = vpop.f32.mrb[0].mxu0
  %v1437 = vadd.f32 0.0, %v1436
  %v1438 = vpop.f32.mrb[0].mxu0
  %v1439 = vadd.f32 0.0, %v1438
  %v1440 = vpop.f32.mrb[0].mxu0
  %v1441 = vadd.f32 0.0, %v1440
  %1442 = vmatprep.mubr.bf16.mxu0 %v470
  %1443 = vmatmul.mubr.bf16.gmra.mrb[0].mxu0 %v285
  %v1444 = vpop.f32.mrb[0].mxu0
  %v1445 = vadd.f32 0.0, %v1444
  %v1446 = vpop.f32.mrb[0].mxu0
  %v1447 = vadd.f32 0.0, %v1446
  %v1448 = vpop.f32.mrb[0].mxu0
  %v1449 = vadd.f32 0.0, %v1448
  %v1450 = vpop.f32.mrb[0].mxu0
  %v1451 = vadd.f32 0.0, %v1450
  %1452 = vmatprep.mubr.bf16.mxu0 %v473
  %1453 = vmatmul.mubr.bf16.gmra.mrb[0].mxu0 %v287
  %v1454 = vpop.f32.mrb[0].mxu0
  %v1455 = vadd.f32 0.0, %v1454
  %v1456 = vpop.f32.mrb[0].mxu0
  %v1457 = vadd.f32 0.0, %v1456
  %v1458 = vpop.f32.mrb[0].mxu0
  %v1459 = vadd.f32 0.0, %v1458
  %v1460 = vpop.f32.mrb[0].mxu0
  %v1461 = vadd.f32 0.0, %v1460
  %1462 = vmatprep.mubr.bf16.mxu0 %v1232
  %1463 = vmatmul.mubr.bf16.gmra.mrb[0].mxu0 %v1119
  %v1464 = vpop.f32.mrb[0].mxu0
  %v1465 = vadd.f32 0.0, %v1464
  %v1466 = vpop.f32.mrb[0].mxu0
  %v1467 = vadd.f32 0.0, %v1466
  %v1468 = vpop.f32.mrb[0].mxu0
  %v1469 = vadd.f32 0.0, %v1468
  %v1470 = vpop.f32.mrb[0].mxu0
  %v1471 = vadd.f32 0.0, %v1470
  %1472 = vdwg.mxu0
  %v1473 = vadd.f32 %v885, %v1275
  %v1474 = vadd.f32 %v887, %v1277
  %v1475 = vadd.f32 %v889, %v1279
  %v1476 = vadd.f32 %v891, %v1281
  %v1477 = vadd.f32 %v895, %v1285
  %v1478 = vadd.f32 %v897, %v1287
  %v1479 = vadd.f32 %v899, %v1289
  %v1480 = vadd.f32 %v901, %v1291
  %v1481 = vadd.f32 %v905, %v1295
  %v1482 = vadd.f32 %v907, %v1297
  %v1483 = vadd.f32 %v909, %v1299
  %v1484 = vadd.f32 %v911, %v1301
  %v1485 = vadd.f32 %v915, %v1305
  %v1486 = vadd.f32 %v917, %v1307
  %v1487 = vadd.f32 %v919, %v1309
  %v1488 = vadd.f32 %v921, %v1311
  %v1489 = vadd.f32 %v925, %v1315
  %v1490 = vadd.f32 %v927, %v1317
  %v1491 = vadd.f32 %v929, %v1319
  %v1492 = vadd.f32 %v931, %v1321
  %v1493 = vadd.f32 %v935, %v1325
  %v1494 = vadd.f32 %v937, %v1327
  %v1495 = vadd.f32 %v939, %v1329
  %v1496 = vadd.f32 %v941, %v1331
  %v1497 = vadd.f32 %v945, %v1335
  %v1498 = vadd.f32 %v947, %v1337
  %v1499 = vadd.f32 %v949, %v1339
  %v1500 = vadd.f32 %v951, %v1341
  %v1501 = vadd.f32 %v955, %v1345
  %v1502 = vadd.f32 %v957, %v1347
  %v1503 = vadd.f32 %v959, %v1349
  %v1504 = vadd.f32 %v961, %v1351
  %v1505 = vadd.f32 %v965, %v1355
  %v1506 = vadd.f32 %v967, %v1357
  %v1507 = vadd.f32 %v969, %v1359
  %v1508 = vadd.f32 %v971, %v1361
  %v1509 = vadd.f32 %v975, %v1365
  %v1510 = vadd.f32 %v977, %v1367
  %v1511 = vadd.f32 %v979, %v1369
  %v1512 = vadd.f32 %v981, %v1371
  %v1513 = vadd.f32 %v985, %v1375
  %v1514 = vadd.f32 %v987, %v1377
  %v1515 = vadd.f32 %v989, %v1379
  %v1516 = vadd.f32 %v991, %v1381
  %v1517 = vadd.f32 %v995, %v1385
  %v1518 = vadd.f32 %v997, %v1387
  %v1519 = vadd.f32 %v999, %v1389
  %v1520 = vadd.f32 %v1001, %v1391
  %v1521 = vadd.f32 %v1005, %v1395
  %v1522 = vadd.f32 %v1007, %v1397
  %v1523 = vadd.f32 %v1009, %v1399
  %v1524 = vadd.f32 %v1011, %v1401
  %v1525 = vadd.f32 %v1015, %v1405
  %v1526 = vadd.f32 %v1017, %v1407
  %v1527 = vadd.f32 %v1019, %v1409
  %v1528 = vadd.f32 %v1021, %v1411
  %v1529 = vadd.f32 %v1025, %v1415
  %v1530 = vadd.f32 %v1027, %v1417
  %v1531 = vadd.f32 %v1029, %v1419
  %v1532 = vadd.f32 %v1031, %v1421
  %v1533 = vadd.f32 %v1035, %v1425
  %v1534 = vadd.f32 %v1037, %v1427
  %v1535 = vadd.f32 %v1039, %v1429
  %v1536 = vadd.f32 %v1041, %v1431
  %v1537 = vadd.f32 %v1045, %v1435
  %v1538 = vadd.f32 %v1047, %v1437
  %v1539 = vadd.f32 %v1049, %v1439
  %v1540 = vadd.f32 %v1051, %v1441
  %v1541 = vadd.f32 %v1055, %v1445
  %v1542 = vadd.f32 %v1057, %v1447
  %v1543 = vadd.f32 %v1059, %v1449
  %v1544 = vadd.f32 %v1061, %v1451
  %v1545 = vadd.f32 %v1065, %v1455
  %v1546 = vadd.f32 %v1067, %v1457
  %v1547 = vadd.f32 %v1069, %v1459
  %v1548 = vadd.f32 %v1071, %v1461
  %v1549 = vadd.f32 %v1075, %v1465
  %v1550 = vadd.f32 %v1077, %v1467
  %v1551 = vadd.f32 %v1079, %v1469
  %v1552 = vadd.f32 %v1081, %v1471
  %v1553 = vld [vmem:[%s0] sm:$0xff]
  %v1554 = vld [vmem:[%s0 + $0x8] sm:$0xff]
  %v1555 = vld [vmem:[%s0 + $0x10] sm:$0xff]
  %v1556 = vld [vmem:[%s0 + $0x18] sm:$0xff]
  %v1557 = vld [vmem:[%s0 + $0x20] sm:$0xff]
  %v1558 = vld [vmem:[%s0 + $0x28] sm:$0xff]
  %v1559 = vld [vmem:[%s0 + $0x30] sm:$0xff]
  %v1560 = vld [vmem:[%s0 + $0x38] sm:$0xff]
  %v1561 = vld [vmem:[%s0 + $0x40] sm:$0xff]
  %v1562 = vld [vmem:[%s0 + $0x48] sm:$0xff]
  %v1563 = vld [vmem:[%s0 + $0x50] sm:$0xff]
  %v1564 = vld [vmem:[%s0 + $0x58] sm:$0xff]
  %v1565 = vld [vmem:[%s0 + $0x60] sm:$0xff]
  %v1566 = vld [vmem:[%s0 + $0x68] sm:$0xff]
  %v1567 = vld [vmem:[%s0 + $0x70] sm:$0xff]
  %v1568 = vld [vmem:[%s0 + $0x78] sm:$0xff]
  %v1569 = vld [vmem:[%s0 + $0x80] sm:$0xff]
  %v1570 = vld [vmem:[%s0 + $0x88] sm:$0xff]
  %v1571 = vld [vmem:[%s0 + $0x90] sm:$0xff]
  %v1572 = vld [vmem:[%s0 + $0x98] sm:$0xff]
  %v1573 = vld [vmem:[%s0 + $0xa0] sm:$0xff]
  %v1574 = vld [vmem:[%s0 + $0xa8] sm:$0xff]
  %v1575 = vld [vmem:[%s0 + $0xb0] sm:$0xff]
  %v1576 = vld [vmem:[%s0 + $0xb8] sm:$0xff]
  %v1577 = vld [vmem:[%s0 + $0xc0] sm:$0x11]
  %v1578 = vld [vmem:[%s0 + $0xc8] sm:$0xff]
  %v1579 = vld [vmem:[%s0 + $0xd0] sm:$0xff]
  %v1580 = vld [vmem:[%s0 + $0xd8] sm:$0xff]
  %v1581 = vld [vmem:[%s0 + $0xe0] sm:$0xff]
  %v1582 = vld [vmem:[%s0 + $0xe8] sm:$0xff]
  %v1583 = vld [vmem:[%s0 + $0xf0] sm:$0xff]
  %v1584 = vld [vmem:[%s0 + $0xf8] sm:$0xff]
  %v1585 = vld [vmem:[%s0 + $0x100] sm:$0xff]
  %v1586 = vld [vmem:[%s0 + $0x108] sm:$0xff]
  %v1587 = vld [vmem:[%s0 + $0x110] sm:$0xff]
  %v1588 = vld [vmem:[%s0 + $0x118] sm:$0xff]
  %v1589 = vld [vmem:[%s0 + $0x120] sm:$0xff]
  %v1590 = vld [vmem:[%s0 + $0x128] sm:$0xff]
  %v1591 = vld [vmem:[%s0 + $0x130] sm:$0xff]
  %v1592 = vld [vmem:[%s0 + $0x138] sm:$0xff]
  %v1593 = vld [vmem:[%s0 + $0x140] sm:$0xff]
  %v1594 = vld [vmem:[%s0 + $0x148] sm:$0xff]
  %v1595 = vld [vmem:[%s0 + $0x150] sm:$0xff]
  %v1596 = vld [vmem:[%s0 + $0x158] sm:$0xff]
  %v1597 = vld [vmem:[%s0 + $0x160] sm:$0xff]
  %v1598 = vld [vmem:[%s0 + $0x168] sm:$0xff]
  %v1599 = vld [vmem:[%s0 + $0x170] sm:$0xff]
  %v1600 = vld [vmem:[%s0 + $0x178] sm:$0xff]
  %v1601 = vld [vmem:[%s0 + $0x180] sm:$0xff]
  %v1602 = vld [vmem:[%s0 + $0x188] sm:$0x11]
  %vm1603 = vsmask.f32 3328
  %vm1604 = vsmask.f32 7440
  %vm1605 = vmor %vm1603, %vm1604
  %v1607 = vshrl.u32 %v1553, 16
  %v1609 = vrot.slane %v1607, 4
  %v1610 = vshll.u32 %v1553, 16
  %v1612 = vrot.slane %v1610, 5
  %v1613 = vor.u32 %v1609, %v1612
  %v1614 = vrot.slane %v1613, 4
  %v1616 = vshll.u32 %v1554, 16
  %v1618 = vrot.slane %v1616, 5
  %v1619 = vsel %vm1605, %v1614, %v1618
  %v1620 = vshrl.u32 %v1554, 16
  %v1622 = vrot.slane %v1620, 4
  %v1623 = vor.u32 %v1622, %v1618
  %v1624 = vrot.slane %v1623, 4
  %v1626 = vshll.u32 %v1555, 16
  %v1628 = vrot.slane %v1626, 5
  %v1629 = vsel %vm1605, %v1624, %v1628
  %v1630 = vshrl.u32 %v1555, 16
  %v1632 = vrot.slane %v1630, 4
  %v1633 = vor.u32 %v1632, %v1628
  %v1634 = vrot.slane %v1633, 4
  %v1636 = vshll.u32 %v1556, 16
  %v1638 = vrot.slane %v1636, 5
  %v1639 = vsel %vm1605, %v1634, %v1638
  %v1640 = vshrl.u32 %v1556, 16
  %v1642 = vrot.slane %v1640, 4
  %v1643 = vor.u32 %v1642, %v1638
  %v1644 = vrot.slane %v1643, 4
  %v1646 = vshll.u32 %v1557, 16
  %v1648 = vrot.slane %v1646, 5
  %v1649 = vsel %vm1605, %v1644, %v1648
  %v1650 = vshrl.u32 %v1557, 16
  %v1652 = vrot.slane %v1650, 4
  %v1653 = vor.u32 %v1652, %v1648
  %v1654 = vrot.slane %v1653, 4
  %v1656 = vshll.u32 %v1558, 16
  %v1658 = vrot.slane %v1656, 5
  %v1659 = vsel %vm1605, %v1654, %v1658
  %v1660 = vshrl.u32 %v1558, 16
  %v1662 = vrot.slane %v1660, 4
  %v1663 = vor.u32 %v1662, %v1658
  %v1664 = vrot.slane %v1663, 4
  %v1666 = vshll.u32 %v1559, 16
  %v1668 = vrot.slane %v1666, 5
  %v1669 = vsel %vm1605, %v1664, %v1668
  %v1670 = vshrl.u32 %v1559, 16
  %v1672 = vrot.slane %v1670, 4
  %v1673 = vor.u32 %v1672, %v1668
  %v1674 = vrot.slane %v1673, 4
  %v1676 = vshll.u32 %v1560, 16
  %v1678 = vrot.slane %v1676, 5
  %v1679 = vsel %vm1605, %v1674, %v1678
  %v1680 = vshrl.u32 %v1560, 16
  %v1682 = vrot.slane %v1680, 4
  %v1683 = vor.u32 %v1682, %v1678
  %v1684 = vrot.slane %v1683, 4
  %v1686 = vshll.u32 %v1561, 16
  %v1688 = vrot.slane %v1686, 5
  %v1689 = vsel %vm1605, %v1684, %v1688
  %v1690 = vshrl.u32 %v1561, 16
  %v1692 = vrot.slane %v1690, 4
  %v1693 = vor.u32 %v1692, %v1688
  %v1694 = vrot.slane %v1693, 4
  %v1696 = vshll.u32 %v1562, 16
  %v1698 = vrot.slane %v1696, 5
  %v1699 = vsel %vm1605, %v1694, %v1698
  %v1700 = vshrl.u32 %v1562, 16
  %v1702 = vrot.slane %v1700, 4
  %v1703 = vor.u32 %v1702, %v1698
  %v1704 = vrot.slane %v1703, 4
  %v1706 = vshll.u32 %v1563, 16
  %v1708 = vrot.slane %v1706, 5
  %v1709 = vsel %vm1605, %v1704, %v1708
  %v1710 = vshrl.u32 %v1563, 16
  %v1712 = vrot.slane %v1710, 4
  %v1713 = vor.u32 %v1712, %v1708
  %v1714 = vrot.slane %v1713, 4
  %v1716 = vshll.u32 %v1564, 16
  %v1718 = vrot.slane %v1716, 5
  %v1719 = vsel %vm1605, %v1714, %v1718
  %v1720 = vshrl.u32 %v1564, 16
  %v1722 = vrot.slane %v1720, 4
  %v1723 = vor.u32 %v1722, %v1718
  %v1724 = vrot.slane %v1723, 4
  %v1726 = vshll.u32 %v1565, 16
  %v1728 = vrot.slane %v1726, 5
  %v1729 = vsel %vm1605, %v1724, %v1728
  %v1730 = vshrl.u32 %v1565, 16
  %v1732 = vrot.slane %v1730, 4
  %v1733 = vor.u32 %v1732, %v1728
  %v1734 = vrot.slane %v1733, 4
  %v1736 = vshll.u32 %v1566, 16
  %v1738 = vrot.slane %v1736, 5
  %v1739 = vsel %vm1605, %v1734, %v1738
  %v1740 = vshrl.u32 %v1566, 16
  %v1742 = vrot.slane %v1740, 4
  %v1743 = vor.u32 %v1742, %v1738
  %v1744 = vrot.slane %v1743, 4
  %v1746 = vshll.u32 %v1567, 16
  %v1748 = vrot.slane %v1746, 5
  %v1749 = vsel %vm1605, %v1744, %v1748
  %v1750 = vshrl.u32 %v1567, 16
  %v1752 = vrot.slane %v1750, 4
  %v1753 = vor.u32 %v1752, %v1748
  %v1754 = vrot.slane %v1753, 4
  %v1756 = vshll.u32 %v1568, 16
  %v1758 = vrot.slane %v1756, 5
  %v1759 = vsel %vm1605, %v1754, %v1758
  %v1760 = vshrl.u32 %v1568, 16
  %v1762 = vrot.slane %v1760, 4
  %v1763 = vor.u32 %v1762, %v1758
  %v1764 = vrot.slane %v1763, 4
  %v1766 = vshll.u32 %v1569, 16
  %v1768 = vrot.slane %v1766, 5
  %v1769 = vsel %vm1605, %v1764, %v1768
  %v1770 = vshrl.u32 %v1569, 16
  %v1772 = vrot.slane %v1770, 4
  %v1773 = vor.u32 %v1772, %v1768
  %v1774 = vrot.slane %v1773, 4
  %v1776 = vshll.u32 %v1570, 16
  %v1778 = vrot.slane %v1776, 5
  %v1779 = vsel %vm1605, %v1774, %v1778
  %v1780 = vshrl.u32 %v1570, 16
  %v1782 = vrot.slane %v1780, 4
  %v1783 = vor.u32 %v1782, %v1778
  %v1784 = vrot.slane %v1783, 4
  %v1786 = vshll.u32 %v1571, 16
  %v1788 = vrot.slane %v1786, 5
  %v1789 = vsel %vm1605, %v1784, %v1788
  %v1790 = vshrl.u32 %v1571, 16
  %v1792 = vrot.slane %v1790, 4
  %v1793 = vor.u32 %v1792, %v1788
  %v1794 = vrot.slane %v1793, 4
  %v1796 = vshll.u32 %v1572, 16
  %v1798 = vrot.slane %v1796, 5
  %v1799 = vsel %vm1605, %v1794, %v1798
  %v1800 = vshrl.u32 %v1572, 16
  %v1802 = vrot.slane %v1800, 4
  %v1803 = vor.u32 %v1802, %v1798
  %v1804 = vrot.slane %v1803, 4
  %v1806 = vshll.u32 %v1573, 16
  %v1808 = vrot.slane %v1806, 5
  %v1809 = vsel %vm1605, %v1804, %v1808
  %v1811 = vshrl.u32 %v1578, 16
  %v1813 = vrot.slane %v1811, 4
  %v1814 = vshll.u32 %v1578, 16
  %v1816 = vrot.slane %v1814, 5
  %v1817 = vor.u32 %v1813, %v1816
  %v1818 = vrot.slane %v1817, 4
  %v1820 = vshll.u32 %v1579, 16
  %v1822 = vrot.slane %v1820, 5
  %v1823 = vsel %vm1605, %v1818, %v1822
  %v1824 = vshrl.u32 %v1579, 16
  %v1826 = vrot.slane %v1824, 4
  %v1827 = vor.u32 %v1826, %v1822
  %v1828 = vrot.slane %v1827, 4
  %v1830 = vshll.u32 %v1580, 16
  %v1832 = vrot.slane %v1830, 5
  %v1833 = vsel %vm1605, %v1828, %v1832
  %v1834 = vshrl.u32 %v1580, 16
  %v1836 = vrot.slane %v1834, 4
  %v1837 = vor.u32 %v1836, %v1832
  %v1838 = vrot.slane %v1837, 4
  %v1840 = vshll.u32 %v1581, 16
  %v1842 = vrot.slane %v1840, 5
  %v1843 = vsel %vm1605, %v1838, %v1842
  %v1844 = vshrl.u32 %v1581, 16
  %v1846 = vrot.slane %v1844, 4
  %v1847 = vor.u32 %v1846, %v1842
  %v1848 = vrot.slane %v1847, 4
  %v1850 = vshll.u32 %v1582, 16
  %v1852 = vrot.slane %v1850, 5
  %v1853 = vsel %vm1605, %v1848, %v1852
  %v1854 = vshrl.u32 %v1582, 16
  %v1856 = vrot.slane %v1854, 4
  %v1857 = vor.u32 %v1856, %v1852
  %v1858 = vrot.slane %v1857, 4
  %v1860 = vshll.u32 %v1583, 16
  %v1862 = vrot.slane %v1860, 5
  %v1863 = vsel %vm1605, %v1858, %v1862
  %v1864 = vshrl.u32 %v1583, 16
  %v1866 = vrot.slane %v1864, 4
  %v1867 = vor.u32 %v1866, %v1862
  %v1868 = vrot.slane %v1867, 4
  %v1870 = vshll.u32 %v1584, 16
  %v1872 = vrot.slane %v1870, 5
  %v1873 = vsel %vm1605, %v1868, %v1872
  %v1874 = vshrl.u32 %v1584, 16
  %v1876 = vrot.slane %v1874, 4
  %v1877 = vor.u32 %v1876, %v1872
  %v1878 = vrot.slane %v1877, 4
  %v1880 = vshll.u32 %v1585, 16
  %v1882 = vrot.slane %v1880, 5
  %v1883 = vsel %vm1605, %v1878, %v1882
  %v1884 = vshrl.u32 %v1585, 16
  %v1886 = vrot.slane %v1884, 4
  %v1887 = vor.u32 %v1886, %v1882
  %v1888 = vrot.slane %v1887, 4
  %v1890 = vshll.u32 %v1586, 16
  %v1892 = vrot.slane %v1890, 5
  %v1893 = vsel %vm1605, %v1888, %v1892
  %v1894 = vshrl.u32 %v1586, 16
  %v1896 = vrot.slane %v1894, 4
  %v1897 = vor.u32 %v1896, %v1892
  %v1898 = vrot.slane %v1897, 4
  %v1900 = vshll.u32 %v1587, 16
  %v1902 = vrot.slane %v1900, 5
  %v1903 = vsel %vm1605, %v1898, %v1902
  %v1904 = vshrl.u32 %v1587, 16
  %v1906 = vrot.slane %v1904, 4
  %v1907 = vor.u32 %v1906, %v1902
  %v1908 = vrot.slane %v1907, 4
  %v1910 = vshll.u32 %v1588, 16
  %v1912 = vrot.slane %v1910, 5
  %v1913 = vsel %vm1605, %v1908, %v1912
  %v1914 = vshrl.u32 %v1588, 16
  %v1916 = vrot.slane %v1914, 4
  %v1917 = vor.u32 %v1916, %v1912
  %v1918 = vrot.slane %v1917, 4
  %v1920 = vshll.u32 %v1589, 16
  %v1922 = vrot.slane %v1920, 5
  %v1923 = vsel %vm1605, %v1918, %v1922
  %v1924 = vshrl.u32 %v1589, 16
  %v1926 = vrot.slane %v1924, 4
  %v1927 = vor.u32 %v1926, %v1922
  %v1928 = vrot.slane %v1927, 4
  %v1930 = vshll.u32 %v1590, 16
  %v1932 = vrot.slane %v1930, 5
  %v1933 = vsel %vm1605, %v1928, %v1932
  %v1934 = vshrl.u32 %v1590, 16
  %v1936 = vrot.slane %v1934, 4
  %v1937 = vor.u32 %v1936, %v1932
  %v1938 = vrot.slane %v1937, 4
  %v1940 = vshll.u32 %v1591, 16
  %v1942 = vrot.slane %v1940, 5
  %v1943 = vsel %vm1605, %v1938, %v1942
  %v1944 = vshrl.u32 %v1591, 16
  %v1946 = vrot.slane %v1944, 4
  %v1947 = vor.u32 %v1946, %v1942
  %v1948 = vrot.slane %v1947, 4
  %v1950 = vshll.u32 %v1592, 16
  %v1952 = vrot.slane %v1950, 5
  %v1953 = vsel %vm1605, %v1948, %v1952
  %v1954 = vshrl.u32 %v1592, 16
  %v1956 = vrot.slane %v1954, 4
  %v1957 = vor.u32 %v1956, %v1952
  %v1958 = vrot.slane %v1957, 4
  %v1960 = vshll.u32 %v1593, 16
  %v1962 = vrot.slane %v1960, 5
  %v1963 = vsel %vm1605, %v1958, %v1962
  %v1964 = vshrl.u32 %v1593, 16
  %v1966 = vrot.slane %v1964, 4
  %v1967 = vor.u32 %v1966, %v1962
  %v1968 = vrot.slane %v1967, 4
  %v1970 = vshll.u32 %v1594, 16
  %v1972 = vrot.slane %v1970, 5
  %v1973 = vsel %vm1605, %v1968, %v1972
  %v1974 = vshrl.u32 %v1594, 16
  %v1976 = vrot.slane %v1974, 4
  %v1977 = vor.u32 %v1976, %v1972
  %v1978 = vrot.slane %v1977, 4
  %v1980 = vshll.u32 %v1595, 16
  %v1982 = vrot.slane %v1980, 5
  %v1983 = vsel %vm1605, %v1978, %v1982
  %v1984 = vshrl.u32 %v1595, 16
  %v1986 = vrot.slane %v1984, 4
  %v1987 = vor.u32 %v1986, %v1982
  %v1988 = vrot.slane %v1987, 4
  %v1990 = vshll.u32 %v1596, 16
  %v1992 = vrot.slane %v1990, 5
  %v1993 = vsel %vm1605, %v1988, %v1992
  %v1994 = vshrl.u32 %v1596, 16
  %v1996 = vrot.slane %v1994, 4
  %v1997 = vor.u32 %v1996, %v1992
  %v1998 = vrot.slane %v1997, 4
  %v2000 = vshll.u32 %v1597, 16
  %v2002 = vrot.slane %v2000, 5
  %v2003 = vsel %vm1605, %v1998, %v2002
  %v2004 = vshrl.u32 %v1597, 16
  %v2006 = vrot.slane %v2004, 4
  %v2007 = vor.u32 %v2006, %v2002
  %v2008 = vrot.slane %v2007, 4
  %v2010 = vshll.u32 %v1598, 16
  %v2012 = vrot.slane %v2010, 5
  %v2013 = vsel %vm1605, %v2008, %v2012
  %s2014 = scalar_lea.vmem %s2, 168
  %v2015 = vld [vmem:[%s2014] sm:$0xff]
  %v2016 = vld [vmem:[%s2014 + $0x8] sm:$0xff]
  %v2017 = vld [vmem:[%s2014 + $0x10] sm:$0xff]
  %v2018 = vld [vmem:[%s2014 + $0x18] sm:$0xff]
  %v2019 = vld [vmem:[%s2014 + $0x20] sm:$0xff]
  %v2020 = vld [vmem:[%s2014 + $0x28] sm:$0xff]
  %v2021 = vld [vmem:[%s2014 + $0x30] sm:$0xff]
  %v2022 = vld [vmem:[%s2014 + $0x38] sm:$0xff]
  %v2023 = vld [vmem:[%s2014 + $0x40] sm:$0xff]
  %v2024 = vld [vmem:[%s2014 + $0x48] sm:$0xff]
  %v2025 = vld [vmem:[%s2014 + $0x50] sm:$0xff]
  %v2026 = vld [vmem:[%s2014 + $0x58] sm:$0xff]
  %v2027 = vld [vmem:[%s2014 + $0x60] sm:$0xff]
  %v2028 = vld [vmem:[%s2014 + $0x68] sm:$0xff]
  %v2029 = vld [vmem:[%s2014 + $0x70] sm:$0xff]
  %v2030 = vld [vmem:[%s2014 + $0x78] sm:$0xff]
  %v2031 = vld [vmem:[%s2014 + $0x80] sm:$0xff]
  %v2032 = vld [vmem:[%s2014 + $0x88] sm:$0xff]
  %v2033 = vld [vmem:[%s2014 + $0x90] sm:$0xff]
  %v2034 = vld [vmem:[%s2014 + $0x98] sm:$0xff]
  %v2035 = vld [vmem:[%s2014 + $0xa0] sm:$0x77]
  %v2036 = vunpack.c.l.b16 %v1619
  %v2037 = vunpack.c.h.b16 %v1619
  %v2038 = vunpack.c.l.b16 %v1629
  %v2039 = vunpack.c.h.b16 %v1629
  %v2040 = vunpack.c.l.b16 %v1639
  %v2041 = vunpack.c.h.b16 %v1639
  %v2042 = vunpack.c.l.b16 %v1649
  %v2043 = vunpack.c.h.b16 %v1649
  %v2044 = vunpack.c.l.b16 %v1659
  %v2045 = vunpack.c.h.b16 %v1659
  %v2046 = vunpack.c.l.b16 %v1669
  %v2047 = vunpack.c.h.b16 %v1669
  %v2048 = vunpack.c.l.b16 %v1679
  %v2049 = vunpack.c.h.b16 %v1679
  %v2050 = vunpack.c.l.b16 %v1689
  %v2051 = vunpack.c.h.b16 %v1689
  %v2052 = vunpack.c.l.b16 %v1699
  %v2053 = vunpack.c.h.b16 %v1699
  %v2054 = vunpack.c.l.b16 %v1709
  %v2055 = vunpack.c.h.b16 %v1709
  %v2056 = vunpack.c.l.b16 %v1719
  %v2057 = vunpack.c.h.b16 %v1719
  %v2058 = vunpack.c.l.b16 %v1729
  %v2059 = vunpack.c.h.b16 %v1729
  %v2060 = vunpack.c.l.b16 %v1739
  %v2061 = vunpack.c.h.b16 %v1739
  %v2062 = vunpack.c.l.b16 %v1749
  %v2063 = vunpack.c.h.b16 %v1749
  %v2064 = vunpack.c.l.b16 %v1759
  %v2065 = vunpack.c.h.b16 %v1759
  %v2066 = vunpack.c.l.b16 %v1769
  %v2067 = vunpack.c.h.b16 %v1769
  %v2068 = vunpack.c.l.b16 %v1779
  %v2069 = vunpack.c.h.b16 %v1779
  %v2070 = vunpack.c.l.b16 %v1789
  %v2071 = vunpack.c.h.b16 %v1789
  %v2072 = vunpack.c.l.b16 %v1799
  %v2073 = vunpack.c.h.b16 %v1799
  %v2074 = vunpack.c.l.b16 %v1809
  %v2075 = vunpack.c.h.b16 %v1809
  %v2076 = vunpack.c.l.b16 %v1823
  %v2077 = vunpack.c.h.b16 %v1823
  %v2078 = vunpack.c.l.b16 %v1833
  %v2079 = vunpack.c.h.b16 %v1833
  %v2080 = vunpack.c.l.b16 %v1843
  %v2081 = vunpack.c.h.b16 %v1843
  %v2082 = vunpack.c.l.b16 %v1853
  %v2083 = vunpack.c.h.b16 %v1853
  %v2084 = vunpack.c.l.b16 %v1863
  %v2085 = vunpack.c.h.b16 %v1863
  %v2086 = vunpack.c.l.b16 %v1873
  %v2087 = vunpack.c.h.b16 %v1873
  %v2088 = vunpack.c.l.b16 %v1883
  %v2089 = vunpack.c.h.b16 %v1883
  %v2090 = vunpack.c.l.b16 %v1893
  %v2091 = vunpack.c.h.b16 %v1893
  %v2092 = vunpack.c.l.b16 %v1903
  %v2093 = vunpack.c.h.b16 %v1903
  %v2094 = vunpack.c.l.b16 %v1913
  %v2095 = vunpack.c.h.b16 %v1913
  %v2096 = vunpack.c.l.b16 %v1923
  %v2097 = vunpack.c.h.b16 %v1923
  %v2098 = vunpack.c.l.b16 %v1933
  %v2099 = vunpack.c.h.b16 %v1933
  %v2100 = vunpack.c.l.b16 %v1943
  %v2101 = vunpack.c.h.b16 %v1943
  %v2102 = vunpack.c.l.b16 %v1953
  %v2103 = vunpack.c.h.b16 %v1953
  %v2104 = vunpack.c.l.b16 %v1963
  %v2105 = vunpack.c.h.b16 %v1963
  %v2106 = vunpack.c.l.b16 %v1973
  %v2107 = vunpack.c.h.b16 %v1973
  %v2108 = vunpack.c.l.b16 %v1983
  %v2109 = vunpack.c.h.b16 %v1983
  %v2110 = vunpack.c.l.b16 %v1993
  %v2111 = vunpack.c.h.b16 %v1993
  %v2112 = vunpack.c.l.b16 %v2003
  %v2113 = vunpack.c.h.b16 %v2003
  %v2114 = vunpack.c.l.b16 %v2013
  %v2115 = vunpack.c.h.b16 %v2013
  %v2116 = vpack.c.b16 %v2038, %v2036
  %v2117 = vpack.c.b16 %v2039, %v2037
  %v2118 = vpack.c.b16 %v2042, %v2040
  %v2119 = vpack.c.b16 %v2043, %v2041
  %v2120 = vpack.c.b16 %v2046, %v2044
  %v2121 = vpack.c.b16 %v2047, %v2045
  %v2122 = vpack.c.b16 %v2050, %v2048
  %v2123 = vpack.c.b16 %v2051, %v2049
  %v2124 = vpack.c.b16 %v2054, %v2052
  %v2125 = vpack.c.b16 %v2055, %v2053
  %v2126 = vpack.c.b16 %v2058, %v2056
  %v2127 = vpack.c.b16 %v2059, %v2057
  %v2128 = vpack.c.b16 %v2062, %v2060
  %v2129 = vpack.c.b16 %v2063, %v2061
  %v2130 = vpack.c.b16 %v2066, %v2064
  %v2131 = vpack.c.b16 %v2067, %v2065
  %v2132 = vpack.c.b16 %v2070, %v2068
  %v2133 = vpack.c.b16 %v2071, %v2069
  %v2134 = vpack.c.b16 %v2074, %v2072
  %v2135 = vpack.c.b16 %v2075, %v2073
  %v2136 = vpack.c.b16 %v2078, %v2076
  %v2137 = vpack.c.b16 %v2079, %v2077
  %v2138 = vpack.c.b16 %v2082, %v2080
  %v2139 = vpack.c.b16 %v2083, %v2081
  %v2140 = vpack.c.b16 %v2086, %v2084
  %v2141 = vpack.c.b16 %v2087, %v2085
  %v2142 = vpack.c.b16 %v2090, %v2088
  %v2143 = vpack.c.b16 %v2091, %v2089
  %v2144 = vpack.c.b16 %v2094, %v2092
  %v2145 = vpack.c.b16 %v2095, %v2093
  %v2146 = vpack.c.b16 %v2098, %v2096
  %v2147 = vpack.c.b16 %v2099, %v2097
  %v2148 = vpack.c.b16 %v2102, %v2100
  %v2149 = vpack.c.b16 %v2103, %v2101
  %v2150 = vpack.c.b16 %v2106, %v2104
  %v2151 = vpack.c.b16 %v2107, %v2105
  %v2152 = vpack.c.b16 %v2110, %v2108
  %v2153 = vpack.c.b16 %v2111, %v2109
  %v2154 = vpack.c.b16 %v2114, %v2112
  %v2155 = vpack.c.b16 %v2115, %v2113
  %v2197 = vunpack.c.l.b16 %v2015
  %v2198 = vunpack.c.h.b16 %v2015
  %v2199 = vunpack.c.l.b16 %v2016
  %v2200 = vunpack.c.h.b16 %v2016
  %v2201 = vunpack.c.l.b16 %v2017
  %v2202 = vunpack.c.h.b16 %v2017
  %v2203 = vunpack.c.l.b16 %v2018
  %v2204 = vunpack.c.h.b16 %v2018
  %v2205 = vunpack.c.l.b16 %v2019
  %v2206 = vunpack.c.h.b16 %v2019
  %v2207 = vunpack.c.l.b16 %v2020
  %v2208 = vunpack.c.h.b16 %v2020
  %v2209 = vunpack.c.l.b16 %v2021
  %v2210 = vunpack.c.h.b16 %v2021
  %v2211 = vunpack.c.l.b16 %v2022
  %v2212 = vunpack.c.h.b16 %v2022
  %v2213 = vunpack.c.l.b16 %v2023
  %v2214 = vunpack.c.h.b16 %v2023
  %v2215 = vunpack.c.l.b16 %v2024
  %v2216 = vunpack.c.h.b16 %v2024
  %v2217 = vunpack.c.l.b16 %v2025
  %v2218 = vunpack.c.h.b16 %v2025
  %v2219 = vunpack.c.l.b16 %v2026
  %v2220 = vunpack.c.h.b16 %v2026
  %v2221 = vunpack.c.l.b16 %v2027
  %v2222 = vunpack.c.h.b16 %v2027
  %v2223 = vunpack.c.l.b16 %v2028
  %v2224 = vunpack.c.h.b16 %v2028
  %v2225 = vunpack.c.l.b16 %v2029
  %v2226 = vunpack.c.h.b16 %v2029
  %v2227 = vunpack.c.l.b16 %v2030
  %v2228 = vunpack.c.h.b16 %v2030
  %v2229 = vunpack.c.l.b16 %v2031
  %v2230 = vunpack.c.h.b16 %v2031
  %v2231 = vunpack.c.l.b16 %v2032
  %v2232 = vunpack.c.h.b16 %v2032
  %v2233 = vunpack.c.l.b16 %v2033
  %v2234 = vunpack.c.h.b16 %v2033
  %v2235 = vunpack.c.l.b16 %v2034
  %v2236 = vunpack.c.h.b16 %v2034
  %v2237 = vunpack.c.l.b16 %v2035
  %v2238 = vunpack.c.h.b16 %v2035
  %v2239 = vpack.c.b16 %v2199, %v2197
  %v2240 = vpack.c.b16 %v2200, %v2198
  %v2241 = vpack.c.b16 %v2203, %v2201
  %v2242 = vpack.c.b16 %v2204, %v2202
  %v2243 = vpack.c.b16 %v2207, %v2205
  %v2244 = vpack.c.b16 %v2208, %v2206
  %v2245 = vpack.c.b16 %v2211, %v2209
  %v2246 = vpack.c.b16 %v2212, %v2210
  %v2247 = vpack.c.b16 %v2215, %v2213
  %v2248 = vpack.c.b16 %v2216, %v2214
  %v2249 = vpack.c.b16 %v2219, %v2217
  %v2250 = vpack.c.b16 %v2220, %v2218
  %v2251 = vpack.c.b16 %v2223, %v2221
  %v2252 = vpack.c.b16 %v2224, %v2222
  %v2253 = vpack.c.b16 %v2227, %v2225
  %v2254 = vpack.c.b16 %v2228, %v2226
  %v2255 = vpack.c.b16 %v2231, %v2229
  %v2256 = vpack.c.b16 %v2232, %v2230
  %v2257 = vpack.c.b16 %v2235, %v2233
  %v2258 = vpack.c.b16 %v2236, %v2234
  %v2259 = vpack.c.b16 %v2237, %v2237
  %v2260 = vpack.c.b16 %v2238, %v2238
  %v2282 = vsel %vm414, %v2117, 0
  %v2285 = vsel %vm414, %v2119, 0
  %v2288 = vsel %vm414, %v2121, 0
  %v2291 = vsel %vm414, %v2123, 0
  %v2294 = vsel %vm414, %v2125, 0
  %v2297 = vsel %vm414, %v2127, 0
  %v2300 = vsel %vm414, %v2129, 0
  %v2303 = vsel %vm414, %v2131, 0
  %v2306 = vsel %vm414, %v2133, 0
  %v2309 = vsel %vm414, %v2135, 0
  %v2312 = vsel %vm414, %v2137, 0
  %v2315 = vsel %vm414, %v2139, 0
  %v2318 = vsel %vm414, %v2141, 0
  %v2321 = vsel %vm414, %v2143, 0
  %v2324 = vsel %vm414, %v2145, 0
  %v2327 = vsel %vm414, %v2147, 0
  %v2330 = vsel %vm414, %v2149, 0
  %v2333 = vsel %vm414, %v2151, 0
  %v2336 = vsel %vm414, %v2153, 0
  %v2339 = vsel %vm414, %v2155, 0
  %v2342 = vsel %vm475, %v2259, 0
  %v2345 = vsel %vm475, %v2260, 0
  %2347 = vmatprep.subr.bf16.mxu0 %v2240
  %2348 = vmatpush1.bf16.msra.mxu0 %v2239
  %2349 = vmatprep.subr.bf16.mxu0 %v2242
  %2350 = vmatpush1.bf16.msra.mxu0 %v2241
  %2351 = vmatprep.subr.bf16.mxu0 %v2244
  %2352 = vmatpush1.bf16.msra.mxu0 %v2243
  %2353 = vmatprep.subr.bf16.mxu0 %v2246
  %2354 = vmatpush1.bf16.msra.mxu0 %v2245
  %2355 = vmatprep.subr.bf16.mxu0 %v2248
  %2356 = vmatpush1.bf16.msra.mxu0 %v2247
  %2357 = vmatprep.subr.bf16.mxu0 %v2250
  %2358 = vmatpush1.bf16.msra.mxu0 %v2249
  %2359 = vmatprep.subr.bf16.mxu0 %v2252
  %2360 = vmatpush1.bf16.msra.mxu0 %v2251
  %2361 = vmatprep.subr.bf16.mxu0 %v2254
  %2362 = vmatpush1.bf16.msra.mxu0 %v2253
  %2363 = vmatprep.subr.bf16.mxu0 %v2256
  %2364 = vmatpush1.bf16.msra.mxu0 %v2255
  %2365 = vmatprep.subr.bf16.mxu0 %v2258
  %2366 = vmatpush1.bf16.msra.mxu0 %v2257
  %2367 = vmatprep.subr.bf16.mxu0 %v2345
  %2368 = vmatpush1.bf16.msra.mxu0 %v2342
  %2369 = vmatprep.subr.bf16.mxu0 0
  %2370 = vmatpush1.bf16.msra.mxu0 0
  %2371 = vmatprep.subr.bf16.mxu0 0
  %2372 = vmatpush1.bf16.msra.mxu0 0
  %2373 = vmatprep.subr.bf16.mxu0 0
  %2374 = vmatpush1.bf16.msra.mxu0 0
  %2375 = vmatprep.subr.bf16.mxu0 0
  %2376 = vmatpush1.bf16.msra.mxu0 0
  %2377 = vmatprep.subr.bf16.mxu0 0
  %2378 = vmatpush1.bf16.msra.mxu0 0
  %2379 = vmatprep.mubr.bf16.mxu0 %v2282
  %2380 = vmatmul.mubr.bf16.gmra.mrb[0].mxu0 %v2116
  %v2381 = vpop.f32.mrb[0].mxu0
  %v2382 = vadd.f32 0.0, %v2381
  %v2383 = vpop.f32.mrb[0].mxu0
  %v2384 = vadd.f32 0.0, %v2383
  %v2385 = vpop.f32.mrb[0].mxu0
  %v2386 = vadd.f32 0.0, %v2385
  %v2387 = vpop.f32.mrb[0].mxu0
  %v2388 = vadd.f32 0.0, %v2387
  %2389 = vmatprep.mubr.bf16.mxu0 %v2285
  %2390 = vmatmul.mubr.bf16.gmra.mrb[0].mxu0 %v2118
  %v2391 = vpop.f32.mrb[0].mxu0
  %v2392 = vadd.f32 0.0, %v2391
  %v2393 = vpop.f32.mrb[0].mxu0
  %v2394 = vadd.f32 0.0, %v2393
  %v2395 = vpop.f32.mrb[0].mxu0
  %v2396 = vadd.f32 0.0, %v2395
  %v2397 = vpop.f32.mrb[0].mxu0
  %v2398 = vadd.f32 0.0, %v2397
  %2399 = vmatprep.mubr.bf16.mxu0 %v2288
  %2400 = vmatmul.mubr.bf16.gmra.mrb[0].mxu0 %v2120
  %v2401 = vpop.f32.mrb[0].mxu0
  %v2402 = vadd.f32 0.0, %v2401
  %v2403 = vpop.f32.mrb[0].mxu0
  %v2404 = vadd.f32 0.0, %v2403
  %v2405 = vpop.f32.mrb[0].mxu0
  %v2406 = vadd.f32 0.0, %v2405
  %v2407 = vpop.f32.mrb[0].mxu0
  %v2408 = vadd.f32 0.0, %v2407
  %2409 = vmatprep.mubr.bf16.mxu0 %v2291
  %2410 = vmatmul.mubr.bf16.gmra.mrb[0].mxu0 %v2122
  %v2411 = vpop.f32.mrb[0].mxu0
  %v2412 = vadd.f32 0.0, %v2411
  %v2413 = vpop.f32.mrb[0].mxu0
  %v2414 = vadd.f32 0.0, %v2413
  %v2415 = vpop.f32.mrb[0].mxu0
  %v2416 = vadd.f32 0.0, %v2415
  %v2417 = vpop.f32.mrb[0].mxu0
  %v2418 = vadd.f32 0.0, %v2417
  %2419 = vmatprep.mubr.bf16.mxu0 %v2294
  %2420 = vmatmul.mubr.bf16.gmra.mrb[0].mxu0 %v2124
  %v2421 = vpop.f32.mrb[0].mxu0
  %v2422 = vadd.f32 0.0, %v2421
  %v2423 = vpop.f32.mrb[0].mxu0
  %v2424 = vadd.f32 0.0, %v2423
  %v2425 = vpop.f32.mrb[0].mxu0
  %v2426 = vadd.f32 0.0, %v2425
  %v2427 = vpop.f32.mrb[0].mxu0
  %v2428 = vadd.f32 0.0, %v2427
  %2429 = vmatprep.mubr.bf16.mxu0 %v2297
  %2430 = vmatmul.mubr.bf16.gmra.mrb[0].mxu0 %v2126
  %v2431 = vpop.f32.mrb[0].mxu0
  %v2432 = vadd.f32 0.0, %v2431
  %v2433 = vpop.f32.mrb[0].mxu0
  %v2434 = vadd.f32 0.0, %v2433
  %v2435 = vpop.f32.mrb[0].mxu0
  %v2436 = vadd.f32 0.0, %v2435
  %v2437 = vpop.f32.mrb[0].mxu0
  %v2438 = vadd.f32 0.0, %v2437
  %2439 = vmatprep.mubr.bf16.mxu0 %v2300
  %2440 = vmatmul.mubr.bf16.gmra.mrb[0].mxu0 %v2128
  %v2441 = vpop.f32.mrb[0].mxu0
  %v2442 = vadd.f32 0.0, %v2441
  %v2443 = vpop.f32.mrb[0].mxu0
  %v2444 = vadd.f32 0.0, %v2443
  %v2445 = vpop.f32.mrb[0].mxu0
  %v2446 = vadd.f32 0.0, %v2445
  %v2447 = vpop.f32.mrb[0].mxu0
  %v2448 = vadd.f32 0.0, %v2447
  %2449 = vmatprep.mubr.bf16.mxu0 %v2303
  %2450 = vmatmul.mubr.bf16.gmra.mrb[0].mxu0 %v2130
  %v2451 = vpop.f32.mrb[0].mxu0
  %v2452 = vadd.f32 0.0, %v2451
  %v2453 = vpop.f32.mrb[0].mxu0
  %v2454 = vadd.f32 0.0, %v2453
  %v2455 = vpop.f32.mrb[0].mxu0
  %v2456 = vadd.f32 0.0, %v2455
  %v2457 = vpop.f32.mrb[0].mxu0
  %v2458 = vadd.f32 0.0, %v2457
  %2459 = vmatprep.mubr.bf16.mxu0 %v2306
  %2460 = vmatmul.mubr.bf16.gmra.mrb[0].mxu0 %v2132
  %v2461 = vpop.f32.mrb[0].mxu0
  %v2462 = vadd.f32 0.0, %v2461
  %v2463 = vpop.f32.mrb[0].mxu0
  %v2464 = vadd.f32 0.0, %v2463
  %v2465 = vpop.f32.mrb[0].mxu0
  %v2466 = vadd.f32 0.0, %v2465
  %v2467 = vpop.f32.mrb[0].mxu0
  %v2468 = vadd.f32 0.0, %v2467
  %2469 = vmatprep.mubr.bf16.mxu0 %v2309
  %2470 = vmatmul.mubr.bf16.gmra.mrb[0].mxu0 %v2134
  %v2471 = vpop.f32.mrb[0].mxu0
  %v2472 = vadd.f32 0.0, %v2471
  %v2473 = vpop.f32.mrb[0].mxu0
  %v2474 = vadd.f32 0.0, %v2473
  %v2475 = vpop.f32.mrb[0].mxu0
  %v2476 = vadd.f32 0.0, %v2475
  %v2477 = vpop.f32.mrb[0].mxu0
  %v2478 = vadd.f32 0.0, %v2477
  %2479 = vmatprep.mubr.bf16.mxu0 %v2312
  %2480 = vmatmul.mubr.bf16.gmra.mrb[0].mxu0 %v2136
  %v2481 = vpop.f32.mrb[0].mxu0
  %v2482 = vadd.f32 0.0, %v2481
  %v2483 = vpop.f32.mrb[0].mxu0
  %v2484 = vadd.f32 0.0, %v2483
  %v2485 = vpop.f32.mrb[0].mxu0
  %v2486 = vadd.f32 0.0, %v2485
  %v2487 = vpop.f32.mrb[0].mxu0
  %v2488 = vadd.f32 0.0, %v2487
  %2489 = vmatprep.mubr.bf16.mxu0 %v2315
  %2490 = vmatmul.mubr.bf16.gmra.mrb[0].mxu0 %v2138
  %v2491 = vpop.f32.mrb[0].mxu0
  %v2492 = vadd.f32 0.0, %v2491
  %v2493 = vpop.f32.mrb[0].mxu0
  %v2494 = vadd.f32 0.0, %v2493
  %v2495 = vpop.f32.mrb[0].mxu0
  %v2496 = vadd.f32 0.0, %v2495
  %v2497 = vpop.f32.mrb[0].mxu0
  %v2498 = vadd.f32 0.0, %v2497
  %2499 = vmatprep.mubr.bf16.mxu0 %v2318
  %2500 = vmatmul.mubr.bf16.gmra.mrb[0].mxu0 %v2140
  %v2501 = vpop.f32.mrb[0].mxu0
  %v2502 = vadd.f32 0.0, %v2501
  %v2503 = vpop.f32.mrb[0].mxu0
  %v2504 = vadd.f32 0.0, %v2503
  %v2505 = vpop.f32.mrb[0].mxu0
  %v2506 = vadd.f32 0.0, %v2505
  %v2507 = vpop.f32.mrb[0].mxu0
  %v2508 = vadd.f32 0.0, %v2507
  %2509 = vmatprep.mubr.bf16.mxu0 %v2321
  %2510 = vmatmul.mubr.bf16.gmra.mrb[0].mxu0 %v2142
  %v2511 = vpop.f32.mrb[0].mxu0
  %v2512 = vadd.f32 0.0, %v2511
  %v2513 = vpop.f32.mrb[0].mxu0
  %v2514 = vadd.f32 0.0, %v2513
  %v2515 = vpop.f32.mrb[0].mxu0
  %v2516 = vadd.f32 0.0, %v2515
  %v2517 = vpop.f32.mrb[0].mxu0
  %v2518 = vadd.f32 0.0, %v2517
  %2519 = vmatprep.mubr.bf16.mxu0 %v2324
  %2520 = vmatmul.mubr.bf16.gmra.mrb[0].mxu0 %v2144
  %v2521 = vpop.f32.mrb[0].mxu0
  %v2522 = vadd.f32 0.0, %v2521
  %v2523 = vpop.f32.mrb[0].mxu0
  %v2524 = vadd.f32 0.0, %v2523
  %v2525 = vpop.f32.mrb[0].mxu0
  %v2526 = vadd.f32 0.0, %v2525
  %v2527 = vpop.f32.mrb[0].mxu0
  %v2528 = vadd.f32 0.0, %v2527
  %2529 = vmatprep.mubr.bf16.mxu0 %v2327
  %2530 = vmatmul.mubr.bf16.gmra.mrb[0].mxu0 %v2146
  %v2531 = vpop.f32.mrb[0].mxu0
  %v2532 = vadd.f32 0.0, %v2531
  %v2533 = vpop.f32.mrb[0].mxu0
  %v2534 = vadd.f32 0.0, %v2533
  %v2535 = vpop.f32.mrb[0].mxu0
  %v2536 = vadd.f32 0.0, %v2535
  %v2537 = vpop.f32.mrb[0].mxu0
  %v2538 = vadd.f32 0.0, %v2537
  %2539 = vmatprep.mubr.bf16.mxu0 %v2330
  %2540 = vmatmul.mubr.bf16.gmra.mrb[0].mxu0 %v2148
  %v2541 = vpop.f32.mrb[0].mxu0
  %v2542 = vadd.f32 0.0, %v2541
  %v2543 = vpop.f32.mrb[0].mxu0
  %v2544 = vadd.f32 0.0, %v2543
  %v2545 = vpop.f32.mrb[0].mxu0
  %v2546 = vadd.f32 0.0, %v2545
  %v2547 = vpop.f32.mrb[0].mxu0
  %v2548 = vadd.f32 0.0, %v2547
  %2549 = vmatprep.mubr.bf16.mxu0 %v2333
  %2550 = vmatmul.mubr.bf16.gmra.mrb[0].mxu0 %v2150
  %v2551 = vpop.f32.mrb[0].mxu0
  %v2552 = vadd.f32 0.0, %v2551
  %v2553 = vpop.f32.mrb[0].mxu0
  %v2554 = vadd.f32 0.0, %v2553
  %v2555 = vpop.f32.mrb[0].mxu0
  %v2556 = vadd.f32 0.0, %v2555
  %v2557 = vpop.f32.mrb[0].mxu0
  %v2558 = vadd.f32 0.0, %v2557
  %2559 = vmatprep.mubr.bf16.mxu0 %v2336
  %2560 = vmatmul.mubr.bf16.gmra.mrb[0].mxu0 %v2152
  %v2561 = vpop.f32.mrb[0].mxu0
  %v2562 = vadd.f32 0.0, %v2561
  %v2563 = vpop.f32.mrb[0].mxu0
  %v2564 = vadd.f32 0.0, %v2563
  %v2565 = vpop.f32.mrb[0].mxu0
  %v2566 = vadd.f32 0.0, %v2565
  %v2567 = vpop.f32.mrb[0].mxu0
  %v2568 = vadd.f32 0.0, %v2567
  %2569 = vmatprep.mubr.bf16.mxu0 %v2339
  %2570 = vmatmul.mubr.bf16.gmra.mrb[0].mxu0 %v2154
  %v2571 = vpop.f32.mrb[0].mxu0
  %v2572 = vadd.f32 0.0, %v2571
  %v2573 = vpop.f32.mrb[0].mxu0
  %v2574 = vadd.f32 0.0, %v2573
  %v2575 = vpop.f32.mrb[0].mxu0
  %v2576 = vadd.f32 0.0, %v2575
  %v2577 = vpop.f32.mrb[0].mxu0
  %v2578 = vadd.f32 0.0, %v2577
  %2579 = vdwg.mxu0
  %v2580 = vadd.f32 %v1473, %v2382
  %v2581 = vadd.f32 %v1474, %v2384
  %v2582 = vadd.f32 %v1475, %v2386
  %v2583 = vadd.f32 %v1476, %v2388
  %v2584 = vadd.f32 %v1477, %v2392
  %v2585 = vadd.f32 %v1478, %v2394
  %v2586 = vadd.f32 %v1479, %v2396
  %v2587 = vadd.f32 %v1480, %v2398
  %v2588 = vadd.f32 %v1481, %v2402
  %v2589 = vadd.f32 %v1482, %v2404
  %v2590 = vadd.f32 %v1483, %v2406
  %v2591 = vadd.f32 %v1484, %v2408
  %v2592 = vadd.f32 %v1485, %v2412
  %v2593 = vadd.f32 %v1486, %v2414
  %v2594 = vadd.f32 %v1487, %v2416
  %v2595 = vadd.f32 %v1488, %v2418
  %v2596 = vadd.f32 %v1489, %v2422
  %v2597 = vadd.f32 %v1490, %v2424
  %v2598 = vadd.f32 %v1491, %v2426
  %v2599 = vadd.f32 %v1492, %v2428
  %v2600 = vadd.f32 %v1493, %v2432
  %v2601 = vadd.f32 %v1494, %v2434
  %v2602 = vadd.f32 %v1495, %v2436
  %v2603 = vadd.f32 %v1496, %v2438
  %v2604 = vadd.f32 %v1497, %v2442
  %v2605 = vadd.f32 %v1498, %v2444
  %v2606 = vadd.f32 %v1499, %v2446
  %v2607 = vadd.f32 %v1500, %v2448
  %v2608 = vadd.f32 %v1501, %v2452
  %v2609 = vadd.f32 %v1502, %v2454
  %v2610 = vadd.f32 %v1503, %v2456
  %v2611 = vadd.f32 %v1504, %v2458
  %v2612 = vadd.f32 %v1505, %v2462
  %v2613 = vadd.f32 %v1506, %v2464
  %v2614 = vadd.f32 %v1507, %v2466
  %v2615 = vadd.f32 %v1508, %v2468
  %v2616 = vadd.f32 %v1509, %v2472
  %v2617 = vadd.f32 %v1510, %v2474
  %v2618 = vadd.f32 %v1511, %v2476
  %v2619 = vadd.f32 %v1512, %v2478
  %v2620 = vadd.f32 %v1513, %v2482
  %v2621 = vadd.f32 %v1514, %v2484
  %v2622 = vadd.f32 %v1515, %v2486
  %v2623 = vadd.f32 %v1516, %v2488
  %v2624 = vadd.f32 %v1517, %v2492
  %v2625 = vadd.f32 %v1518, %v2494
  %v2626 = vadd.f32 %v1519, %v2496
  %v2627 = vadd.f32 %v1520, %v2498
  %v2628 = vadd.f32 %v1521, %v2502
  %v2629 = vadd.f32 %v1522, %v2504
  %v2630 = vadd.f32 %v1523, %v2506
  %v2631 = vadd.f32 %v1524, %v2508
  %v2632 = vadd.f32 %v1525, %v2512
  %v2633 = vadd.f32 %v1526, %v2514
  %v2634 = vadd.f32 %v1527, %v2516
  %v2635 = vadd.f32 %v1528, %v2518
  %v2636 = vadd.f32 %v1529, %v2522
  %v2637 = vadd.f32 %v1530, %v2524
  %v2638 = vadd.f32 %v1531, %v2526
  %v2639 = vadd.f32 %v1532, %v2528
  %v2640 = vadd.f32 %v1533, %v2532
  %v2641 = vadd.f32 %v1534, %v2534
  %v2642 = vadd.f32 %v1535, %v2536
  %v2643 = vadd.f32 %v1536, %v2538
  %v2644 = vadd.f32 %v1537, %v2542
  %v2645 = vadd.f32 %v1538, %v2544
  %v2646 = vadd.f32 %v1539, %v2546
  %v2647 = vadd.f32 %v1540, %v2548
  %v2648 = vadd.f32 %v1541, %v2552
  %v2649 = vadd.f32 %v1542, %v2554
  %v2650 = vadd.f32 %v1543, %v2556
  %v2651 = vadd.f32 %v1544, %v2558
  %v2652 = vadd.f32 %v1545, %v2562
  %v2653 = vadd.f32 %v1546, %v2564
  %v2654 = vadd.f32 %v1547, %v2566
  %v2655 = vadd.f32 %v1548, %v2568
  %v2656 = vadd.f32 %v1549, %v2572
  %v2657 = vadd.f32 %v1550, %v2574
  %v2658 = vadd.f32 %v1551, %v2576
  %v2659 = vadd.f32 %v1552, %v2578
  %v2660 = vshrl.u32 %v1573, 16
  %v2662 = vrot.slane %v2660, 4
  %v2663 = vor.u32 %v2662, %v1808
  %v2664 = vrot.slane %v2663, 4
  %v2666 = vshll.u32 %v1574, 16
  %v2668 = vrot.slane %v2666, 5
  %v2669 = vsel %vm1605, %v2664, %v2668
  %v2670 = vshrl.u32 %v1574, 16
  %v2672 = vrot.slane %v2670, 4
  %v2673 = vor.u32 %v2672, %v2668
  %v2674 = vrot.slane %v2673, 4
  %v2676 = vshll.u32 %v1575, 16
  %v2678 = vrot.slane %v2676, 5
  %v2679 = vsel %vm1605, %v2674, %v2678
  %v2680 = vshrl.u32 %v1598, 16
  %v2682 = vrot.slane %v2680, 4
  %v2683 = vor.u32 %v2682, %v2012
  %v2684 = vrot.slane %v2683, 4
  %v2686 = vshll.u32 %v1599, 16
  %v2688 = vrot.slane %v2686, 5
  %v2689 = vsel %vm1605, %v2684, %v2688
  %v2690 = vshrl.u32 %v1599, 16
  %v2692 = vrot.slane %v2690, 4
  %v2693 = vor.u32 %v2692, %v2688
  %v2694 = vrot.slane %v2693, 4
  %v2696 = vshll.u32 %v1600, 16
  %v2698 = vrot.slane %v2696, 5
  %v2699 = vsel %vm1605, %v2694, %v2698
  %s2700 = scalar_lea.vmem %s2, 672
  %v2701 = vld [vmem:[%s2700] sm:$0xff]
  %v2702 = vld [vmem:[%s2700 + $0x8] sm:$0xff]
  %v2703 = vld [vmem:[%s2700 + $0x10] sm:$0xff]
  %v2704 = vld [vmem:[%s2700 + $0x18] sm:$0xff]
  %v2705 = vld [vmem:[%s2700 + $0x20] sm:$0xff]
  %v2706 = vld [vmem:[%s2700 + $0x28] sm:$0xff]
  %v2707 = vld [vmem:[%s2700 + $0x30] sm:$0xff]
  %v2708 = vld [vmem:[%s2700 + $0x38] sm:$0xff]
  %v2709 = vld [vmem:[%s2700 + $0x40] sm:$0xff]
  %v2710 = vld [vmem:[%s2700 + $0x48] sm:$0xff]
  %v2711 = vld [vmem:[%s2700 + $0x50] sm:$0xff]
  %v2712 = vld [vmem:[%s2700 + $0x58] sm:$0xff]
  %v2713 = vld [vmem:[%s2700 + $0x60] sm:$0xff]
  %v2714 = vld [vmem:[%s2700 + $0x68] sm:$0xff]
  %v2715 = vld [vmem:[%s2700 + $0x70] sm:$0xff]
  %v2716 = vld [vmem:[%s2700 + $0x78] sm:$0xff]
  %v2717 = vld [vmem:[%s2700 + $0x80] sm:$0xff]
  %v2718 = vld [vmem:[%s2700 + $0x88] sm:$0xff]
  %v2719 = vld [vmem:[%s2700 + $0x90] sm:$0xff]
  %v2720 = vld [vmem:[%s2700 + $0x98] sm:$0xff]
  %v2721 = vld [vmem:[%s2700 + $0xa0] sm:$0x77]
  %v2722 = vunpack.c.l.b16 %v2669
  %v2723 = vunpack.c.h.b16 %v2669
  %v2724 = vunpack.c.l.b16 %v2679
  %v2725 = vunpack.c.h.b16 %v2679
  %v2726 = vunpack.c.l.b16 %v2689
  %v2727 = vunpack.c.h.b16 %v2689
  %v2728 = vunpack.c.l.b16 %v2699
  %v2729 = vunpack.c.h.b16 %v2699
  %v2730 = vpack.c.b16 %v2724, %v2722
  %v2731 = vpack.c.b16 %v2725, %v2723
  %v2732 = vpack.c.b16 %v2728, %v2726
  %v2733 = vpack.c.b16 %v2729, %v2727
  %v2757 = vunpack.c.l.b16 %v2701
  %v2758 = vunpack.c.h.b16 %v2701
  %v2759 = vunpack.c.l.b16 %v2702
  %v2760 = vunpack.c.h.b16 %v2702
  %v2761 = vunpack.c.l.b16 %v2703
  %v2762 = vunpack.c.h.b16 %v2703
  %v2763 = vunpack.c.l.b16 %v2704
  %v2764 = vunpack.c.h.b16 %v2704
  %v2765 = vunpack.c.l.b16 %v2705
  %v2766 = vunpack.c.h.b16 %v2705
  %v2767 = vunpack.c.l.b16 %v2706
  %v2768 = vunpack.c.h.b16 %v2706
  %v2769 = vunpack.c.l.b16 %v2707
  %v2770 = vunpack.c.h.b16 %v2707
  %v2771 = vunpack.c.l.b16 %v2708
  %v2772 = vunpack.c.h.b16 %v2708
  %v2773 = vunpack.c.l.b16 %v2709
  %v2774 = vunpack.c.h.b16 %v2709
  %v2775 = vunpack.c.l.b16 %v2710
  %v2776 = vunpack.c.h.b16 %v2710
  %v2777 = vunpack.c.l.b16 %v2711
  %v2778 = vunpack.c.h.b16 %v2711
  %v2779 = vunpack.c.l.b16 %v2712
  %v2780 = vunpack.c.h.b16 %v2712
  %v2781 = vunpack.c.l.b16 %v2713
  %v2782 = vunpack.c.h.b16 %v2713
  %v2783 = vunpack.c.l.b16 %v2714
  %v2784 = vunpack.c.h.b16 %v2714
  %v2785 = vunpack.c.l.b16 %v2715
  %v2786 = vunpack.c.h.b16 %v2715
  %v2787 = vunpack.c.l.b16 %v2716
  %v2788 = vunpack.c.h.b16 %v2716
  %v2789 = vunpack.c.l.b16 %v2717
  %v2790 = vunpack.c.h.b16 %v2717
  %v2791 = vunpack.c.l.b16 %v2718
  %v2792 = vunpack.c.h.b16 %v2718
  %v2793 = vunpack.c.l.b16 %v2719
  %v2794 = vunpack.c.h.b16 %v2719
  %v2795 = vunpack.c.l.b16 %v2720
  %v2796 = vunpack.c.h.b16 %v2720
  %v2797 = vunpack.c.l.b16 %v2721
  %v2798 = vunpack.c.h.b16 %v2721
  %v2799 = vpack.c.b16 %v2759, %v2757
  %v2800 = vpack.c.b16 %v2760, %v2758
  %v2801 = vpack.c.b16 %v2763, %v2761
  %v2802 = vpack.c.b16 %v2764, %v2762
  %v2803 = vpack.c.b16 %v2767, %v2765
  %v2804 = vpack.c.b16 %v2768, %v2766
  %v2805 = vpack.c.b16 %v2771, %v2769
  %v2806 = vpack.c.b16 %v2772, %v2770
  %v2807 = vpack.c.b16 %v2775, %v2773
  %v2808 = vpack.c.b16 %v2776, %v2774
  %v2809 = vpack.c.b16 %v2779, %v2777
  %v2810 = vpack.c.b16 %v2780, %v2778
  %v2811 = vpack.c.b16 %v2783, %v2781
  %v2812 = vpack.c.b16 %v2784, %v2782
  %v2813 = vpack.c.b16 %v2787, %v2785
  %v2814 = vpack.c.b16 %v2788, %v2786
  %v2815 = vpack.c.b16 %v2791, %v2789
  %v2816 = vpack.c.b16 %v2792, %v2790
  %v2817 = vpack.c.b16 %v2795, %v2793
  %v2818 = vpack.c.b16 %v2796, %v2794
  %v2819 = vpack.c.b16 %v2797, %v2797
  %v2820 = vpack.c.b16 %v2798, %v2798
  %v2842 = vsel %vm414, %v2731, 0
  %v2845 = vsel %vm414, %v2733, 0
  %v2848 = vsel %vm475, %v2819, 0
  %v2851 = vsel %vm475, %v2820, 0
  %2853 = vmatprep.subr.bf16.mxu0 %v2800
  %2854 = vmatpush1.bf16.msra.mxu0 %v2799
  %2855 = vmatprep.subr.bf16.mxu0 %v2802
  %2856 = vmatpush1.bf16.msra.mxu0 %v2801
  %2857 = vmatprep.subr.bf16.mxu0 %v2804
  %2858 = vmatpush1.bf16.msra.mxu0 %v2803
  %2859 = vmatprep.subr.bf16.mxu0 %v2806
  %2860 = vmatpush1.bf16.msra.mxu0 %v2805
  %2861 = vmatprep.subr.bf16.mxu0 %v2808
  %2862 = vmatpush1.bf16.msra.mxu0 %v2807
  %2863 = vmatprep.subr.bf16.mxu0 %v2810
  %2864 = vmatpush1.bf16.msra.mxu0 %v2809
  %2865 = vmatprep.subr.bf16.mxu0 %v2812
  %2866 = vmatpush1.bf16.msra.mxu0 %v2811
  %2867 = vmatprep.subr.bf16.mxu0 %v2814
  %2868 = vmatpush1.bf16.msra.mxu0 %v2813
  %2869 = vmatprep.subr.bf16.mxu0 %v2816
  %2870 = vmatpush1.bf16.msra.mxu0 %v2815
  %2871 = vmatprep.subr.bf16.mxu0 %v2818
  %2872 = vmatpush1.bf16.msra.mxu0 %v2817
  %2873 = vmatprep.subr.bf16.mxu0 %v2851
  %2874 = vmatpush1.bf16.msra.mxu0 %v2848
  %2875 = vmatprep.subr.bf16.mxu0 0
  %2876 = vmatpush1.bf16.msra.mxu0 0
  %2877 = vmatprep.subr.bf16.mxu0 0
  %2878 = vmatpush1.bf16.msra.mxu0 0
  %2879 = vmatprep.subr.bf16.mxu0 0
  %2880 = vmatpush1.bf16.msra.mxu0 0
  %2881 = vmatprep.subr.bf16.mxu0 0
  %2882 = vmatpush1.bf16.msra.mxu0 0
  %2883 = vmatprep.subr.bf16.mxu0 0
  %2884 = vmatpush1.bf16.msra.mxu0 0
  %2885 = vmatprep.mubr.bf16.mxu0 %v2285
  %2886 = vmatmul.mubr.bf16.gmra.mrb[0].mxu0 %v2118
  %v2887 = vpop.f32.mrb[0].mxu0
  %v2888 = vadd.f32 0.0, %v2887
  %v2889 = vpop.f32.mrb[0].mxu0
  %v2890 = vadd.f32 0.0, %v2889
  %v2891 = vpop.f32.mrb[0].mxu0
  %v2892 = vadd.f32 0.0, %v2891
  %v2893 = vpop.f32.mrb[0].mxu0
  %v2894 = vadd.f32 0.0, %v2893
  %2895 = vmatprep.mubr.bf16.mxu0 %v2288
  %2896 = vmatmul.mubr.bf16.gmra.mrb[0].mxu0 %v2120
  %v2897 = vpop.f32.mrb[0].mxu0
  %v2898 = vadd.f32 0.0, %v2897
  %v2899 = vpop.f32.mrb[0].mxu0
  %v2900 = vadd.f32 0.0, %v2899
  %v2901 = vpop.f32.mrb[0].mxu0
  %v2902 = vadd.f32 0.0, %v2901
  %v2903 = vpop.f32.mrb[0].mxu0
  %v2904 = vadd.f32 0.0, %v2903
  %2905 = vmatprep.mubr.bf16.mxu0 %v2291
  %2906 = vmatmul.mubr.bf16.gmra.mrb[0].mxu0 %v2122
  %v2907 = vpop.f32.mrb[0].mxu0
  %v2908 = vadd.f32 0.0, %v2907
  %v2909 = vpop.f32.mrb[0].mxu0
  %v2910 = vadd.f32 0.0, %v2909
  %v2911 = vpop.f32.mrb[0].mxu0
  %v2912 = vadd.f32 0.0, %v2911
  %v2913 = vpop.f32.mrb[0].mxu0
  %v2914 = vadd.f32 0.0, %v2913
  %2915 = vmatprep.mubr.bf16.mxu0 %v2294
  %2916 = vmatmul.mubr.bf16.gmra.mrb[0].mxu0 %v2124
  %v2917 = vpop.f32.mrb[0].mxu0
  %v2918 = vadd.f32 0.0, %v2917
  %v2919 = vpop.f32.mrb[0].mxu0
  %v2920 = vadd.f32 0.0, %v2919
  %v2921 = vpop.f32.mrb[0].mxu0
  %v2922 = vadd.f32 0.0, %v2921
  %v2923 = vpop.f32.mrb[0].mxu0
  %v2924 = vadd.f32 0.0, %v2923
  %2925 = vmatprep.mubr.bf16.mxu0 %v2297
  %2926 = vmatmul.mubr.bf16.gmra.mrb[0].mxu0 %v2126
  %v2927 = vpop.f32.mrb[0].mxu0
  %v2928 = vadd.f32 0.0, %v2927
  %v2929 = vpop.f32.mrb[0].mxu0
  %v2930 = vadd.f32 0.0, %v2929
  %v2931 = vpop.f32.mrb[0].mxu0
  %v2932 = vadd.f32 0.0, %v2931
  %v2933 = vpop.f32.mrb[0].mxu0
  %v2934 = vadd.f32 0.0, %v2933
  %2935 = vmatprep.mubr.bf16.mxu0 %v2300
  %2936 = vmatmul.mubr.bf16.gmra.mrb[0].mxu0 %v2128
  %v2937 = vpop.f32.mrb[0].mxu0
  %v2938 = vadd.f32 0.0, %v2937
  %v2939 = vpop.f32.mrb[0].mxu0
  %v2940 = vadd.f32 0.0, %v2939
  %v2941 = vpop.f32.mrb[0].mxu0
  %v2942 = vadd.f32 0.0, %v2941
  %v2943 = vpop.f32.mrb[0].mxu0
  %v2944 = vadd.f32 0.0, %v2943
  %2945 = vmatprep.mubr.bf16.mxu0 %v2303
  %2946 = vmatmul.mubr.bf16.gmra.mrb[0].mxu0 %v2130
  %v2947 = vpop.f32.mrb[0].mxu0
  %v2948 = vadd.f32 0.0, %v2947
  %v2949 = vpop.f32.mrb[0].mxu0
  %v2950 = vadd.f32 0.0, %v2949
  %v2951 = vpop.f32.mrb[0].mxu0
  %v2952 = vadd.f32 0.0, %v2951
  %v2953 = vpop.f32.mrb[0].mxu0
  %v2954 = vadd.f32 0.0, %v2953
  %2955 = vmatprep.mubr.bf16.mxu0 %v2306
  %2956 = vmatmul.mubr.bf16.gmra.mrb[0].mxu0 %v2132
  %v2957 = vpop.f32.mrb[0].mxu0
  %v2958 = vadd.f32 0.0, %v2957
  %v2959 = vpop.f32.mrb[0].mxu0
  %v2960 = vadd.f32 0.0, %v2959
  %v2961 = vpop.f32.mrb[0].mxu0
  %v2962 = vadd.f32 0.0, %v2961
  %v2963 = vpop.f32.mrb[0].mxu0
  %v2964 = vadd.f32 0.0, %v2963
  %2965 = vmatprep.mubr.bf16.mxu0 %v2309
  %2966 = vmatmul.mubr.bf16.gmra.mrb[0].mxu0 %v2134
  %v2967 = vpop.f32.mrb[0].mxu0
  %v2968 = vadd.f32 0.0, %v2967
  %v2969 = vpop.f32.mrb[0].mxu0
  %v2970 = vadd.f32 0.0, %v2969
  %v2971 = vpop.f32.mrb[0].mxu0
  %v2972 = vadd.f32 0.0, %v2971
  %v2973 = vpop.f32.mrb[0].mxu0
  %v2974 = vadd.f32 0.0, %v2973
  %2975 = vmatprep.mubr.bf16.mxu0 %v2842
  %2976 = vmatmul.mubr.bf16.gmra.mrb[0].mxu0 %v2730
  %v2977 = vpop.f32.mrb[0].mxu0
  %v2978 = vadd.f32 0.0, %v2977
  %v2979 = vpop.f32.mrb[0].mxu0
  %v2980 = vadd.f32 0.0, %v2979
  %v2981 = vpop.f32.mrb[0].mxu0
  %v2982 = vadd.f32 0.0, %v2981
  %v2983 = vpop.f32.mrb[0].mxu0
  %v2984 = vadd.f32 0.0, %v2983
  %2985 = vmatprep.mubr.bf16.mxu0 %v2315
  %2986 = vmatmul.mubr.bf16.gmra.mrb[0].mxu0 %v2138
  %v2987 = vpop.f32.mrb[0].mxu0
  %v2988 = vadd.f32 0.0, %v2987
  %v2989 = vpop.f32.mrb[0].mxu0
  %v2990 = vadd.f32 0.0, %v2989
  %v2991 = vpop.f32.mrb[0].mxu0
  %v2992 = vadd.f32 0.0, %v2991
  %v2993 = vpop.f32.mrb[0].mxu0
  %v2994 = vadd.f32 0.0, %v2993
  %2995 = vmatprep.mubr.bf16.mxu0 %v2318
  %2996 = vmatmul.mubr.bf16.gmra.mrb[0].mxu0 %v2140
  %v2997 = vpop.f32.mrb[0].mxu0
  %v2998 = vadd.f32 0.0, %v2997
  %v2999 = vpop.f32.mrb[0].mxu0
  %v3000 = vadd.f32 0.0, %v2999
  %v3001 = vpop.f32.mrb[0].mxu0
  %v3002 = vadd.f32 0.0, %v3001
  %v3003 = vpop.f32.mrb[0].mxu0
  %v3004 = vadd.f32 0.0, %v3003
  %3005 = vmatprep.mubr.bf16.mxu0 %v2321
  %3006 = vmatmul.mubr.bf16.gmra.mrb[0].mxu0 %v2142
  %v3007 = vpop.f32.mrb[0].mxu0
  %v3008 = vadd.f32 0.0, %v3007
  %v3009 = vpop.f32.mrb[0].mxu0
  %v3010 = vadd.f32 0.0, %v3009
  %v3011 = vpop.f32.mrb[0].mxu0
  %v3012 = vadd.f32 0.0, %v3011
  %v3013 = vpop.f32.mrb[0].mxu0
  %v3014 = vadd.f32 0.0, %v3013
  %3015 = vmatprep.mubr.bf16.mxu0 %v2324
  %3016 = vmatmul.mubr.bf16.gmra.mrb[0].mxu0 %v2144
  %v3017 = vpop.f32.mrb[0].mxu0
  %v3018 = vadd.f32 0.0, %v3017
  %v3019 = vpop.f32.mrb[0].mxu0
  %v3020 = vadd.f32 0.0, %v3019
  %v3021 = vpop.f32.mrb[0].mxu0
  %v3022 = vadd.f32 0.0, %v3021
  %v3023 = vpop.f32.mrb[0].mxu0
  %v3024 = vadd.f32 0.0, %v3023
  %3025 = vmatprep.mubr.bf16.mxu0 %v2327
  %3026 = vmatmul.mubr.bf16.gmra.mrb[0].mxu0 %v2146
  %v3027 = vpop.f32.mrb[0].mxu0
  %v3028 = vadd.f32 0.0, %v3027
  %v3029 = vpop.f32.mrb[0].mxu0
  %v3030 = vadd.f32 0.0, %v3029
  %v3031 = vpop.f32.mrb[0].mxu0
  %v3032 = vadd.f32 0.0, %v3031
  %v3033 = vpop.f32.mrb[0].mxu0
  %v3034 = vadd.f32 0.0, %v3033
  %3035 = vmatprep.mubr.bf16.mxu0 %v2330
  %3036 = vmatmul.mubr.bf16.gmra.mrb[0].mxu0 %v2148
  %v3037 = vpop.f32.mrb[0].mxu0
  %v3038 = vadd.f32 0.0, %v3037
  %v3039 = vpop.f32.mrb[0].mxu0
  %v3040 = vadd.f32 0.0, %v3039
  %v3041 = vpop.f32.mrb[0].mxu0
  %v3042 = vadd.f32 0.0, %v3041
  %v3043 = vpop.f32.mrb[0].mxu0
  %v3044 = vadd.f32 0.0, %v3043
  %3045 = vmatprep.mubr.bf16.mxu0 %v2333
  %3046 = vmatmul.mubr.bf16.gmra.mrb[0].mxu0 %v2150
  %v3047 = vpop.f32.mrb[0].mxu0
  %v3048 = vadd.f32 0.0, %v3047
  %v3049 = vpop.f32.mrb[0].mxu0
  %v3050 = vadd.f32 0.0, %v3049
  %v3051 = vpop.f32.mrb[0].mxu0
  %v3052 = vadd.f32 0.0, %v3051
  %v3053 = vpop.f32.mrb[0].mxu0
  %v3054 = vadd.f32 0.0, %v3053
  %3055 = vmatprep.mubr.bf16.mxu0 %v2336
  %3056 = vmatmul.mubr.bf16.gmra.mrb[0].mxu0 %v2152
  %v3057 = vpop.f32.mrb[0].mxu0
  %v3058 = vadd.f32 0.0, %v3057
  %v3059 = vpop.f32.mrb[0].mxu0
  %v3060 = vadd.f32 0.0, %v3059
  %v3061 = vpop.f32.mrb[0].mxu0
  %v3062 = vadd.f32 0.0, %v3061
  %v3063 = vpop.f32.mrb[0].mxu0
  %v3064 = vadd.f32 0.0, %v3063
  %3065 = vmatprep.mubr.bf16.mxu0 %v2339
  %3066 = vmatmul.mubr.bf16.gmra.mrb[0].mxu0 %v2154
  %v3067 = vpop.f32.mrb[0].mxu0
  %v3068 = vadd.f32 0.0, %v3067
  %v3069 = vpop.f32.mrb[0].mxu0
  %v3070 = vadd.f32 0.0, %v3069
  %v3071 = vpop.f32.mrb[0].mxu0
  %v3072 = vadd.f32 0.0, %v3071
  %v3073 = vpop.f32.mrb[0].mxu0
  %v3074 = vadd.f32 0.0, %v3073
  %3075 = vmatprep.mubr.bf16.mxu0 %v2845
  %3076 = vmatmul.mubr.bf16.gmra.mrb[0].mxu0 %v2732
  %v3077 = vpop.f32.mrb[0].mxu0
  %v3078 = vadd.f32 0.0, %v3077
  %v3079 = vpop.f32.mrb[0].mxu0
  %v3080 = vadd.f32 0.0, %v3079
  %v3081 = vpop.f32.mrb[0].mxu0
  %v3082 = vadd.f32 0.0, %v3081
  %v3083 = vpop.f32.mrb[0].mxu0
  %v3084 = vadd.f32 0.0, %v3083
  %3085 = vdwg.mxu0
  %v3086 = vadd.f32 %v2580, %v2888
  %v3087 = vadd.f32 %v2581, %v2890
  %v3088 = vadd.f32 %v2582, %v2892
  %v3089 = vadd.f32 %v2583, %v2894
  %v3090 = vadd.f32 %v2584, %v2898
  %v3091 = vadd.f32 %v2585, %v2900
  %v3092 = vadd.f32 %v2586, %v2902
  %v3093 = vadd.f32 %v2587, %v2904
  %v3094 = vadd.f32 %v2588, %v2908
  %v3095 = vadd.f32 %v2589, %v2910
  %v3096 = vadd.f32 %v2590, %v2912
  %v3097 = vadd.f32 %v2591, %v2914
  %v3098 = vadd.f32 %v2592, %v2918
  %v3099 = vadd.f32 %v2593, %v2920
  %v3100 = vadd.f32 %v2594, %v2922
  %v3101 = vadd.f32 %v2595, %v2924
  %v3102 = vadd.f32 %v2596, %v2928
  %v3103 = vadd.f32 %v2597, %v2930
  %v3104 = vadd.f32 %v2598, %v2932
  %v3105 = vadd.f32 %v2599, %v2934
  %v3106 = vadd.f32 %v2600, %v2938
  %v3107 = vadd.f32 %v2601, %v2940
  %v3108 = vadd.f32 %v2602, %v2942
  %v3109 = vadd.f32 %v2603, %v2944
  %v3110 = vadd.f32 %v2604, %v2948
  %v3111 = vadd.f32 %v2605, %v2950
  %v3112 = vadd.f32 %v2606, %v2952
  %v3113 = vadd.f32 %v2607, %v2954
  %v3114 = vadd.f32 %v2608, %v2958
  %v3115 = vadd.f32 %v2609, %v2960
  %v3116 = vadd.f32 %v2610, %v2962
  %v3117 = vadd.f32 %v2611, %v2964
  %v3118 = vadd.f32 %v2612, %v2968
  %v3119 = vadd.f32 %v2613, %v2970
  %v3120 = vadd.f32 %v2614, %v2972
  %v3121 = vadd.f32 %v2615, %v2974
  %v3122 = vadd.f32 %v2616, %v2978
  %v3123 = vadd.f32 %v2617, %v2980
  %v3124 = vadd.f32 %v2618, %v2982
  %v3125 = vadd.f32 %v2619, %v2984
  %v3126 = vadd.f32 %v2620, %v2988
  %v3127 = vadd.f32 %v2621, %v2990
  %v3128 = vadd.f32 %v2622, %v2992
  %v3129 = vadd.f32 %v2623, %v2994
  %v3130 = vadd.f32 %v2624, %v2998
  %v3131 = vadd.f32 %v2625, %v3000
  %v3132 = vadd.f32 %v2626, %v3002
  %v3133 = vadd.f32 %v2627, %v3004
  %v3134 = vadd.f32 %v2628, %v3008
  %v3135 = vadd.f32 %v2629, %v3010
  %v3136 = vadd.f32 %v2630, %v3012
  %v3137 = vadd.f32 %v2631, %v3014
  %v3138 = vadd.f32 %v2632, %v3018
  %v3139 = vadd.f32 %v2633, %v3020
  %v3140 = vadd.f32 %v2634, %v3022
  %v3141 = vadd.f32 %v2635, %v3024
  %v3142 = vadd.f32 %v2636, %v3028
  %v3143 = vadd.f32 %v2637, %v3030
  %v3144 = vadd.f32 %v2638, %v3032
  %v3145 = vadd.f32 %v2639, %v3034
  %v3146 = vadd.f32 %v2640, %v3038
  %v3147 = vadd.f32 %v2641, %v3040
  %v3148 = vadd.f32 %v2642, %v3042
  %v3149 = vadd.f32 %v2643, %v3044
  %v3150 = vadd.f32 %v2644, %v3048
  %v3151 = vadd.f32 %v2645, %v3050
  %v3152 = vadd.f32 %v2646, %v3052
  %v3153 = vadd.f32 %v2647, %v3054
  %v3154 = vadd.f32 %v2648, %v3058
  %v3155 = vadd.f32 %v2649, %v3060
  %v3156 = vadd.f32 %v2650, %v3062
  %v3157 = vadd.f32 %v2651, %v3064
  %v3158 = vadd.f32 %v2652, %v3068
  %v3159 = vadd.f32 %v2653, %v3070
  %v3160 = vadd.f32 %v2654, %v3072
  %v3161 = vadd.f32 %v2655, %v3074
  %v3162 = vadd.f32 %v2656, %v3078
  %v3163 = vadd.f32 %v2657, %v3080
  %v3164 = vadd.f32 %v2658, %v3082
  %v3165 = vadd.f32 %v2659, %v3084
  %v3166 = vshrl.u32 %v1575, 16
  %v3168 = vrot.slane %v3166, 4
  %v3169 = vor.u32 %v3168, %v2678
  %v3170 = vrot.slane %v3169, 4
  %v3172 = vshll.u32 %v1576, 16
  %v3174 = vrot.slane %v3172, 5
  %v3175 = vsel %vm1605, %v3170, %v3174
  %v3176 = vshrl.u32 %v1576, 16
  %v3178 = vrot.slane %v3176, 4
  %v3179 = vor.u32 %v3178, %v3174
  %v3180 = vrot.slane %v3179, 4
  %v3182 = vshll.u32 %v1577, 16
  %v3184 = vrot.slane %v3182, 5
  %v3185 = vsel %vm1605, %v3180, %v3184
  %v3186 = vshrl.u32 %v1600, 16
  %v3188 = vrot.slane %v3186, 4
  %v3189 = vor.u32 %v3188, %v2698
  %v3190 = vrot.slane %v3189, 4
  %v3192 = vshll.u32 %v1601, 16
  %v3194 = vrot.slane %v3192, 5
  %v3195 = vsel %vm1605, %v3190, %v3194
  %v3196 = vshrl.u32 %v1601, 16
  %v3198 = vrot.slane %v3196, 4
  %v3199 = vor.u32 %v3198, %v3194
  %v3200 = vrot.slane %v3199, 4
  %v3202 = vshll.u32 %v1602, 16
  %v3204 = vrot.slane %v3202, 5
  %v3205 = vsel %vm1605, %v3200, %v3204
  %s3206 = scalar_lea.vmem %s2, 1176
  %v3207 = vld [vmem:[%s3206] sm:$0xff]
  %v3208 = vld [vmem:[%s3206 + $0x8] sm:$0xff]
  %v3209 = vld [vmem:[%s3206 + $0x10] sm:$0xff]
  %v3210 = vld [vmem:[%s3206 + $0x18] sm:$0xff]
  %v3211 = vld [vmem:[%s3206 + $0x20] sm:$0xff]
  %v3212 = vld [vmem:[%s3206 + $0x28] sm:$0xff]
  %v3213 = vld [vmem:[%s3206 + $0x30] sm:$0xff]
  %v3214 = vld [vmem:[%s3206 + $0x38] sm:$0xff]
  %v3215 = vld [vmem:[%s3206 + $0x40] sm:$0xff]
  %v3216 = vld [vmem:[%s3206 + $0x48] sm:$0xff]
  %v3217 = vld [vmem:[%s3206 + $0x50] sm:$0xff]
  %v3218 = vld [vmem:[%s3206 + $0x58] sm:$0xff]
  %v3219 = vld [vmem:[%s3206 + $0x60] sm:$0xff]
  %v3220 = vld [vmem:[%s3206 + $0x68] sm:$0xff]
  %v3221 = vld [vmem:[%s3206 + $0x70] sm:$0xff]
  %v3222 = vld [vmem:[%s3206 + $0x78] sm:$0xff]
  %v3223 = vld [vmem:[%s3206 + $0x80] sm:$0xff]
  %v3224 = vld [vmem:[%s3206 + $0x88] sm:$0xff]
  %v3225 = vld [vmem:[%s3206 + $0x90] sm:$0xff]
  %v3226 = vld [vmem:[%s3206 + $0x98] sm:$0xff]
  %v3227 = vld [vmem:[%s3206 + $0xa0] sm:$0x77]
  %v3228 = vunpack.c.l.b16 %v3175
  %v3229 = vunpack.c.h.b16 %v3175
  %v3230 = vunpack.c.l.b16 %v3185
  %v3231 = vunpack.c.h.b16 %v3185
  %v3232 = vunpack.c.l.b16 %v3195
  %v3233 = vunpack.c.h.b16 %v3195
  %v3234 = vunpack.c.l.b16 %v3205
  %v3235 = vunpack.c.h.b16 %v3205
  %v3236 = vpack.c.b16 %v3230, %v3228
  %v3237 = vpack.c.b16 %v3231, %v3229
  %v3238 = vpack.c.b16 %v3234, %v3232
  %v3239 = vpack.c.b16 %v3235, %v3233
  %v3263 = vunpack.c.l.b16 %v3207
  %v3264 = vunpack.c.h.b16 %v3207
  %v3265 = vunpack.c.l.b16 %v3208
  %v3266 = vunpack.c.h.b16 %v3208
  %v3267 = vunpack.c.l.b16 %v3209
  %v3268 = vunpack.c.h.b16 %v3209
  %v3269 = vunpack.c.l.b16 %v3210
  %v3270 = vunpack.c.h.b16 %v3210
  %v3271 = vunpack.c.l.b16 %v3211
  %v3272 = vunpack.c.h.b16 %v3211
  %v3273 = vunpack.c.l.b16 %v3212
  %v3274 = vunpack.c.h.b16 %v3212
  %v3275 = vunpack.c.l.b16 %v3213
  %v3276 = vunpack.c.h.b16 %v3213
  %v3277 = vunpack.c.l.b16 %v3214
  %v3278 = vunpack.c.h.b16 %v3214
  %v3279 = vunpack.c.l.b16 %v3215
  %v3280 = vunpack.c.h.b16 %v3215
  %v3281 = vunpack.c.l.b16 %v3216
  %v3282 = vunpack.c.h.b16 %v3216
  %v3283 = vunpack.c.l.b16 %v3217
  %v3284 = vunpack.c.h.b16 %v3217
  %v3285 = vunpack.c.l.b16 %v3218
  %v3286 = vunpack.c.h.b16 %v3218
  %v3287 = vunpack.c.l.b16 %v3219
  %v3288 = vunpack.c.h.b16 %v3219
  %v3289 = vunpack.c.l.b16 %v3220
  %v3290 = vunpack.c.h.b16 %v3220
  %v3291 = vunpack.c.l.b16 %v3221
  %v3292 = vunpack.c.h.b16 %v3221
  %v3293 = vunpack.c.l.b16 %v3222
  %v3294 = vunpack.c.h.b16 %v3222
  %v3295 = vunpack.c.l.b16 %v3223
  %v3296 = vunpack.c.h.b16 %v3223
  %v3297 = vunpack.c.l.b16 %v3224
  %v3298 = vunpack.c.h.b16 %v3224
  %v3299 = vunpack.c.l.b16 %v3225
  %v3300 = vunpack.c.h.b16 %v3225
  %v3301 = vunpack.c.l.b16 %v3226
  %v3302 = vunpack.c.h.b16 %v3226
  %v3303 = vunpack.c.l.b16 %v3227
  %v3304 = vunpack.c.h.b16 %v3227
  %v3305 = vpack.c.b16 %v3265, %v3263
  %v3306 = vpack.c.b16 %v3266, %v3264
  %v3307 = vpack.c.b16 %v3269, %v3267
  %v3308 = vpack.c.b16 %v3270, %v3268
  %v3309 = vpack.c.b16 %v3273, %v3271
  %v3310 = vpack.c.b16 %v3274, %v3272
  %v3311 = vpack.c.b16 %v3277, %v3275
  %v3312 = vpack.c.b16 %v3278, %v3276
  %v3313 = vpack.c.b16 %v3281, %v3279
  %v3314 = vpack.c.b16 %v3282, %v3280
  %v3315 = vpack.c.b16 %v3285, %v3283
  %v3316 = vpack.c.b16 %v3286, %v3284
  %v3317 = vpack.c.b16 %v3289, %v3287
  %v3318 = vpack.c.b16 %v3290, %v3288
  %v3319 = vpack.c.b16 %v3293, %v3291
  %v3320 = vpack.c.b16 %v3294, %v3292
  %v3321 = vpack.c.b16 %v3297, %v3295
  %v3322 = vpack.c.b16 %v3298, %v3296
  %v3323 = vpack.c.b16 %v3301, %v3299
  %v3324 = vpack.c.b16 %v3302, %v3300
  %v3325 = vpack.c.b16 %v3303, %v3303
  %v3326 = vpack.c.b16 %v3304, %v3304
  %v3348 = vsel %vm414, %v3237, 0
  %v3351 = vsel %vm414, %v3239, 0
  %v3354 = vsel %vm475, %v3325, 0
  %v3357 = vsel %vm475, %v3326, 0
  %3359 = vmatprep.subr.bf16.mxu0 %v3306
  %3360 = vmatpush1.bf16.msra.mxu0 %v3305
  %3361 = vmatprep.subr.bf16.mxu0 %v3308
  %3362 = vmatpush1.bf16.msra.mxu0 %v3307
  %3363 = vmatprep.subr.bf16.mxu0 %v3310
  %3364 = vmatpush1.bf16.msra.mxu0 %v3309
  %3365 = vmatprep.subr.bf16.mxu0 %v3312
  %3366 = vmatpush1.bf16.msra.mxu0 %v3311
  %3367 = vmatprep.subr.bf16.mxu0 %v3314
  %3368 = vmatpush1.bf16.msra.mxu0 %v3313
  %3369 = vmatprep.subr.bf16.mxu0 %v3316
  %3370 = vmatpush1.bf16.msra.mxu0 %v3315
  %3371 = vmatprep.subr.bf16.mxu0 %v3318
  %3372 = vmatpush1.bf16.msra.mxu0 %v3317
  %3373 = vmatprep.subr.bf16.mxu0 %v3320
  %3374 = vmatpush1.bf16.msra.mxu0 %v3319
  %3375 = vmatprep.subr.bf16.mxu0 %v3322
  %3376 = vmatpush1.bf16.msra.mxu0 %v3321
  %3377 = vmatprep.subr.bf16.mxu0 %v3324
  %3378 = vmatpush1.bf16.msra.mxu0 %v3323
  %3379 = vmatprep.subr.bf16.mxu0 %v3357
  %3380 = vmatpush1.bf16.msra.mxu0 %v3354
  %3381 = vmatprep.subr.bf16.mxu0 0
  %3382 = vmatpush1.bf16.msra.mxu0 0
  %3383 = vmatprep.subr.bf16.mxu0 0
  %3384 = vmatpush1.bf16.msra.mxu0 0
  %3385 = vmatprep.subr.bf16.mxu0 0
  %3386 = vmatpush1.bf16.msra.mxu0 0
  %3387 = vmatprep.subr.bf16.mxu0 0
  %3388 = vmatpush1.bf16.msra.mxu0 0
  %3389 = vmatprep.subr.bf16.mxu0 0
  %3390 = vmatpush1.bf16.msra.mxu0 0
  %3391 = vmatprep.mubr.bf16.mxu0 %v2288
  %3392 = vmatmul.mubr.bf16.gmra.mrb[0].mxu0 %v2120
  %v3393 = vpop.f32.mrb[0].mxu0
  %v3394 = vadd.f32 0.0, %v3393
  %v3395 = vpop.f32.mrb[0].mxu0
  %v3396 = vadd.f32 0.0, %v3395
  %v3397 = vpop.f32.mrb[0].mxu0
  %v3398 = vadd.f32 0.0, %v3397
  %v3399 = vpop.f32.mrb[0].mxu0
  %v3400 = vadd.f32 0.0, %v3399
  %3401 = vmatprep.mubr.bf16.mxu0 %v2291
  %3402 = vmatmul.mubr.bf16.gmra.mrb[0].mxu0 %v2122
  %v3403 = vpop.f32.mrb[0].mxu0
  %v3404 = vadd.f32 0.0, %v3403
  %v3405 = vpop.f32.mrb[0].mxu0
  %v3406 = vadd.f32 0.0, %v3405
  %v3407 = vpop.f32.mrb[0].mxu0
  %v3408 = vadd.f32 0.0, %v3407
  %v3409 = vpop.f32.mrb[0].mxu0
  %v3410 = vadd.f32 0.0, %v3409
  %3411 = vmatprep.mubr.bf16.mxu0 %v2294
  %3412 = vmatmul.mubr.bf16.gmra.mrb[0].mxu0 %v2124
  %v3413 = vpop.f32.mrb[0].mxu0
  %v3414 = vadd.f32 0.0, %v3413
  %v3415 = vpop.f32.mrb[0].mxu0
  %v3416 = vadd.f32 0.0, %v3415
  %v3417 = vpop.f32.mrb[0].mxu0
  %v3418 = vadd.f32 0.0, %v3417
  %v3419 = vpop.f32.mrb[0].mxu0
  %v3420 = vadd.f32 0.0, %v3419
  %3421 = vmatprep.mubr.bf16.mxu0 %v2297
  %3422 = vmatmul.mubr.bf16.gmra.mrb[0].mxu0 %v2126
  %v3423 = vpop.f32.mrb[0].mxu0
  %v3424 = vadd.f32 0.0, %v3423
  %v3425 = vpop.f32.mrb[0].mxu0
  %v3426 = vadd.f32 0.0, %v3425
  %v3427 = vpop.f32.mrb[0].mxu0
  %v3428 = vadd.f32 0.0, %v3427
  %v3429 = vpop.f32.mrb[0].mxu0
  %v3430 = vadd.f32 0.0, %v3429
  %3431 = vmatprep.mubr.bf16.mxu0 %v2300
  %3432 = vmatmul.mubr.bf16.gmra.mrb[0].mxu0 %v2128
  %v3433 = vpop.f32.mrb[0].mxu0
  %v3434 = vadd.f32 0.0, %v3433
  %v3435 = vpop.f32.mrb[0].mxu0
  %v3436 = vadd.f32 0.0, %v3435
  %v3437 = vpop.f32.mrb[0].mxu0
  %v3438 = vadd.f32 0.0, %v3437
  %v3439 = vpop.f32.mrb[0].mxu0
  %v3440 = vadd.f32 0.0, %v3439
  %3441 = vmatprep.mubr.bf16.mxu0 %v2303
  %3442 = vmatmul.mubr.bf16.gmra.mrb[0].mxu0 %v2130
  %v3443 = vpop.f32.mrb[0].mxu0
  %v3444 = vadd.f32 0.0, %v3443
  %v3445 = vpop.f32.mrb[0].mxu0
  %v3446 = vadd.f32 0.0, %v3445
  %v3447 = vpop.f32.mrb[0].mxu0
  %v3448 = vadd.f32 0.0, %v3447
  %v3449 = vpop.f32.mrb[0].mxu0
  %v3450 = vadd.f32 0.0, %v3449
  %3451 = vmatprep.mubr.bf16.mxu0 %v2306
  %3452 = vmatmul.mubr.bf16.gmra.mrb[0].mxu0 %v2132
  %v3453 = vpop.f32.mrb[0].mxu0
  %v3454 = vadd.f32 0.0, %v3453
  %v3455 = vpop.f32.mrb[0].mxu0
  %v3456 = vadd.f32 0.0, %v3455
  %v3457 = vpop.f32.mrb[0].mxu0
  %v3458 = vadd.f32 0.0, %v3457
  %v3459 = vpop.f32.mrb[0].mxu0
  %v3460 = vadd.f32 0.0, %v3459
  %3461 = vmatprep.mubr.bf16.mxu0 %v2309
  %3462 = vmatmul.mubr.bf16.gmra.mrb[0].mxu0 %v2134
  %v3463 = vpop.f32.mrb[0].mxu0
  %v3464 = vadd.f32 0.0, %v3463
  %v3465 = vpop.f32.mrb[0].mxu0
  %v3466 = vadd.f32 0.0, %v3465
  %v3467 = vpop.f32.mrb[0].mxu0
  %v3468 = vadd.f32 0.0, %v3467
  %v3469 = vpop.f32.mrb[0].mxu0
  %v3470 = vadd.f32 0.0, %v3469
  %3471 = vmatprep.mubr.bf16.mxu0 %v2842
  %3472 = vmatmul.mubr.bf16.gmra.mrb[0].mxu0 %v2730
  %v3473 = vpop.f32.mrb[0].mxu0
  %v3474 = vadd.f32 0.0, %v3473
  %v3475 = vpop.f32.mrb[0].mxu0
  %v3476 = vadd.f32 0.0, %v3475
  %v3477 = vpop.f32.mrb[0].mxu0
  %v3478 = vadd.f32 0.0, %v3477
  %v3479 = vpop.f32.mrb[0].mxu0
  %v3480 = vadd.f32 0.0, %v3479
  %3481 = vmatprep.mubr.bf16.mxu0 %v3348
  %3482 = vmatmul.mubr.bf16.gmra.mrb[0].mxu0 %v3236
  %v3483 = vpop.f32.mrb[0].mxu0
  %v3484 = vadd.f32 0.0, %v3483
  %v3485 = vpop.f32.mrb[0].mxu0
  %v3486 = vadd.f32 0.0, %v3485
  %v3487 = vpop.f32.mrb[0].mxu0
  %v3488 = vadd.f32 0.0, %v3487
  %v3489 = vpop.f32.mrb[0].mxu0
  %v3490 = vadd.f32 0.0, %v3489
  %3491 = vmatprep.mubr.bf16.mxu0 %v2318
  %3492 = vmatmul.mubr.bf16.gmra.mrb[0].mxu0 %v2140
  %v3493 = vpop.f32.mrb[0].mxu0
  %v3494 = vadd.f32 0.0, %v3493
  %v3495 = vpop.f32.mrb[0].mxu0
  %v3496 = vadd.f32 0.0, %v3495
  %v3497 = vpop.f32.mrb[0].mxu0
  %v3498 = vadd.f32 0.0, %v3497
  %v3499 = vpop.f32.mrb[0].mxu0
  %v3500 = vadd.f32 0.0, %v3499
  %3501 = vmatprep.mubr.bf16.mxu0 %v2321
  %3502 = vmatmul.mubr.bf16.gmra.mrb[0].mxu0 %v2142
  %v3503 = vpop.f32.mrb[0].mxu0
  %v3504 = vadd.f32 0.0, %v3503
  %v3505 = vpop.f32.mrb[0].mxu0
  %v3506 = vadd.f32 0.0, %v3505
  %v3507 = vpop.f32.mrb[0].mxu0
  %v3508 = vadd.f32 0.0, %v3507
  %v3509 = vpop.f32.mrb[0].mxu0
  %v3510 = vadd.f32 0.0, %v3509
  %3511 = vmatprep.mubr.bf16.mxu0 %v2324
  %3512 = vmatmul.mubr.bf16.gmra.mrb[0].mxu0 %v2144
  %v3513 = vpop.f32.mrb[0].mxu0
  %v3514 = vadd.f32 0.0, %v3513
  %v3515 = vpop.f32.mrb[0].mxu0
  %v3516 = vadd.f32 0.0, %v3515
  %v3517 = vpop.f32.mrb[0].mxu0
  %v3518 = vadd.f32 0.0, %v3517
  %v3519 = vpop.f32.mrb[0].mxu0
  %v3520 = vadd.f32 0.0, %v3519
  %3521 = vmatprep.mubr.bf16.mxu0 %v2327
  %3522 = vmatmul.mubr.bf16.gmra.mrb[0].mxu0 %v2146
  %v3523 = vpop.f32.mrb[0].mxu0
  %v3524 = vadd.f32 0.0, %v3523
  %v3525 = vpop.f32.mrb[0].mxu0
  %v3526 = vadd.f32 0.0, %v3525
  %v3527 = vpop.f32.mrb[0].mxu0
  %v3528 = vadd.f32 0.0, %v3527
  %v3529 = vpop.f32.mrb[0].mxu0
  %v3530 = vadd.f32 0.0, %v3529
  %3531 = vmatprep.mubr.bf16.mxu0 %v2330
  %3532 = vmatmul.mubr.bf16.gmra.mrb[0].mxu0 %v2148
  %v3533 = vpop.f32.mrb[0].mxu0
  %v3534 = vadd.f32 0.0, %v3533
  %v3535 = vpop.f32.mrb[0].mxu0
  %v3536 = vadd.f32 0.0, %v3535
  %v3537 = vpop.f32.mrb[0].mxu0
  %v3538 = vadd.f32 0.0, %v3537
  %v3539 = vpop.f32.mrb[0].mxu0
  %v3540 = vadd.f32 0.0, %v3539
  %3541 = vmatprep.mubr.bf16.mxu0 %v2333
  %3542 = vmatmul.mubr.bf16.gmra.mrb[0].mxu0 %v2150
  %v3543 = vpop.f32.mrb[0].mxu0
  %v3544 = vadd.f32 0.0, %v3543
  %v3545 = vpop.f32.mrb[0].mxu0
  %v3546 = vadd.f32 0.0, %v3545
  %v3547 = vpop.f32.mrb[0].mxu0
  %v3548 = vadd.f32 0.0, %v3547
  %v3549 = vpop.f32.mrb[0].mxu0
  %v3550 = vadd.f32 0.0, %v3549
  %3551 = vmatprep.mubr.bf16.mxu0 %v2336
  %3552 = vmatmul.mubr.bf16.gmra.mrb[0].mxu0 %v2152
  %v3553 = vpop.f32.mrb[0].mxu0
  %v3554 = vadd.f32 0.0, %v3553
  %v3555 = vpop.f32.mrb[0].mxu0
  %v3556 = vadd.f32 0.0, %v3555
  %v3557 = vpop.f32.mrb[0].mxu0
  %v3558 = vadd.f32 0.0, %v3557
  %v3559 = vpop.f32.mrb[0].mxu0
  %v3560 = vadd.f32 0.0, %v3559
  %3561 = vmatprep.mubr.bf16.mxu0 %v2339
  %3562 = vmatmul.mubr.bf16.gmra.mrb[0].mxu0 %v2154
  %v3563 = vpop.f32.mrb[0].mxu0
  %v3564 = vadd.f32 0.0, %v3563
  %v3565 = vpop.f32.mrb[0].mxu0
  %v3566 = vadd.f32 0.0, %v3565
  %v3567 = vpop.f32.mrb[0].mxu0
  %v3568 = vadd.f32 0.0, %v3567
  %v3569 = vpop.f32.mrb[0].mxu0
  %v3570 = vadd.f32 0.0, %v3569
  %3571 = vmatprep.mubr.bf16.mxu0 %v2845
  %3572 = vmatmul.mubr.bf16.gmra.mrb[0].mxu0 %v2732
  %v3573 = vpop.f32.mrb[0].mxu0
  %v3574 = vadd.f32 0.0, %v3573
  %v3575 = vpop.f32.mrb[0].mxu0
  %v3576 = vadd.f32 0.0, %v3575
  %v3577 = vpop.f32.mrb[0].mxu0
  %v3578 = vadd.f32 0.0, %v3577
  %v3579 = vpop.f32.mrb[0].mxu0
  %v3580 = vadd.f32 0.0, %v3579
  %3581 = vmatprep.mubr.bf16.mxu0 %v3351
  %3582 = vmatmul.mubr.bf16.gmra.mrb[0].mxu0 %v3238
  %v3583 = vpop.f32.mrb[0].mxu0
  %v3584 = vadd.f32 0.0, %v3583
  %v3585 = vpop.f32.mrb[0].mxu0
  %v3586 = vadd.f32 0.0, %v3585
  %v3587 = vpop.f32.mrb[0].mxu0
  %v3588 = vadd.f32 0.0, %v3587
  %v3589 = vpop.f32.mrb[0].mxu0
  %v3590 = vadd.f32 0.0, %v3589
  %3591 = vdwg.mxu0
  %v3592 = vadd.f32 %v3086, %v3394
  %v3593 = vadd.f32 %v3087, %v3396
  %v3594 = vadd.f32 %v3088, %v3398
  %v3595 = vadd.f32 %v3089, %v3400
  %v3596 = vadd.f32 %v3090, %v3404
  %v3597 = vadd.f32 %v3091, %v3406
  %v3598 = vadd.f32 %v3092, %v3408
  %v3599 = vadd.f32 %v3093, %v3410
  %v3600 = vadd.f32 %v3094, %v3414
  %v3601 = vadd.f32 %v3095, %v3416
  %v3602 = vadd.f32 %v3096, %v3418
  %v3603 = vadd.f32 %v3097, %v3420
  %v3604 = vadd.f32 %v3098, %v3424
  %v3605 = vadd.f32 %v3099, %v3426
  %v3606 = vadd.f32 %v3100, %v3428
  %v3607 = vadd.f32 %v3101, %v3430
  %v3608 = vadd.f32 %v3102, %v3434
  %v3609 = vadd.f32 %v3103, %v3436
  %v3610 = vadd.f32 %v3104, %v3438
  %v3611 = vadd.f32 %v3105, %v3440
  %v3612 = vadd.f32 %v3106, %v3444
  %v3613 = vadd.f32 %v3107, %v3446
  %v3614 = vadd.f32 %v3108, %v3448
  %v3615 = vadd.f32 %v3109, %v3450
  %v3616 = vadd.f32 %v3110, %v3454
  %v3617 = vadd.f32 %v3111, %v3456
  %v3618 = vadd.f32 %v3112, %v3458
  %v3619 = vadd.f32 %v3113, %v3460
  %v3620 = vadd.f32 %v3114, %v3464
  %v3621 = vadd.f32 %v3115, %v3466
  %v3622 = vadd.f32 %v3116, %v3468
  %v3623 = vadd.f32 %v3117, %v3470
  %v3624 = vadd.f32 %v3118, %v3474
  %v3625 = vadd.f32 %v3119, %v3476
  %v3626 = vadd.f32 %v3120, %v3478
  %v3627 = vadd.f32 %v3121, %v3480
  %v3628 = vadd.f32 %v3122, %v3484
  %v3629 = vadd.f32 %v3123, %v3486
  %v3630 = vadd.f32 %v3124, %v3488
  %v3631 = vadd.f32 %v3125, %v3490
  %v3632 = vadd.f32 %v3126, %v3494
  %v3633 = vadd.f32 %v3127, %v3496
  %v3634 = vadd.f32 %v3128, %v3498
  %v3635 = vadd.f32 %v3129, %v3500
  %v3636 = vadd.f32 %v3130, %v3504
  %v3637 = vadd.f32 %v3131, %v3506
  %v3638 = vadd.f32 %v3132, %v3508
  %v3639 = vadd.f32 %v3133, %v3510
  %v3640 = vadd.f32 %v3134, %v3514
  %v3641 = vadd.f32 %v3135, %v3516
  %v3642 = vadd.f32 %v3136, %v3518
  %v3643 = vadd.f32 %v3137, %v3520
  %v3644 = vadd.f32 %v3138, %v3524
  %v3645 = vadd.f32 %v3139, %v3526
  %v3646 = vadd.f32 %v3140, %v3528
  %v3647 = vadd.f32 %v3141, %v3530
  %v3648 = vadd.f32 %v3142, %v3534
  %v3649 = vadd.f32 %v3143, %v3536
  %v3650 = vadd.f32 %v3144, %v3538
  %v3651 = vadd.f32 %v3145, %v3540
  %v3652 = vadd.f32 %v3146, %v3544
  %v3653 = vadd.f32 %v3147, %v3546
  %v3654 = vadd.f32 %v3148, %v3548
  %v3655 = vadd.f32 %v3149, %v3550
  %v3656 = vadd.f32 %v3150, %v3554
  %v3657 = vadd.f32 %v3151, %v3556
  %v3658 = vadd.f32 %v3152, %v3558
  %v3659 = vadd.f32 %v3153, %v3560
  %v3660 = vadd.f32 %v3154, %v3564
  %v3661 = vadd.f32 %v3155, %v3566
  %v3662 = vadd.f32 %v3156, %v3568
  %v3663 = vadd.f32 %v3157, %v3570
  %v3664 = vadd.f32 %v3158, %v3574
  %v3665 = vadd.f32 %v3159, %v3576
  %v3666 = vadd.f32 %v3160, %v3578
  %v3667 = vadd.f32 %v3161, %v3580
  %v3668 = vadd.f32 %v3162, %v3584
  %v3669 = vadd.f32 %v3163, %v3586
  %v3670 = vadd.f32 %v3164, %v3588
  %v3671 = vadd.f32 %v3165, %v3590
  %v3672 = vld [vmem:[%s0] sm:$0xee]
  %v3673 = vld [vmem:[%s0 + $0xc8] sm:$0xee]
  %vm3716 = vcmask 1042432
  %vm3717 = vcmask 1046532
  %vm3718 = vmor %vm3716, %vm3717
  %v3719 = vrot.slane %v3672, 5
  %v3720 = vrot.slane %v3719, 4
  %v3721 = vrot.slane %v1554, 5
  %v3722 = vsel %vm3718, %v3720, %v3721
  %v3723 = vrot.slane %v3721, 4
  %v3724 = vrot.slane %v1555, 5
  %v3725 = vsel %vm3718, %v3723, %v3724
  %v3726 = vrot.slane %v3724, 4
  %v3727 = vrot.slane %v1556, 5
  %v3728 = vsel %vm3718, %v3726, %v3727
  %v3729 = vrot.slane %v3727, 4
  %v3730 = vrot.slane %v1557, 5
  %v3731 = vsel %vm3718, %v3729, %v3730
  %v3732 = vrot.slane %v3730, 4
  %v3733 = vrot.slane %v1558, 5
  %v3734 = vsel %vm3718, %v3732, %v3733
  %v3735 = vrot.slane %v3733, 4
  %v3736 = vrot.slane %v1559, 5
  %v3737 = vsel %vm3718, %v3735, %v3736
  %v3738 = vrot.slane %v3736, 4
  %v3739 = vrot.slane %v1560, 5
  %v3740 = vsel %vm3718, %v3738, %v3739
  %v3741 = vrot.slane %v3739, 4
  %v3742 = vrot.slane %v1561, 5
  %v3743 = vsel %vm3718, %v3741, %v3742
  %v3744 = vrot.slane %v3742, 4
  %v3745 = vrot.slane %v1562, 5
  %v3746 = vsel %vm3718, %v3744, %v3745
  %v3747 = vrot.slane %v3745, 4
  %v3748 = vrot.slane %v1563, 5
  %v3749 = vsel %vm3718, %v3747, %v3748
  %v3750 = vrot.slane %v3748, 4
  %v3751 = vrot.slane %v1564, 5
  %v3752 = vsel %vm3718, %v3750, %v3751
  %v3753 = vrot.slane %v3751, 4
  %v3754 = vrot.slane %v1565, 5
  %v3755 = vsel %vm3718, %v3753, %v3754
  %v3756 = vrot.slane %v3754, 4
  %v3757 = vrot.slane %v1566, 5
  %v3758 = vsel %vm3718, %v3756, %v3757
  %v3759 = vrot.slane %v3757, 4
  %v3760 = vrot.slane %v1567, 5
  %v3761 = vsel %vm3718, %v3759, %v3760
  %v3762 = vrot.slane %v3760, 4
  %v3763 = vrot.slane %v1568, 5
  %v3764 = vsel %vm3718, %v3762, %v3763
  %v3765 = vrot.slane %v3763, 4
  %v3766 = vrot.slane %v1569, 5
  %v3767 = vsel %vm3718, %v3765, %v3766
  %v3768 = vrot.slane %v3766, 4
  %v3769 = vrot.slane %v1570, 5
  %v3770 = vsel %vm3718, %v3768, %v3769
  %v3771 = vrot.slane %v3769, 4
  %v3772 = vrot.slane %v1571, 5
  %v3773 = vsel %vm3718, %v3771, %v3772
  %v3774 = vrot.slane %v3772, 4
  %v3775 = vrot.slane %v1572, 5
  %v3776 = vsel %vm3718, %v3774, %v3775
  %v3777 = vrot.slane %v3775, 4
  %v3778 = vrot.slane %v1573, 5
  %v3779 = vsel %vm3718, %v3777, %v3778
  %v3780 = vrot.slane %v3673, 5
  %v3781 = vrot.slane %v3780, 4
  %v3782 = vrot.slane %v1579, 5
  %v3783 = vsel %vm3718, %v3781, %v3782
  %v3784 = vrot.slane %v3782, 4
  %v3785 = vrot.slane %v1580, 5
  %v3786 = vsel %vm3718, %v3784, %v3785
  %v3787 = vrot.slane %v3785, 4
  %v3788 = vrot.slane %v1581, 5
  %v3789 = vsel %vm3718, %v3787, %v3788
  %v3790 = vrot.slane %v3788, 4
  %v3791 = vrot.slane %v1582, 5
  %v3792 = vsel %vm3718, %v3790, %v3791
  %v3793 = vrot.slane %v3791, 4
  %v3794 = vrot.slane %v1583, 5
  %v3795 = vsel %vm3718, %v3793, %v3794
  %v3796 = vrot.slane %v3794, 4
  %v3797 = vrot.slane %v1584, 5
  %v3798 = vsel %vm3718, %v3796, %v3797
  %v3799 = vrot.slane %v3797, 4
  %v3800 = vrot.slane %v1585, 5
  %v3801 = vsel %vm3718, %v3799, %v3800
  %v3802 = vrot.slane %v3800, 4
  %v3803 = vrot.slane %v1586, 5
  %v3804 = vsel %vm3718, %v3802, %v3803
  %v3805 = vrot.slane %v3803, 4
  %v3806 = vrot.slane %v1587, 5
  %v3807 = vsel %vm3718, %v3805, %v3806
  %v3808 = vrot.slane %v3806, 4
  %v3809 = vrot.slane %v1588, 5
  %v3810 = vsel %vm3718, %v3808, %v3809
  %v3811 = vrot.slane %v3809, 4
  %v3812 = vrot.slane %v1589, 5
  %v3813 = vsel %vm3718, %v3811, %v3812
  %v3814 = vrot.slane %v3812, 4
  %v3815 = vrot.slane %v1590, 5
  %v3816 = vsel %vm3718, %v3814, %v3815
  %v3817 = vrot.slane %v3815, 4
  %v3818 = vrot.slane %v1591, 5
  %v3819 = vsel %vm3718, %v3817, %v3818
  %v3820 = vrot.slane %v3818, 4
  %v3821 = vrot.slane %v1592, 5
  %v3822 = vsel %vm3718, %v3820, %v3821
  %v3823 = vrot.slane %v3821, 4
  %v3824 = vrot.slane %v1593, 5
  %v3825 = vsel %vm3718, %v3823, %v3824
  %v3826 = vrot.slane %v3824, 4
  %v3827 = vrot.slane %v1594, 5
  %v3828 = vsel %vm3718, %v3826, %v3827
  %v3829 = vrot.slane %v3827, 4
  %v3830 = vrot.slane %v1595, 5
  %v3831 = vsel %vm3718, %v3829, %v3830
  %v3832 = vrot.slane %v3830, 4
  %v3833 = vrot.slane %v1596, 5
  %v3834 = vsel %vm3718, %v3832, %v3833
  %v3835 = vrot.slane %v3833, 4
  %v3836 = vrot.slane %v1597, 5
  %v3837 = vsel %vm3718, %v3835, %v3836
  %v3838 = vrot.slane %v3836, 4
  %v3839 = vrot.slane %v1598, 5
  %v3840 = vsel %vm3718, %v3838, %v3839
  %s3841 = scalar_lea.vmem %s2, 336
  %v3842 = vld [vmem:[%s3841] sm:$0xff]
  %v3843 = vld [vmem:[%s3841 + $0x8] sm:$0xff]
  %v3844 = vld [vmem:[%s3841 + $0x10] sm:$0xff]
  %v3845 = vld [vmem:[%s3841 + $0x18] sm:$0xff]
  %v3846 = vld [vmem:[%s3841 + $0x20] sm:$0xff]
  %v3847 = vld [vmem:[%s3841 + $0x28] sm:$0xff]
  %v3848 = vld [vmem:[%s3841 + $0x30] sm:$0xff]
  %v3849 = vld [vmem:[%s3841 + $0x38] sm:$0xff]
  %v3850 = vld [vmem:[%s3841 + $0x40] sm:$0xff]
  %v3851 = vld [vmem:[%s3841 + $0x48] sm:$0xff]
  %v3852 = vld [vmem:[%s3841 + $0x50] sm:$0xff]
  %v3853 = vld [vmem:[%s3841 + $0x58] sm:$0xff]
  %v3854 = vld [vmem:[%s3841 + $0x60] sm:$0xff]
  %v3855 = vld [vmem:[%s3841 + $0x68] sm:$0xff]
  %v3856 = vld [vmem:[%s3841 + $0x70] sm:$0xff]
  %v3857 = vld [vmem:[%s3841 + $0x78] sm:$0xff]
  %v3858 = vld [vmem:[%s3841 + $0x80] sm:$0xff]
  %v3859 = vld [vmem:[%s3841 + $0x88] sm:$0xff]
  %v3860 = vld [vmem:[%s3841 + $0x90] sm:$0xff]
  %v3861 = vld [vmem:[%s3841 + $0x98] sm:$0xff]
  %v3862 = vld [vmem:[%s3841 + $0xa0] sm:$0x77]
  %v3863 = vunpack.c.l.b16 %v3722
  %v3864 = vunpack.c.h.b16 %v3722
  %v3865 = vunpack.c.l.b16 %v3725
  %v3866 = vunpack.c.h.b16 %v3725
  %v3867 = vunpack.c.l.b16 %v3728
  %v3868 = vunpack.c.h.b16 %v3728
  %v3869 = vunpack.c.l.b16 %v3731
  %v3870 = vunpack.c.h.b16 %v3731
  %v3871 = vunpack.c.l.b16 %v3734
  %v3872 = vunpack.c.h.b16 %v3734
  %v3873 = vunpack.c.l.b16 %v3737
  %v3874 = vunpack.c.h.b16 %v3737
  %v3875 = vunpack.c.l.b16 %v3740
  %v3876 = vunpack.c.h.b16 %v3740
  %v3877 = vunpack.c.l.b16 %v3743
  %v3878 = vunpack.c.h.b16 %v3743
  %v3879 = vunpack.c.l.b16 %v3746
  %v3880 = vunpack.c.h.b16 %v3746
  %v3881 = vunpack.c.l.b16 %v3749
  %v3882 = vunpack.c.h.b16 %v3749
  %v3883 = vunpack.c.l.b16 %v3752
  %v3884 = vunpack.c.h.b16 %v3752
  %v3885 = vunpack.c.l.b16 %v3755
  %v3886 = vunpack.c.h.b16 %v3755
  %v3887 = vunpack.c.l.b16 %v3758
  %v3888 = vunpack.c.h.b16 %v3758
  %v3889 = vunpack.c.l.b16 %v3761
  %v3890 = vunpack.c.h.b16 %v3761
  %v3891 = vunpack.c.l.b16 %v3764
  %v3892 = vunpack.c.h.b16 %v3764
  %v3893 = vunpack.c.l.b16 %v3767
  %v3894 = vunpack.c.h.b16 %v3767
  %v3895 = vunpack.c.l.b16 %v3770
  %v3896 = vunpack.c.h.b16 %v3770
  %v3897 = vunpack.c.l.b16 %v3773
  %v3898 = vunpack.c.h.b16 %v3773
  %v3899 = vunpack.c.l.b16 %v3776
  %v3900 = vunpack.c.h.b16 %v3776
  %v3901 = vunpack.c.l.b16 %v3779
  %v3902 = vunpack.c.h.b16 %v3779
  %v3903 = vunpack.c.l.b16 %v3783
  %v3904 = vunpack.c.h.b16 %v3783
  %v3905 = vunpack.c.l.b16 %v3786
  %v3906 = vunpack.c.h.b16 %v3786
  %v3907 = vunpack.c.l.b16 %v3789
  %v3908 = vunpack.c.h.b16 %v3789
  %v3909 = vunpack.c.l.b16 %v3792
  %v3910 = vunpack.c.h.b16 %v3792
  %v3911 = vunpack.c.l.b16 %v3795
  %v3912 = vunpack.c.h.b16 %v3795
  %v3913 = vunpack.c.l.b16 %v3798
  %v3914 = vunpack.c.h.b16 %v3798
  %v3915 = vunpack.c.l.b16 %v3801
  %v3916 = vunpack.c.h.b16 %v3801
  %v3917 = vunpack.c.l.b16 %v3804
  %v3918 = vunpack.c.h.b16 %v3804
  %v3919 = vunpack.c.l.b16 %v3807
  %v3920 = vunpack.c.h.b16 %v3807
  %v3921 = vunpack.c.l.b16 %v3810
  %v3922 = vunpack.c.h.b16 %v3810
  %v3923 = vunpack.c.l.b16 %v3813
  %v3924 = vunpack.c.h.b16 %v3813
  %v3925 = vunpack.c.l.b16 %v3816
  %v3926 = vunpack.c.h.b16 %v3816
  %v3927 = vunpack.c.l.b16 %v3819
  %v3928 = vunpack.c.h.b16 %v3819
  %v3929 = vunpack.c.l.b16 %v3822
  %v3930 = vunpack.c.h.b16 %v3822
  %v3931 = vunpack.c.l.b16 %v3825
  %v3932 = vunpack.c.h.b16 %v3825
  %v3933 = vunpack.c.l.b16 %v3828
  %v3934 = vunpack.c.h.b16 %v3828
  %v3935 = vunpack.c.l.b16 %v3831
  %v3936 = vunpack.c.h.b16 %v3831
  %v3937 = vunpack.c.l.b16 %v3834
  %v3938 = vunpack.c.h.b16 %v3834
  %v3939 = vunpack.c.l.b16 %v3837
  %v3940 = vunpack.c.h.b16 %v3837
  %v3941 = vunpack.c.l.b16 %v3840
  %v3942 = vunpack.c.h.b16 %v3840
  %v3943 = vpack.c.b16 %v3865, %v3863
  %v3944 = vpack.c.b16 %v3866, %v3864
  %v3945 = vpack.c.b16 %v3869, %v3867
  %v3946 = vpack.c.b16 %v3870, %v3868
  %v3947 = vpack.c.b16 %v3873, %v3871
  %v3948 = vpack.c.b16 %v3874, %v3872
  %v3949 = vpack.c.b16 %v3877, %v3875
  %v3950 = vpack.c.b16 %v3878, %v3876
  %v3951 = vpack.c.b16 %v3881, %v3879
  %v3952 = vpack.c.b16 %v3882, %v3880
  %v3953 = vpack.c.b16 %v3885, %v3883
  %v3954 = vpack.c.b16 %v3886, %v3884
  %v3955 = vpack.c.b16 %v3889, %v3887
  %v3956 = vpack.c.b16 %v3890, %v3888
  %v3957 = vpack.c.b16 %v3893, %v3891
  %v3958 = vpack.c.b16 %v3894, %v3892
  %v3959 = vpack.c.b16 %v3897, %v3895
  %v3960 = vpack.c.b16 %v3898, %v3896
  %v3961 = vpack.c.b16 %v3901, %v3899
  %v3962 = vpack.c.b16 %v3902, %v3900
  %v3963 = vpack.c.b16 %v3905, %v3903
  %v3964 = vpack.c.b16 %v3906, %v3904
  %v3965 = vpack.c.b16 %v3909, %v3907
  %v3966 = vpack.c.b16 %v3910, %v3908
  %v3967 = vpack.c.b16 %v3913, %v3911
  %v3968 = vpack.c.b16 %v3914, %v3912
  %v3969 = vpack.c.b16 %v3917, %v3915
  %v3970 = vpack.c.b16 %v3918, %v3916
  %v3971 = vpack.c.b16 %v3921, %v3919
  %v3972 = vpack.c.b16 %v3922, %v3920
  %v3973 = vpack.c.b16 %v3925, %v3923
  %v3974 = vpack.c.b16 %v3926, %v3924
  %v3975 = vpack.c.b16 %v3929, %v3927
  %v3976 = vpack.c.b16 %v3930, %v3928
  %v3977 = vpack.c.b16 %v3933, %v3931
  %v3978 = vpack.c.b16 %v3934, %v3932
  %v3979 = vpack.c.b16 %v3937, %v3935
  %v3980 = vpack.c.b16 %v3938, %v3936
  %v3981 = vpack.c.b16 %v3941, %v3939
  %v3982 = vpack.c.b16 %v3942, %v3940
  %v4024 = vunpack.c.l.b16 %v3842
  %v4025 = vunpack.c.h.b16 %v3842
  %v4026 = vunpack.c.l.b16 %v3843
  %v4027 = vunpack.c.h.b16 %v3843
  %v4028 = vunpack.c.l.b16 %v3844
  %v4029 = vunpack.c.h.b16 %v3844
  %v4030 = vunpack.c.l.b16 %v3845
  %v4031 = vunpack.c.h.b16 %v3845
  %v4032 = vunpack.c.l.b16 %v3846
  %v4033 = vunpack.c.h.b16 %v3846
  %v4034 = vunpack.c.l.b16 %v3847
  %v4035 = vunpack.c.h.b16 %v3847
  %v4036 = vunpack.c.l.b16 %v3848
  %v4037 = vunpack.c.h.b16 %v3848
  %v4038 = vunpack.c.l.b16 %v3849
  %v4039 = vunpack.c.h.b16 %v3849
  %v4040 = vunpack.c.l.b16 %v3850
  %v4041 = vunpack.c.h.b16 %v3850
  %v4042 = vunpack.c.l.b16 %v3851
  %v4043 = vunpack.c.h.b16 %v3851
  %v4044 = vunpack.c.l.b16 %v3852
  %v4045 = vunpack.c.h.b16 %v3852
  %v4046 = vunpack.c.l.b16 %v3853
  %v4047 = vunpack.c.h.b16 %v3853
  %v4048 = vunpack.c.l.b16 %v3854
  %v4049 = vunpack.c.h.b16 %v3854
  %v4050 = vunpack.c.l.b16 %v3855
  %v4051 = vunpack.c.h.b16 %v3855
  %v4052 = vunpack.c.l.b16 %v3856
  %v4053 = vunpack.c.h.b16 %v3856
  %v4054 = vunpack.c.l.b16 %v3857
  %v4055 = vunpack.c.h.b16 %v3857
  %v4056 = vunpack.c.l.b16 %v3858
  %v4057 = vunpack.c.h.b16 %v3858
  %v4058 = vunpack.c.l.b16 %v3859
  %v4059 = vunpack.c.h.b16 %v3859
  %v4060 = vunpack.c.l.b16 %v3860
  %v4061 = vunpack.c.h.b16 %v3860
  %v4062 = vunpack.c.l.b16 %v3861
  %v4063 = vunpack.c.h.b16 %v3861
  %v4064 = vunpack.c.l.b16 %v3862
  %v4065 = vunpack.c.h.b16 %v3862
  %v4066 = vpack.c.b16 %v4026, %v4024
  %v4067 = vpack.c.b16 %v4027, %v4025
  %v4068 = vpack.c.b16 %v4030, %v4028
  %v4069 = vpack.c.b16 %v4031, %v4029
  %v4070 = vpack.c.b16 %v4034, %v4032
  %v4071 = vpack.c.b16 %v4035, %v4033
  %v4072 = vpack.c.b16 %v4038, %v4036
  %v4073 = vpack.c.b16 %v4039, %v4037
  %v4074 = vpack.c.b16 %v4042, %v4040
  %v4075 = vpack.c.b16 %v4043, %v4041
  %v4076 = vpack.c.b16 %v4046, %v4044
  %v4077 = vpack.c.b16 %v4047, %v4045
  %v4078 = vpack.c.b16 %v4050, %v4048
  %v4079 = vpack.c.b16 %v4051, %v4049
  %v4080 = vpack.c.b16 %v4054, %v4052
  %v4081 = vpack.c.b16 %v4055, %v4053
  %v4082 = vpack.c.b16 %v4058, %v4056
  %v4083 = vpack.c.b16 %v4059, %v4057
  %v4084 = vpack.c.b16 %v4062, %v4060
  %v4085 = vpack.c.b16 %v4063, %v4061
  %v4086 = vpack.c.b16 %v4064, %v4064
  %v4087 = vpack.c.b16 %v4065, %v4065
  %v4109 = vsel %vm414, %v3944, 0
  %v4112 = vsel %vm414, %v3946, 0
  %v4115 = vsel %vm414, %v3948, 0
  %v4118 = vsel %vm414, %v3950, 0
  %v4121 = vsel %vm414, %v3952, 0
  %v4124 = vsel %vm414, %v3954, 0
  %v4127 = vsel %vm414, %v3956, 0
  %v4130 = vsel %vm414, %v3958, 0
  %v4133 = vsel %vm414, %v3960, 0
  %v4136 = vsel %vm414, %v3962, 0
  %v4139 = vsel %vm414, %v3964, 0
  %v4142 = vsel %vm414, %v3966, 0
  %v4145 = vsel %vm414, %v3968, 0
  %v4148 = vsel %vm414, %v3970, 0
  %v4151 = vsel %vm414, %v3972, 0
  %v4154 = vsel %vm414, %v3974, 0
  %v4157 = vsel %vm414, %v3976, 0
  %v4160 = vsel %vm414, %v3978, 0
  %v4163 = vsel %vm414, %v3980, 0
  %v4166 = vsel %vm414, %v3982, 0
  %v4169 = vsel %vm475, %v4086, 0
  %v4172 = vsel %vm475, %v4087, 0
  %4174 = vmatprep.subr.bf16.mxu0 %v4067
  %4175 = vmatpush1.bf16.msra.mxu0 %v4066
  %4176 = vmatprep.subr.bf16.mxu0 %v4069
  %4177 = vmatpush1.bf16.msra.mxu0 %v4068
  %4178 = vmatprep.subr.bf16.mxu0 %v4071
  %4179 = vmatpush1.bf16.msra.mxu0 %v4070
  %4180 = vmatprep.subr.bf16.mxu0 %v4073
  %4181 = vmatpush1.bf16.msra.mxu0 %v4072
  %4182 = vmatprep.subr.bf16.mxu0 %v4075
  %4183 = vmatpush1.bf16.msra.mxu0 %v4074
  %4184 = vmatprep.subr.bf16.mxu0 %v4077
  %4185 = vmatpush1.bf16.msra.mxu0 %v4076
  %4186 = vmatprep.subr.bf16.mxu0 %v4079
  %4187 = vmatpush1.bf16.msra.mxu0 %v4078
  %4188 = vmatprep.subr.bf16.mxu0 %v4081
  %4189 = vmatpush1.bf16.msra.mxu0 %v4080
  %4190 = vmatprep.subr.bf16.mxu0 %v4083
  %4191 = vmatpush1.bf16.msra.mxu0 %v4082
  %4192 = vmatprep.subr.bf16.mxu0 %v4085
  %4193 = vmatpush1.bf16.msra.mxu0 %v4084
  %4194 = vmatprep.subr.bf16.mxu0 %v4172
  %4195 = vmatpush1.bf16.msra.mxu0 %v4169
  %4196 = vmatprep.subr.bf16.mxu0 0
  %4197 = vmatpush1.bf16.msra.mxu0 0
  %4198 = vmatprep.subr.bf16.mxu0 0
  %4199 = vmatpush1.bf16.msra.mxu0 0
  %4200 = vmatprep.subr.bf16.mxu0 0
  %4201 = vmatpush1.bf16.msra.mxu0 0
  %4202 = vmatprep.subr.bf16.mxu0 0
  %4203 = vmatpush1.bf16.msra.mxu0 0
  %4204 = vmatprep.subr.bf16.mxu0 0
  %4205 = vmatpush1.bf16.msra.mxu0 0
  %4206 = vmatprep.mubr.bf16.mxu0 %v4109
  %4207 = vmatmul.mubr.bf16.gmra.mrb[0].mxu0 %v3943
  %v4208 = vpop.f32.mrb[0].mxu0
  %v4209 = vadd.f32 0.0, %v4208
  %v4210 = vpop.f32.mrb[0].mxu0
  %v4211 = vadd.f32 0.0, %v4210
  %v4212 = vpop.f32.mrb[0].mxu0
  %v4213 = vadd.f32 0.0, %v4212
  %v4214 = vpop.f32.mrb[0].mxu0
  %v4215 = vadd.f32 0.0, %v4214
  %4216 = vmatprep.mubr.bf16.mxu0 %v4112
  %4217 = vmatmul.mubr.bf16.gmra.mrb[0].mxu0 %v3945
  %v4218 = vpop.f32.mrb[0].mxu0
  %v4219 = vadd.f32 0.0, %v4218
  %v4220 = vpop.f32.mrb[0].mxu0
  %v4221 = vadd.f32 0.0, %v4220
  %v4222 = vpop.f32.mrb[0].mxu0
  %v4223 = vadd.f32 0.0, %v4222
  %v4224 = vpop.f32.mrb[0].mxu0
  %v4225 = vadd.f32 0.0, %v4224
  %4226 = vmatprep.mubr.bf16.mxu0 %v4115
  %4227 = vmatmul.mubr.bf16.gmra.mrb[0].mxu0 %v3947
  %v4228 = vpop.f32.mrb[0].mxu0
  %v4229 = vadd.f32 0.0, %v4228
  %v4230 = vpop.f32.mrb[0].mxu0
  %v4231 = vadd.f32 0.0, %v4230
  %v4232 = vpop.f32.mrb[0].mxu0
  %v4233 = vadd.f32 0.0, %v4232
  %v4234 = vpop.f32.mrb[0].mxu0
  %v4235 = vadd.f32 0.0, %v4234
  %4236 = vmatprep.mubr.bf16.mxu0 %v4118
  %4237 = vmatmul.mubr.bf16.gmra.mrb[0].mxu0 %v3949
  %v4238 = vpop.f32.mrb[0].mxu0
  %v4239 = vadd.f32 0.0, %v4238
  %v4240 = vpop.f32.mrb[0].mxu0
  %v4241 = vadd.f32 0.0, %v4240
  %v4242 = vpop.f32.mrb[0].mxu0
  %v4243 = vadd.f32 0.0, %v4242
  %v4244 = vpop.f32.mrb[0].mxu0
  %v4245 = vadd.f32 0.0, %v4244
  %4246 = vmatprep.mubr.bf16.mxu0 %v4121
  %4247 = vmatmul.mubr.bf16.gmra.mrb[0].mxu0 %v3951
  %v4248 = vpop.f32.mrb[0].mxu0
  %v4249 = vadd.f32 0.0, %v4248
  %v4250 = vpop.f32.mrb[0].mxu0
  %v4251 = vadd.f32 0.0, %v4250
  %v4252 = vpop.f32.mrb[0].mxu0
  %v4253 = vadd.f32 0.0, %v4252
  %v4254 = vpop.f32.mrb[0].mxu0
  %v4255 = vadd.f32 0.0, %v4254
  %4256 = vmatprep.mubr.bf16.mxu0 %v4124
  %4257 = vmatmul.mubr.bf16.gmra.mrb[0].mxu0 %v3953
  %v4258 = vpop.f32.mrb[0].mxu0
  %v4259 = vadd.f32 0.0, %v4258
  %v4260 = vpop.f32.mrb[0].mxu0
  %v4261 = vadd.f32 0.0, %v4260
  %v4262 = vpop.f32.mrb[0].mxu0
  %v4263 = vadd.f32 0.0, %v4262
  %v4264 = vpop.f32.mrb[0].mxu0
  %v4265 = vadd.f32 0.0, %v4264
  %4266 = vmatprep.mubr.bf16.mxu0 %v4127
  %4267 = vmatmul.mubr.bf16.gmra.mrb[0].mxu0 %v3955
  %v4268 = vpop.f32.mrb[0].mxu0
  %v4269 = vadd.f32 0.0, %v4268
  %v4270 = vpop.f32.mrb[0].mxu0
  %v4271 = vadd.f32 0.0, %v4270
  %v4272 = vpop.f32.mrb[0].mxu0
  %v4273 = vadd.f32 0.0, %v4272
  %v4274 = vpop.f32.mrb[0].mxu0
  %v4275 = vadd.f32 0.0, %v4274
  %4276 = vmatprep.mubr.bf16.mxu0 %v4130
  %4277 = vmatmul.mubr.bf16.gmra.mrb[0].mxu0 %v3957
  %v4278 = vpop.f32.mrb[0].mxu0
  %v4279 = vadd.f32 0.0, %v4278
  %v4280 = vpop.f32.mrb[0].mxu0
  %v4281 = vadd.f32 0.0, %v4280
  %v4282 = vpop.f32.mrb[0].mxu0
  %v4283 = vadd.f32 0.0, %v4282
  %v4284 = vpop.f32.mrb[0].mxu0
  %v4285 = vadd.f32 0.0, %v4284
  %4286 = vmatprep.mubr.bf16.mxu0 %v4133
  %4287 = vmatmul.mubr.bf16.gmra.mrb[0].mxu0 %v3959
  %v4288 = vpop.f32.mrb[0].mxu0
  %v4289 = vadd.f32 0.0, %v4288
  %v4290 = vpop.f32.mrb[0].mxu0
  %v4291 = vadd.f32 0.0, %v4290
  %v4292 = vpop.f32.mrb[0].mxu0
  %v4293 = vadd.f32 0.0, %v4292
  %v4294 = vpop.f32.mrb[0].mxu0
  %v4295 = vadd.f32 0.0, %v4294
  %4296 = vmatprep.mubr.bf16.mxu0 %v4136
  %4297 = vmatmul.mubr.bf16.gmra.mrb[0].mxu0 %v3961
  %v4298 = vpop.f32.mrb[0].mxu0
  %v4299 = vadd.f32 0.0, %v4298
  %v4300 = vpop.f32.mrb[0].mxu0
  %v4301 = vadd.f32 0.0, %v4300
  %v4302 = vpop.f32.mrb[0].mxu0
  %v4303 = vadd.f32 0.0, %v4302
  %v4304 = vpop.f32.mrb[0].mxu0
  %v4305 = vadd.f32 0.0, %v4304
  %4306 = vmatprep.mubr.bf16.mxu0 %v4139
  %4307 = vmatmul.mubr.bf16.gmra.mrb[0].mxu0 %v3963
  %v4308 = vpop.f32.mrb[0].mxu0
  %v4309 = vadd.f32 0.0, %v4308
  %v4310 = vpop.f32.mrb[0].mxu0
  %v4311 = vadd.f32 0.0, %v4310
  %v4312 = vpop.f32.mrb[0].mxu0
  %v4313 = vadd.f32 0.0, %v4312
  %v4314 = vpop.f32.mrb[0].mxu0
  %v4315 = vadd.f32 0.0, %v4314
  %4316 = vmatprep.mubr.bf16.mxu0 %v4142
  %4317 = vmatmul.mubr.bf16.gmra.mrb[0].mxu0 %v3965
  %v4318 = vpop.f32.mrb[0].mxu0
  %v4319 = vadd.f32 0.0, %v4318
  %v4320 = vpop.f32.mrb[0].mxu0
  %v4321 = vadd.f32 0.0, %v4320
  %v4322 = vpop.f32.mrb[0].mxu0
  %v4323 = vadd.f32 0.0, %v4322
  %v4324 = vpop.f32.mrb[0].mxu0
  %v4325 = vadd.f32 0.0, %v4324
  %4326 = vmatprep.mubr.bf16.mxu0 %v4145
  %4327 = vmatmul.mubr.bf16.gmra.mrb[0].mxu0 %v3967
  %v4328 = vpop.f32.mrb[0].mxu0
  %v4329 = vadd.f32 0.0, %v4328
  %v4330 = vpop.f32.mrb[0].mxu0
  %v4331 = vadd.f32 0.0, %v4330
  %v4332 = vpop.f32.mrb[0].mxu0
  %v4333 = vadd.f32 0.0, %v4332
  %v4334 = vpop.f32.mrb[0].mxu0
  %v4335 = vadd.f32 0.0, %v4334
  %4336 = vmatprep.mubr.bf16.mxu0 %v4148
  %4337 = vmatmul.mubr.bf16.gmra.mrb[0].mxu0 %v3969
  %v4338 = vpop.f32.mrb[0].mxu0
  %v4339 = vadd.f32 0.0, %v4338
  %v4340 = vpop.f32.mrb[0].mxu0
  %v4341 = vadd.f32 0.0, %v4340
  %v4342 = vpop.f32.mrb[0].mxu0
  %v4343 = vadd.f32 0.0, %v4342
  %v4344 = vpop.f32.mrb[0].mxu0
  %v4345 = vadd.f32 0.0, %v4344
  %4346 = vmatprep.mubr.bf16.mxu0 %v4151
  %4347 = vmatmul.mubr.bf16.gmra.mrb[0].mxu0 %v3971
  %v4348 = vpop.f32.mrb[0].mxu0
  %v4349 = vadd.f32 0.0, %v4348
  %v4350 = vpop.f32.mrb[0].mxu0
  %v4351 = vadd.f32 0.0, %v4350
  %v4352 = vpop.f32.mrb[0].mxu0
  %v4353 = vadd.f32 0.0, %v4352
  %v4354 = vpop.f32.mrb[0].mxu0
  %v4355 = vadd.f32 0.0, %v4354
  %4356 = vmatprep.mubr.bf16.mxu0 %v4154
  %4357 = vmatmul.mubr.bf16.gmra.mrb[0].mxu0 %v3973
  %v4358 = vpop.f32.mrb[0].mxu0
  %v4359 = vadd.f32 0.0, %v4358
  %v4360 = vpop.f32.mrb[0].mxu0
  %v4361 = vadd.f32 0.0, %v4360
  %v4362 = vpop.f32.mrb[0].mxu0
  %v4363 = vadd.f32 0.0, %v4362
  %v4364 = vpop.f32.mrb[0].mxu0
  %v4365 = vadd.f32 0.0, %v4364
  %4366 = vmatprep.mubr.bf16.mxu0 %v4157
  %4367 = vmatmul.mubr.bf16.gmra.mrb[0].mxu0 %v3975
  %v4368 = vpop.f32.mrb[0].mxu0
  %v4369 = vadd.f32 0.0, %v4368
  %v4370 = vpop.f32.mrb[0].mxu0
  %v4371 = vadd.f32 0.0, %v4370
  %v4372 = vpop.f32.mrb[0].mxu0
  %v4373 = vadd.f32 0.0, %v4372
  %v4374 = vpop.f32.mrb[0].mxu0
  %v4375 = vadd.f32 0.0, %v4374
  %4376 = vmatprep.mubr.bf16.mxu0 %v4160
  %4377 = vmatmul.mubr.bf16.gmra.mrb[0].mxu0 %v3977
  %v4378 = vpop.f32.mrb[0].mxu0
  %v4379 = vadd.f32 0.0, %v4378
  %v4380 = vpop.f32.mrb[0].mxu0
  %v4381 = vadd.f32 0.0, %v4380
  %v4382 = vpop.f32.mrb[0].mxu0
  %v4383 = vadd.f32 0.0, %v4382
  %v4384 = vpop.f32.mrb[0].mxu0
  %v4385 = vadd.f32 0.0, %v4384
  %4386 = vmatprep.mubr.bf16.mxu0 %v4163
  %4387 = vmatmul.mubr.bf16.gmra.mrb[0].mxu0 %v3979
  %v4388 = vpop.f32.mrb[0].mxu0
  %v4389 = vadd.f32 0.0, %v4388
  %v4390 = vpop.f32.mrb[0].mxu0
  %v4391 = vadd.f32 0.0, %v4390
  %v4392 = vpop.f32.mrb[0].mxu0
  %v4393 = vadd.f32 0.0, %v4392
  %v4394 = vpop.f32.mrb[0].mxu0
  %v4395 = vadd.f32 0.0, %v4394
  %4396 = vmatprep.mubr.bf16.mxu0 %v4166
  %4397 = vmatmul.mubr.bf16.gmra.mrb[0].mxu0 %v3981
  %v4398 = vpop.f32.mrb[0].mxu0
  %v4399 = vadd.f32 0.0, %v4398
  %v4400 = vpop.f32.mrb[0].mxu0
  %v4401 = vadd.f32 0.0, %v4400
  %v4402 = vpop.f32.mrb[0].mxu0
  %v4403 = vadd.f32 0.0, %v4402
  %v4404 = vpop.f32.mrb[0].mxu0
  %v4405 = vadd.f32 0.0, %v4404
  %4406 = vdwg.mxu0
  %v4407 = vadd.f32 %v3592, %v4209
  %v4408 = vadd.f32 %v3593, %v4211
  %v4409 = vadd.f32 %v3594, %v4213
  %v4410 = vadd.f32 %v3595, %v4215
  %v4411 = vadd.f32 %v3596, %v4219
  %v4412 = vadd.f32 %v3597, %v4221
  %v4413 = vadd.f32 %v3598, %v4223
  %v4414 = vadd.f32 %v3599, %v4225
  %v4415 = vadd.f32 %v3600, %v4229
  %v4416 = vadd.f32 %v3601, %v4231
  %v4417 = vadd.f32 %v3602, %v4233
  %v4418 = vadd.f32 %v3603, %v4235
  %v4419 = vadd.f32 %v3604, %v4239
  %v4420 = vadd.f32 %v3605, %v4241
  %v4421 = vadd.f32 %v3606, %v4243
  %v4422 = vadd.f32 %v3607, %v4245
  %v4423 = vadd.f32 %v3608, %v4249
  %v4424 = vadd.f32 %v3609, %v4251
  %v4425 = vadd.f32 %v3610, %v4253
  %v4426 = vadd.f32 %v3611, %v4255
  %v4427 = vadd.f32 %v3612, %v4259
  %v4428 = vadd.f32 %v3613, %v4261
  %v4429 = vadd.f32 %v3614, %v4263
  %v4430 = vadd.f32 %v3615, %v4265
  %v4431 = vadd.f32 %v3616, %v4269
  %v4432 = vadd.f32 %v3617, %v4271
  %v4433 = vadd.f32 %v3618, %v4273
  %v4434 = vadd.f32 %v3619, %v4275
  %v4435 = vadd.f32 %v3620, %v4279
  %v4436 = vadd.f32 %v3621, %v4281
  %v4437 = vadd.f32 %v3622, %v4283
  %v4438 = vadd.f32 %v3623, %v4285
  %v4439 = vadd.f32 %v3624, %v4289
  %v4440 = vadd.f32 %v3625, %v4291
  %v4441 = vadd.f32 %v3626, %v4293
  %v4442 = vadd.f32 %v3627, %v4295
  %v4443 = vadd.f32 %v3628, %v4299
  %v4444 = vadd.f32 %v3629, %v4301
  %v4445 = vadd.f32 %v3630, %v4303
  %v4446 = vadd.f32 %v3631, %v4305
  %v4447 = vadd.f32 %v3632, %v4309
  %v4448 = vadd.f32 %v3633, %v4311
  %v4449 = vadd.f32 %v3634, %v4313
  %v4450 = vadd.f32 %v3635, %v4315
  %v4451 = vadd.f32 %v3636, %v4319
  %v4452 = vadd.f32 %v3637, %v4321
  %v4453 = vadd.f32 %v3638, %v4323
  %v4454 = vadd.f32 %v3639, %v4325
  %v4455 = vadd.f32 %v3640, %v4329
  %v4456 = vadd.f32 %v3641, %v4331
  %v4457 = vadd.f32 %v3642, %v4333
  %v4458 = vadd.f32 %v3643, %v4335
  %v4459 = vadd.f32 %v3644, %v4339
  %v4460 = vadd.f32 %v3645, %v4341
  %v4461 = vadd.f32 %v3646, %v4343
  %v4462 = vadd.f32 %v3647, %v4345
  %v4463 = vadd.f32 %v3648, %v4349
  %v4464 = vadd.f32 %v3649, %v4351
  %v4465 = vadd.f32 %v3650, %v4353
  %v4466 = vadd.f32 %v3651, %v4355
  %v4467 = vadd.f32 %v3652, %v4359
  %v4468 = vadd.f32 %v3653, %v4361
  %v4469 = vadd.f32 %v3654, %v4363
  %v4470 = vadd.f32 %v3655, %v4365
  %v4471 = vadd.f32 %v3656, %v4369
  %v4472 = vadd.f32 %v3657, %v4371
  %v4473 = vadd.f32 %v3658, %v4373
  %v4474 = vadd.f32 %v3659, %v4375
  %v4475 = vadd.f32 %v3660, %v4379
  %v4476 = vadd.f32 %v3661, %v4381
  %v4477 = vadd.f32 %v3662, %v4383
  %v4478 = vadd.f32 %v3663, %v4385
  %v4479 = vadd.f32 %v3664, %v4389
  %v4480 = vadd.f32 %v3665, %v4391
  %v4481 = vadd.f32 %v3666, %v4393
  %v4482 = vadd.f32 %v3667, %v4395
  %v4483 = vadd.f32 %v3668, %v4399
  %v4484 = vadd.f32 %v3669, %v4401
  %v4485 = vadd.f32 %v3670, %v4403
  %v4486 = vadd.f32 %v3671, %v4405
  %v4491 = vrot.slane %v3778, 4
  %v4492 = vrot.slane %v1574, 5
  %v4493 = vsel %vm3718, %v4491, %v4492
  %v4494 = vrot.slane %v4492, 4
  %v4495 = vrot.slane %v1575, 5
  %v4496 = vsel %vm3718, %v4494, %v4495
  %v4497 = vrot.slane %v3839, 4
  %v4498 = vrot.slane %v1599, 5
  %v4499 = vsel %vm3718, %v4497, %v4498
  %v4500 = vrot.slane %v4498, 4
  %v4501 = vrot.slane %v1600, 5
  %v4502 = vsel %vm3718, %v4500, %v4501
  %s4503 = scalar_lea.vmem %s2, 840
  %v4504 = vld [vmem:[%s4503] sm:$0xff]
  %v4505 = vld [vmem:[%s4503 + $0x8] sm:$0xff]
  %v4506 = vld [vmem:[%s4503 + $0x10] sm:$0xff]
  %v4507 = vld [vmem:[%s4503 + $0x18] sm:$0xff]
  %v4508 = vld [vmem:[%s4503 + $0x20] sm:$0xff]
  %v4509 = vld [vmem:[%s4503 + $0x28] sm:$0xff]
  %v4510 = vld [vmem:[%s4503 + $0x30] sm:$0xff]
  %v4511 = vld [vmem:[%s4503 + $0x38] sm:$0xff]
  %v4512 = vld [vmem:[%s4503 + $0x40] sm:$0xff]
  %v4513 = vld [vmem:[%s4503 + $0x48] sm:$0xff]
  %v4514 = vld [vmem:[%s4503 + $0x50] sm:$0xff]
  %v4515 = vld [vmem:[%s4503 + $0x58] sm:$0xff]
  %v4516 = vld [vmem:[%s4503 + $0x60] sm:$0xff]
  %v4517 = vld [vmem:[%s4503 + $0x68] sm:$0xff]
  %v4518 = vld [vmem:[%s4503 + $0x70] sm:$0xff]
  %v4519 = vld [vmem:[%s4503 + $0x78] sm:$0xff]
  %v4520 = vld [vmem:[%s4503 + $0x80] sm:$0xff]
  %v4521 = vld [vmem:[%s4503 + $0x88] sm:$0xff]
  %v4522 = vld [vmem:[%s4503 + $0x90] sm:$0xff]
  %v4523 = vld [vmem:[%s4503 + $0x98] sm:$0xff]
  %v4524 = vld [vmem:[%s4503 + $0xa0] sm:$0x77]
  %v4525 = vunpack.c.l.b16 %v4493
  %v4526 = vunpack.c.h.b16 %v4493
  %v4527 = vunpack.c.l.b16 %v4496
  %v4528 = vunpack.c.h.b16 %v4496
  %v4529 = vunpack.c.l.b16 %v4499
  %v4530 = vunpack.c.h.b16 %v4499
  %v4531 = vunpack.c.l.b16 %v4502
  %v4532 = vunpack.c.h.b16 %v4502
  %v4533 = vpack.c.b16 %v4527, %v4525
  %v4534 = vpack.c.b16 %v4528, %v4526
  %v4535 = vpack.c.b16 %v4531, %v4529
  %v4536 = vpack.c.b16 %v4532, %v4530
  %v4560 = vunpack.c.l.b16 %v4504
  %v4561 = vunpack.c.h.b16 %v4504
  %v4562 = vunpack.c.l.b16 %v4505
  %v4563 = vunpack.c.h.b16 %v4505
  %v4564 = vunpack.c.l.b16 %v4506
  %v4565 = vunpack.c.h.b16 %v4506
  %v4566 = vunpack.c.l.b16 %v4507
  %v4567 = vunpack.c.h.b16 %v4507
  %v4568 = vunpack.c.l.b16 %v4508
  %v4569 = vunpack.c.h.b16 %v4508
  %v4570 = vunpack.c.l.b16 %v4509
  %v4571 = vunpack.c.h.b16 %v4509
  %v4572 = vunpack.c.l.b16 %v4510
  %v4573 = vunpack.c.h.b16 %v4510
  %v4574 = vunpack.c.l.b16 %v4511
  %v4575 = vunpack.c.h.b16 %v4511
  %v4576 = vunpack.c.l.b16 %v4512
  %v4577 = vunpack.c.h.b16 %v4512
  %v4578 = vunpack.c.l.b16 %v4513
  %v4579 = vunpack.c.h.b16 %v4513
  %v4580 = vunpack.c.l.b16 %v4514
  %v4581 = vunpack.c.h.b16 %v4514
  %v4582 = vunpack.c.l.b16 %v4515
  %v4583 = vunpack.c.h.b16 %v4515
  %v4584 = vunpack.c.l.b16 %v4516
  %v4585 = vunpack.c.h.b16 %v4516
  %v4586 = vunpack.c.l.b16 %v4517
  %v4587 = vunpack.c.h.b16 %v4517
  %v4588 = vunpack.c.l.b16 %v4518
  %v4589 = vunpack.c.h.b16 %v4518
  %v4590 = vunpack.c.l.b16 %v4519
  %v4591 = vunpack.c.h.b16 %v4519
  %v4592 = vunpack.c.l.b16 %v4520
  %v4593 = vunpack.c.h.b16 %v4520
  %v4594 = vunpack.c.l.b16 %v4521
  %v4595 = vunpack.c.h.b16 %v4521
  %v4596 = vunpack.c.l.b16 %v4522
  %v4597 = vunpack.c.h.b16 %v4522
  %v4598 = vunpack.c.l.b16 %v4523
  %v4599 = vunpack.c.h.b16 %v4523
  %v4600 = vunpack.c.l.b16 %v4524
  %v4601 = vunpack.c.h.b16 %v4524
  %v4602 = vpack.c.b16 %v4562, %v4560
  %v4603 = vpack.c.b16 %v4563, %v4561
  %v4604 = vpack.c.b16 %v4566, %v4564
  %v4605 = vpack.c.b16 %v4567, %v4565
  %v4606 = vpack.c.b16 %v4570, %v4568
  %v4607 = vpack.c.b16 %v4571, %v4569
  %v4608 = vpack.c.b16 %v4574, %v4572
  %v4609 = vpack.c.b16 %v4575, %v4573
  %v4610 = vpack.c.b16 %v4578, %v4576
  %v4611 = vpack.c.b16 %v4579, %v4577
  %v4612 = vpack.c.b16 %v4582, %v4580
  %v4613 = vpack.c.b16 %v4583, %v4581
  %v4614 = vpack.c.b16 %v4586, %v4584
  %v4615 = vpack.c.b16 %v4587, %v4585
  %v4616 = vpack.c.b16 %v4590, %v4588
  %v4617 = vpack.c.b16 %v4591, %v4589
  %v4618 = vpack.c.b16 %v4594, %v4592
  %v4619 = vpack.c.b16 %v4595, %v4593
  %v4620 = vpack.c.b16 %v4598, %v4596
  %v4621 = vpack.c.b16 %v4599, %v4597
  %v4622 = vpack.c.b16 %v4600, %v4600
  %v4623 = vpack.c.b16 %v4601, %v4601
  %v4645 = vsel %vm414, %v4534, 0
  %v4648 = vsel %vm414, %v4536, 0
  %v4651 = vsel %vm475, %v4622, 0
  %v4654 = vsel %vm475, %v4623, 0
  %4656 = vmatprep.subr.bf16.mxu0 %v4603
  %4657 = vmatpush1.bf16.msra.mxu0 %v4602
  %4658 = vmatprep.subr.bf16.mxu0 %v4605
  %4659 = vmatpush1.bf16.msra.mxu0 %v4604
  %4660 = vmatprep.subr.bf16.mxu0 %v4607
  %4661 = vmatpush1.bf16.msra.mxu0 %v4606
  %4662 = vmatprep.subr.bf16.mxu0 %v4609
  %4663 = vmatpush1.bf16.msra.mxu0 %v4608
  %4664 = vmatprep.subr.bf16.mxu0 %v4611
  %4665 = vmatpush1.bf16.msra.mxu0 %v4610
  %4666 = vmatprep.subr.bf16.mxu0 %v4613
  %4667 = vmatpush1.bf16.msra.mxu0 %v4612
  %4668 = vmatprep.subr.bf16.mxu0 %v4615
  %4669 = vmatpush1.bf16.msra.mxu0 %v4614
  %4670 = vmatprep.subr.bf16.mxu0 %v4617
  %4671 = vmatpush1.bf16.msra.mxu0 %v4616
  %4672 = vmatprep.subr.bf16.mxu0 %v4619
  %4673 = vmatpush1.bf16.msra.mxu0 %v4618
  %4674 = vmatprep.subr.bf16.mxu0 %v4621
  %4675 = vmatpush1.bf16.msra.mxu0 %v4620
  %4676 = vmatprep.subr.bf16.mxu0 %v4654
  %4677 = vmatpush1.bf16.msra.mxu0 %v4651
  %4678 = vmatprep.subr.bf16.mxu0 0
  %4679 = vmatpush1.bf16.msra.mxu0 0
  %4680 = vmatprep.subr.bf16.mxu0 0
  %4681 = vmatpush1.bf16.msra.mxu0 0
  %4682 = vmatprep.subr.bf16.mxu0 0
  %4683 = vmatpush1.bf16.msra.mxu0 0
  %4684 = vmatprep.subr.bf16.mxu0 0
  %4685 = vmatpush1.bf16.msra.mxu0 0
  %4686 = vmatprep.subr.bf16.mxu0 0
  %4687 = vmatpush1.bf16.msra.mxu0 0
  %4688 = vmatprep.mubr.bf16.mxu0 %v4112
  %4689 = vmatmul.mubr.bf16.gmra.mrb[0].mxu0 %v3945
  %v4690 = vpop.f32.mrb[0].mxu0
  %v4691 = vadd.f32 0.0, %v4690
  %v4692 = vpop.f32.mrb[0].mxu0
  %v4693 = vadd.f32 0.0, %v4692
  %v4694 = vpop.f32.mrb[0].mxu0
  %v4695 = vadd.f32 0.0, %v4694
  %v4696 = vpop.f32.mrb[0].mxu0
  %v4697 = vadd.f32 0.0, %v4696
  %4698 = vmatprep.mubr.bf16.mxu0 %v4115
  %4699 = vmatmul.mubr.bf16.gmra.mrb[0].mxu0 %v3947
  %v4700 = vpop.f32.mrb[0].mxu0
  %v4701 = vadd.f32 0.0, %v4700
  %v4702 = vpop.f32.mrb[0].mxu0
  %v4703 = vadd.f32 0.0, %v4702
  %v4704 = vpop.f32.mrb[0].mxu0
  %v4705 = vadd.f32 0.0, %v4704
  %v4706 = vpop.f32.mrb[0].mxu0
  %v4707 = vadd.f32 0.0, %v4706
  %4708 = vmatprep.mubr.bf16.mxu0 %v4118
  %4709 = vmatmul.mubr.bf16.gmra.mrb[0].mxu0 %v3949
  %v4710 = vpop.f32.mrb[0].mxu0
  %v4711 = vadd.f32 0.0, %v4710
  %v4712 = vpop.f32.mrb[0].mxu0
  %v4713 = vadd.f32 0.0, %v4712
  %v4714 = vpop.f32.mrb[0].mxu0
  %v4715 = vadd.f32 0.0, %v4714
  %v4716 = vpop.f32.mrb[0].mxu0
  %v4717 = vadd.f32 0.0, %v4716
  %4718 = vmatprep.mubr.bf16.mxu0 %v4121
  %4719 = vmatmul.mubr.bf16.gmra.mrb[0].mxu0 %v3951
  %v4720 = vpop.f32.mrb[0].mxu0
  %v4721 = vadd.f32 0.0, %v4720
  %v4722 = vpop.f32.mrb[0].mxu0
  %v4723 = vadd.f32 0.0, %v4722
  %v4724 = vpop.f32.mrb[0].mxu0
  %v4725 = vadd.f32 0.0, %v4724
  %v4726 = vpop.f32.mrb[0].mxu0
  %v4727 = vadd.f32 0.0, %v4726
  %4728 = vmatprep.mubr.bf16.mxu0 %v4124
  %4729 = vmatmul.mubr.bf16.gmra.mrb[0].mxu0 %v3953
  %v4730 = vpop.f32.mrb[0].mxu0
  %v4731 = vadd.f32 0.0, %v4730
  %v4732 = vpop.f32.mrb[0].mxu0
  %v4733 = vadd.f32 0.0, %v4732
  %v4734 = vpop.f32.mrb[0].mxu0
  %v4735 = vadd.f32 0.0, %v4734
  %v4736 = vpop.f32.mrb[0].mxu0
  %v4737 = vadd.f32 0.0, %v4736
  %4738 = vmatprep.mubr.bf16.mxu0 %v4127
  %4739 = vmatmul.mubr.bf16.gmra.mrb[0].mxu0 %v3955
  %v4740 = vpop.f32.mrb[0].mxu0
  %v4741 = vadd.f32 0.0, %v4740
  %v4742 = vpop.f32.mrb[0].mxu0
  %v4743 = vadd.f32 0.0, %v4742
  %v4744 = vpop.f32.mrb[0].mxu0
  %v4745 = vadd.f32 0.0, %v4744
  %v4746 = vpop.f32.mrb[0].mxu0
  %v4747 = vadd.f32 0.0, %v4746
  %4748 = vmatprep.mubr.bf16.mxu0 %v4130
  %4749 = vmatmul.mubr.bf16.gmra.mrb[0].mxu0 %v3957
  %v4750 = vpop.f32.mrb[0].mxu0
  %v4751 = vadd.f32 0.0, %v4750
  %v4752 = vpop.f32.mrb[0].mxu0
  %v4753 = vadd.f32 0.0, %v4752
  %v4754 = vpop.f32.mrb[0].mxu0
  %v4755 = vadd.f32 0.0, %v4754
  %v4756 = vpop.f32.mrb[0].mxu0
  %v4757 = vadd.f32 0.0, %v4756
  %4758 = vmatprep.mubr.bf16.mxu0 %v4133
  %4759 = vmatmul.mubr.bf16.gmra.mrb[0].mxu0 %v3959
  %v4760 = vpop.f32.mrb[0].mxu0
  %v4761 = vadd.f32 0.0, %v4760
  %v4762 = vpop.f32.mrb[0].mxu0
  %v4763 = vadd.f32 0.0, %v4762
  %v4764 = vpop.f32.mrb[0].mxu0
  %v4765 = vadd.f32 0.0, %v4764
  %v4766 = vpop.f32.mrb[0].mxu0
  %v4767 = vadd.f32 0.0, %v4766
  %4768 = vmatprep.mubr.bf16.mxu0 %v4136
  %4769 = vmatmul.mubr.bf16.gmra.mrb[0].mxu0 %v3961
  %v4770 = vpop.f32.mrb[0].mxu0
  %v4771 = vadd.f32 0.0, %v4770
  %v4772 = vpop.f32.mrb[0].mxu0
  %v4773 = vadd.f32 0.0, %v4772
  %v4774 = vpop.f32.mrb[0].mxu0
  %v4775 = vadd.f32 0.0, %v4774
  %v4776 = vpop.f32.mrb[0].mxu0
  %v4777 = vadd.f32 0.0, %v4776
  %4778 = vmatprep.mubr.bf16.mxu0 %v4645
  %4779 = vmatmul.mubr.bf16.gmra.mrb[0].mxu0 %v4533
  %v4780 = vpop.f32.mrb[0].mxu0
  %v4781 = vadd.f32 0.0, %v4780
  %v4782 = vpop.f32.mrb[0].mxu0
  %v4783 = vadd.f32 0.0, %v4782
  %v4784 = vpop.f32.mrb[0].mxu0
  %v4785 = vadd.f32 0.0, %v4784
  %v4786 = vpop.f32.mrb[0].mxu0
  %v4787 = vadd.f32 0.0, %v4786
  %4788 = vmatprep.mubr.bf16.mxu0 %v4142
  %4789 = vmatmul.mubr.bf16.gmra.mrb[0].mxu0 %v3965
  %v4790 = vpop.f32.mrb[0].mxu0
  %v4791 = vadd.f32 0.0, %v4790
  %v4792 = vpop.f32.mrb[0].mxu0
  %v4793 = vadd.f32 0.0, %v4792
  %v4794 = vpop.f32.mrb[0].mxu0
  %v4795 = vadd.f32 0.0, %v4794
  %v4796 = vpop.f32.mrb[0].mxu0
  %v4797 = vadd.f32 0.0, %v4796
  %4798 = vmatprep.mubr.bf16.mxu0 %v4145
  %4799 = vmatmul.mubr.bf16.gmra.mrb[0].mxu0 %v3967
  %v4800 = vpop.f32.mrb[0].mxu0
  %v4801 = vadd.f32 0.0, %v4800
  %v4802 = vpop.f32.mrb[0].mxu0
  %v4803 = vadd.f32 0.0, %v4802
  %v4804 = vpop.f32.mrb[0].mxu0
  %v4805 = vadd.f32 0.0, %v4804
  %v4806 = vpop.f32.mrb[0].mxu0
  %v4807 = vadd.f32 0.0, %v4806
  %4808 = vmatprep.mubr.bf16.mxu0 %v4148
  %4809 = vmatmul.mubr.bf16.gmra.mrb[0].mxu0 %v3969
  %v4810 = vpop.f32.mrb[0].mxu0
  %v4811 = vadd.f32 0.0, %v4810
  %v4812 = vpop.f32.mrb[0].mxu0
  %v4813 = vadd.f32 0.0, %v4812
  %v4814 = vpop.f32.mrb[0].mxu0
  %v4815 = vadd.f32 0.0, %v4814
  %v4816 = vpop.f32.mrb[0].mxu0
  %v4817 = vadd.f32 0.0, %v4816
  %4818 = vmatprep.mubr.bf16.mxu0 %v4151
  %4819 = vmatmul.mubr.bf16.gmra.mrb[0].mxu0 %v3971
  %v4820 = vpop.f32.mrb[0].mxu0
  %v4821 = vadd.f32 0.0, %v4820
  %v4822 = vpop.f32.mrb[0].mxu0
  %v4823 = vadd.f32 0.0, %v4822
  %v4824 = vpop.f32.mrb[0].mxu0
  %v4825 = vadd.f32 0.0, %v4824
  %v4826 = vpop.f32.mrb[0].mxu0
  %v4827 = vadd.f32 0.0, %v4826
  %4828 = vmatprep.mubr.bf16.mxu0 %v4154
  %4829 = vmatmul.mubr.bf16.gmra.mrb[0].mxu0 %v3973
  %v4830 = vpop.f32.mrb[0].mxu0
  %v4831 = vadd.f32 0.0, %v4830
  %v4832 = vpop.f32.mrb[0].mxu0
  %v4833 = vadd.f32 0.0, %v4832
  %v4834 = vpop.f32.mrb[0].mxu0
  %v4835 = vadd.f32 0.0, %v4834
  %v4836 = vpop.f32.mrb[0].mxu0
  %v4837 = vadd.f32 0.0, %v4836
  %4838 = vmatprep.mubr.bf16.mxu0 %v4157
  %4839 = vmatmul.mubr.bf16.gmra.mrb[0].mxu0 %v3975
  %v4840 = vpop.f32.mrb[0].mxu0
  %v4841 = vadd.f32 0.0, %v4840
  %v4842 = vpop.f32.mrb[0].mxu0
  %v4843 = vadd.f32 0.0, %v4842
  %v4844 = vpop.f32.mrb[0].mxu0
  %v4845 = vadd.f32 0.0, %v4844
  %v4846 = vpop.f32.mrb[0].mxu0
  %v4847 = vadd.f32 0.0, %v4846
  %4848 = vmatprep.mubr.bf16.mxu0 %v4160
  %4849 = vmatmul.mubr.bf16.gmra.mrb[0].mxu0 %v3977
  %v4850 = vpop.f32.mrb[0].mxu0
  %v4851 = vadd.f32 0.0, %v4850
  %v4852 = vpop.f32.mrb[0].mxu0
  %v4853 = vadd.f32 0.0, %v4852
  %v4854 = vpop.f32.mrb[0].mxu0
  %v4855 = vadd.f32 0.0, %v4854
  %v4856 = vpop.f32.mrb[0].mxu0
  %v4857 = vadd.f32 0.0, %v4856
  %4858 = vmatprep.mubr.bf16.mxu0 %v4163
  %4859 = vmatmul.mubr.bf16.gmra.mrb[0].mxu0 %v3979
  %v4860 = vpop.f32.mrb[0].mxu0
  %v4861 = vadd.f32 0.0, %v4860
  %v4862 = vpop.f32.mrb[0].mxu0
  %v4863 = vadd.f32 0.0, %v4862
  %v4864 = vpop.f32.mrb[0].mxu0
  %v4865 = vadd.f32 0.0, %v4864
  %v4866 = vpop.f32.mrb[0].mxu0
  %v4867 = vadd.f32 0.0, %v4866
  %4868 = vmatprep.mubr.bf16.mxu0 %v4166
  %4869 = vmatmul.mubr.bf16.gmra.mrb[0].mxu0 %v3981
  %v4870 = vpop.f32.mrb[0].mxu0
  %v4871 = vadd.f32 0.0, %v4870
  %v4872 = vpop.f32.mrb[0].mxu0
  %v4873 = vadd.f32 0.0, %v4872
  %v4874 = vpop.f32.mrb[0].mxu0
  %v4875 = vadd.f32 0.0, %v4874
  %v4876 = vpop.f32.mrb[0].mxu0
  %v4877 = vadd.f32 0.0, %v4876
  %4878 = vmatprep.mubr.bf16.mxu0 %v4648
  %4879 = vmatmul.mubr.bf16.gmra.mrb[0].mxu0 %v4535
  %v4880 = vpop.f32.mrb[0].mxu0
  %v4881 = vadd.f32 0.0, %v4880
  %v4882 = vpop.f32.mrb[0].mxu0
  %v4883 = vadd.f32 0.0, %v4882
  %v4884 = vpop.f32.mrb[0].mxu0
  %v4885 = vadd.f32 0.0, %v4884
  %v4886 = vpop.f32.mrb[0].mxu0
  %v4887 = vadd.f32 0.0, %v4886
  %4888 = vdwg.mxu0
  %v4889 = vadd.f32 %v4407, %v4691
  %v4890 = vadd.f32 %v4408, %v4693
  %v4891 = vadd.f32 %v4409, %v4695
  %v4892 = vadd.f32 %v4410, %v4697
  %v4893 = vadd.f32 %v4411, %v4701
  %v4894 = vadd.f32 %v4412, %v4703
  %v4895 = vadd.f32 %v4413, %v4705
  %v4896 = vadd.f32 %v4414, %v4707
  %v4897 = vadd.f32 %v4415, %v4711
  %v4898 = vadd.f32 %v4416, %v4713
  %v4899 = vadd.f32 %v4417, %v4715
  %v4900 = vadd.f32 %v4418, %v4717
  %v4901 = vadd.f32 %v4419, %v4721
  %v4902 = vadd.f32 %v4420, %v4723
  %v4903 = vadd.f32 %v4421, %v4725
  %v4904 = vadd.f32 %v4422, %v4727
  %v4905 = vadd.f32 %v4423, %v4731
  %v4906 = vadd.f32 %v4424, %v4733
  %v4907 = vadd.f32 %v4425, %v4735
  %v4908 = vadd.f32 %v4426, %v4737
  %v4909 = vadd.f32 %v4427, %v4741
  %v4910 = vadd.f32 %v4428, %v4743
  %v4911 = vadd.f32 %v4429, %v4745
  %v4912 = vadd.f32 %v4430, %v4747
  %v4913 = vadd.f32 %v4431, %v4751
  %v4914 = vadd.f32 %v4432, %v4753
  %v4915 = vadd.f32 %v4433, %v4755
  %v4916 = vadd.f32 %v4434, %v4757
  %v4917 = vadd.f32 %v4435, %v4761
  %v4918 = vadd.f32 %v4436, %v4763
  %v4919 = vadd.f32 %v4437, %v4765
  %v4920 = vadd.f32 %v4438, %v4767
  %v4921 = vadd.f32 %v4439, %v4771
  %v4922 = vadd.f32 %v4440, %v4773
  %v4923 = vadd.f32 %v4441, %v4775
  %v4924 = vadd.f32 %v4442, %v4777
  %v4925 = vadd.f32 %v4443, %v4781
  %v4926 = vadd.f32 %v4444, %v4783
  %v4927 = vadd.f32 %v4445, %v4785
  %v4928 = vadd.f32 %v4446, %v4787
  %v4929 = vadd.f32 %v4447, %v4791
  %v4930 = vadd.f32 %v4448, %v4793
  %v4931 = vadd.f32 %v4449, %v4795
  %v4932 = vadd.f32 %v4450, %v4797
  %v4933 = vadd.f32 %v4451, %v4801
  %v4934 = vadd.f32 %v4452, %v4803
  %v4935 = vadd.f32 %v4453, %v4805
  %v4936 = vadd.f32 %v4454, %v4807
  %v4937 = vadd.f32 %v4455, %v4811
  %v4938 = vadd.f32 %v4456, %v4813
  %v4939 = vadd.f32 %v4457, %v4815
  %v4940 = vadd.f32 %v4458, %v4817
  %v4941 = vadd.f32 %v4459, %v4821
  %v4942 = vadd.f32 %v4460, %v4823
  %v4943 = vadd.f32 %v4461, %v4825
  %v4944 = vadd.f32 %v4462, %v4827
  %v4945 = vadd.f32 %v4463, %v4831
  %v4946 = vadd.f32 %v4464, %v4833
  %v4947 = vadd.f32 %v4465, %v4835
  %v4948 = vadd.f32 %v4466, %v4837
  %v4949 = vadd.f32 %v4467, %v4841
  %v4950 = vadd.f32 %v4468, %v4843
  %v4951 = vadd.f32 %v4469, %v4845
  %v4952 = vadd.f32 %v4470, %v4847
  %v4953 = vadd.f32 %v4471, %v4851
  %v4954 = vadd.f32 %v4472, %v4853
  %v4955 = vadd.f32 %v4473, %v4855
  %v4956 = vadd.f32 %v4474, %v4857
  %v4957 = vadd.f32 %v4475, %v4861
  %v4958 = vadd.f32 %v4476, %v4863
  %v4959 = vadd.f32 %v4477, %v4865
  %v4960 = vadd.f32 %v4478, %v4867
  %v4961 = vadd.f32 %v4479, %v4871
  %v4962 = vadd.f32 %v4480, %v4873
  %v4963 = vadd.f32 %v4481, %v4875
  %v4964 = vadd.f32 %v4482, %v4877
  %v4965 = vadd.f32 %v4483, %v4881
  %v4966 = vadd.f32 %v4484, %v4883
  %v4967 = vadd.f32 %v4485, %v4885
  %v4968 = vadd.f32 %v4486, %v4887
  %v4973 = vrot.slane %v4495, 4
  %v4974 = vrot.slane %v1576, 5
  %v4975 = vsel %vm3718, %v4973, %v4974
  %v4976 = vrot.slane %v4974, 4
  %v4977 = vrot.slane %v1577, 5
  %v4978 = vsel %vm3718, %v4976, %v4977
  %v4979 = vrot.slane %v4501, 4
  %v4980 = vrot.slane %v1601, 5
  %v4981 = vsel %vm3718, %v4979, %v4980
  %v4982 = vrot.slane %v4980, 4
  %v4983 = vrot.slane %v1602, 5
  %v4984 = vsel %vm3718, %v4982, %v4983
  %s4985 = scalar_lea.vmem %s2, 1344
  %v4986 = vld [vmem:[%s4985] sm:$0xff]
  %v4987 = vld [vmem:[%s4985 + $0x8] sm:$0xff]
  %v4988 = vld [vmem:[%s4985 + $0x10] sm:$0xff]
  %v4989 = vld [vmem:[%s4985 + $0x18] sm:$0xff]
  %v4990 = vld [vmem:[%s4985 + $0x20] sm:$0xff]
  %v4991 = vld [vmem:[%s4985 + $0x28] sm:$0xff]
  %v4992 = vld [vmem:[%s4985 + $0x30] sm:$0xff]
  %v4993 = vld [vmem:[%s4985 + $0x38] sm:$0xff]
  %v4994 = vld [vmem:[%s4985 + $0x40] sm:$0xff]
  %v4995 = vld [vmem:[%s4985 + $0x48] sm:$0xff]
  %v4996 = vld [vmem:[%s4985 + $0x50] sm:$0xff]
  %v4997 = vld [vmem:[%s4985 + $0x58] sm:$0xff]
  %v4998 = vld [vmem:[%s4985 + $0x60] sm:$0xff]
  %v4999 = vld [vmem:[%s4985 + $0x68] sm:$0xff]
  %v5000 = vld [vmem:[%s4985 + $0x70] sm:$0xff]
  %v5001 = vld [vmem:[%s4985 + $0x78] sm:$0xff]
  %v5002 = vld [vmem:[%s4985 + $0x80] sm:$0xff]
  %v5003 = vld [vmem:[%s4985 + $0x88] sm:$0xff]
  %v5004 = vld [vmem:[%s4985 + $0x90] sm:$0xff]
  %v5005 = vld [vmem:[%s4985 + $0x98] sm:$0xff]
  %v5006 = vld [vmem:[%s4985 + $0xa0] sm:$0x77]
  %v5007 = vunpack.c.l.b16 %v4975
  %v5008 = vunpack.c.h.b16 %v4975
  %v5009 = vunpack.c.l.b16 %v4978
  %v5010 = vunpack.c.h.b16 %v4978
  %v5011 = vunpack.c.l.b16 %v4981
  %v5012 = vunpack.c.h.b16 %v4981
  %v5013 = vunpack.c.l.b16 %v4984
  %v5014 = vunpack.c.h.b16 %v4984
  %v5015 = vpack.c.b16 %v5009, %v5007
  %v5016 = vpack.c.b16 %v5010, %v5008
  %v5017 = vpack.c.b16 %v5013, %v5011
  %v5018 = vpack.c.b16 %v5014, %v5012
  %v5042 = vunpack.c.l.b16 %v4986
  %v5043 = vunpack.c.h.b16 %v4986
  %v5044 = vunpack.c.l.b16 %v4987
  %v5045 = vunpack.c.h.b16 %v4987
  %v5046 = vunpack.c.l.b16 %v4988
  %v5047 = vunpack.c.h.b16 %v4988
  %v5048 = vunpack.c.l.b16 %v4989
  %v5049 = vunpack.c.h.b16 %v4989
  %v5050 = vunpack.c.l.b16 %v4990
  %v5051 = vunpack.c.h.b16 %v4990
  %v5052 = vunpack.c.l.b16 %v4991
  %v5053 = vunpack.c.h.b16 %v4991
  %v5054 = vunpack.c.l.b16 %v4992
  %v5055 = vunpack.c.h.b16 %v4992
  %v5056 = vunpack.c.l.b16 %v4993
  %v5057 = vunpack.c.h.b16 %v4993
  %v5058 = vunpack.c.l.b16 %v4994
  %v5059 = vunpack.c.h.b16 %v4994
  %v5060 = vunpack.c.l.b16 %v4995
  %v5061 = vunpack.c.h.b16 %v4995
  %v5062 = vunpack.c.l.b16 %v4996
  %v5063 = vunpack.c.h.b16 %v4996
  %v5064 = vunpack.c.l.b16 %v4997
  %v5065 = vunpack.c.h.b16 %v4997
  %v5066 = vunpack.c.l.b16 %v4998
  %v5067 = vunpack.c.h.b16 %v4998
  %v5068 = vunpack.c.l.b16 %v4999
  %v5069 = vunpack.c.h.b16 %v4999
  %v5070 = vunpack.c.l.b16 %v5000
  %v5071 = vunpack.c.h.b16 %v5000
  %v5072 = vunpack.c.l.b16 %v5001
  %v5073 = vunpack.c.h.b16 %v5001
  %v5074 = vunpack.c.l.b16 %v5002
  %v5075 = vunpack.c.h.b16 %v5002
  %v5076 = vunpack.c.l.b16 %v5003
  %v5077 = vunpack.c.h.b16 %v5003
  %v5078 = vunpack.c.l.b16 %v5004
  %v5079 = vunpack.c.h.b16 %v5004
  %v5080 = vunpack.c.l.b16 %v5005
  %v5081 = vunpack.c.h.b16 %v5005
  %v5082 = vunpack.c.l.b16 %v5006
  %v5083 = vunpack.c.h.b16 %v5006
  %v5084 = vpack.c.b16 %v5044, %v5042
  %v5085 = vpack.c.b16 %v5045, %v5043
  %v5086 = vpack.c.b16 %v5048, %v5046
  %v5087 = vpack.c.b16 %v5049, %v5047
  %v5088 = vpack.c.b16 %v5052, %v5050
  %v5089 = vpack.c.b16 %v5053, %v5051
  %v5090 = vpack.c.b16 %v5056, %v5054
  %v5091 = vpack.c.b16 %v5057, %v5055
  %v5092 = vpack.c.b16 %v5060, %v5058
  %v5093 = vpack.c.b16 %v5061, %v5059
  %v5094 = vpack.c.b16 %v5064, %v5062
  %v5095 = vpack.c.b16 %v5065, %v5063
  %v5096 = vpack.c.b16 %v5068, %v5066
  %v5097 = vpack.c.b16 %v5069, %v5067
  %v5098 = vpack.c.b16 %v5072, %v5070
  %v5099 = vpack.c.b16 %v5073, %v5071
  %v5100 = vpack.c.b16 %v5076, %v5074
  %v5101 = vpack.c.b16 %v5077, %v5075
  %v5102 = vpack.c.b16 %v5080, %v5078
  %v5103 = vpack.c.b16 %v5081, %v5079
  %v5104 = vpack.c.b16 %v5082, %v5082
  %v5105 = vpack.c.b16 %v5083, %v5083
  %v5127 = vsel %vm414, %v5016, 0
  %v5130 = vsel %vm414, %v5018, 0
  %v5133 = vsel %vm475, %v5104, 0
  %v5136 = vsel %vm475, %v5105, 0
  %5138 = vmatprep.subr.bf16.mxu0 %v5085
  %5139 = vmatpush1.bf16.msra.mxu0 %v5084
  %5140 = vmatprep.subr.bf16.mxu0 %v5087
  %5141 = vmatpush1.bf16.msra.mxu0 %v5086
  %5142 = vmatprep.subr.bf16.mxu0 %v5089
  %5143 = vmatpush1.bf16.msra.mxu0 %v5088
  %5144 = vmatprep.subr.bf16.mxu0 %v5091
  %5145 = vmatpush1.bf16.msra.mxu0 %v5090
  %5146 = vmatprep.subr.bf16.mxu0 %v5093
  %5147 = vmatpush1.bf16.msra.mxu0 %v5092
  %5148 = vmatprep.subr.bf16.mxu0 %v5095
  %5149 = vmatpush1.bf16.msra.mxu0 %v5094
  %5150 = vmatprep.subr.bf16.mxu0 %v5097
  %5151 = vmatpush1.bf16.msra.mxu0 %v5096
  %5152 = vmatprep.subr.bf16.mxu0 %v5099
  %5153 = vmatpush1.bf16.msra.mxu0 %v5098
  %5154 = vmatprep.subr.bf16.mxu0 %v5101
  %5155 = vmatpush1.bf16.msra.mxu0 %v5100
  %5156 = vmatprep.subr.bf16.mxu0 %v5103
  %5157 = vmatpush1.bf16.msra.mxu0 %v5102
  %5158 = vmatprep.subr.bf16.mxu0 %v5136
  %5159 = vmatpush1.bf16.msra.mxu0 %v5133
  %5160 = vmatprep.subr.bf16.mxu0 0
  %5161 = vmatpush1.bf16.msra.mxu0 0
  %5162 = vmatprep.subr.bf16.mxu0 0
  %5163 = vmatpush1.bf16.msra.mxu0 0
  %5164 = vmatprep.subr.bf16.mxu0 0
  %5165 = vmatpush1.bf16.msra.mxu0 0
  %5166 = vmatprep.subr.bf16.mxu0 0
  %5167 = vmatpush1.bf16.msra.mxu0 0
  %5168 = vmatprep.subr.bf16.mxu0 0
  %5169 = vmatpush1.bf16.msra.mxu0 0
  %5170 = vmatprep.mubr.bf16.mxu0 %v4115
  %5171 = vmatmul.mubr.bf16.gmra.mrb[0].mxu0 %v3947
  %v5172 = vpop.f32.mrb[0].mxu0
  %v5173 = vadd.f32 0.0, %v5172
  %v5174 = vpop.f32.mrb[0].mxu0
  %v5175 = vadd.f32 0.0, %v5174
  %v5176 = vpop.f32.mrb[0].mxu0
  %v5177 = vadd.f32 0.0, %v5176
  %v5178 = vpop.f32.mrb[0].mxu0
  %v5179 = vadd.f32 0.0, %v5178
  %5180 = vmatprep.mubr.bf16.mxu0 %v4118
  %5181 = vmatmul.mubr.bf16.gmra.mrb[0].mxu0 %v3949
  %v5182 = vpop.f32.mrb[0].mxu0
  %v5183 = vadd.f32 0.0, %v5182
  %v5184 = vpop.f32.mrb[0].mxu0
  %v5185 = vadd.f32 0.0, %v5184
  %v5186 = vpop.f32.mrb[0].mxu0
  %v5187 = vadd.f32 0.0, %v5186
  %v5188 = vpop.f32.mrb[0].mxu0
  %v5189 = vadd.f32 0.0, %v5188
  %5190 = vmatprep.mubr.bf16.mxu0 %v4121
  %5191 = vmatmul.mubr.bf16.gmra.mrb[0].mxu0 %v3951
  %v5192 = vpop.f32.mrb[0].mxu0
  %v5193 = vadd.f32 0.0, %v5192
  %v5194 = vpop.f32.mrb[0].mxu0
  %v5195 = vadd.f32 0.0, %v5194
  %v5196 = vpop.f32.mrb[0].mxu0
  %v5197 = vadd.f32 0.0, %v5196
  %v5198 = vpop.f32.mrb[0].mxu0
  %v5199 = vadd.f32 0.0, %v5198
  %5200 = vmatprep.mubr.bf16.mxu0 %v4124
  %5201 = vmatmul.mubr.bf16.gmra.mrb[0].mxu0 %v3953
  %v5202 = vpop.f32.mrb[0].mxu0
  %v5203 = vadd.f32 0.0, %v5202
  %v5204 = vpop.f32.mrb[0].mxu0
  %v5205 = vadd.f32 0.0, %v5204
  %v5206 = vpop.f32.mrb[0].mxu0
  %v5207 = vadd.f32 0.0, %v5206
  %v5208 = vpop.f32.mrb[0].mxu0
  %v5209 = vadd.f32 0.0, %v5208
  %5210 = vmatprep.mubr.bf16.mxu0 %v4127
  %5211 = vmatmul.mubr.bf16.gmra.mrb[0].mxu0 %v3955
  %v5212 = vpop.f32.mrb[0].mxu0
  %v5213 = vadd.f32 0.0, %v5212
  %v5214 = vpop.f32.mrb[0].mxu0
  %v5215 = vadd.f32 0.0, %v5214
  %v5216 = vpop.f32.mrb[0].mxu0
  %v5217 = vadd.f32 0.0, %v5216
  %v5218 = vpop.f32.mrb[0].mxu0
  %v5219 = vadd.f32 0.0, %v5218
  %5220 = vmatprep.mubr.bf16.mxu0 %v4130
  %5221 = vmatmul.mubr.bf16.gmra.mrb[0].mxu0 %v3957
  %v5222 = vpop.f32.mrb[0].mxu0
  %v5223 = vadd.f32 0.0, %v5222
  %v5224 = vpop.f32.mrb[0].mxu0
  %v5225 = vadd.f32 0.0, %v5224
  %v5226 = vpop.f32.mrb[0].mxu0
  %v5227 = vadd.f32 0.0, %v5226
  %v5228 = vpop.f32.mrb[0].mxu0
  %v5229 = vadd.f32 0.0, %v5228
  %5230 = vmatprep.mubr.bf16.mxu0 %v4133
  %5231 = vmatmul.mubr.bf16.gmra.mrb[0].mxu0 %v3959
  %v5232 = vpop.f32.mrb[0].mxu0
  %v5233 = vadd.f32 0.0, %v5232
  %v5234 = vpop.f32.mrb[0].mxu0
  %v5235 = vadd.f32 0.0, %v5234
  %v5236 = vpop.f32.mrb[0].mxu0
  %v5237 = vadd.f32 0.0, %v5236
  %v5238 = vpop.f32.mrb[0].mxu0
  %v5239 = vadd.f32 0.0, %v5238
  %5240 = vmatprep.mubr.bf16.mxu0 %v4136
  %5241 = vmatmul.mubr.bf16.gmra.mrb[0].mxu0 %v3961
  %v5242 = vpop.f32.mrb[0].mxu0
  %v5243 = vadd.f32 0.0, %v5242
  %v5244 = vpop.f32.mrb[0].mxu0
  %v5245 = vadd.f32 0.0, %v5244
  %v5246 = vpop.f32.mrb[0].mxu0
  %v5247 = vadd.f32 0.0, %v5246
  %v5248 = vpop.f32.mrb[0].mxu0
  %v5249 = vadd.f32 0.0, %v5248
  %5250 = vmatprep.mubr.bf16.mxu0 %v4645
  %5251 = vmatmul.mubr.bf16.gmra.mrb[0].mxu0 %v4533
  %v5252 = vpop.f32.mrb[0].mxu0
  %v5253 = vadd.f32 0.0, %v5252
  %v5254 = vpop.f32.mrb[0].mxu0
  %v5255 = vadd.f32 0.0, %v5254
  %v5256 = vpop.f32.mrb[0].mxu0
  %v5257 = vadd.f32 0.0, %v5256
  %v5258 = vpop.f32.mrb[0].mxu0
  %v5259 = vadd.f32 0.0, %v5258
  %5260 = vmatprep.mubr.bf16.mxu0 %v5127
  %5261 = vmatmul.mubr.bf16.gmra.mrb[0].mxu0 %v5015
  %v5262 = vpop.f32.mrb[0].mxu0
  %v5263 = vadd.f32 0.0, %v5262
  %v5264 = vpop.f32.mrb[0].mxu0
  %v5265 = vadd.f32 0.0, %v5264
  %v5266 = vpop.f32.mrb[0].mxu0
  %v5267 = vadd.f32 0.0, %v5266
  %v5268 = vpop.f32.mrb[0].mxu0
  %v5269 = vadd.f32 0.0, %v5268
  %5270 = vmatprep.mubr.bf16.mxu0 %v4145
  %5271 = vmatmul.mubr.bf16.gmra.mrb[0].mxu0 %v3967
  %v5272 = vpop.f32.mrb[0].mxu0
  %v5273 = vadd.f32 0.0, %v5272
  %v5274 = vpop.f32.mrb[0].mxu0
  %v5275 = vadd.f32 0.0, %v5274
  %v5276 = vpop.f32.mrb[0].mxu0
  %v5277 = vadd.f32 0.0, %v5276
  %v5278 = vpop.f32.mrb[0].mxu0
  %v5279 = vadd.f32 0.0, %v5278
  %5280 = vmatprep.mubr.bf16.mxu0 %v4148
  %5281 = vmatmul.mubr.bf16.gmra.mrb[0].mxu0 %v3969
  %v5282 = vpop.f32.mrb[0].mxu0
  %v5283 = vadd.f32 0.0, %v5282
  %v5284 = vpop.f32.mrb[0].mxu0
  %v5285 = vadd.f32 0.0, %v5284
  %v5286 = vpop.f32.mrb[0].mxu0
  %v5287 = vadd.f32 0.0, %v5286
  %v5288 = vpop.f32.mrb[0].mxu0
  %v5289 = vadd.f32 0.0, %v5288
  %5290 = vmatprep.mubr.bf16.mxu0 %v4151
  %5291 = vmatmul.mubr.bf16.gmra.mrb[0].mxu0 %v3971
  %v5292 = vpop.f32.mrb[0].mxu0
  %v5293 = vadd.f32 0.0, %v5292
  %v5294 = vpop.f32.mrb[0].mxu0
  %v5295 = vadd.f32 0.0, %v5294
  %v5296 = vpop.f32.mrb[0].mxu0
  %v5297 = vadd.f32 0.0, %v5296
  %v5298 = vpop.f32.mrb[0].mxu0
  %v5299 = vadd.f32 0.0, %v5298
  %5300 = vmatprep.mubr.bf16.mxu0 %v4154
  %5301 = vmatmul.mubr.bf16.gmra.mrb[0].mxu0 %v3973
  %v5302 = vpop.f32.mrb[0].mxu0
  %v5303 = vadd.f32 0.0, %v5302
  %v5304 = vpop.f32.mrb[0].mxu0
  %v5305 = vadd.f32 0.0, %v5304
  %v5306 = vpop.f32.mrb[0].mxu0
  %v5307 = vadd.f32 0.0, %v5306
  %v5308 = vpop.f32.mrb[0].mxu0
  %v5309 = vadd.f32 0.0, %v5308
  %5310 = vmatprep.mubr.bf16.mxu0 %v4157
  %5311 = vmatmul.mubr.bf16.gmra.mrb[0].mxu0 %v3975
  %v5312 = vpop.f32.mrb[0].mxu0
  %v5313 = vadd.f32 0.0, %v5312
  %v5314 = vpop.f32.mrb[0].mxu0
  %v5315 = vadd.f32 0.0, %v5314
  %v5316 = vpop.f32.mrb[0].mxu0
  %v5317 = vadd.f32 0.0, %v5316
  %v5318 = vpop.f32.mrb[0].mxu0
  %v5319 = vadd.f32 0.0, %v5318
  %5320 = vmatprep.mubr.bf16.mxu0 %v4160
  %5321 = vmatmul.mubr.bf16.gmra.mrb[0].mxu0 %v3977
  %v5322 = vpop.f32.mrb[0].mxu0
  %v5323 = vadd.f32 0.0, %v5322
  %v5324 = vpop.f32.mrb[0].mxu0
  %v5325 = vadd.f32 0.0, %v5324
  %v5326 = vpop.f32.mrb[0].mxu0
  %v5327 = vadd.f32 0.0, %v5326
  %v5328 = vpop.f32.mrb[0].mxu0
  %v5329 = vadd.f32 0.0, %v5328
  %5330 = vmatprep.mubr.bf16.mxu0 %v4163
  %5331 = vmatmul.mubr.bf16.gmra.mrb[0].mxu0 %v3979
  %v5332 = vpop.f32.mrb[0].mxu0
  %v5333 = vadd.f32 0.0, %v5332
  %v5334 = vpop.f32.mrb[0].mxu0
  %v5335 = vadd.f32 0.0, %v5334
  %v5336 = vpop.f32.mrb[0].mxu0
  %v5337 = vadd.f32 0.0, %v5336
  %v5338 = vpop.f32.mrb[0].mxu0
  %v5339 = vadd.f32 0.0, %v5338
  %5340 = vmatprep.mubr.bf16.mxu0 %v4166
  %5341 = vmatmul.mubr.bf16.gmra.mrb[0].mxu0 %v3981
  %v5342 = vpop.f32.mrb[0].mxu0
  %v5343 = vadd.f32 0.0, %v5342
  %v5344 = vpop.f32.mrb[0].mxu0
  %v5345 = vadd.f32 0.0, %v5344
  %v5346 = vpop.f32.mrb[0].mxu0
  %v5347 = vadd.f32 0.0, %v5346
  %v5348 = vpop.f32.mrb[0].mxu0
  %v5349 = vadd.f32 0.0, %v5348
  %5350 = vmatprep.mubr.bf16.mxu0 %v4648
  %5351 = vmatmul.mubr.bf16.gmra.mrb[0].mxu0 %v4535
  %v5352 = vpop.f32.mrb[0].mxu0
  %v5353 = vadd.f32 0.0, %v5352
  %v5354 = vpop.f32.mrb[0].mxu0
  %v5355 = vadd.f32 0.0, %v5354
  %v5356 = vpop.f32.mrb[0].mxu0
  %v5357 = vadd.f32 0.0, %v5356
  %v5358 = vpop.f32.mrb[0].mxu0
  %v5359 = vadd.f32 0.0, %v5358
  %5360 = vmatprep.mubr.bf16.mxu0 %v5130
  %5361 = vmatmul.mubr.bf16.gmra.mrb[0].mxu0 %v5017
  %v5362 = vpop.f32.mrb[0].mxu0
  %v5363 = vadd.f32 0.0, %v5362
  %v5364 = vpop.f32.mrb[0].mxu0
  %v5365 = vadd.f32 0.0, %v5364
  %v5366 = vpop.f32.mrb[0].mxu0
  %v5367 = vadd.f32 0.0, %v5366
  %v5368 = vpop.f32.mrb[0].mxu0
  %v5369 = vadd.f32 0.0, %v5368
  %5370 = vdwg.mxu0
  %v5371 = vadd.f32 %v4889, %v5173
  %v5372 = vadd.f32 %v4890, %v5175
  %v5373 = vadd.f32 %v4891, %v5177
  %v5374 = vadd.f32 %v4892, %v5179
  %v5375 = vadd.f32 %v4893, %v5183
  %v5376 = vadd.f32 %v4894, %v5185
  %v5377 = vadd.f32 %v4895, %v5187
  %v5378 = vadd.f32 %v4896, %v5189
  %v5379 = vadd.f32 %v4897, %v5193
  %v5380 = vadd.f32 %v4898, %v5195
  %v5381 = vadd.f32 %v4899, %v5197
  %v5382 = vadd.f32 %v4900, %v5199
  %v5383 = vadd.f32 %v4901, %v5203
  %v5384 = vadd.f32 %v4902, %v5205
  %v5385 = vadd.f32 %v4903, %v5207
  %v5386 = vadd.f32 %v4904, %v5209
  %v5387 = vadd.f32 %v4905, %v5213
  %v5388 = vadd.f32 %v4906, %v5215
  %v5389 = vadd.f32 %v4907, %v5217
  %v5390 = vadd.f32 %v4908, %v5219
  %v5391 = vadd.f32 %v4909, %v5223
  %v5392 = vadd.f32 %v4910, %v5225
  %v5393 = vadd.f32 %v4911, %v5227
  %v5394 = vadd.f32 %v4912, %v5229
  %v5395 = vadd.f32 %v4913, %v5233
  %v5396 = vadd.f32 %v4914, %v5235
  %v5397 = vadd.f32 %v4915, %v5237
  %v5398 = vadd.f32 %v4916, %v5239
  %v5399 = vadd.f32 %v4917, %v5243
  %v5400 = vadd.f32 %v4918, %v5245
  %v5401 = vadd.f32 %v4919, %v5247
  %v5402 = vadd.f32 %v4920, %v5249
  %v5403 = vadd.f32 %v4921, %v5253
  %v5404 = vadd.f32 %v4922, %v5255
  %v5405 = vadd.f32 %v4923, %v5257
  %v5406 = vadd.f32 %v4924, %v5259
  %v5407 = vadd.f32 %v4925, %v5263
  %v5408 = vadd.f32 %v4926, %v5265
  %v5409 = vadd.f32 %v4927, %v5267
  %v5410 = vadd.f32 %v4928, %v5269
  %v5411 = vadd.f32 %v4929, %v5273
  %v5412 = vadd.f32 %v4930, %v5275
  %v5413 = vadd.f32 %v4931, %v5277
  %v5414 = vadd.f32 %v4932, %v5279
  %v5415 = vadd.f32 %v4933, %v5283
  %v5416 = vadd.f32 %v4934, %v5285
  %v5417 = vadd.f32 %v4935, %v5287
  %v5418 = vadd.f32 %v4936, %v5289
  %v5419 = vadd.f32 %v4937, %v5293
  %v5420 = vadd.f32 %v4938, %v5295
  %v5421 = vadd.f32 %v4939, %v5297
  %v5422 = vadd.f32 %v4940, %v5299
  %v5423 = vadd.f32 %v4941, %v5303
  %v5424 = vadd.f32 %v4942, %v5305
  %v5425 = vadd.f32 %v4943, %v5307
  %v5426 = vadd.f32 %v4944, %v5309
  %v5427 = vadd.f32 %v4945, %v5313
  %v5428 = vadd.f32 %v4946, %v5315
  %v5429 = vadd.f32 %v4947, %v5317
  %v5430 = vadd.f32 %v4948, %v5319
  %v5431 = vadd.f32 %v4949, %v5323
  %v5432 = vadd.f32 %v4950, %v5325
  %v5433 = vadd.f32 %v4951, %v5327
  %v5434 = vadd.f32 %v4952, %v5329
  %v5435 = vadd.f32 %v4953, %v5333
  %v5436 = vadd.f32 %v4954, %v5335
  %v5437 = vadd.f32 %v4955, %v5337
  %v5438 = vadd.f32 %v4956, %v5339
  %v5439 = vadd.f32 %v4957, %v5343
  %v5440 = vadd.f32 %v4958, %v5345
  %v5441 = vadd.f32 %v4959, %v5347
  %v5442 = vadd.f32 %v4960, %v5349
  %v5443 = vadd.f32 %v4961, %v5353
  %v5444 = vadd.f32 %v4962, %v5355
  %v5445 = vadd.f32 %v4963, %v5357
  %v5446 = vadd.f32 %v4964, %v5359
  %v5447 = vadd.f32 %v4965, %v5363
  %v5448 = vadd.f32 %v4966, %v5365
  %v5449 = vadd.f32 %v4967, %v5367
  %v5450 = vadd.f32 %v4968, %v5369
  %v5451 = vld [vmem:[%s3] sm:$0x3]
  %v5453 = vlaneseq
  %v5454 = vshrl.u32 %v5453, 7
  %v5455 = vsub.s32 0, %v5454
  %v5456 = vrot.slane %v5451, %v5455
  %v5457 = vlaneseq
  %v5458 = vshrl.u32 %v5457, 7
  %v5459 = vsub.s32 1, %v5458
  %v5460 = vrot.slane %v5451, %v5459
  %v5463 = vadd.f32 %v5371, %v5456
  %v5464 = vadd.f32 %v5372, %v5460
  %v5465 = vadd.f32 %v5373, %v5456
  %v5466 = vadd.f32 %v5374, %v5460
  %v5467 = vadd.f32 %v5375, %v5456
  %v5468 = vadd.f32 %v5376, %v5460
  %v5469 = vadd.f32 %v5377, %v5456
  %v5470 = vadd.f32 %v5378, %v5460
  %v5471 = vadd.f32 %v5379, %v5456
  %v5472 = vadd.f32 %v5380, %v5460
  %v5473 = vadd.f32 %v5381, %v5456
  %v5474 = vadd.f32 %v5382, %v5460
  %v5475 = vadd.f32 %v5383, %v5456
  %v5476 = vadd.f32 %v5384, %v5460
  %v5477 = vadd.f32 %v5385, %v5456
  %v5478 = vadd.f32 %v5386, %v5460
  %v5479 = vadd.f32 %v5387, %v5456
  %v5480 = vadd.f32 %v5388, %v5460
  %v5481 = vadd.f32 %v5389, %v5456
  %v5482 = vadd.f32 %v5390, %v5460
  %v5483 = vadd.f32 %v5391, %v5456
  %v5484 = vadd.f32 %v5392, %v5460
  %v5485 = vadd.f32 %v5393, %v5456
  %v5486 = vadd.f32 %v5394, %v5460
  %v5487 = vadd.f32 %v5395, %v5456
  %v5488 = vadd.f32 %v5396, %v5460
  %v5489 = vadd.f32 %v5397, %v5456
  %v5490 = vadd.f32 %v5398, %v5460
  %v5491 = vadd.f32 %v5399, %v5456
  %v5492 = vadd.f32 %v5400, %v5460
  %v5493 = vadd.f32 %v5401, %v5456
  %v5494 = vadd.f32 %v5402, %v5460
  %v5495 = vadd.f32 %v5403, %v5456
  %v5496 = vadd.f32 %v5404, %v5460
  %v5497 = vadd.f32 %v5405, %v5456
  %v5498 = vadd.f32 %v5406, %v5460
  %v5499 = vadd.f32 %v5407, %v5456
  %v5500 = vadd.f32 %v5408, %v5460
  %v5501 = vadd.f32 %v5409, %v5456
  %v5502 = vadd.f32 %v5410, %v5460
  %v5503 = vadd.f32 %v5411, %v5456
  %v5504 = vadd.f32 %v5412, %v5460
  %v5505 = vadd.f32 %v5413, %v5456
  %v5506 = vadd.f32 %v5414, %v5460
  %v5507 = vadd.f32 %v5415, %v5456
  %v5508 = vadd.f32 %v5416, %v5460
  %v5509 = vadd.f32 %v5417, %v5456
  %v5510 = vadd.f32 %v5418, %v5460
  %v5511 = vadd.f32 %v5419, %v5456
  %v5512 = vadd.f32 %v5420, %v5460
  %v5513 = vadd.f32 %v5421, %v5456
  %v5514 = vadd.f32 %v5422, %v5460
  %v5515 = vadd.f32 %v5423, %v5456
  %v5516 = vadd.f32 %v5424, %v5460
  %v5517 = vadd.f32 %v5425, %v5456
  %v5518 = vadd.f32 %v5426, %v5460
  %v5519 = vadd.f32 %v5427, %v5456
  %v5520 = vadd.f32 %v5428, %v5460
  %v5521 = vadd.f32 %v5429, %v5456
  %v5522 = vadd.f32 %v5430, %v5460
  %v5523 = vadd.f32 %v5431, %v5456
  %v5524 = vadd.f32 %v5432, %v5460
  %v5525 = vadd.f32 %v5433, %v5456
  %v5526 = vadd.f32 %v5434, %v5460
  %v5527 = vadd.f32 %v5435, %v5456
  %v5528 = vadd.f32 %v5436, %v5460
  %v5529 = vadd.f32 %v5437, %v5456
  %v5530 = vadd.f32 %v5438, %v5460
  %v5531 = vadd.f32 %v5439, %v5456
  %v5532 = vadd.f32 %v5440, %v5460
  %v5533 = vadd.f32 %v5441, %v5456
  %v5534 = vadd.f32 %v5442, %v5460
  %v5535 = vadd.f32 %v5443, %v5456
  %v5536 = vadd.f32 %v5444, %v5460
  %v5537 = vadd.f32 %v5445, %v5456
  %v5538 = vadd.f32 %v5446, %v5460
  %v5539 = vadd.f32 %v5447, %v5456
  %v5540 = vadd.f32 %v5448, %v5460
  %v5541 = vadd.f32 %v5449, %v5456
  %v5542 = vadd.f32 %v5450, %v5460
  %v5543 = vmax.f32 %v5463, 0.0
  %v5544 = vmax.f32 %v5464, 0.0
  %v5545 = vmax.f32 %v5465, 0.0
  %v5546 = vmax.f32 %v5466, 0.0
  %v5547 = vmax.f32 %v5467, 0.0
  %v5548 = vmax.f32 %v5468, 0.0
  %v5549 = vmax.f32 %v5469, 0.0
  %v5550 = vmax.f32 %v5470, 0.0
  %v5551 = vmax.f32 %v5471, 0.0
  %v5552 = vmax.f32 %v5472, 0.0
  %v5553 = vmax.f32 %v5473, 0.0
  %v5554 = vmax.f32 %v5474, 0.0
  %v5555 = vmax.f32 %v5475, 0.0
  %v5556 = vmax.f32 %v5476, 0.0
  %v5557 = vmax.f32 %v5477, 0.0
  %v5558 = vmax.f32 %v5478, 0.0
  %v5559 = vmax.f32 %v5479, 0.0
  %v5560 = vmax.f32 %v5480, 0.0
  %v5561 = vmax.f32 %v5481, 0.0
  %v5562 = vmax.f32 %v5482, 0.0
  %v5563 = vmax.f32 %v5483, 0.0
  %v5564 = vmax.f32 %v5484, 0.0
  %v5565 = vmax.f32 %v5485, 0.0
  %v5566 = vmax.f32 %v5486, 0.0
  %v5567 = vmax.f32 %v5487, 0.0
  %v5568 = vmax.f32 %v5488, 0.0
  %v5569 = vmax.f32 %v5489, 0.0
  %v5570 = vmax.f32 %v5490, 0.0
  %v5571 = vmax.f32 %v5491, 0.0
  %v5572 = vmax.f32 %v5492, 0.0
  %v5573 = vmax.f32 %v5493, 0.0
  %v5574 = vmax.f32 %v5494, 0.0
  %v5575 = vmax.f32 %v5495, 0.0
  %v5576 = vmax.f32 %v5496, 0.0
  %v5577 = vmax.f32 %v5497, 0.0
  %v5578 = vmax.f32 %v5498, 0.0
  %v5579 = vmax.f32 %v5499, 0.0
  %v5580 = vmax.f32 %v5500, 0.0
  %v5581 = vmax.f32 %v5501, 0.0
  %v5582 = vmax.f32 %v5502, 0.0
  %v5583 = vmax.f32 %v5503, 0.0
  %v5584 = vmax.f32 %v5504, 0.0
  %v5585 = vmax.f32 %v5505, 0.0
  %v5586 = vmax.f32 %v5506, 0.0
  %v5587 = vmax.f32 %v5507, 0.0
  %v5588 = vmax.f32 %v5508, 0.0
  %v5589 = vmax.f32 %v5509, 0.0
  %v5590 = vmax.f32 %v5510, 0.0
  %v5591 = vmax.f32 %v5511, 0.0
  %v5592 = vmax.f32 %v5512, 0.0
  %v5593 = vmax.f32 %v5513, 0.0
  %v5594 = vmax.f32 %v5514, 0.0
  %v5595 = vmax.f32 %v5515, 0.0
  %v5596 = vmax.f32 %v5516, 0.0
  %v5597 = vmax.f32 %v5517, 0.0
  %v5598 = vmax.f32 %v5518, 0.0
  %v5599 = vmax.f32 %v5519, 0.0
  %v5600 = vmax.f32 %v5520, 0.0
  %v5601 = vmax.f32 %v5521, 0.0
  %v5602 = vmax.f32 %v5522, 0.0
  %v5603 = vmax.f32 %v5523, 0.0
  %v5604 = vmax.f32 %v5524, 0.0
  %v5605 = vmax.f32 %v5525, 0.0
  %v5606 = vmax.f32 %v5526, 0.0
  %v5607 = vmax.f32 %v5527, 0.0
  %v5608 = vmax.f32 %v5528, 0.0
  %v5609 = vmax.f32 %v5529, 0.0
  %v5610 = vmax.f32 %v5530, 0.0
  %v5611 = vmax.f32 %v5531, 0.0
  %v5612 = vmax.f32 %v5532, 0.0
  %v5613 = vmax.f32 %v5533, 0.0
  %v5614 = vmax.f32 %v5534, 0.0
  %v5615 = vmax.f32 %v5535, 0.0
  %v5616 = vmax.f32 %v5536, 0.0
  %v5617 = vmax.f32 %v5537, 0.0
  %v5618 = vmax.f32 %v5538, 0.0
  %v5619 = vmax.f32 %v5539, 0.0
  %v5620 = vmax.f32 %v5540, 0.0
  %v5621 = vmax.f32 %v5541, 0.0
  %v5622 = vmax.f32 %v5542, 0.0
  %v5623 = vpack.c.bf16 %v5545, %v5543
  %v5624 = vpack.c.bf16 %v5546, %v5544
  %v5625 = vpack.c.bf16 %v5549, %v5547
  %v5626 = vpack.c.bf16 %v5550, %v5548
  %v5627 = vpack.c.bf16 %v5553, %v5551
  %v5628 = vpack.c.bf16 %v5554, %v5552
  %v5629 = vpack.c.bf16 %v5557, %v5555
  %v5630 = vpack.c.bf16 %v5558, %v5556
  %v5631 = vpack.c.bf16 %v5561, %v5559
  %v5632 = vpack.c.bf16 %v5562, %v5560
  %v5633 = vpack.c.bf16 %v5565, %v5563
  %v5634 = vpack.c.bf16 %v5566, %v5564
  %v5635 = vpack.c.bf16 %v5569, %v5567
  %v5636 = vpack.c.bf16 %v5570, %v5568
  %v5637 = vpack.c.bf16 %v5573, %v5571
  %v5638 = vpack.c.bf16 %v5574, %v5572
  %v5639 = vpack.c.bf16 %v5577, %v5575
  %v5640 = vpack.c.bf16 %v5578, %v5576
  %v5641 = vpack.c.bf16 %v5581, %v5579
  %v5642 = vpack.c.bf16 %v5582, %v5580
  %v5643 = vpack.c.bf16 %v5585, %v5583
  %v5644 = vpack.c.bf16 %v5586, %v5584
  %v5645 = vpack.c.bf16 %v5589, %v5587
  %v5646 = vpack.c.bf16 %v5590, %v5588
  %v5647 = vpack.c.bf16 %v5593, %v5591
  %v5648 = vpack.c.bf16 %v5594, %v5592
  %v5649 = vpack.c.bf16 %v5597, %v5595
  %v5650 = vpack.c.bf16 %v5598, %v5596
  %v5651 = vpack.c.bf16 %v5601, %v5599
  %v5652 = vpack.c.bf16 %v5602, %v5600
  %v5653 = vpack.c.bf16 %v5605, %v5603
  %v5654 = vpack.c.bf16 %v5606, %v5604
  %v5655 = vpack.c.bf16 %v5609, %v5607
  %v5656 = vpack.c.bf16 %v5610, %v5608
  %v5657 = vpack.c.bf16 %v5613, %v5611
  %v5658 = vpack.c.bf16 %v5614, %v5612
  %v5659 = vpack.c.bf16 %v5617, %v5615
  %v5660 = vpack.c.bf16 %v5618, %v5616
  %v5661 = vpack.c.bf16 %v5621, %v5619
  %v5662 = vpack.c.bf16 %v5622, %v5620
  %v5663 = vld [vmem:[%s4] sm:$0xf]
  %v5664 = vld [vmem:[%s4 + $0x4] sm:$0xf]
  %v5665 = vld [vmem:[%s4 + $0x8] sm:$0xf]
  %v5666 = vld [vmem:[%s4 + $0xc] sm:$0xf]
  %v5667 = vld [vmem:[%s4 + $0x10] sm:$0xf]
  %v5668 = vld [vmem:[%s4 + $0x14] sm:$0xf]
  %v5669 = vld [vmem:[%s4 + $0x18] sm:$0xf]
  %v5670 = vld [vmem:[%s4 + $0x1c] sm:$0xf]
  %v5671 = vld [vmem:[%s4 + $0x20] sm:$0xf]
  %v5672 = vld [vmem:[%s4 + $0x24] sm:$0xf]
  %v5673 = vld [vmem:[%s4 + $0x28] sm:$0xf]
  %v5674 = vld [vmem:[%s4 + $0x2c] sm:$0xf]
  %v5675 = vld [vmem:[%s4 + $0x30] sm:$0xf]
  %v5676 = vld [vmem:[%s4 + $0x34] sm:$0xf]
  %v5677 = vld [vmem:[%s4 + $0x38] sm:$0xf]
  %v5678 = vld [vmem:[%s4 + $0x3c] sm:$0xf]
  %v5679 = vld [vmem:[%s4 + $0x40] sm:$0xf]
  %v5680 = vld [vmem:[%s4 + $0x44] sm:$0xf]
  %v5681 = vld [vmem:[%s4 + $0x48] sm:$0xf]
  %v5682 = vld [vmem:[%s4 + $0x4c] sm:$0xf]
  %v5683 = vld [vmem:[%s4 + $0x50] sm:$0xf]
  %v5684 = vld [vmem:[%s4 + $0x54] sm:$0xf]
  %v5685 = vld [vmem:[%s4 + $0x58] sm:$0xf]
  %v5686 = vld [vmem:[%s4 + $0x5c] sm:$0xf]
  %v5687 = vld [vmem:[%s4 + $0x60] sm:$0xf]
  %v5688 = vld [vmem:[%s4 + $0x64] sm:$0xf]
  %v5689 = vld [vmem:[%s4 + $0x68] sm:$0xf]
  %v5690 = vld [vmem:[%s4 + $0x6c] sm:$0xf]
  %v5691 = vld [vmem:[%s4 + $0x70] sm:$0xf]
  %v5692 = vld [vmem:[%s4 + $0x74] sm:$0xf]
  %v5693 = vld [vmem:[%s4 + $0x78] sm:$0xf]
  %v5694 = vld [vmem:[%s4 + $0x7c] sm:$0xf]
  %v5695 = vld [vmem:[%s5] sm:$0x1]
  %v5697 = vlaneseq
  %v5698 = vshrl.u32 %v5697, 7
  %v5699 = vsub.s32 0, %v5698
  %v5700 = vrot.slane %v5695, %v5699
  %v5734 = vunpack.c.l.b16 %v5663
  %v5735 = vunpack.c.l.b16 %v5664
  %v5736 = vunpack.c.l.b16 %v5665
  %v5737 = vunpack.c.l.b16 %v5666
  %v5738 = vunpack.c.l.b16 %v5667
  %v5739 = vunpack.c.l.b16 %v5668
  %v5740 = vunpack.c.l.b16 %v5669
  %v5741 = vunpack.c.l.b16 %v5670
  %v5742 = vunpack.c.l.b16 %v5671
  %v5743 = vunpack.c.l.b16 %v5672
  %v5744 = vunpack.c.l.b16 %v5673
  %v5745 = vunpack.c.l.b16 %v5674
  %v5746 = vunpack.c.l.b16 %v5675
  %v5747 = vunpack.c.l.b16 %v5676
  %v5748 = vunpack.c.l.b16 %v5677
  %v5749 = vunpack.c.l.b16 %v5678
  %v5750 = vunpack.c.l.b16 %v5679
  %v5751 = vunpack.c.l.b16 %v5680
  %v5752 = vunpack.c.l.b16 %v5681
  %v5753 = vunpack.c.l.b16 %v5682
  %v5754 = vunpack.c.l.b16 %v5683
  %v5755 = vunpack.c.l.b16 %v5684
  %v5756 = vunpack.c.l.b16 %v5685
  %v5757 = vunpack.c.l.b16 %v5686
  %v5758 = vunpack.c.l.b16 %v5687
  %v5759 = vunpack.c.l.b16 %v5688
  %v5760 = vunpack.c.l.b16 %v5689
  %v5761 = vunpack.c.l.b16 %v5690
  %v5762 = vunpack.c.l.b16 %v5691
  %v5763 = vunpack.c.l.b16 %v5692
  %v5764 = vunpack.c.l.b16 %v5693
  %v5765 = vunpack.c.l.b16 %v5694
  %v5766 = vpack.c.b16 %v5735, %v5734
  %v5767 = vpack.c.b16 %v5737, %v5736
  %v5768 = vpack.c.b16 %v5739, %v5738
  %v5769 = vpack.c.b16 %v5741, %v5740
  %v5770 = vpack.c.b16 %v5743, %v5742
  %v5771 = vpack.c.b16 %v5745, %v5744
  %v5772 = vpack.c.b16 %v5747, %v5746
  %v5773 = vpack.c.b16 %v5749, %v5748
  %v5774 = vpack.c.b16 %v5751, %v5750
  %v5775 = vpack.c.b16 %v5753, %v5752
  %v5776 = vpack.c.b16 %v5755, %v5754
  %v5777 = vpack.c.b16 %v5757, %v5756
  %v5778 = vpack.c.b16 %v5759, %v5758
  %v5779 = vpack.c.b16 %v5761, %v5760
  %v5780 = vpack.c.b16 %v5763, %v5762
  %v5781 = vpack.c.b16 %v5765, %v5764
  %5798 = vmatprep.subr.bf16.mxu0 0
  %5799 = vmatpush1.bf16.msra.mxu0 %v5766
  %5800 = vmatprep.subr.bf16.mxu0 0
  %5801 = vmatpush1.bf16.msra.mxu0 %v5767
  %5802 = vmatprep.subr.bf16.mxu0 0
  %5803 = vmatpush1.bf16.msra.mxu0 %v5768
  %5804 = vmatprep.subr.bf16.mxu0 0
  %5805 = vmatpush1.bf16.msra.mxu0 %v5769
  %5806 = vmatprep.subr.bf16.mxu0 0
  %5807 = vmatpush1.bf16.msra.mxu0 %v5770
  %5808 = vmatprep.subr.bf16.mxu0 0
  %5809 = vmatpush1.bf16.msra.mxu0 %v5771
  %5810 = vmatprep.subr.bf16.mxu0 0
  %5811 = vmatpush1.bf16.msra.mxu0 %v5772
  %5812 = vmatprep.subr.bf16.mxu0 0
  %5813 = vmatpush1.bf16.msra.mxu0 %v5773
  %5814 = vmatprep.subr.bf16.mxu0 0
  %5815 = vmatpush1.bf16.msra.mxu0 %v5774
  %5816 = vmatprep.subr.bf16.mxu0 0
  %5817 = vmatpush1.bf16.msra.mxu0 %v5775
  %5818 = vmatprep.subr.bf16.mxu0 0
  %5819 = vmatpush1.bf16.msra.mxu0 %v5776
  %5820 = vmatprep.subr.bf16.mxu0 0
  %5821 = vmatpush1.bf16.msra.mxu0 %v5777
  %5822 = vmatprep.subr.bf16.mxu0 0
  %5823 = vmatpush1.bf16.msra.mxu0 %v5778
  %5824 = vmatprep.subr.bf16.mxu0 0
  %5825 = vmatpush1.bf16.msra.mxu0 %v5779
  %5826 = vmatprep.subr.bf16.mxu0 0
  %5827 = vmatpush1.bf16.msra.mxu0 %v5780
  %5828 = vmatprep.subr.bf16.mxu0 0
  %5829 = vmatpush1.bf16.msra.mxu0 %v5781
  %5830 = vmatprep.mubr.bf16.mxu0 %v5624
  %5831 = vmatmul.mubr.bf16.gmra.mrb[0].mxu0 %v5623
  %v5832 = vpop.f32.mrb[0].mxu0
  %v5833 = vadd.f32 %v5700, %v5832
  %v5834 = vpop.f32.mrb[0].mxu0
  %v5835 = vpop.f32.mrb[0].mxu0
  %v5836 = vadd.f32 %v5700, %v5835
  %v5837 = vpop.f32.mrb[0].mxu0
  %5838 = vmatprep.mubr.bf16.mxu0 %v5626
  %5839 = vmatmul.mubr.bf16.gmra.mrb[0].mxu0 %v5625
  %v5840 = vpop.f32.mrb[0].mxu0
  %v5841 = vadd.f32 %v5700, %v5840
  %v5842 = vpop.f32.mrb[0].mxu0
  %v5843 = vpop.f32.mrb[0].mxu0
  %v5844 = vadd.f32 %v5700, %v5843
  %v5845 = vpop.f32.mrb[0].mxu0
  %5846 = vmatprep.mubr.bf16.mxu0 %v5628
  %5847 = vmatmul.mubr.bf16.gmra.mrb[0].mxu0 %v5627
  %v5848 = vpop.f32.mrb[0].mxu0
  %v5849 = vadd.f32 %v5700, %v5848
  %v5850 = vpop.f32.mrb[0].mxu0
  %v5851 = vpop.f32.mrb[0].mxu0
  %v5852 = vadd.f32 %v5700, %v5851
  %v5853 = vpop.f32.mrb[0].mxu0
  %5854 = vmatprep.mubr.bf16.mxu0 %v5630
  %5855 = vmatmul.mubr.bf16.gmra.mrb[0].mxu0 %v5629
  %v5856 = vpop.f32.mrb[0].mxu0
  %v5857 = vadd.f32 %v5700, %v5856
  %v5858 = vpop.f32.mrb[0].mxu0
  %v5859 = vpop.f32.mrb[0].mxu0
  %v5860 = vadd.f32 %v5700, %v5859
  %v5861 = vpop.f32.mrb[0].mxu0
  %5862 = vmatprep.mubr.bf16.mxu0 %v5632
  %5863 = vmatmul.mubr.bf16.gmra.mrb[0].mxu0 %v5631
  %v5864 = vpop.f32.mrb[0].mxu0
  %v5865 = vadd.f32 %v5700, %v5864
  %v5866 = vpop.f32.mrb[0].mxu0
  %v5867 = vpop.f32.mrb[0].mxu0
  %v5868 = vadd.f32 %v5700, %v5867
  %v5869 = vpop.f32.mrb[0].mxu0
  %5870 = vmatprep.mubr.bf16.mxu0 %v5634
  %5871 = vmatmul.mubr.bf16.gmra.mrb[0].mxu0 %v5633
  %v5872 = vpop.f32.mrb[0].mxu0
  %v5873 = vadd.f32 %v5700, %v5872
  %v5874 = vpop.f32.mrb[0].mxu0
  %v5875 = vpop.f32.mrb[0].mxu0
  %v5876 = vadd.f32 %v5700, %v5875
  %v5877 = vpop.f32.mrb[0].mxu0
  %5878 = vmatprep.mubr.bf16.mxu0 %v5636
  %5879 = vmatmul.mubr.bf16.gmra.mrb[0].mxu0 %v5635
  %v5880 = vpop.f32.mrb[0].mxu0
  %v5881 = vadd.f32 %v5700, %v5880
  %v5882 = vpop.f32.mrb[0].mxu0
  %v5883 = vpop.f32.mrb[0].mxu0
  %v5884 = vadd.f32 %v5700, %v5883
  %v5885 = vpop.f32.mrb[0].mxu0
  %5886 = vmatprep.mubr.bf16.mxu0 %v5638
  %5887 = vmatmul.mubr.bf16.gmra.mrb[0].mxu0 %v5637
  %v5888 = vpop.f32.mrb[0].mxu0
  %v5889 = vadd.f32 %v5700, %v5888
  %v5890 = vpop.f32.mrb[0].mxu0
  %v5891 = vpop.f32.mrb[0].mxu0
  %v5892 = vadd.f32 %v5700, %v5891
  %v5893 = vpop.f32.mrb[0].mxu0
  %5894 = vmatprep.mubr.bf16.mxu0 %v5640
  %5895 = vmatmul.mubr.bf16.gmra.mrb[0].mxu0 %v5639
  %v5896 = vpop.f32.mrb[0].mxu0
  %v5897 = vadd.f32 %v5700, %v5896
  %v5898 = vpop.f32.mrb[0].mxu0
  %v5899 = vpop.f32.mrb[0].mxu0
  %v5900 = vadd.f32 %v5700, %v5899
  %v5901 = vpop.f32.mrb[0].mxu0
  %5902 = vmatprep.mubr.bf16.mxu0 %v5642
  %5903 = vmatmul.mubr.bf16.gmra.mrb[0].mxu0 %v5641
  %v5904 = vpop.f32.mrb[0].mxu0
  %v5905 = vadd.f32 %v5700, %v5904
  %v5906 = vpop.f32.mrb[0].mxu0
  %v5907 = vpop.f32.mrb[0].mxu0
  %v5908 = vadd.f32 %v5700, %v5907
  %v5909 = vpop.f32.mrb[0].mxu0
  %5910 = vmatprep.mubr.bf16.mxu0 %v5644
  %5911 = vmatmul.mubr.bf16.gmra.mrb[0].mxu0 %v5643
  %v5912 = vpop.f32.mrb[0].mxu0
  %v5913 = vadd.f32 %v5700, %v5912
  %v5914 = vpop.f32.mrb[0].mxu0
  %v5915 = vpop.f32.mrb[0].mxu0
  %v5916 = vadd.f32 %v5700, %v5915
  %v5917 = vpop.f32.mrb[0].mxu0
  %5918 = vmatprep.mubr.bf16.mxu0 %v5646
  %5919 = vmatmul.mubr.bf16.gmra.mrb[0].mxu0 %v5645
  %v5920 = vpop.f32.mrb[0].mxu0
  %v5921 = vadd.f32 %v5700, %v5920
  %v5922 = vpop.f32.mrb[0].mxu0
  %v5923 = vpop.f32.mrb[0].mxu0
  %v5924 = vadd.f32 %v5700, %v5923
  %v5925 = vpop.f32.mrb[0].mxu0
  %5926 = vmatprep.mubr.bf16.mxu0 %v5648
  %5927 = vmatmul.mubr.bf16.gmra.mrb[0].mxu0 %v5647
  %v5928 = vpop.f32.mrb[0].mxu0
  %v5929 = vadd.f32 %v5700, %v5928
  %v5930 = vpop.f32.mrb[0].mxu0
  %v5931 = vpop.f32.mrb[0].mxu0
  %v5932 = vadd.f32 %v5700, %v5931
  %v5933 = vpop.f32.mrb[0].mxu0
  %5934 = vmatprep.mubr.bf16.mxu0 %v5650
  %5935 = vmatmul.mubr.bf16.gmra.mrb[0].mxu0 %v5649
  %v5936 = vpop.f32.mrb[0].mxu0
  %v5937 = vadd.f32 %v5700, %v5936
  %v5938 = vpop.f32.mrb[0].mxu0
  %v5939 = vpop.f32.mrb[0].mxu0
  %v5940 = vadd.f32 %v5700, %v5939
  %v5941 = vpop.f32.mrb[0].mxu0
  %5942 = vmatprep.mubr.bf16.mxu0 %v5652
  %5943 = vmatmul.mubr.bf16.gmra.mrb[0].mxu0 %v5651
  %v5944 = vpop.f32.mrb[0].mxu0
  %v5945 = vadd.f32 %v5700, %v5944
  %v5946 = vpop.f32.mrb[0].mxu0
  %v5947 = vpop.f32.mrb[0].mxu0
  %v5948 = vadd.f32 %v5700, %v5947
  %v5949 = vpop.f32.mrb[0].mxu0
  %5950 = vmatprep.mubr.bf16.mxu0 %v5654
  %5951 = vmatmul.mubr.bf16.gmra.mrb[0].mxu0 %v5653
  %v5952 = vpop.f32.mrb[0].mxu0
  %v5953 = vadd.f32 %v5700, %v5952
  %v5954 = vpop.f32.mrb[0].mxu0
  %v5955 = vpop.f32.mrb[0].mxu0
  %v5956 = vadd.f32 %v5700, %v5955
  %v5957 = vpop.f32.mrb[0].mxu0
  %5958 = vmatprep.mubr.bf16.mxu0 %v5656
  %5959 = vmatmul.mubr.bf16.gmra.mrb[0].mxu0 %v5655
  %v5960 = vpop.f32.mrb[0].mxu0
  %v5961 = vadd.f32 %v5700, %v5960
  %v5962 = vpop.f32.mrb[0].mxu0
  %v5963 = vpop.f32.mrb[0].mxu0
  %v5964 = vadd.f32 %v5700, %v5963
  %v5965 = vpop.f32.mrb[0].mxu0
  %5966 = vmatprep.mubr.bf16.mxu0 %v5658
  %5967 = vmatmul.mubr.bf16.gmra.mrb[0].mxu0 %v5657
  %v5968 = vpop.f32.mrb[0].mxu0
  %v5969 = vadd.f32 %v5700, %v5968
  %v5970 = vpop.f32.mrb[0].mxu0
  %v5971 = vpop.f32.mrb[0].mxu0
  %v5972 = vadd.f32 %v5700, %v5971
  %v5973 = vpop.f32.mrb[0].mxu0
  %5974 = vmatprep.mubr.bf16.mxu0 %v5660
  %5975 = vmatmul.mubr.bf16.gmra.mrb[0].mxu0 %v5659
  %v5976 = vpop.f32.mrb[0].mxu0
  %v5977 = vadd.f32 %v5700, %v5976
  %v5978 = vpop.f32.mrb[0].mxu0
  %v5979 = vpop.f32.mrb[0].mxu0
  %v5980 = vadd.f32 %v5700, %v5979
  %v5981 = vpop.f32.mrb[0].mxu0
  %5982 = vmatprep.mubr.bf16.mxu0 %v5662
  %5983 = vmatmul.mubr.bf16.gmra.mrb[0].mxu0 %v5661
  %v5984 = vpop.f32.mrb[0].mxu0
  %v5985 = vadd.f32 %v5700, %v5984
  %v5986 = vpop.f32.mrb[0].mxu0
  %v5987 = vpop.f32.mrb[0].mxu0
  %v5988 = vadd.f32 %v5700, %v5987
  %v5989 = vpop.f32.mrb[0].mxu0
  %5990 = vdwg.mxu0
  %v5991 = vmax.f32 %v5833, 0.0
  %v5992 = vmax.f32 %v5836, 0.0
  %v5993 = vmax.f32 %v5841, 0.0
  %v5994 = vmax.f32 %v5844, 0.0
  %v5995 = vmax.f32 %v5849, 0.0
  %v5996 = vmax.f32 %v5852, 0.0
  %v5997 = vmax.f32 %v5857, 0.0
  %v5998 = vmax.f32 %v5860, 0.0
  %v5999 = vmax.f32 %v5865, 0.0
  %v6000 = vmax.f32 %v5868, 0.0
  %v6001 = vmax.f32 %v5873, 0.0
  %v6002 = vmax.f32 %v5876, 0.0
  %v6003 = vmax.f32 %v5881, 0.0
  %v6004 = vmax.f32 %v5884, 0.0
  %v6005 = vmax.f32 %v5889, 0.0
  %v6006 = vmax.f32 %v5892, 0.0
  %v6007 = vmax.f32 %v5897, 0.0
  %v6008 = vmax.f32 %v5900, 0.0
  %v6009 = vmax.f32 %v5905, 0.0
  %v6010 = vmax.f32 %v5908, 0.0
  %v6011 = vmax.f32 %v5913, 0.0
  %v6012 = vmax.f32 %v5916, 0.0
  %v6013 = vmax.f32 %v5921, 0.0
  %v6014 = vmax.f32 %v5924, 0.0
  %v6015 = vmax.f32 %v5929, 0.0
  %v6016 = vmax.f32 %v5932, 0.0
  %v6017 = vmax.f32 %v5937, 0.0
  %v6018 = vmax.f32 %v5940, 0.0
  %v6019 = vmax.f32 %v5945, 0.0
  %v6020 = vmax.f32 %v5948, 0.0
  %v6021 = vmax.f32 %v5953, 0.0
  %v6022 = vmax.f32 %v5956, 0.0
  %v6023 = vmax.f32 %v5961, 0.0
  %v6024 = vmax.f32 %v5964, 0.0
  %v6025 = vmax.f32 %v5969, 0.0
  %v6026 = vmax.f32 %v5972, 0.0
  %v6027 = vmax.f32 %v5977, 0.0
  %v6028 = vmax.f32 %v5980, 0.0
  %v6029 = vmax.f32 %v5985, 0.0
  %v6030 = vmax.f32 %v5988, 0.0
  %v6031 = vmax.f32 %v5991, %v5993
  %v6032 = vmax.f32 %v5992, %v5994
  %v6033 = vmax.f32 %v5995, %v5997
  %v6034 = vmax.f32 %v5996, %v5998
  %v6035 = vmax.f32 %v5999, %v6001
  %v6036 = vmax.f32 %v6000, %v6002
  %v6037 = vmax.f32 %v6003, %v6005
  %v6038 = vmax.f32 %v6004, %v6006
  %v6039 = vmax.f32 %v6007, %v6009
  %v6040 = vmax.f32 %v6008, %v6010
  %v6041 = vmax.f32 %v6011, %v6013
  %v6042 = vmax.f32 %v6012, %v6014
  %v6043 = vmax.f32 %v6015, %v6017
  %v6044 = vmax.f32 %v6016, %v6018
  %v6045 = vmax.f32 %v6019, %v6021
  %v6046 = vmax.f32 %v6020, %v6022
  %v6047 = vmax.f32 %v6023, %v6025
  %v6048 = vmax.f32 %v6024, %v6026
  %v6049 = vmax.f32 %v6027, %v6029
  %v6050 = vmax.f32 %v6028, %v6030
  %v6051 = vpack.c.bf16 %v6032, %v6031
  %v6052 = vpack.c.bf16 %v6034, %v6033
  %v6053 = vpack.c.bf16 %v6036, %v6035
  %v6054 = vpack.c.bf16 %v6038, %v6037
  %v6055 = vpack.c.bf16 %v6040, %v6039
  %v6056 = vpack.c.bf16 %v6042, %v6041
  %v6057 = vpack.c.bf16 %v6044, %v6043
  %v6058 = vpack.c.bf16 %v6046, %v6045
  %v6059 = vpack.c.bf16 %v6048, %v6047
  %v6060 = vpack.c.bf16 %v6050, %v6049
  %v6071 = vunpack.c.l.b16 %v6051
  %v6072 = vunpack.c.h.b16 %v6051
  %v6073 = vunpack.c.l.b16 %v6052
  %v6074 = vunpack.c.h.b16 %v6052
  %v6075 = vunpack.c.l.b16 %v6053
  %v6076 = vunpack.c.h.b16 %v6053
  %v6077 = vunpack.c.l.b16 %v6054
  %v6078 = vunpack.c.h.b16 %v6054
  %v6079 = vunpack.c.l.b16 %v6055
  %v6080 = vunpack.c.h.b16 %v6055
  %v6081 = vunpack.c.l.b16 %v6056
  %v6082 = vunpack.c.h.b16 %v6056
  %v6083 = vunpack.c.l.b16 %v6057
  %v6084 = vunpack.c.h.b16 %v6057
  %v6085 = vunpack.c.l.b16 %v6058
  %v6086 = vunpack.c.h.b16 %v6058
  %v6087 = vunpack.c.l.b16 %v6059
  %v6088 = vunpack.c.h.b16 %v6059
  %v6089 = vunpack.c.l.b16 %v6060
  %v6090 = vunpack.c.h.b16 %v6060
  %v6091 = vpack.c.b16 %v6071, %v6071
  %v6092 = vpack.c.b16 %v6072, %v6072
  %v6093 = vpack.c.b16 %v6073, %v6073
  %v6094 = vpack.c.b16 %v6074, %v6074
  %v6095 = vpack.c.b16 %v6075, %v6075
  %v6096 = vpack.c.b16 %v6076, %v6076
  %v6097 = vpack.c.b16 %v6077, %v6077
  %v6098 = vpack.c.b16 %v6078, %v6078
  %v6099 = vpack.c.b16 %v6079, %v6079
  %v6100 = vpack.c.b16 %v6080, %v6080
  %v6101 = vpack.c.b16 %v6081, %v6081
  %v6102 = vpack.c.b16 %v6082, %v6082
  %v6103 = vpack.c.b16 %v6083, %v6083
  %v6104 = vpack.c.b16 %v6084, %v6084
  %v6105 = vpack.c.b16 %v6085, %v6085
  %v6106 = vpack.c.b16 %v6086, %v6086
  %v6107 = vpack.c.b16 %v6087, %v6087
  %v6108 = vpack.c.b16 %v6088, %v6088
  %v6109 = vpack.c.b16 %v6089, %v6089
  %v6110 = vpack.c.b16 %v6090, %v6090
  %6131 = vst [vmem:[%s10] sm:$0xf] %v6091
  %6132 = vst [vmem:[%s10 + $0x4] sm:$0xf] %v6092
  %6133 = vst [vmem:[%s10 + $0x8] sm:$0xf] %v6093
  %6134 = vst [vmem:[%s10 + $0xc] sm:$0xf] %v6094
  %6135 = vst [vmem:[%s10 + $0x10] sm:$0xf] %v6095
  %6136 = vst [vmem:[%s10 + $0x14] sm:$0xf] %v6096
  %6137 = vst [vmem:[%s10 + $0x18] sm:$0xf] %v6097
  %6138 = vst [vmem:[%s10 + $0x1c] sm:$0xf] %v6098
  %6139 = vst [vmem:[%s10 + $0x20] sm:$0xf] %v6099
  %6140 = vst [vmem:[%s10 + $0x24] sm:$0xf] %v6100
  %6141 = vst [vmem:[%s10 + $0x28] sm:$0xf] %v6101
  %6142 = vst [vmem:[%s10 + $0x2c] sm:$0xf] %v6102
  %6143 = vst [vmem:[%s10 + $0x30] sm:$0xf] %v6103
  %6144 = vst [vmem:[%s10 + $0x34] sm:$0xf] %v6104
  %6145 = vst [vmem:[%s10 + $0x38] sm:$0xf] %v6105
  %6146 = vst [vmem:[%s10 + $0x3c] sm:$0xf] %v6106
  %6147 = vst [vmem:[%s10 + $0x40] sm:$0xf] %v6107
  %6148 = vst [vmem:[%s10 + $0x44] sm:$0xf] %v6108
  %6149 = vst [vmem:[%s10 + $0x48] sm:$0xf] %v6109
  %6150 = vst [vmem:[%s10 + $0x4c] sm:$0xf] %v6110
  %v6151 = vld [vmem:[%s1] sm:$0xf]
  %v6152 = vld [vmem:[%s1 + $0x4] sm:$0xf]
  %v6153 = vld [vmem:[%s1 + $0x8] sm:$0xf]
  %v6154 = vld [vmem:[%s1 + $0xc] sm:$0xf]
  %v6155 = vld [vmem:[%s1 + $0x10] sm:$0xf]
  %v6156 = vld [vmem:[%s1 + $0x14] sm:$0xf]
  %v6157 = vld [vmem:[%s1 + $0x18] sm:$0xf]
  %v6158 = vld [vmem:[%s1 + $0x1c] sm:$0xf]
  %v6159 = vld [vmem:[%s1 + $0x20] sm:$0xf]
  %v6160 = vld [vmem:[%s1 + $0x24] sm:$0xf]
  %v6161 = vld [vmem:[%s1 + $0x28] sm:$0xf]
  %v6162 = vld [vmem:[%s1 + $0x2c] sm:$0xf]
  %v6163 = vld [vmem:[%s1 + $0x30] sm:$0xf]
  %v6164 = vld [vmem:[%s1 + $0x34] sm:$0xf]
  %v6165 = vld [vmem:[%s1 + $0x38] sm:$0xf]
  %v6166 = vld [vmem:[%s1 + $0x3c] sm:$0xf]
  %v6167 = vld [vmem:[%s1 + $0x40] sm:$0xf]
  %v6168 = vld [vmem:[%s1 + $0x44] sm:$0xf]
  %v6169 = vld [vmem:[%s1 + $0x48] sm:$0xf]
  %v6170 = vld [vmem:[%s1 + $0x4c] sm:$0xf]
  %v6171 = vld [vmem:[%s1 + $0x50] sm:$0xf]
  %v6172 = vld [vmem:[%s1 + $0x54] sm:$0xf]
  %v6173 = vld [vmem:[%s1 + $0x58] sm:$0xf]
  %v6174 = vld [vmem:[%s1 + $0x5c] sm:$0xf]
  %v6175 = vld [vmem:[%s1 + $0x60] sm:$0xf]
  %v6176 = vld [vmem:[%s1 + $0x64] sm:$0xf]
  %v6177 = vld [vmem:[%s1 + $0x68] sm:$0xf]
  %v6178 = vld [vmem:[%s1 + $0x6c] sm:$0xf]
  %v6179 = vld [vmem:[%s1 + $0x70] sm:$0xf]
  %v6180 = vld [vmem:[%s1 + $0x74] sm:$0xf]
  %v6181 = vld [vmem:[%s1 + $0x78] sm:$0xf]
  %v6182 = vld [vmem:[%s1 + $0x7c] sm:$0xf]
  %v6183 = vld [vmem:[%s1 + $0x80] sm:$0xf]
  %v6184 = vld [vmem:[%s1 + $0x84] sm:$0xf]
  %v6185 = vld [vmem:[%s1 + $0x88] sm:$0xf]
  %v6186 = vld [vmem:[%s1 + $0x8c] sm:$0xf]
  %v6187 = vld [vmem:[%s1 + $0x90] sm:$0xf]
  %v6188 = vld [vmem:[%s1 + $0x94] sm:$0xf]
  %v6189 = vld [vmem:[%s1 + $0x98] sm:$0xf]
  %v6190 = vld [vmem:[%s1 + $0x9c] sm:$0xf]
  %v6191 = vld [vmem:[%s1 + $0xa0] sm:$0xf]
  %v6192 = vld [vmem:[%s1 + $0xa4] sm:$0xf]
  %v6193 = vld [vmem:[%s6] sm:$0xf]
  %v6194 = vld [vmem:[%s6 + $0x4] sm:$0xf]
  %v6195 = vld [vmem:[%s7] sm:$0x1]
  %v6197 = vlaneseq
  %v6198 = vshrl.u32 %v6197, 7
  %v6199 = vsub.s32 0, %v6198
  %v6200 = vrot.slane %v6195, %v6199
  %v6244 = vunpack.c.l.b16 %v6151
  %v6245 = vunpack.c.l.b16 %v6152
  %v6246 = vunpack.c.l.b16 %v6153
  %v6247 = vunpack.c.l.b16 %v6154
  %v6248 = vunpack.c.l.b16 %v6155
  %v6249 = vunpack.c.l.b16 %v6156
  %v6250 = vunpack.c.l.b16 %v6157
  %v6251 = vunpack.c.l.b16 %v6158
  %v6252 = vunpack.c.l.b16 %v6159
  %v6253 = vunpack.c.l.b16 %v6160
  %v6254 = vunpack.c.l.b16 %v6161
  %v6255 = vunpack.c.l.b16 %v6162
  %v6256 = vunpack.c.l.b16 %v6163
  %v6257 = vunpack.c.l.b16 %v6164
  %v6258 = vunpack.c.l.b16 %v6165
  %v6259 = vunpack.c.l.b16 %v6166
  %v6260 = vunpack.c.l.b16 %v6167
  %v6261 = vunpack.c.l.b16 %v6168
  %v6262 = vunpack.c.l.b16 %v6169
  %v6263 = vunpack.c.l.b16 %v6170
  %v6264 = vunpack.c.l.b16 %v6171
  %v6265 = vunpack.c.l.b16 %v6172
  %v6266 = vunpack.c.l.b16 %v6173
  %v6267 = vunpack.c.l.b16 %v6174
  %v6268 = vunpack.c.l.b16 %v6175
  %v6269 = vunpack.c.l.b16 %v6176
  %v6270 = vunpack.c.l.b16 %v6177
  %v6271 = vunpack.c.l.b16 %v6178
  %v6272 = vunpack.c.l.b16 %v6179
  %v6273 = vunpack.c.l.b16 %v6180
  %v6274 = vunpack.c.l.b16 %v6181
  %v6275 = vunpack.c.l.b16 %v6182
  %v6276 = vunpack.c.l.b16 %v6183
  %v6277 = vunpack.c.l.b16 %v6184
  %v6278 = vunpack.c.l.b16 %v6185
  %v6279 = vunpack.c.l.b16 %v6186
  %v6280 = vunpack.c.l.b16 %v6187
  %v6281 = vunpack.c.l.b16 %v6188
  %v6282 = vunpack.c.l.b16 %v6189
  %v6283 = vunpack.c.l.b16 %v6190
  %v6284 = vunpack.c.l.b16 %v6191
  %v6285 = vunpack.c.l.b16 %v6192
  %v6286 = vpack.c.b16 %v6245, %v6244
  %v6287 = vpack.c.b16 %v6247, %v6246
  %v6288 = vpack.c.b16 %v6249, %v6248
  %v6289 = vpack.c.b16 %v6251, %v6250
  %v6290 = vpack.c.b16 %v6253, %v6252
  %v6291 = vpack.c.b16 %v6255, %v6254
  %v6292 = vpack.c.b16 %v6257, %v6256
  %v6293 = vpack.c.b16 %v6259, %v6258
  %v6294 = vpack.c.b16 %v6261, %v6260
  %v6295 = vpack.c.b16 %v6263, %v6262
  %v6296 = vpack.c.b16 %v6265, %v6264
  %v6297 = vpack.c.b16 %v6267, %v6266
  %v6298 = vpack.c.b16 %v6269, %v6268
  %v6299 = vpack.c.b16 %v6271, %v6270
  %v6300 = vpack.c.b16 %v6273, %v6272
  %v6301 = vpack.c.b16 %v6275, %v6274
  %v6302 = vpack.c.b16 %v6277, %v6276
  %v6303 = vpack.c.b16 %v6279, %v6278
  %v6304 = vpack.c.b16 %v6281, %v6280
  %v6305 = vpack.c.b16 %v6283, %v6282
  %v6306 = vpack.c.b16 %v6285, %v6284
  %v6309 = vunpack.c.l.b16 %v6193
  %v6310 = vunpack.c.l.b16 %v6194
  %v6311 = vpack.c.b16 %v6310, %v6309
  %vm6313 = vcmask 130048
  %v6315 = vsel %vm6313, %v6286, 0
  %v6318 = vsel %vm6313, %v6287, 0
  %v6321 = vsel %vm6313, %v6288, 0
  %v6324 = vsel %vm6313, %v6289, 0
  %v6327 = vsel %vm6313, %v6290, 0
  %v6330 = vsel %vm6313, %v6291, 0
  %v6333 = vsel %vm6313, %v6292, 0
  %v6336 = vsel %vm6313, %v6293, 0
  %v6339 = vsel %vm6313, %v6294, 0
  %v6342 = vsel %vm6313, %v6295, 0
  %v6345 = vsel %vm6313, %v6296, 0
  %v6348 = vsel %vm6313, %v6297, 0
  %v6351 = vsel %vm6313, %v6298, 0
  %v6354 = vsel %vm6313, %v6299, 0
  %v6357 = vsel %vm6313, %v6300, 0
  %v6360 = vsel %vm6313, %v6301, 0
  %v6363 = vsel %vm6313, %v6302, 0
  %v6366 = vsel %vm6313, %v6303, 0
  %v6369 = vsel %vm6313, %v6304, 0
  %v6372 = vsel %vm6313, %v6305, 0
  %v6375 = vsel %vm6313, %v6306, 0
  %6377 = vmatprep.subr.bf16.mxu0 0
  %6378 = vmatpush1.bf16.msra.mxu0 %v6311
  %6379 = vmatprep.subr.bf16.mxu0 0
  %6380 = vmatpush1.bf16.msra.mxu0 0
  %6381 = vmatprep.subr.bf16.mxu0 0
  %6382 = vmatpush1.bf16.msra.mxu0 0
  %6383 = vmatprep.subr.bf16.mxu0 0
  %6384 = vmatpush1.bf16.msra.mxu0 0
  %6385 = vmatprep.subr.bf16.mxu0 0
  %6386 = vmatpush1.bf16.msra.mxu0 0
  %6387 = vmatprep.subr.bf16.mxu0 0
  %6388 = vmatpush1.bf16.msra.mxu0 0
  %6389 = vmatprep.subr.bf16.mxu0 0
  %6390 = vmatpush1.bf16.msra.mxu0 0
  %6391 = vmatprep.subr.bf16.mxu0 0
  %6392 = vmatpush1.bf16.msra.mxu0 0
  %6393 = vmatprep.subr.bf16.mxu0 0
  %6394 = vmatpush1.bf16.msra.mxu0 0
  %6395 = vmatprep.subr.bf16.mxu0 0
  %6396 = vmatpush1.bf16.msra.mxu0 0
  %6397 = vmatprep.subr.bf16.mxu0 0
  %6398 = vmatpush1.bf16.msra.mxu0 0
  %6399 = vmatprep.subr.bf16.mxu0 0
  %6400 = vmatpush1.bf16.msra.mxu0 0
  %6401 = vmatprep.subr.bf16.mxu0 0
  %6402 = vmatpush1.bf16.msra.mxu0 0
  %6403 = vmatprep.subr.bf16.mxu0 0
  %6404 = vmatpush1.bf16.msra.mxu0 0
  %6405 = vmatprep.subr.bf16.mxu0 0
  %6406 = vmatpush1.bf16.msra.mxu0 0
  %6407 = vmatprep.subr.bf16.mxu0 0
  %6408 = vmatpush1.bf16.msra.mxu0 0
  %6409 = vmatprep.mubr.bf16.mxu0 0
  %6410 = vmatmul.mubr.bf16.gmra.mrb[0].mxu0 %v6315
  %v6411 = vpop.f32.mrb[0].mxu0
  %v6412 = vadd.f32 %v6200, %v6411
  %v6413 = vpop.f32.mrb[0].mxu0
  %v6414 = vpop.f32.mrb[0].mxu0
  %v6415 = vadd.f32 %v6200, %v6414
  %v6416 = vpop.f32.mrb[0].mxu0
  %6417 = vmatprep.mubr.bf16.mxu0 0
  %6418 = vmatmul.mubr.bf16.gmra.mrb[0].mxu0 %v6318
  %v6419 = vpop.f32.mrb[0].mxu0
  %v6420 = vadd.f32 %v6200, %v6419
  %v6421 = vpop.f32.mrb[0].mxu0
  %v6422 = vpop.f32.mrb[0].mxu0
  %v6423 = vadd.f32 %v6200, %v6422
  %v6424 = vpop.f32.mrb[0].mxu0
  %6425 = vmatprep.mubr.bf16.mxu0 0
  %6426 = vmatmul.mubr.bf16.gmra.mrb[0].mxu0 %v6321
  %v6427 = vpop.f32.mrb[0].mxu0
  %v6428 = vadd.f32 %v6200, %v6427
  %v6429 = vpop.f32.mrb[0].mxu0
  %v6430 = vpop.f32.mrb[0].mxu0
  %v6431 = vadd.f32 %v6200, %v6430
  %v6432 = vpop.f32.mrb[0].mxu0
  %6433 = vmatprep.mubr.bf16.mxu0 0
  %6434 = vmatmul.mubr.bf16.gmra.mrb[0].mxu0 %v6324
  %v6435 = vpop.f32.mrb[0].mxu0
  %v6436 = vadd.f32 %v6200, %v6435
  %v6437 = vpop.f32.mrb[0].mxu0
  %v6438 = vpop.f32.mrb[0].mxu0
  %v6439 = vadd.f32 %v6200, %v6438
  %v6440 = vpop.f32.mrb[0].mxu0
  %6441 = vmatprep.mubr.bf16.mxu0 0
  %6442 = vmatmul.mubr.bf16.gmra.mrb[0].mxu0 %v6327
  %v6443 = vpop.f32.mrb[0].mxu0
  %v6444 = vadd.f32 %v6200, %v6443
  %v6445 = vpop.f32.mrb[0].mxu0
  %v6446 = vpop.f32.mrb[0].mxu0
  %v6447 = vadd.f32 %v6200, %v6446
  %v6448 = vpop.f32.mrb[0].mxu0
  %6449 = vmatprep.mubr.bf16.mxu0 0
  %6450 = vmatmul.mubr.bf16.gmra.mrb[0].mxu0 %v6330
  %v6451 = vpop.f32.mrb[0].mxu0
  %v6452 = vadd.f32 %v6200, %v6451
  %v6453 = vpop.f32.mrb[0].mxu0
  %v6454 = vpop.f32.mrb[0].mxu0
  %v6455 = vadd.f32 %v6200, %v6454
  %v6456 = vpop.f32.mrb[0].mxu0
  %6457 = vmatprep.mubr.bf16.mxu0 0
  %6458 = vmatmul.mubr.bf16.gmra.mrb[0].mxu0 %v6333
  %v6459 = vpop.f32.mrb[0].mxu0
  %v6460 = vadd.f32 %v6200, %v6459
  %v6461 = vpop.f32.mrb[0].mxu0
  %v6462 = vpop.f32.mrb[0].mxu0
  %v6463 = vadd.f32 %v6200, %v6462
  %v6464 = vpop.f32.mrb[0].mxu0
  %6465 = vmatprep.mubr.bf16.mxu0 0
  %6466 = vmatmul.mubr.bf16.gmra.mrb[0].mxu0 %v6336
  %v6467 = vpop.f32.mrb[0].mxu0
  %v6468 = vadd.f32 %v6200, %v6467
  %v6469 = vpop.f32.mrb[0].mxu0
  %v6470 = vpop.f32.mrb[0].mxu0
  %v6471 = vadd.f32 %v6200, %v6470
  %v6472 = vpop.f32.mrb[0].mxu0
  %6473 = vmatprep.mubr.bf16.mxu0 0
  %6474 = vmatmul.mubr.bf16.gmra.mrb[0].mxu0 %v6339
  %v6475 = vpop.f32.mrb[0].mxu0
  %v6476 = vadd.f32 %v6200, %v6475
  %v6477 = vpop.f32.mrb[0].mxu0
  %v6478 = vpop.f32.mrb[0].mxu0
  %v6479 = vadd.f32 %v6200, %v6478
  %v6480 = vpop.f32.mrb[0].mxu0
  %6481 = vmatprep.mubr.bf16.mxu0 0
  %6482 = vmatmul.mubr.bf16.gmra.mrb[0].mxu0 %v6342
  %v6483 = vpop.f32.mrb[0].mxu0
  %v6484 = vadd.f32 %v6200, %v6483
  %v6485 = vpop.f32.mrb[0].mxu0
  %v6486 = vpop.f32.mrb[0].mxu0
  %v6487 = vadd.f32 %v6200, %v6486
  %v6488 = vpop.f32.mrb[0].mxu0
  %6489 = vmatprep.mubr.bf16.mxu0 0
  %6490 = vmatmul.mubr.bf16.gmra.mrb[0].mxu0 %v6345
  %v6491 = vpop.f32.mrb[0].mxu0
  %v6492 = vadd.f32 %v6200, %v6491
  %v6493 = vpop.f32.mrb[0].mxu0
  %v6494 = vpop.f32.mrb[0].mxu0
  %v6495 = vadd.f32 %v6200, %v6494
  %v6496 = vpop.f32.mrb[0].mxu0
  %6497 = vmatprep.mubr.bf16.mxu0 0
  %6498 = vmatmul.mubr.bf16.gmra.mrb[0].mxu0 %v6348
  %v6499 = vpop.f32.mrb[0].mxu0
  %v6500 = vadd.f32 %v6200, %v6499
  %v6501 = vpop.f32.mrb[0].mxu0
  %v6502 = vpop.f32.mrb[0].mxu0
  %v6503 = vadd.f32 %v6200, %v6502
  %v6504 = vpop.f32.mrb[0].mxu0
  %6505 = vmatprep.mubr.bf16.mxu0 0
  %6506 = vmatmul.mubr.bf16.gmra.mrb[0].mxu0 %v6351
  %v6507 = vpop.f32.mrb[0].mxu0
  %v6508 = vadd.f32 %v6200, %v6507
  %v6509 = vpop.f32.mrb[0].mxu0
  %v6510 = vpop.f32.mrb[0].mxu0
  %v6511 = vadd.f32 %v6200, %v6510
  %v6512 = vpop.f32.mrb[0].mxu0
  %6513 = vmatprep.mubr.bf16.mxu0 0
  %6514 = vmatmul.mubr.bf16.gmra.mrb[0].mxu0 %v6354
  %v6515 = vpop.f32.mrb[0].mxu0
  %v6516 = vadd.f32 %v6200, %v6515
  %v6517 = vpop.f32.mrb[0].mxu0
  %v6518 = vpop.f32.mrb[0].mxu0
  %v6519 = vadd.f32 %v6200, %v6518
  %v6520 = vpop.f32.mrb[0].mxu0
  %6521 = vmatprep.mubr.bf16.mxu0 0
  %6522 = vmatmul.mubr.bf16.gmra.mrb[0].mxu0 %v6357
  %v6523 = vpop.f32.mrb[0].mxu0
  %v6524 = vadd.f32 %v6200, %v6523
  %v6525 = vpop.f32.mrb[0].mxu0
  %v6526 = vpop.f32.mrb[0].mxu0
  %v6527 = vadd.f32 %v6200, %v6526
  %v6528 = vpop.f32.mrb[0].mxu0
  %6529 = vmatprep.mubr.bf16.mxu0 0
  %6530 = vmatmul.mubr.bf16.gmra.mrb[0].mxu0 %v6360
  %v6531 = vpop.f32.mrb[0].mxu0
  %v6532 = vadd.f32 %v6200, %v6531
  %v6533 = vpop.f32.mrb[0].mxu0
  %v6534 = vpop.f32.mrb[0].mxu0
  %v6535 = vadd.f32 %v6200, %v6534
  %v6536 = vpop.f32.mrb[0].mxu0
  %6537 = vmatprep.mubr.bf16.mxu0 0
  %6538 = vmatmul.mubr.bf16.gmra.mrb[0].mxu0 %v6363
  %v6539 = vpop.f32.mrb[0].mxu0
  %v6540 = vadd.f32 %v6200, %v6539
  %v6541 = vpop.f32.mrb[0].mxu0
  %v6542 = vpop.f32.mrb[0].mxu0
  %v6543 = vadd.f32 %v6200, %v6542
  %v6544 = vpop.f32.mrb[0].mxu0
  %6545 = vmatprep.mubr.bf16.mxu0 0
  %6546 = vmatmul.mubr.bf16.gmra.mrb[0].mxu0 %v6366
  %v6547 = vpop.f32.mrb[0].mxu0
  %v6548 = vadd.f32 %v6200, %v6547
  %v6549 = vpop.f32.mrb[0].mxu0
  %v6550 = vpop.f32.mrb[0].mxu0
  %v6551 = vadd.f32 %v6200, %v6550
  %v6552 = vpop.f32.mrb[0].mxu0
  %6553 = vmatprep.mubr.bf16.mxu0 0
  %6554 = vmatmul.mubr.bf16.gmra.mrb[0].mxu0 %v6369
  %v6555 = vpop.f32.mrb[0].mxu0
  %v6556 = vadd.f32 %v6200, %v6555
  %v6557 = vpop.f32.mrb[0].mxu0
  %v6558 = vpop.f32.mrb[0].mxu0
  %v6559 = vadd.f32 %v6200, %v6558
  %v6560 = vpop.f32.mrb[0].mxu0
  %6561 = vmatprep.mubr.bf16.mxu0 0
  %6562 = vmatmul.mubr.bf16.gmra.mrb[0].mxu0 %v6372
  %v6563 = vpop.f32.mrb[0].mxu0
  %v6564 = vadd.f32 %v6200, %v6563
  %v6565 = vpop.f32.mrb[0].mxu0
  %v6566 = vpop.f32.mrb[0].mxu0
  %v6567 = vadd.f32 %v6200, %v6566
  %v6568 = vpop.f32.mrb[0].mxu0
  %6569 = vmatprep.mubr.bf16.mxu0 0
  %6570 = vmatmul.mubr.bf16.gmra.mrb[0].mxu0 %v6375
  %v6571 = vpop.f32.mrb[0].mxu0
  %v6572 = vadd.f32 %v6200, %v6571
  %v6573 = vpop.f32.mrb[0].mxu0
  %v6574 = vpop.f32.mrb[0].mxu0
  %v6575 = vadd.f32 %v6200, %v6574
  %v6576 = vpop.f32.mrb[0].mxu0
  %6577 = vdwg.mxu0
  %v6578 = vmax.f32 %v6412, 0.0
  %v6579 = vmax.f32 %v6415, 0.0
  %v6580 = vmax.f32 %v6420, 0.0
  %v6581 = vmax.f32 %v6423, 0.0
  %v6582 = vmax.f32 %v6428, 0.0
  %v6583 = vmax.f32 %v6431, 0.0
  %v6584 = vmax.f32 %v6436, 0.0
  %v6585 = vmax.f32 %v6439, 0.0
  %v6586 = vmax.f32 %v6444, 0.0
  %v6587 = vmax.f32 %v6447, 0.0
  %v6588 = vmax.f32 %v6452, 0.0
  %v6589 = vmax.f32 %v6455, 0.0
  %v6590 = vmax.f32 %v6460, 0.0
  %v6591 = vmax.f32 %v6463, 0.0
  %v6592 = vmax.f32 %v6468, 0.0
  %v6593 = vmax.f32 %v6471, 0.0
  %v6594 = vmax.f32 %v6476, 0.0
  %v6595 = vmax.f32 %v6479, 0.0
  %v6596 = vmax.f32 %v6484, 0.0
  %v6597 = vmax.f32 %v6487, 0.0
  %v6598 = vmax.f32 %v6492, 0.0
  %v6599 = vmax.f32 %v6495, 0.0
  %v6600 = vmax.f32 %v6500, 0.0
  %v6601 = vmax.f32 %v6503, 0.0
  %v6602 = vmax.f32 %v6508, 0.0
  %v6603 = vmax.f32 %v6511, 0.0
  %v6604 = vmax.f32 %v6516, 0.0
  %v6605 = vmax.f32 %v6519, 0.0
  %v6606 = vmax.f32 %v6524, 0.0
  %v6607 = vmax.f32 %v6527, 0.0
  %v6608 = vmax.f32 %v6532, 0.0
  %v6609 = vmax.f32 %v6535, 0.0
  %v6610 = vmax.f32 %v6540, 0.0
  %v6611 = vmax.f32 %v6543, 0.0
  %v6612 = vmax.f32 %v6548, 0.0
  %v6613 = vmax.f32 %v6551, 0.0
  %v6614 = vmax.f32 %v6556, 0.0
  %v6615 = vmax.f32 %v6559, 0.0
  %v6616 = vmax.f32 %v6564, 0.0
  %v6617 = vmax.f32 %v6567, 0.0
  %v6618 = vmax.f32 %v6572, 0.0
  %v6619 = vmax.f32 %v6575, 0.0
  %v6620 = vpack.c.bf16 %v6579, %v6578
  %v6621 = vpack.c.bf16 %v6581, %v6580
  %v6622 = vpack.c.bf16 %v6583, %v6582
  %v6623 = vpack.c.bf16 %v6585, %v6584
  %v6624 = vpack.c.bf16 %v6587, %v6586
  %v6625 = vpack.c.bf16 %v6589, %v6588
  %v6626 = vpack.c.bf16 %v6591, %v6590
  %v6627 = vpack.c.bf16 %v6593, %v6592
  %v6628 = vpack.c.bf16 %v6595, %v6594
  %v6629 = vpack.c.bf16 %v6597, %v6596
  %v6630 = vpack.c.bf16 %v6600, %v6599
  %v6631 = vpack.c.bf16 %v6602, %v6601
  %v6632 = vpack.c.bf16 %v6604, %v6603
  %v6633 = vpack.c.bf16 %v6606, %v6605
  %v6634 = vpack.c.bf16 %v6608, %v6607
  %v6635 = vpack.c.bf16 %v6610, %v6609
  %v6636 = vpack.c.bf16 %v6612, %v6611
  %v6637 = vpack.c.bf16 %v6614, %v6613
  %v6638 = vpack.c.bf16 %v6616, %v6615
  %v6639 = vpack.c.bf16 %v6618, %v6617
  %v6640 = vld [vmem:[%s8] sm:$0xf]
  %v6641 = vld [vmem:[%s8 + $0x4] sm:$0xf]
  %v6642 = vld [vmem:[%s8 + $0x8] sm:$0xf]
  %v6643 = vld [vmem:[%s8 + $0xc] sm:$0xf]
  %v6644 = vld [vmem:[%s8 + $0x10] sm:$0xf]
  %v6645 = vld [vmem:[%s8 + $0x14] sm:$0xf]
  %v6646 = vld [vmem:[%s8 + $0x18] sm:$0xf]
  %v6647 = vld [vmem:[%s8 + $0x1c] sm:$0xf]
  %vm6690 = vcmask 1046528
  %v6691 = vrot.slane %v6578, 1
  %v6692 = vrot.slane %v6579, 1
  %v6693 = vsel %vm6690, %v6691, %v6692
  %v6694 = vrot.slane %v6580, 1
  %v6695 = vsel %vm6690, %v6692, %v6694
  %v6696 = vrot.slane %v6581, 1
  %v6697 = vsel %vm6690, %v6694, %v6696
  %v6698 = vrot.slane %v6582, 1
  %v6699 = vsel %vm6690, %v6696, %v6698
  %v6700 = vrot.slane %v6583, 1
  %v6701 = vsel %vm6690, %v6698, %v6700
  %v6702 = vrot.slane %v6584, 1
  %v6703 = vsel %vm6690, %v6700, %v6702
  %v6704 = vrot.slane %v6585, 1
  %v6705 = vsel %vm6690, %v6702, %v6704
  %v6706 = vrot.slane %v6586, 1
  %v6707 = vsel %vm6690, %v6704, %v6706
  %v6708 = vrot.slane %v6587, 1
  %v6709 = vsel %vm6690, %v6706, %v6708
  %v6710 = vrot.slane %v6588, 1
  %v6711 = vsel %vm6690, %v6708, %v6710
  %v6712 = vrot.slane %v6589, 1
  %v6713 = vsel %vm6690, %v6710, %v6712
  %v6714 = vrot.slane %v6590, 1
  %v6715 = vsel %vm6690, %v6712, %v6714
  %v6716 = vrot.slane %v6591, 1
  %v6717 = vsel %vm6690, %v6714, %v6716
  %v6718 = vrot.slane %v6592, 1
  %v6719 = vsel %vm6690, %v6716, %v6718
  %v6720 = vrot.slane %v6593, 1
  %v6721 = vsel %vm6690, %v6718, %v6720
  %v6722 = vrot.slane %v6594, 1
  %v6723 = vsel %vm6690, %v6720, %v6722
  %v6724 = vrot.slane %v6595, 1
  %v6725 = vsel %vm6690, %v6722, %v6724
  %v6726 = vrot.slane %v6596, 1
  %v6727 = vsel %vm6690, %v6724, %v6726
  %v6728 = vrot.slane %v6597, 1
  %v6729 = vsel %vm6690, %v6726, %v6728
  %v6730 = vrot.slane %v6598, 1
  %v6731 = vsel %vm6690, %v6728, %v6730
  %v6732 = vrot.slane %v6599, 1
  %v6733 = vrot.slane %v6600, 1
  %v6734 = vsel %vm6690, %v6732, %v6733
  %v6735 = vrot.slane %v6601, 1
  %v6736 = vsel %vm6690, %v6733, %v6735
  %v6737 = vrot.slane %v6602, 1
  %v6738 = vsel %vm6690, %v6735, %v6737
  %v6739 = vrot.slane %v6603, 1
  %v6740 = vsel %vm6690, %v6737, %v6739
  %v6741 = vrot.slane %v6604, 1
  %v6742 = vsel %vm6690, %v6739, %v6741
  %v6743 = vrot.slane %v6605, 1
  %v6744 = vsel %vm6690, %v6741, %v6743
  %v6745 = vrot.slane %v6606, 1
  %v6746 = vsel %vm6690, %v6743, %v6745
  %v6747 = vrot.slane %v6607, 1
  %v6748 = vsel %vm6690, %v6745, %v6747
  %v6749 = vrot.slane %v6608, 1
  %v6750 = vsel %vm6690, %v6747, %v6749
  %v6751 = vrot.slane %v6609, 1
  %v6752 = vsel %vm6690, %v6749, %v6751
  %v6753 = vrot.slane %v6610, 1
  %v6754 = vsel %vm6690, %v6751, %v6753
  %v6755 = vrot.slane %v6611, 1
  %v6756 = vsel %vm6690, %v6753, %v6755
  %v6757 = vrot.slane %v6612, 1
  %v6758 = vsel %vm6690, %v6755, %v6757
  %v6759 = vrot.slane %v6613, 1
  %v6760 = vsel %vm6690, %v6757, %v6759
  %v6761 = vrot.slane %v6614, 1
  %v6762 = vsel %vm6690, %v6759, %v6761
  %v6763 = vrot.slane %v6615, 1
  %v6764 = vsel %vm6690, %v6761, %v6763
  %v6765 = vrot.slane %v6616, 1
  %v6766 = vsel %vm6690, %v6763, %v6765
  %v6767 = vrot.slane %v6617, 1
  %v6768 = vsel %vm6690, %v6765, %v6767
  %v6769 = vrot.slane %v6618, 1
  %v6770 = vsel %vm6690, %v6767, %v6769
  %v6771 = vrot.slane %v6619, 1
  %v6772 = vsel %vm6690, %v6769, %v6771
  %v6813 = vpack.c.bf16 %v6695, %v6693
  %v6814 = vpack.c.bf16 %v6699, %v6697
  %v6815 = vpack.c.bf16 %v6703, %v6701
  %v6816 = vpack.c.bf16 %v6707, %v6705
  %v6817 = vpack.c.bf16 %v6711, %v6709
  %v6818 = vpack.c.bf16 %v6715, %v6713
  %v6819 = vpack.c.bf16 %v6719, %v6717
  %v6820 = vpack.c.bf16 %v6723, %v6721
  %v6821 = vpack.c.bf16 %v6727, %v6725
  %v6822 = vpack.c.bf16 %v6731, %v6729
  %v6823 = vpack.c.bf16 %v6736, %v6734
  %v6824 = vpack.c.bf16 %v6740, %v6738
  %v6825 = vpack.c.bf16 %v6744, %v6742
  %v6826 = vpack.c.bf16 %v6748, %v6746
  %v6827 = vpack.c.bf16 %v6752, %v6750
  %v6828 = vpack.c.bf16 %v6756, %v6754
  %v6829 = vpack.c.bf16 %v6760, %v6758
  %v6830 = vpack.c.bf16 %v6764, %v6762
  %v6831 = vpack.c.bf16 %v6768, %v6766
  %v6832 = vpack.c.bf16 %v6772, %v6770
  %s6833 = scalar_lea.vmem %s8, 32
  %v6834 = vld [vmem:[%s6833] sm:$0xf]
  %v6835 = vld [vmem:[%s6833 + $0x4] sm:$0xf]
  %v6836 = vld [vmem:[%s6833 + $0x8] sm:$0xf]
  %v6837 = vld [vmem:[%s6833 + $0xc] sm:$0xf]
  %v6838 = vld [vmem:[%s6833 + $0x10] sm:$0xf]
  %v6839 = vld [vmem:[%s6833 + $0x14] sm:$0xf]
  %v6840 = vld [vmem:[%s6833 + $0x18] sm:$0xf]
  %v6841 = vld [vmem:[%s6833 + $0x1c] sm:$0xf]
  %v6850 = vunpack.c.l.b16 %v6834
  %v6851 = vunpack.c.l.b16 %v6835
  %v6852 = vunpack.c.l.b16 %v6836
  %v6853 = vunpack.c.l.b16 %v6837
  %v6854 = vunpack.c.l.b16 %v6838
  %v6855 = vunpack.c.l.b16 %v6839
  %v6856 = vunpack.c.l.b16 %v6840
  %v6857 = vunpack.c.l.b16 %v6841
  %v6858 = vpack.c.b16 %v6851, %v6850
  %v6859 = vpack.c.b16 %v6853, %v6852
  %v6860 = vpack.c.b16 %v6855, %v6854
  %v6861 = vpack.c.b16 %v6857, %v6856
  %vm6866 = vcmask 523264
  %v6868 = vsel %vm6866, %v6813, 0
  %v6871 = vsel %vm6866, %v6814, 0
  %v6874 = vsel %vm6866, %v6815, 0
  %v6877 = vsel %vm6866, %v6816, 0
  %v6880 = vsel %vm6866, %v6817, 0
  %v6883 = vsel %vm6866, %v6818, 0
  %v6886 = vsel %vm6866, %v6819, 0
  %v6889 = vsel %vm6866, %v6820, 0
  %v6892 = vsel %vm6866, %v6821, 0
  %v6895 = vsel %vm6866, %v6822, 0
  %v6898 = vsel %vm6866, %v6823, 0
  %v6901 = vsel %vm6866, %v6824, 0
  %v6904 = vsel %vm6866, %v6825, 0
  %v6907 = vsel %vm6866, %v6826, 0
  %v6910 = vsel %vm6866, %v6827, 0
  %v6913 = vsel %vm6866, %v6828, 0
  %v6916 = vsel %vm6866, %v6829, 0
  %v6919 = vsel %vm6866, %v6830, 0
  %v6922 = vsel %vm6866, %v6831, 0
  %v6925 = vsel %vm6866, %v6832, 0
  %6927 = vmatprep.subr.bf16.mxu0 0
  %6928 = vmatpush1.bf16.msra.mxu0 %v6858
  %6929 = vmatprep.subr.bf16.mxu0 0
  %6930 = vmatpush1.bf16.msra.mxu0 %v6859
  %6931 = vmatprep.subr.bf16.mxu0 0
  %6932 = vmatpush1.bf16.msra.mxu0 %v6860
  %6933 = vmatprep.subr.bf16.mxu0 0
  %6934 = vmatpush1.bf16.msra.mxu0 %v6861
  %6935 = vmatprep.subr.bf16.mxu0 0
  %6936 = vmatpush1.bf16.msra.mxu0 0
  %6937 = vmatprep.subr.bf16.mxu0 0
  %6938 = vmatpush1.bf16.msra.mxu0 0
  %6939 = vmatprep.subr.bf16.mxu0 0
  %6940 = vmatpush1.bf16.msra.mxu0 0
  %6941 = vmatprep.subr.bf16.mxu0 0
  %6942 = vmatpush1.bf16.msra.mxu0 0
  %6943 = vmatprep.subr.bf16.mxu0 0
  %6944 = vmatpush1.bf16.msra.mxu0 0
  %6945 = vmatprep.subr.bf16.mxu0 0
  %6946 = vmatpush1.bf16.msra.mxu0 0
  %6947 = vmatprep.subr.bf16.mxu0 0
  %6948 = vmatpush1.bf16.msra.mxu0 0
  %6949 = vmatprep.subr.bf16.mxu0 0
  %6950 = vmatpush1.bf16.msra.mxu0 0
  %6951 = vmatprep.subr.bf16.mxu0 0
  %6952 = vmatpush1.bf16.msra.mxu0 0
  %6953 = vmatprep.subr.bf16.mxu0 0
  %6954 = vmatpush1.bf16.msra.mxu0 0
  %6955 = vmatprep.subr.bf16.mxu0 0
  %6956 = vmatpush1.bf16.msra.mxu0 0
  %6957 = vmatprep.subr.bf16.mxu0 0
  %6958 = vmatpush1.bf16.msra.mxu0 0
  %6959 = vmatprep.mubr.bf16.mxu0 0
  %6960 = vmatmul.mubr.bf16.gmra.mrb[0].mxu0 %v6868
  %v6961 = vpop.f32.mrb[0].mxu0
  %v6962 = vadd.f32 0.0, %v6961
  %v6963 = vpop.f32.mrb[0].mxu0
  %v6964 = vpop.f32.mrb[0].mxu0
  %v6965 = vadd.f32 0.0, %v6964
  %v6966 = vpop.f32.mrb[0].mxu0
  %6967 = vmatprep.mubr.bf16.mxu0 0
  %6968 = vmatmul.mubr.bf16.gmra.mrb[0].mxu0 %v6871
  %v6969 = vpop.f32.mrb[0].mxu0
  %v6970 = vadd.f32 0.0, %v6969
  %v6971 = vpop.f32.mrb[0].mxu0
  %v6972 = vpop.f32.mrb[0].mxu0
  %v6973 = vadd.f32 0.0, %v6972
  %v6974 = vpop.f32.mrb[0].mxu0
  %6975 = vmatprep.mubr.bf16.mxu0 0
  %6976 = vmatmul.mubr.bf16.gmra.mrb[0].mxu0 %v6874
  %v6977 = vpop.f32.mrb[0].mxu0
  %v6978 = vadd.f32 0.0, %v6977
  %v6979 = vpop.f32.mrb[0].mxu0
  %v6980 = vpop.f32.mrb[0].mxu0
  %v6981 = vadd.f32 0.0, %v6980
  %v6982 = vpop.f32.mrb[0].mxu0
  %6983 = vmatprep.mubr.bf16.mxu0 0
  %6984 = vmatmul.mubr.bf16.gmra.mrb[0].mxu0 %v6877
  %v6985 = vpop.f32.mrb[0].mxu0
  %v6986 = vadd.f32 0.0, %v6985
  %v6987 = vpop.f32.mrb[0].mxu0
  %v6988 = vpop.f32.mrb[0].mxu0
  %v6989 = vadd.f32 0.0, %v6988
  %v6990 = vpop.f32.mrb[0].mxu0
  %6991 = vmatprep.mubr.bf16.mxu0 0
  %6992 = vmatmul.mubr.bf16.gmra.mrb[0].mxu0 %v6880
  %v6993 = vpop.f32.mrb[0].mxu0
  %v6994 = vadd.f32 0.0, %v6993
  %v6995 = vpop.f32.mrb[0].mxu0
  %v6996 = vpop.f32.mrb[0].mxu0
  %v6997 = vadd.f32 0.0, %v6996
  %v6998 = vpop.f32.mrb[0].mxu0
  %6999 = vmatprep.mubr.bf16.mxu0 0
  %7000 = vmatmul.mubr.bf16.gmra.mrb[0].mxu0 %v6883
  %v7001 = vpop.f32.mrb[0].mxu0
  %v7002 = vadd.f32 0.0, %v7001
  %v7003 = vpop.f32.mrb[0].mxu0
  %v7004 = vpop.f32.mrb[0].mxu0
  %v7005 = vadd.f32 0.0, %v7004
  %v7006 = vpop.f32.mrb[0].mxu0
  %7007 = vmatprep.mubr.bf16.mxu0 0
  %7008 = vmatmul.mubr.bf16.gmra.mrb[0].mxu0 %v6886
  %v7009 = vpop.f32.mrb[0].mxu0
  %v7010 = vadd.f32 0.0, %v7009
  %v7011 = vpop.f32.mrb[0].mxu0
  %v7012 = vpop.f32.mrb[0].mxu0
  %v7013 = vadd.f32 0.0, %v7012
  %v7014 = vpop.f32.mrb[0].mxu0
  %7015 = vmatprep.mubr.bf16.mxu0 0
  %7016 = vmatmul.mubr.bf16.gmra.mrb[0].mxu0 %v6889
  %v7017 = vpop.f32.mrb[0].mxu0
  %v7018 = vadd.f32 0.0, %v7017
  %v7019 = vpop.f32.mrb[0].mxu0
  %v7020 = vpop.f32.mrb[0].mxu0
  %v7021 = vadd.f32 0.0, %v7020
  %v7022 = vpop.f32.mrb[0].mxu0
  %7023 = vmatprep.mubr.bf16.mxu0 0
  %7024 = vmatmul.mubr.bf16.gmra.mrb[0].mxu0 %v6892
  %v7025 = vpop.f32.mrb[0].mxu0
  %v7026 = vadd.f32 0.0, %v7025
  %v7027 = vpop.f32.mrb[0].mxu0
  %v7028 = vpop.f32.mrb[0].mxu0
  %v7029 = vadd.f32 0.0, %v7028
  %v7030 = vpop.f32.mrb[0].mxu0
  %7031 = vmatprep.mubr.bf16.mxu0 0
  %7032 = vmatmul.mubr.bf16.gmra.mrb[0].mxu0 %v6895
  %v7033 = vpop.f32.mrb[0].mxu0
  %v7034 = vadd.f32 0.0, %v7033
  %v7035 = vpop.f32.mrb[0].mxu0
  %v7036 = vpop.f32.mrb[0].mxu0
  %v7037 = vadd.f32 0.0, %v7036
  %v7038 = vpop.f32.mrb[0].mxu0
  %7039 = vmatprep.mubr.bf16.mxu0 0
  %7040 = vmatmul.mubr.bf16.gmra.mrb[0].mxu0 %v6898
  %v7041 = vpop.f32.mrb[0].mxu0
  %v7042 = vadd.f32 0.0, %v7041
  %v7043 = vpop.f32.mrb[0].mxu0
  %v7044 = vpop.f32.mrb[0].mxu0
  %v7045 = vadd.f32 0.0, %v7044
  %v7046 = vpop.f32.mrb[0].mxu0
  %7047 = vmatprep.mubr.bf16.mxu0 0
  %7048 = vmatmul.mubr.bf16.gmra.mrb[0].mxu0 %v6901
  %v7049 = vpop.f32.mrb[0].mxu0
  %v7050 = vadd.f32 0.0, %v7049
  %v7051 = vpop.f32.mrb[0].mxu0
  %v7052 = vpop.f32.mrb[0].mxu0
  %v7053 = vadd.f32 0.0, %v7052
  %v7054 = vpop.f32.mrb[0].mxu0
  %7055 = vmatprep.mubr.bf16.mxu0 0
  %7056 = vmatmul.mubr.bf16.gmra.mrb[0].mxu0 %v6904
  %v7057 = vpop.f32.mrb[0].mxu0
  %v7058 = vadd.f32 0.0, %v7057
  %v7059 = vpop.f32.mrb[0].mxu0
  %v7060 = vpop.f32.mrb[0].mxu0
  %v7061 = vadd.f32 0.0, %v7060
  %v7062 = vpop.f32.mrb[0].mxu0
  %7063 = vmatprep.mubr.bf16.mxu0 0
  %7064 = vmatmul.mubr.bf16.gmra.mrb[0].mxu0 %v6907
  %v7065 = vpop.f32.mrb[0].mxu0
  %v7066 = vadd.f32 0.0, %v7065
  %v7067 = vpop.f32.mrb[0].mxu0
  %v7068 = vpop.f32.mrb[0].mxu0
  %v7069 = vadd.f32 0.0, %v7068
  %v7070 = vpop.f32.mrb[0].mxu0
  %7071 = vmatprep.mubr.bf16.mxu0 0
  %7072 = vmatmul.mubr.bf16.gmra.mrb[0].mxu0 %v6910
  %v7073 = vpop.f32.mrb[0].mxu0
  %v7074 = vadd.f32 0.0, %v7073
  %v7075 = vpop.f32.mrb[0].mxu0
  %v7076 = vpop.f32.mrb[0].mxu0
  %v7077 = vadd.f32 0.0, %v7076
  %v7078 = vpop.f32.mrb[0].mxu0
  %7079 = vmatprep.mubr.bf16.mxu0 0
  %7080 = vmatmul.mubr.bf16.gmra.mrb[0].mxu0 %v6913
  %v7081 = vpop.f32.mrb[0].mxu0
  %v7082 = vadd.f32 0.0, %v7081
  %v7083 = vpop.f32.mrb[0].mxu0
  %v7084 = vpop.f32.mrb[0].mxu0
  %v7085 = vadd.f32 0.0, %v7084
  %v7086 = vpop.f32.mrb[0].mxu0
  %7087 = vmatprep.mubr.bf16.mxu0 0
  %7088 = vmatmul.mubr.bf16.gmra.mrb[0].mxu0 %v6916
  %v7089 = vpop.f32.mrb[0].mxu0
  %v7090 = vadd.f32 0.0, %v7089
  %v7091 = vpop.f32.mrb[0].mxu0
  %v7092 = vpop.f32.mrb[0].mxu0
  %v7093 = vadd.f32 0.0, %v7092
  %v7094 = vpop.f32.mrb[0].mxu0
  %7095 = vmatprep.mubr.bf16.mxu0 0
  %7096 = vmatmul.mubr.bf16.gmra.mrb[0].mxu0 %v6919
  %v7097 = vpop.f32.mrb[0].mxu0
  %v7098 = vadd.f32 0.0, %v7097
  %v7099 = vpop.f32.mrb[0].mxu0
  %v7100 = vpop.f32.mrb[0].mxu0
  %v7101 = vadd.f32 0.0, %v7100
  %v7102 = vpop.f32.mrb[0].mxu0
  %7103 = vmatprep.mubr.bf16.mxu0 0
  %7104 = vmatmul.mubr.bf16.gmra.mrb[0].mxu0 %v6922
  %v7105 = vpop.f32.mrb[0].mxu0
  %v7106 = vadd.f32 0.0, %v7105
  %v7107 = vpop.f32.mrb[0].mxu0
  %v7108 = vpop.f32.mrb[0].mxu0
  %v7109 = vadd.f32 0.0, %v7108
  %v7110 = vpop.f32.mrb[0].mxu0
  %7111 = vmatprep.mubr.bf16.mxu0 0
  %7112 = vmatmul.mubr.bf16.gmra.mrb[0].mxu0 %v6925
  %v7113 = vpop.f32.mrb[0].mxu0
  %v7114 = vadd.f32 0.0, %v7113
  %v7115 = vpop.f32.mrb[0].mxu0
  %v7116 = vpop.f32.mrb[0].mxu0
  %v7117 = vadd.f32 0.0, %v7116
  %v7118 = vpop.f32.mrb[0].mxu0
  %7119 = vdwg.mxu0
  %v7128 = vunpack.c.l.b16 %v6640
  %v7129 = vunpack.c.l.b16 %v6641
  %v7130 = vunpack.c.l.b16 %v6642
  %v7131 = vunpack.c.l.b16 %v6643
  %v7132 = vunpack.c.l.b16 %v6644
  %v7133 = vunpack.c.l.b16 %v6645
  %v7134 = vunpack.c.l.b16 %v6646
  %v7135 = vunpack.c.l.b16 %v6647
  %v7136 = vpack.c.b16 %v7129, %v7128
  %v7137 = vpack.c.b16 %v7131, %v7130
  %v7138 = vpack.c.b16 %v7133, %v7132
  %v7139 = vpack.c.b16 %v7135, %v7134
  %v7145 = vsel %vm6866, %v6620, 0
  %v7148 = vsel %vm6866, %v6621, 0
  %v7151 = vsel %vm6866, %v6622, 0
  %v7154 = vsel %vm6866, %v6623, 0
  %v7157 = vsel %vm6866, %v6624, 0
  %v7160 = vsel %vm6866, %v6625, 0
  %v7163 = vsel %vm6866, %v6626, 0
  %v7166 = vsel %vm6866, %v6627, 0
  %v7169 = vsel %vm6866, %v6628, 0
  %v7172 = vsel %vm6866, %v6629, 0
  %v7175 = vsel %vm6866, %v6630, 0
  %v7178 = vsel %vm6866, %v6631, 0
  %v7181 = vsel %vm6866, %v6632, 0
  %v7184 = vsel %vm6866, %v6633, 0
  %v7187 = vsel %vm6866, %v6634, 0
  %v7190 = vsel %vm6866, %v6635, 0
  %v7193 = vsel %vm6866, %v6636, 0
  %v7196 = vsel %vm6866, %v6637, 0
  %v7199 = vsel %vm6866, %v6638, 0
  %v7202 = vsel %vm6866, %v6639, 0
  %7204 = vmatprep.subr.bf16.mxu0 0
  %7205 = vmatpush1.bf16.msra.mxu0 %v7136
  %7206 = vmatprep.subr.bf16.mxu0 0
  %7207 = vmatpush1.bf16.msra.mxu0 %v7137
  %7208 = vmatprep.subr.bf16.mxu0 0
  %7209 = vmatpush1.bf16.msra.mxu0 %v7138
  %7210 = vmatprep.subr.bf16.mxu0 0
  %7211 = vmatpush1.bf16.msra.mxu0 %v7139
  %7212 = vmatprep.subr.bf16.mxu0 0
  %7213 = vmatpush1.bf16.msra.mxu0 0
  %7214 = vmatprep.subr.bf16.mxu0 0
  %7215 = vmatpush1.bf16.msra.mxu0 0
  %7216 = vmatprep.subr.bf16.mxu0 0
  %7217 = vmatpush1.bf16.msra.mxu0 0
  %7218 = vmatprep.subr.bf16.mxu0 0
  %7219 = vmatpush1.bf16.msra.mxu0 0
  %7220 = vmatprep.subr.bf16.mxu0 0
  %7221 = vmatpush1.bf16.msra.mxu0 0
  %7222 = vmatprep.subr.bf16.mxu0 0
  %7223 = vmatpush1.bf16.msra.mxu0 0
  %7224 = vmatprep.subr.bf16.mxu0 0
  %7225 = vmatpush1.bf16.msra.mxu0 0
  %7226 = vmatprep.subr.bf16.mxu0 0
  %7227 = vmatpush1.bf16.msra.mxu0 0
  %7228 = vmatprep.subr.bf16.mxu0 0
  %7229 = vmatpush1.bf16.msra.mxu0 0
  %7230 = vmatprep.subr.bf16.mxu0 0
  %7231 = vmatpush1.bf16.msra.mxu0 0
  %7232 = vmatprep.subr.bf16.mxu0 0
  %7233 = vmatpush1.bf16.msra.mxu0 0
  %7234 = vmatprep.subr.bf16.mxu0 0
  %7235 = vmatpush1.bf16.msra.mxu0 0
  %7236 = vmatprep.mubr.bf16.mxu0 0
  %7237 = vmatmul.mubr.bf16.gmra.mrb[0].mxu0 %v7145
  %v7238 = vpop.f32.mrb[0].mxu0
  %v7239 = vadd.f32 %v6962, %v7238
  %v7240 = vpop.f32.mrb[0].mxu0
  %v7241 = vpop.f32.mrb[0].mxu0
  %v7242 = vadd.f32 %v6965, %v7241
  %v7243 = vpop.f32.mrb[0].mxu0
  %7244 = vmatprep.mubr.bf16.mxu0 0
  %7245 = vmatmul.mubr.bf16.gmra.mrb[0].mxu0 %v7148
  %v7246 = vpop.f32.mrb[0].mxu0
  %v7247 = vadd.f32 %v6970, %v7246
  %v7248 = vpop.f32.mrb[0].mxu0
  %v7249 = vpop.f32.mrb[0].mxu0
  %v7250 = vadd.f32 %v6973, %v7249
  %v7251 = vpop.f32.mrb[0].mxu0
  %7252 = vmatprep.mubr.bf16.mxu0 0
  %7253 = vmatmul.mubr.bf16.gmra.mrb[0].mxu0 %v7151
  %v7254 = vpop.f32.mrb[0].mxu0
  %v7255 = vadd.f32 %v6978, %v7254
  %v7256 = vpop.f32.mrb[0].mxu0
  %v7257 = vpop.f32.mrb[0].mxu0
  %v7258 = vadd.f32 %v6981, %v7257
  %v7259 = vpop.f32.mrb[0].mxu0
  %7260 = vmatprep.mubr.bf16.mxu0 0
  %7261 = vmatmul.mubr.bf16.gmra.mrb[0].mxu0 %v7154
  %v7262 = vpop.f32.mrb[0].mxu0
  %v7263 = vadd.f32 %v6986, %v7262
  %v7264 = vpop.f32.mrb[0].mxu0
  %v7265 = vpop.f32.mrb[0].mxu0
  %v7266 = vadd.f32 %v6989, %v7265
  %v7267 = vpop.f32.mrb[0].mxu0
  %7268 = vmatprep.mubr.bf16.mxu0 0
  %7269 = vmatmul.mubr.bf16.gmra.mrb[0].mxu0 %v7157
  %v7270 = vpop.f32.mrb[0].mxu0
  %v7271 = vadd.f32 %v6994, %v7270
  %v7272 = vpop.f32.mrb[0].mxu0
  %v7273 = vpop.f32.mrb[0].mxu0
  %v7274 = vadd.f32 %v6997, %v7273
  %v7275 = vpop.f32.mrb[0].mxu0
  %7276 = vmatprep.mubr.bf16.mxu0 0
  %7277 = vmatmul.mubr.bf16.gmra.mrb[0].mxu0 %v7160
  %v7278 = vpop.f32.mrb[0].mxu0
  %v7279 = vadd.f32 %v7002, %v7278
  %v7280 = vpop.f32.mrb[0].mxu0
  %v7281 = vpop.f32.mrb[0].mxu0
  %v7282 = vadd.f32 %v7005, %v7281
  %v7283 = vpop.f32.mrb[0].mxu0
  %7284 = vmatprep.mubr.bf16.mxu0 0
  %7285 = vmatmul.mubr.bf16.gmra.mrb[0].mxu0 %v7163
  %v7286 = vpop.f32.mrb[0].mxu0
  %v7287 = vadd.f32 %v7010, %v7286
  %v7288 = vpop.f32.mrb[0].mxu0
  %v7289 = vpop.f32.mrb[0].mxu0
  %v7290 = vadd.f32 %v7013, %v7289
  %v7291 = vpop.f32.mrb[0].mxu0
  %7292 = vmatprep.mubr.bf16.mxu0 0
  %7293 = vmatmul.mubr.bf16.gmra.mrb[0].mxu0 %v7166
  %v7294 = vpop.f32.mrb[0].mxu0
  %v7295 = vadd.f32 %v7018, %v7294
  %v7296 = vpop.f32.mrb[0].mxu0
  %v7297 = vpop.f32.mrb[0].mxu0
  %v7298 = vadd.f32 %v7021, %v7297
  %v7299 = vpop.f32.mrb[0].mxu0
  %7300 = vmatprep.mubr.bf16.mxu0 0
  %7301 = vmatmul.mubr.bf16.gmra.mrb[0].mxu0 %v7169
  %v7302 = vpop.f32.mrb[0].mxu0
  %v7303 = vadd.f32 %v7026, %v7302
  %v7304 = vpop.f32.mrb[0].mxu0
  %v7305 = vpop.f32.mrb[0].mxu0
  %v7306 = vadd.f32 %v7029, %v7305
  %v7307 = vpop.f32.mrb[0].mxu0
  %7308 = vmatprep.mubr.bf16.mxu0 0
  %7309 = vmatmul.mubr.bf16.gmra.mrb[0].mxu0 %v7172
  %v7310 = vpop.f32.mrb[0].mxu0
  %v7311 = vadd.f32 %v7034, %v7310
  %v7312 = vpop.f32.mrb[0].mxu0
  %v7313 = vpop.f32.mrb[0].mxu0
  %v7314 = vadd.f32 %v7037, %v7313
  %v7315 = vpop.f32.mrb[0].mxu0
  %7316 = vmatprep.mubr.bf16.mxu0 0
  %7317 = vmatmul.mubr.bf16.gmra.mrb[0].mxu0 %v7175
  %v7318 = vpop.f32.mrb[0].mxu0
  %v7319 = vadd.f32 %v7042, %v7318
  %v7320 = vpop.f32.mrb[0].mxu0
  %v7321 = vpop.f32.mrb[0].mxu0
  %v7322 = vadd.f32 %v7045, %v7321
  %v7323 = vpop.f32.mrb[0].mxu0
  %7324 = vmatprep.mubr.bf16.mxu0 0
  %7325 = vmatmul.mubr.bf16.gmra.mrb[0].mxu0 %v7178
  %v7326 = vpop.f32.mrb[0].mxu0
  %v7327 = vadd.f32 %v7050, %v7326
  %v7328 = vpop.f32.mrb[0].mxu0
  %v7329 = vpop.f32.mrb[0].mxu0
  %v7330 = vadd.f32 %v7053, %v7329
  %v7331 = vpop.f32.mrb[0].mxu0
  %7332 = vmatprep.mubr.bf16.mxu0 0
  %7333 = vmatmul.mubr.bf16.gmra.mrb[0].mxu0 %v7181
  %v7334 = vpop.f32.mrb[0].mxu0
  %v7335 = vadd.f32 %v7058, %v7334
  %v7336 = vpop.f32.mrb[0].mxu0
  %v7337 = vpop.f32.mrb[0].mxu0
  %v7338 = vadd.f32 %v7061, %v7337
  %v7339 = vpop.f32.mrb[0].mxu0
  %7340 = vmatprep.mubr.bf16.mxu0 0
  %7341 = vmatmul.mubr.bf16.gmra.mrb[0].mxu0 %v7184
  %v7342 = vpop.f32.mrb[0].mxu0
  %v7343 = vadd.f32 %v7066, %v7342
  %v7344 = vpop.f32.mrb[0].mxu0
  %v7345 = vpop.f32.mrb[0].mxu0
  %v7346 = vadd.f32 %v7069, %v7345
  %v7347 = vpop.f32.mrb[0].mxu0
  %7348 = vmatprep.mubr.bf16.mxu0 0
  %7349 = vmatmul.mubr.bf16.gmra.mrb[0].mxu0 %v7187
  %v7350 = vpop.f32.mrb[0].mxu0
  %v7351 = vadd.f32 %v7074, %v7350
  %v7352 = vpop.f32.mrb[0].mxu0
  %v7353 = vpop.f32.mrb[0].mxu0
  %v7354 = vadd.f32 %v7077, %v7353
  %v7355 = vpop.f32.mrb[0].mxu0
  %7356 = vmatprep.mubr.bf16.mxu0 0
  %7357 = vmatmul.mubr.bf16.gmra.mrb[0].mxu0 %v7190
  %v7358 = vpop.f32.mrb[0].mxu0
  %v7359 = vadd.f32 %v7082, %v7358
  %v7360 = vpop.f32.mrb[0].mxu0
  %v7361 = vpop.f32.mrb[0].mxu0
  %v7362 = vadd.f32 %v7085, %v7361
  %v7363 = vpop.f32.mrb[0].mxu0
  %7364 = vmatprep.mubr.bf16.mxu0 0
  %7365 = vmatmul.mubr.bf16.gmra.mrb[0].mxu0 %v7193
  %v7366 = vpop.f32.mrb[0].mxu0
  %v7367 = vadd.f32 %v7090, %v7366
  %v7368 = vpop.f32.mrb[0].mxu0
  %v7369 = vpop.f32.mrb[0].mxu0
  %v7370 = vadd.f32 %v7093, %v7369
  %v7371 = vpop.f32.mrb[0].mxu0
  %7372 = vmatprep.mubr.bf16.mxu0 0
  %7373 = vmatmul.mubr.bf16.gmra.mrb[0].mxu0 %v7196
  %v7374 = vpop.f32.mrb[0].mxu0
  %v7375 = vadd.f32 %v7098, %v7374
  %v7376 = vpop.f32.mrb[0].mxu0
  %v7377 = vpop.f32.mrb[0].mxu0
  %v7378 = vadd.f32 %v7101, %v7377
  %v7379 = vpop.f32.mrb[0].mxu0
  %7380 = vmatprep.mubr.bf16.mxu0 0
  %7381 = vmatmul.mubr.bf16.gmra.mrb[0].mxu0 %v7199
  %v7382 = vpop.f32.mrb[0].mxu0
  %v7383 = vadd.f32 %v7106, %v7382
  %v7384 = vpop.f32.mrb[0].mxu0
  %v7385 = vpop.f32.mrb[0].mxu0
  %v7386 = vadd.f32 %v7109, %v7385
  %v7387 = vpop.f32.mrb[0].mxu0
  %7388 = vmatprep.mubr.bf16.mxu0 0
  %7389 = vmatmul.mubr.bf16.gmra.mrb[0].mxu0 %v7202
  %v7390 = vpop.f32.mrb[0].mxu0
  %v7391 = vadd.f32 %v7114, %v7390
  %v7392 = vpop.f32.mrb[0].mxu0
  %v7393 = vpop.f32.mrb[0].mxu0
  %v7394 = vadd.f32 %v7117, %v7393
  %v7395 = vpop.f32.mrb[0].mxu0
  %7396 = vdwg.mxu0
  %vm7397 = vcmask 1045504
  %v7398 = vrot.slane %v6578, 2
  %v7399 = vrot.slane %v6579, 2
  %v7400 = vsel %vm7397, %v7398, %v7399
  %v7401 = vrot.slane %v6580, 2
  %v7402 = vsel %vm7397, %v7399, %v7401
  %v7403 = vrot.slane %v6581, 2
  %v7404 = vsel %vm7397, %v7401, %v7403
  %v7405 = vrot.slane %v6582, 2
  %v7406 = vsel %vm7397, %v7403, %v7405
  %v7407 = vrot.slane %v6583, 2
  %v7408 = vsel %vm7397, %v7405, %v7407
  %v7409 = vrot.slane %v6584, 2
  %v7410 = vsel %vm7397, %v7407, %v7409
  %v7411 = vrot.slane %v6585, 2
  %v7412 = vsel %vm7397, %v7409, %v7411
  %v7413 = vrot.slane %v6586, 2
  %v7414 = vsel %vm7397, %v7411, %v7413
  %v7415 = vrot.slane %v6587, 2
  %v7416 = vsel %vm7397, %v7413, %v7415
  %v7417 = vrot.slane %v6588, 2
  %v7418 = vsel %vm7397, %v7415, %v7417
  %v7419 = vrot.slane %v6589, 2
  %v7420 = vsel %vm7397, %v7417, %v7419
  %v7421 = vrot.slane %v6590, 2
  %v7422 = vsel %vm7397, %v7419, %v7421
  %v7423 = vrot.slane %v6591, 2
  %v7424 = vsel %vm7397, %v7421, %v7423
  %v7425 = vrot.slane %v6592, 2
  %v7426 = vsel %vm7397, %v7423, %v7425
  %v7427 = vrot.slane %v6593, 2
  %v7428 = vsel %vm7397, %v7425, %v7427
  %v7429 = vrot.slane %v6594, 2
  %v7430 = vsel %vm7397, %v7427, %v7429
  %v7431 = vrot.slane %v6595, 2
  %v7432 = vsel %vm7397, %v7429, %v7431
  %v7433 = vrot.slane %v6596, 2
  %v7434 = vsel %vm7397, %v7431, %v7433
  %v7435 = vrot.slane %v6597, 2
  %v7436 = vsel %vm7397, %v7433, %v7435
  %v7437 = vrot.slane %v6598, 2
  %v7438 = vsel %vm7397, %v7435, %v7437
  %v7439 = vrot.slane %v6599, 2
  %v7440 = vrot.slane %v6600, 2
  %v7441 = vsel %vm7397, %v7439, %v7440
  %v7442 = vrot.slane %v6601, 2
  %v7443 = vsel %vm7397, %v7440, %v7442
  %v7444 = vrot.slane %v6602, 2
  %v7445 = vsel %vm7397, %v7442, %v7444
  %v7446 = vrot.slane %v6603, 2
  %v7447 = vsel %vm7397, %v7444, %v7446
  %v7448 = vrot.slane %v6604, 2
  %v7449 = vsel %vm7397, %v7446, %v7448
  %v7450 = vrot.slane %v6605, 2
  %v7451 = vsel %vm7397, %v7448, %v7450
  %v7452 = vrot.slane %v6606, 2
  %v7453 = vsel %vm7397, %v7450, %v7452
  %v7454 = vrot.slane %v6607, 2
  %v7455 = vsel %vm7397, %v7452, %v7454
  %v7456 = vrot.slane %v6608, 2
  %v7457 = vsel %vm7397, %v7454, %v7456
  %v7458 = vrot.slane %v6609, 2
  %v7459 = vsel %vm7397, %v7456, %v7458
  %v7460 = vrot.slane %v6610, 2
  %v7461 = vsel %vm7397, %v7458, %v7460
  %v7462 = vrot.slane %v6611, 2
  %v7463 = vsel %vm7397, %v7460, %v7462
  %v7464 = vrot.slane %v6612, 2
  %v7465 = vsel %vm7397, %v7462, %v7464
  %v7466 = vrot.slane %v6613, 2
  %v7467 = vsel %vm7397, %v7464, %v7466
  %v7468 = vrot.slane %v6614, 2
  %v7469 = vsel %vm7397, %v7466, %v7468
  %v7470 = vrot.slane %v6615, 2
  %v7471 = vsel %vm7397, %v7468, %v7470
  %v7472 = vrot.slane %v6616, 2
  %v7473 = vsel %vm7397, %v7470, %v7472
  %v7474 = vrot.slane %v6617, 2
  %v7475 = vsel %vm7397, %v7472, %v7474
  %v7476 = vrot.slane %v6618, 2
  %v7477 = vsel %vm7397, %v7474, %v7476
  %v7478 = vrot.slane %v6619, 2
  %v7479 = vsel %vm7397, %v7476, %v7478
  %v7520 = vpack.c.bf16 %v7402, %v7400
  %v7521 = vpack.c.bf16 %v7406, %v7404
  %v7522 = vpack.c.bf16 %v7410, %v7408
  %v7523 = vpack.c.bf16 %v7414, %v7412
  %v7524 = vpack.c.bf16 %v7418, %v7416
  %v7525 = vpack.c.bf16 %v7422, %v7420
  %v7526 = vpack.c.bf16 %v7426, %v7424
  %v7527 = vpack.c.bf16 %v7430, %v7428
  %v7528 = vpack.c.bf16 %v7434, %v7432
  %v7529 = vpack.c.bf16 %v7438, %v7436
  %v7530 = vpack.c.bf16 %v7443, %v7441
  %v7531 = vpack.c.bf16 %v7447, %v7445
  %v7532 = vpack.c.bf16 %v7451, %v7449
  %v7533 = vpack.c.bf16 %v7455, %v7453
  %v7534 = vpack.c.bf16 %v7459, %v7457
  %v7535 = vpack.c.bf16 %v7463, %v7461
  %v7536 = vpack.c.bf16 %v7467, %v7465
  %v7537 = vpack.c.bf16 %v7471, %v7469
  %v7538 = vpack.c.bf16 %v7475, %v7473
  %v7539 = vpack.c.bf16 %v7479, %v7477
  %s7540 = scalar_lea.vmem %s8, 64
  %v7541 = vld [vmem:[%s7540] sm:$0xf]
  %v7542 = vld [vmem:[%s7540 + $0x4] sm:$0xf]
  %v7543 = vld [vmem:[%s7540 + $0x8] sm:$0xf]
  %v7544 = vld [vmem:[%s7540 + $0xc] sm:$0xf]
  %v7545 = vld [vmem:[%s7540 + $0x10] sm:$0xf]
  %v7546 = vld [vmem:[%s7540 + $0x14] sm:$0xf]
  %v7547 = vld [vmem:[%s7540 + $0x18] sm:$0xf]
  %v7548 = vld [vmem:[%s7540 + $0x1c] sm:$0xf]
  %v7557 = vunpack.c.l.b16 %v7541
  %v7558 = vunpack.c.l.b16 %v7542
  %v7559 = vunpack.c.l.b16 %v7543
  %v7560 = vunpack.c.l.b16 %v7544
  %v7561 = vunpack.c.l.b16 %v7545
  %v7562 = vunpack.c.l.b16 %v7546
  %v7563 = vunpack.c.l.b16 %v7547
  %v7564 = vunpack.c.l.b16 %v7548
  %v7565 = vpack.c.b16 %v7558, %v7557
  %v7566 = vpack.c.b16 %v7560, %v7559
  %v7567 = vpack.c.b16 %v7562, %v7561
  %v7568 = vpack.c.b16 %v7564, %v7563
  %v7574 = vsel %vm6866, %v7520, 0
  %v7577 = vsel %vm6866, %v7521, 0
  %v7580 = vsel %vm6866, %v7522, 0
  %v7583 = vsel %vm6866, %v7523, 0
  %v7586 = vsel %vm6866, %v7524, 0
  %v7589 = vsel %vm6866, %v7525, 0
  %v7592 = vsel %vm6866, %v7526, 0
  %v7595 = vsel %vm6866, %v7527, 0
  %v7598 = vsel %vm6866, %v7528, 0
  %v7601 = vsel %vm6866, %v7529, 0
  %v7604 = vsel %vm6866, %v7530, 0
  %v7607 = vsel %vm6866, %v7531, 0
  %v7610 = vsel %vm6866, %v7532, 0
  %v7613 = vsel %vm6866, %v7533, 0
  %v7616 = vsel %vm6866, %v7534, 0
  %v7619 = vsel %vm6866, %v7535, 0
  %v7622 = vsel %vm6866, %v7536, 0
  %v7625 = vsel %vm6866, %v7537, 0
  %v7628 = vsel %vm6866, %v7538, 0
  %v7631 = vsel %vm6866, %v7539, 0
  %7633 = vmatprep.subr.bf16.mxu0 0
  %7634 = vmatpush1.bf16.msra.mxu0 %v7565
  %7635 = vmatprep.subr.bf16.mxu0 0
  %7636 = vmatpush1.bf16.msra.mxu0 %v7566
  %7637 = vmatprep.subr.bf16.mxu0 0
  %7638 = vmatpush1.bf16.msra.mxu0 %v7567
  %7639 = vmatprep.subr.bf16.mxu0 0
  %7640 = vmatpush1.bf16.msra.mxu0 %v7568
  %7641 = vmatprep.subr.bf16.mxu0 0
  %7642 = vmatpush1.bf16.msra.mxu0 0
  %7643 = vmatprep.subr.bf16.mxu0 0
  %7644 = vmatpush1.bf16.msra.mxu0 0
  %7645 = vmatprep.subr.bf16.mxu0 0
  %7646 = vmatpush1.bf16.msra.mxu0 0
  %7647 = vmatprep.subr.bf16.mxu0 0
  %7648 = vmatpush1.bf16.msra.mxu0 0
  %7649 = vmatprep.subr.bf16.mxu0 0
  %7650 = vmatpush1.bf16.msra.mxu0 0
  %7651 = vmatprep.subr.bf16.mxu0 0
  %7652 = vmatpush1.bf16.msra.mxu0 0
  %7653 = vmatprep.subr.bf16.mxu0 0
  %7654 = vmatpush1.bf16.msra.mxu0 0
  %7655 = vmatprep.subr.bf16.mxu0 0
  %7656 = vmatpush1.bf16.msra.mxu0 0
  %7657 = vmatprep.subr.bf16.mxu0 0
  %7658 = vmatpush1.bf16.msra.mxu0 0
  %7659 = vmatprep.subr.bf16.mxu0 0
  %7660 = vmatpush1.bf16.msra.mxu0 0
  %7661 = vmatprep.subr.bf16.mxu0 0
  %7662 = vmatpush1.bf16.msra.mxu0 0
  %7663 = vmatprep.subr.bf16.mxu0 0
  %7664 = vmatpush1.bf16.msra.mxu0 0
  %7665 = vmatprep.mubr.bf16.mxu0 0
  %7666 = vmatmul.mubr.bf16.gmra.mrb[0].mxu0 %v7574
  %v7667 = vpop.f32.mrb[0].mxu0
  %v7668 = vadd.f32 0.0, %v7667
  %v7669 = vpop.f32.mrb[0].mxu0
  %v7670 = vpop.f32.mrb[0].mxu0
  %v7671 = vadd.f32 0.0, %v7670
  %v7672 = vpop.f32.mrb[0].mxu0
  %7673 = vmatprep.mubr.bf16.mxu0 0
  %7674 = vmatmul.mubr.bf16.gmra.mrb[0].mxu0 %v7577
  %v7675 = vpop.f32.mrb[0].mxu0
  %v7676 = vadd.f32 0.0, %v7675
  %v7677 = vpop.f32.mrb[0].mxu0
  %v7678 = vpop.f32.mrb[0].mxu0
  %v7679 = vadd.f32 0.0, %v7678
  %v7680 = vpop.f32.mrb[0].mxu0
  %7681 = vmatprep.mubr.bf16.mxu0 0
  %7682 = vmatmul.mubr.bf16.gmra.mrb[0].mxu0 %v7580
  %v7683 = vpop.f32.mrb[0].mxu0
  %v7684 = vadd.f32 0.0, %v7683
  %v7685 = vpop.f32.mrb[0].mxu0
  %v7686 = vpop.f32.mrb[0].mxu0
  %v7687 = vadd.f32 0.0, %v7686
  %v7688 = vpop.f32.mrb[0].mxu0
  %7689 = vmatprep.mubr.bf16.mxu0 0
  %7690 = vmatmul.mubr.bf16.gmra.mrb[0].mxu0 %v7583
  %v7691 = vpop.f32.mrb[0].mxu0
  %v7692 = vadd.f32 0.0, %v7691
  %v7693 = vpop.f32.mrb[0].mxu0
  %v7694 = vpop.f32.mrb[0].mxu0
  %v7695 = vadd.f32 0.0, %v7694
  %v7696 = vpop.f32.mrb[0].mxu0
  %7697 = vmatprep.mubr.bf16.mxu0 0
  %7698 = vmatmul.mubr.bf16.gmra.mrb[0].mxu0 %v7586
  %v7699 = vpop.f32.mrb[0].mxu0
  %v7700 = vadd.f32 0.0, %v7699
  %v7701 = vpop.f32.mrb[0].mxu0
  %v7702 = vpop.f32.mrb[0].mxu0
  %v7703 = vadd.f32 0.0, %v7702
  %v7704 = vpop.f32.mrb[0].mxu0
  %7705 = vmatprep.mubr.bf16.mxu0 0
  %7706 = vmatmul.mubr.bf16.gmra.mrb[0].mxu0 %v7589
  %v7707 = vpop.f32.mrb[0].mxu0
  %v7708 = vadd.f32 0.0, %v7707
  %v7709 = vpop.f32.mrb[0].mxu0
  %v7710 = vpop.f32.mrb[0].mxu0
  %v7711 = vadd.f32 0.0, %v7710
  %v7712 = vpop.f32.mrb[0].mxu0
  %7713 = vmatprep.mubr.bf16.mxu0 0
  %7714 = vmatmul.mubr.bf16.gmra.mrb[0].mxu0 %v7592
  %v7715 = vpop.f32.mrb[0].mxu0
  %v7716 = vadd.f32 0.0, %v7715
  %v7717 = vpop.f32.mrb[0].mxu0
  %v7718 = vpop.f32.mrb[0].mxu0
  %v7719 = vadd.f32 0.0, %v7718
  %v7720 = vpop.f32.mrb[0].mxu0
  %7721 = vmatprep.mubr.bf16.mxu0 0
  %7722 = vmatmul.mubr.bf16.gmra.mrb[0].mxu0 %v7595
  %v7723 = vpop.f32.mrb[0].mxu0
  %v7724 = vadd.f32 0.0, %v7723
  %v7725 = vpop.f32.mrb[0].mxu0
  %v7726 = vpop.f32.mrb[0].mxu0
  %v7727 = vadd.f32 0.0, %v7726
  %v7728 = vpop.f32.mrb[0].mxu0
  %7729 = vmatprep.mubr.bf16.mxu0 0
  %7730 = vmatmul.mubr.bf16.gmra.mrb[0].mxu0 %v7598
  %v7731 = vpop.f32.mrb[0].mxu0
  %v7732 = vadd.f32 0.0, %v7731
  %v7733 = vpop.f32.mrb[0].mxu0
  %v7734 = vpop.f32.mrb[0].mxu0
  %v7735 = vadd.f32 0.0, %v7734
  %v7736 = vpop.f32.mrb[0].mxu0
  %7737 = vmatprep.mubr.bf16.mxu0 0
  %7738 = vmatmul.mubr.bf16.gmra.mrb[0].mxu0 %v7601
  %v7739 = vpop.f32.mrb[0].mxu0
  %v7740 = vadd.f32 0.0, %v7739
  %v7741 = vpop.f32.mrb[0].mxu0
  %v7742 = vpop.f32.mrb[0].mxu0
  %v7743 = vadd.f32 0.0, %v7742
  %v7744 = vpop.f32.mrb[0].mxu0
  %7745 = vmatprep.mubr.bf16.mxu0 0
  %7746 = vmatmul.mubr.bf16.gmra.mrb[0].mxu0 %v7604
  %v7747 = vpop.f32.mrb[0].mxu0
  %v7748 = vadd.f32 0.0, %v7747
  %v7749 = vpop.f32.mrb[0].mxu0
  %v7750 = vpop.f32.mrb[0].mxu0
  %v7751 = vadd.f32 0.0, %v7750
  %v7752 = vpop.f32.mrb[0].mxu0
  %7753 = vmatprep.mubr.bf16.mxu0 0
  %7754 = vmatmul.mubr.bf16.gmra.mrb[0].mxu0 %v7607
  %v7755 = vpop.f32.mrb[0].mxu0
  %v7756 = vadd.f32 0.0, %v7755
  %v7757 = vpop.f32.mrb[0].mxu0
  %v7758 = vpop.f32.mrb[0].mxu0
  %v7759 = vadd.f32 0.0, %v7758
  %v7760 = vpop.f32.mrb[0].mxu0
  %7761 = vmatprep.mubr.bf16.mxu0 0
  %7762 = vmatmul.mubr.bf16.gmra.mrb[0].mxu0 %v7610
  %v7763 = vpop.f32.mrb[0].mxu0
  %v7764 = vadd.f32 0.0, %v7763
  %v7765 = vpop.f32.mrb[0].mxu0
  %v7766 = vpop.f32.mrb[0].mxu0
  %v7767 = vadd.f32 0.0, %v7766
  %v7768 = vpop.f32.mrb[0].mxu0
  %7769 = vmatprep.mubr.bf16.mxu0 0
  %7770 = vmatmul.mubr.bf16.gmra.mrb[0].mxu0 %v7613
  %v7771 = vpop.f32.mrb[0].mxu0
  %v7772 = vadd.f32 0.0, %v7771
  %v7773 = vpop.f32.mrb[0].mxu0
  %v7774 = vpop.f32.mrb[0].mxu0
  %v7775 = vadd.f32 0.0, %v7774
  %v7776 = vpop.f32.mrb[0].mxu0
  %7777 = vmatprep.mubr.bf16.mxu0 0
  %7778 = vmatmul.mubr.bf16.gmra.mrb[0].mxu0 %v7616
  %v7779 = vpop.f32.mrb[0].mxu0
  %v7780 = vadd.f32 0.0, %v7779
  %v7781 = vpop.f32.mrb[0].mxu0
  %v7782 = vpop.f32.mrb[0].mxu0
  %v7783 = vadd.f32 0.0, %v7782
  %v7784 = vpop.f32.mrb[0].mxu0
  %7785 = vmatprep.mubr.bf16.mxu0 0
  %7786 = vmatmul.mubr.bf16.gmra.mrb[0].mxu0 %v7619
  %v7787 = vpop.f32.mrb[0].mxu0
  %v7788 = vadd.f32 0.0, %v7787
  %v7789 = vpop.f32.mrb[0].mxu0
  %v7790 = vpop.f32.mrb[0].mxu0
  %v7791 = vadd.f32 0.0, %v7790
  %v7792 = vpop.f32.mrb[0].mxu0
  %7793 = vmatprep.mubr.bf16.mxu0 0
  %7794 = vmatmul.mubr.bf16.gmra.mrb[0].mxu0 %v7622
  %v7795 = vpop.f32.mrb[0].mxu0
  %v7796 = vadd.f32 0.0, %v7795
  %v7797 = vpop.f32.mrb[0].mxu0
  %v7798 = vpop.f32.mrb[0].mxu0
  %v7799 = vadd.f32 0.0, %v7798
  %v7800 = vpop.f32.mrb[0].mxu0
  %7801 = vmatprep.mubr.bf16.mxu0 0
  %7802 = vmatmul.mubr.bf16.gmra.mrb[0].mxu0 %v7625
  %v7803 = vpop.f32.mrb[0].mxu0
  %v7804 = vadd.f32 0.0, %v7803
  %v7805 = vpop.f32.mrb[0].mxu0
  %v7806 = vpop.f32.mrb[0].mxu0
  %v7807 = vadd.f32 0.0, %v7806
  %v7808 = vpop.f32.mrb[0].mxu0
  %7809 = vmatprep.mubr.bf16.mxu0 0
  %7810 = vmatmul.mubr.bf16.gmra.mrb[0].mxu0 %v7628
  %v7811 = vpop.f32.mrb[0].mxu0
  %v7812 = vadd.f32 0.0, %v7811
  %v7813 = vpop.f32.mrb[0].mxu0
  %v7814 = vpop.f32.mrb[0].mxu0
  %v7815 = vadd.f32 0.0, %v7814
  %v7816 = vpop.f32.mrb[0].mxu0
  %7817 = vmatprep.mubr.bf16.mxu0 0
  %7818 = vmatmul.mubr.bf16.gmra.mrb[0].mxu0 %v7631
  %v7819 = vpop.f32.mrb[0].mxu0
  %v7820 = vadd.f32 0.0, %v7819
  %v7821 = vpop.f32.mrb[0].mxu0
  %v7822 = vpop.f32.mrb[0].mxu0
  %v7823 = vadd.f32 0.0, %v7822
  %v7824 = vpop.f32.mrb[0].mxu0
  %7825 = vdwg.mxu0
  %v7826 = vadd.f32 %v7239, %v7668
  %v7827 = vadd.f32 %v7242, %v7671
  %v7828 = vadd.f32 %v7247, %v7676
  %v7829 = vadd.f32 %v7250, %v7679
  %v7830 = vadd.f32 %v7255, %v7684
  %v7831 = vadd.f32 %v7258, %v7687
  %v7832 = vadd.f32 %v7263, %v7692
  %v7833 = vadd.f32 %v7266, %v7695
  %v7834 = vadd.f32 %v7271, %v7700
  %v7835 = vadd.f32 %v7274, %v7703
  %v7836 = vadd.f32 %v7279, %v7708
  %v7837 = vadd.f32 %v7282, %v7711
  %v7838 = vadd.f32 %v7287, %v7716
  %v7839 = vadd.f32 %v7290, %v7719
  %v7840 = vadd.f32 %v7295, %v7724
  %v7841 = vadd.f32 %v7298, %v7727
  %v7842 = vadd.f32 %v7303, %v7732
  %v7843 = vadd.f32 %v7306, %v7735
  %v7844 = vadd.f32 %v7311, %v7740
  %v7845 = vadd.f32 %v7314, %v7743
  %v7846 = vadd.f32 %v7319, %v7748
  %v7847 = vadd.f32 %v7322, %v7751
  %v7848 = vadd.f32 %v7327, %v7756
  %v7849 = vadd.f32 %v7330, %v7759
  %v7850 = vadd.f32 %v7335, %v7764
  %v7851 = vadd.f32 %v7338, %v7767
  %v7852 = vadd.f32 %v7343, %v7772
  %v7853 = vadd.f32 %v7346, %v7775
  %v7854 = vadd.f32 %v7351, %v7780
  %v7855 = vadd.f32 %v7354, %v7783
  %v7856 = vadd.f32 %v7359, %v7788
  %v7857 = vadd.f32 %v7362, %v7791
  %v7858 = vadd.f32 %v7367, %v7796
  %v7859 = vadd.f32 %v7370, %v7799
  %v7860 = vadd.f32 %v7375, %v7804
  %v7861 = vadd.f32 %v7378, %v7807
  %v7862 = vadd.f32 %v7383, %v7812
  %v7863 = vadd.f32 %v7386, %v7815
  %v7864 = vadd.f32 %v7391, %v7820
  %v7865 = vadd.f32 %v7394, %v7823
  %v7866 = vld [vmem:[%s9] sm:$0x1]
  %v7868 = vlaneseq
  %v7869 = vshrl.u32 %v7868, 7
  %v7870 = vsub.s32 0, %v7869
  %v7871 = vrot.slane %v7866, %v7870
  %v7873 = vadd.f32 %v7826, %v7871
  %v7874 = vadd.f32 %v7827, %v7871
  %v7875 = vadd.f32 %v7828, %v7871
  %v7876 = vadd.f32 %v7829, %v7871
  %v7877 = vadd.f32 %v7830, %v7871
  %v7878 = vadd.f32 %v7831, %v7871
  %v7879 = vadd.f32 %v7832, %v7871
  %v7880 = vadd.f32 %v7833, %v7871
  %v7881 = vadd.f32 %v7834, %v7871
  %v7882 = vadd.f32 %v7835, %v7871
  %v7883 = vadd.f32 %v7836, %v7871
  %v7884 = vadd.f32 %v7837, %v7871
  %v7885 = vadd.f32 %v7838, %v7871
  %v7886 = vadd.f32 %v7839, %v7871
  %v7887 = vadd.f32 %v7840, %v7871
  %v7888 = vadd.f32 %v7841, %v7871
  %v7889 = vadd.f32 %v7842, %v7871
  %v7890 = vadd.f32 %v7843, %v7871
  %v7891 = vadd.f32 %v7844, %v7871
  %v7892 = vadd.f32 %v7845, %v7871
  %v7893 = vadd.f32 %v7846, %v7871
  %v7894 = vadd.f32 %v7847, %v7871
  %v7895 = vadd.f32 %v7848, %v7871
  %v7896 = vadd.f32 %v7849, %v7871
  %v7897 = vadd.f32 %v7850, %v7871
  %v7898 = vadd.f32 %v7851, %v7871
  %v7899 = vadd.f32 %v7852, %v7871
  %v7900 = vadd.f32 %v7853, %v7871
  %v7901 = vadd.f32 %v7854, %v7871
  %v7902 = vadd.f32 %v7855, %v7871
  %v7903 = vadd.f32 %v7856, %v7871
  %v7904 = vadd.f32 %v7857, %v7871
  %v7905 = vadd.f32 %v7858, %v7871
  %v7906 = vadd.f32 %v7859, %v7871
  %v7907 = vadd.f32 %v7860, %v7871
  %v7908 = vadd.f32 %v7861, %v7871
  %v7909 = vadd.f32 %v7862, %v7871
  %v7910 = vadd.f32 %v7863, %v7871
  %v7911 = vadd.f32 %v7864, %v7871
  %v7912 = vadd.f32 %v7865, %v7871
  %v7913 = vmax.f32 %v7873, 0.0
  %v7914 = vmax.f32 %v7874, 0.0
  %v7915 = vmax.f32 %v7875, 0.0
  %v7916 = vmax.f32 %v7876, 0.0
  %v7917 = vmax.f32 %v7877, 0.0
  %v7918 = vmax.f32 %v7878, 0.0
  %v7919 = vmax.f32 %v7879, 0.0
  %v7920 = vmax.f32 %v7880, 0.0
  %v7921 = vmax.f32 %v7881, 0.0
  %v7922 = vmax.f32 %v7882, 0.0
  %v7923 = vmax.f32 %v7883, 0.0
  %v7924 = vmax.f32 %v7884, 0.0
  %v7925 = vmax.f32 %v7885, 0.0
  %v7926 = vmax.f32 %v7886, 0.0
  %v7927 = vmax.f32 %v7887, 0.0
  %v7928 = vmax.f32 %v7888, 0.0
  %v7929 = vmax.f32 %v7889, 0.0
  %v7930 = vmax.f32 %v7890, 0.0
  %v7931 = vmax.f32 %v7891, 0.0
  %v7932 = vmax.f32 %v7892, 0.0
  %v7933 = vmax.f32 %v7893, 0.0
  %v7934 = vmax.f32 %v7894, 0.0
  %v7935 = vmax.f32 %v7895, 0.0
  %v7936 = vmax.f32 %v7896, 0.0
  %v7937 = vmax.f32 %v7897, 0.0
  %v7938 = vmax.f32 %v7898, 0.0
  %v7939 = vmax.f32 %v7899, 0.0
  %v7940 = vmax.f32 %v7900, 0.0
  %v7941 = vmax.f32 %v7901, 0.0
  %v7942 = vmax.f32 %v7902, 0.0
  %v7943 = vmax.f32 %v7903, 0.0
  %v7944 = vmax.f32 %v7904, 0.0
  %v7945 = vmax.f32 %v7905, 0.0
  %v7946 = vmax.f32 %v7906, 0.0
  %v7947 = vmax.f32 %v7907, 0.0
  %v7948 = vmax.f32 %v7908, 0.0
  %v7949 = vmax.f32 %v7909, 0.0
  %v7950 = vmax.f32 %v7910, 0.0
  %v7951 = vmax.f32 %v7911, 0.0
  %v7952 = vmax.f32 %v7912, 0.0
  %v7993 = vrot.slane %v7913, 1
  %v7994 = vrot.slane %v7914, 1
  %v7995 = vsel %vm6690, %v7993, %v7994
  %v7996 = vrot.slane %v7915, 1
  %v7997 = vsel %vm6690, %v7994, %v7996
  %v7998 = vrot.slane %v7916, 1
  %v7999 = vsel %vm6690, %v7996, %v7998
  %v8000 = vrot.slane %v7917, 1
  %v8001 = vsel %vm6690, %v7998, %v8000
  %v8002 = vrot.slane %v7918, 1
  %v8003 = vsel %vm6690, %v8000, %v8002
  %v8004 = vrot.slane %v7919, 1
  %v8005 = vsel %vm6690, %v8002, %v8004
  %v8006 = vrot.slane %v7920, 1
  %v8007 = vsel %vm6690, %v8004, %v8006
  %v8008 = vrot.slane %v7921, 1
  %v8009 = vsel %vm6690, %v8006, %v8008
  %v8010 = vrot.slane %v7922, 1
  %v8011 = vsel %vm6690, %v8008, %v8010
  %v8012 = vrot.slane %v7923, 1
  %v8013 = vsel %vm6690, %v8010, %v8012
  %v8014 = vrot.slane %v7924, 1
  %v8015 = vsel %vm6690, %v8012, %v8014
  %v8016 = vrot.slane %v7925, 1
  %v8017 = vsel %vm6690, %v8014, %v8016
  %v8018 = vrot.slane %v7926, 1
  %v8019 = vsel %vm6690, %v8016, %v8018
  %v8020 = vrot.slane %v7927, 1
  %v8021 = vsel %vm6690, %v8018, %v8020
  %v8022 = vrot.slane %v7928, 1
  %v8023 = vsel %vm6690, %v8020, %v8022
  %v8024 = vrot.slane %v7929, 1
  %v8025 = vsel %vm6690, %v8022, %v8024
  %v8026 = vrot.slane %v7930, 1
  %v8027 = vsel %vm6690, %v8024, %v8026
  %v8028 = vrot.slane %v7931, 1
  %v8029 = vsel %vm6690, %v8026, %v8028
  %v8030 = vrot.slane %v7932, 1
  %v8031 = vsel %vm6690, %v8028, %v8030
  %v8032 = vrot.slane %v7933, 1
  %v8033 = vrot.slane %v7934, 1
  %v8034 = vsel %vm6690, %v8032, %v8033
  %v8035 = vrot.slane %v7935, 1
  %v8036 = vsel %vm6690, %v8033, %v8035
  %v8037 = vrot.slane %v7936, 1
  %v8038 = vsel %vm6690, %v8035, %v8037
  %v8039 = vrot.slane %v7937, 1
  %v8040 = vsel %vm6690, %v8037, %v8039
  %v8041 = vrot.slane %v7938, 1
  %v8042 = vsel %vm6690, %v8039, %v8041
  %v8043 = vrot.slane %v7939, 1
  %v8044 = vsel %vm6690, %v8041, %v8043
  %v8045 = vrot.slane %v7940, 1
  %v8046 = vsel %vm6690, %v8043, %v8045
  %v8047 = vrot.slane %v7941, 1
  %v8048 = vsel %vm6690, %v8045, %v8047
  %v8049 = vrot.slane %v7942, 1
  %v8050 = vsel %vm6690, %v8047, %v8049
  %v8051 = vrot.slane %v7943, 1
  %v8052 = vsel %vm6690, %v8049, %v8051
  %v8053 = vrot.slane %v7944, 1
  %v8054 = vsel %vm6690, %v8051, %v8053
  %v8055 = vrot.slane %v7945, 1
  %v8056 = vsel %vm6690, %v8053, %v8055
  %v8057 = vrot.slane %v7946, 1
  %v8058 = vsel %vm6690, %v8055, %v8057
  %v8059 = vrot.slane %v7947, 1
  %v8060 = vsel %vm6690, %v8057, %v8059
  %v8061 = vrot.slane %v7948, 1
  %v8062 = vsel %vm6690, %v8059, %v8061
  %v8063 = vrot.slane %v7949, 1
  %v8064 = vsel %vm6690, %v8061, %v8063
  %v8065 = vrot.slane %v7950, 1
  %v8066 = vsel %vm6690, %v8063, %v8065
  %v8067 = vrot.slane %v7951, 1
  %v8068 = vsel %vm6690, %v8065, %v8067
  %v8069 = vrot.slane %v7952, 1
  %v8070 = vsel %vm6690, %v8067, %v8069
  %v8111 = vmax.f32 %v7913, %v7995
  %v8112 = vmax.f32 %v7914, %v7997
  %v8113 = vmax.f32 %v7915, %v7999
  %v8114 = vmax.f32 %v7916, %v8001
  %v8115 = vmax.f32 %v7917, %v8003
  %v8116 = vmax.f32 %v7918, %v8005
  %v8117 = vmax.f32 %v7919, %v8007
  %v8118 = vmax.f32 %v7920, %v8009
  %v8119 = vmax.f32 %v7921, %v8011
  %v8120 = vmax.f32 %v7922, %v8013
  %v8121 = vmax.f32 %v7923, %v8015
  %v8122 = vmax.f32 %v7924, %v8017
  %v8123 = vmax.f32 %v7925, %v8019
  %v8124 = vmax.f32 %v7926, %v8021
  %v8125 = vmax.f32 %v7927, %v8023
  %v8126 = vmax.f32 %v7928, %v8025
  %v8127 = vmax.f32 %v7929, %v8027
  %v8128 = vmax.f32 %v7930, %v8029
  %v8129 = vmax.f32 %v7931, %v8031
  %v8130 = vmax.f32 %v7932, %v8030
  %v8131 = vmax.f32 %v7933, %v8034
  %v8132 = vmax.f32 %v7934, %v8036
  %v8133 = vmax.f32 %v7935, %v8038
  %v8134 = vmax.f32 %v7936, %v8040
  %v8135 = vmax.f32 %v7937, %v8042
  %v8136 = vmax.f32 %v7938, %v8044
  %v8137 = vmax.f32 %v7939, %v8046
  %v8138 = vmax.f32 %v7940, %v8048
  %v8139 = vmax.f32 %v7941, %v8050
  %v8140 = vmax.f32 %v7942, %v8052
  %v8141 = vmax.f32 %v7943, %v8054
  %v8142 = vmax.f32 %v7944, %v8056
  %v8143 = vmax.f32 %v7945, %v8058
  %v8144 = vmax.f32 %v7946, %v8060
  %v8145 = vmax.f32 %v7947, %v8062
  %v8146 = vmax.f32 %v7948, %v8064
  %v8147 = vmax.f32 %v7949, %v8066
  %v8148 = vmax.f32 %v7950, %v8068
  %v8149 = vmax.f32 %v7951, %v8070
  %v8150 = vmax.f32 %v7952, %v8069
  %v8151 = vpack.c.bf16 %v8112, %v8111
  %v8152 = vpack.c.bf16 %v8114, %v8113
  %v8153 = vpack.c.bf16 %v8116, %v8115
  %v8154 = vpack.c.bf16 %v8118, %v8117
  %v8155 = vpack.c.bf16 %v8120, %v8119
  %v8156 = vpack.c.bf16 %v8122, %v8121
  %v8157 = vpack.c.bf16 %v8124, %v8123
  %v8158 = vpack.c.bf16 %v8126, %v8125
  %v8159 = vpack.c.bf16 %v8128, %v8127
  %v8160 = vpack.c.bf16 %v8130, %v8129
  %v8161 = vpack.c.bf16 %v8132, %v8131
  %v8162 = vpack.c.bf16 %v8134, %v8133
  %v8163 = vpack.c.bf16 %v8136, %v8135
  %v8164 = vpack.c.bf16 %v8138, %v8137
  %v8165 = vpack.c.bf16 %v8140, %v8139
  %v8166 = vpack.c.bf16 %v8142, %v8141
  %v8167 = vpack.c.bf16 %v8144, %v8143
  %v8168 = vpack.c.bf16 %v8146, %v8145
  %v8169 = vpack.c.bf16 %v8148, %v8147
  %v8170 = vpack.c.bf16 %v8150, %v8149
  %v8191 = vunpack.c.l.b16 %v8151
  %v8192 = vunpack.c.h.b16 %v8151
  %v8193 = vunpack.c.l.b16 %v8152
  %v8194 = vunpack.c.h.b16 %v8152
  %v8195 = vunpack.c.l.b16 %v8153
  %v8196 = vunpack.c.h.b16 %v8153
  %v8197 = vunpack.c.l.b16 %v8154
  %v8198 = vunpack.c.h.b16 %v8154
  %v8199 = vunpack.c.l.b16 %v8155
  %v8200 = vunpack.c.h.b16 %v8155
  %v8201 = vunpack.c.l.b16 %v8156
  %v8202 = vunpack.c.h.b16 %v8156
  %v8203 = vunpack.c.l.b16 %v8157
  %v8204 = vunpack.c.h.b16 %v8157
  %v8205 = vunpack.c.l.b16 %v8158
  %v8206 = vunpack.c.h.b16 %v8158
  %v8207 = vunpack.c.l.b16 %v8159
  %v8208 = vunpack.c.h.b16 %v8159
  %v8209 = vunpack.c.l.b16 %v8160
  %v8210 = vunpack.c.h.b16 %v8160
  %v8211 = vunpack.c.l.b16 %v8161
  %v8212 = vunpack.c.h.b16 %v8161
  %v8213 = vunpack.c.l.b16 %v8162
  %v8214 = vunpack.c.h.b16 %v8162
  %v8215 = vunpack.c.l.b16 %v8163
  %v8216 = vunpack.c.h.b16 %v8163
  %v8217 = vunpack.c.l.b16 %v8164
  %v8218 = vunpack.c.h.b16 %v8164
  %v8219 = vunpack.c.l.b16 %v8165
  %v8220 = vunpack.c.h.b16 %v8165
  %v8221 = vunpack.c.l.b16 %v8166
  %v8222 = vunpack.c.h.b16 %v8166
  %v8223 = vunpack.c.l.b16 %v8167
  %v8224 = vunpack.c.h.b16 %v8167
  %v8225 = vunpack.c.l.b16 %v8168
  %v8226 = vunpack.c.h.b16 %v8168
  %v8227 = vunpack.c.l.b16 %v8169
  %v8228 = vunpack.c.h.b16 %v8169
  %v8229 = vunpack.c.l.b16 %v8170
  %v8230 = vunpack.c.h.b16 %v8170
  %v8231 = vpack.c.b16 %v8191, %v8191
  %v8232 = vpack.c.b16 %v8192, %v8192
  %v8233 = vpack.c.b16 %v8193, %v8193
  %v8234 = vpack.c.b16 %v8194, %v8194
  %v8235 = vpack.c.b16 %v8195, %v8195
  %v8236 = vpack.c.b16 %v8196, %v8196
  %v8237 = vpack.c.b16 %v8197, %v8197
  %v8238 = vpack.c.b16 %v8198, %v8198
  %v8239 = vpack.c.b16 %v8199, %v8199
  %v8240 = vpack.c.b16 %v8200, %v8200
  %v8241 = vpack.c.b16 %v8201, %v8201
  %v8242 = vpack.c.b16 %v8202, %v8202
  %v8243 = vpack.c.b16 %v8203, %v8203
  %v8244 = vpack.c.b16 %v8204, %v8204
  %v8245 = vpack.c.b16 %v8205, %v8205
  %v8246 = vpack.c.b16 %v8206, %v8206
  %v8247 = vpack.c.b16 %v8207, %v8207
  %v8248 = vpack.c.b16 %v8208, %v8208
  %v8249 = vpack.c.b16 %v8209, %v8209
  %v8250 = vpack.c.b16 %v8210, %v8210
  %v8251 = vpack.c.b16 %v8211, %v8211
  %v8252 = vpack.c.b16 %v8212, %v8212
  %v8253 = vpack.c.b16 %v8213, %v8213
  %v8254 = vpack.c.b16 %v8214, %v8214
  %v8255 = vpack.c.b16 %v8215, %v8215
  %v8256 = vpack.c.b16 %v8216, %v8216
  %v8257 = vpack.c.b16 %v8217, %v8217
  %v8258 = vpack.c.b16 %v8218, %v8218
  %v8259 = vpack.c.b16 %v8219, %v8219
  %v8260 = vpack.c.b16 %v8220, %v8220
  %v8261 = vpack.c.b16 %v8221, %v8221
  %v8262 = vpack.c.b16 %v8222, %v8222
  %v8263 = vpack.c.b16 %v8223, %v8223
  %v8264 = vpack.c.b16 %v8224, %v8224
  %v8265 = vpack.c.b16 %v8225, %v8225
  %v8266 = vpack.c.b16 %v8226, %v8226
  %v8267 = vpack.c.b16 %v8227, %v8227
  %v8268 = vpack.c.b16 %v8228, %v8228
  %v8269 = vpack.c.b16 %v8229, %v8229
  %v8270 = vpack.c.b16 %v8230, %v8230
  %vm8311 = vcmask 257024
  %8312 = vst.msk [vmem:[%s11] sm:$0xf] %vm8311, %v8231
  %8313 = vst.msk [vmem:[%s11 + $0x4] sm:$0xf] %vm8311, %v8232
  %8314 = vst.msk [vmem:[%s11 + $0x8] sm:$0xf] %vm8311, %v8233
  %8315 = vst.msk [vmem:[%s11 + $0xc] sm:$0xf] %vm8311, %v8234
  %8316 = vst.msk [vmem:[%s11 + $0x10] sm:$0xf] %vm8311, %v8235
  %8317 = vst.msk [vmem:[%s11 + $0x14] sm:$0xf] %vm8311, %v8236
  %8318 = vst.msk [vmem:[%s11 + $0x18] sm:$0xf] %vm8311, %v8237
  %8319 = vst.msk [vmem:[%s11 + $0x1c] sm:$0xf] %vm8311, %v8238
  %8320 = vst.msk [vmem:[%s11 + $0x20] sm:$0xf] %vm8311, %v8239
  %8321 = vst.msk [vmem:[%s11 + $0x24] sm:$0xf] %vm8311, %v8240
  %8322 = vst.msk [vmem:[%s11 + $0x28] sm:$0xf] %vm8311, %v8241
  %8323 = vst.msk [vmem:[%s11 + $0x2c] sm:$0xf] %vm8311, %v8242
  %8324 = vst.msk [vmem:[%s11 + $0x30] sm:$0xf] %vm8311, %v8243
  %8325 = vst.msk [vmem:[%s11 + $0x34] sm:$0xf] %vm8311, %v8244
  %8326 = vst.msk [vmem:[%s11 + $0x38] sm:$0xf] %vm8311, %v8245
  %8327 = vst.msk [vmem:[%s11 + $0x3c] sm:$0xf] %vm8311, %v8246
  %8328 = vst.msk [vmem:[%s11 + $0x40] sm:$0xf] %vm8311, %v8247
  %8329 = vst.msk [vmem:[%s11 + $0x44] sm:$0xf] %vm8311, %v8248
  %8330 = vst.msk [vmem:[%s11 + $0x48] sm:$0xf] %vm8311, %v8249
  %vm8331 = vcmask 253952
  %8332 = vst.msk [vmem:[%s11 + $0x4c] sm:$0x1] %vm8331, %v8250
  %8333 = vst.msk [vmem:[%s11 + $0x50] sm:$0xf] %vm8311, %v8251
  %8334 = vst.msk [vmem:[%s11 + $0x54] sm:$0xf] %vm8311, %v8252
  %8335 = vst.msk [vmem:[%s11 + $0x58] sm:$0xf] %vm8311, %v8253
  %8336 = vst.msk [vmem:[%s11 + $0x5c] sm:$0xf] %vm8311, %v8254
  %8337 = vst.msk [vmem:[%s11 + $0x60] sm:$0xf] %vm8311, %v8255
  %8338 = vst.msk [vmem:[%s11 + $0x64] sm:$0xf] %vm8311, %v8256
  %8339 = vst.msk [vmem:[%s11 + $0x68] sm:$0xf] %vm8311, %v8257
  %8340 = vst.msk [vmem:[%s11 + $0x6c] sm:$0xf] %vm8311, %v8258
  %8341 = vst.msk [vmem:[%s11 + $0x70] sm:$0xf] %vm8311, %v8259
  %8342 = vst.msk [vmem:[%s11 + $0x74] sm:$0xf] %vm8311, %v8260
  %8343 = vst.msk [vmem:[%s11 + $0x78] sm:$0xf] %vm8311, %v8261
  %8344 = vst.msk [vmem:[%s11 + $0x7c] sm:$0xf] %vm8311, %v8262
  %8345 = vst.msk [vmem:[%s11 + $0x80] sm:$0xf] %vm8311, %v8263
  %8346 = vst.msk [vmem:[%s11 + $0x84] sm:$0xf] %vm8311, %v8264
  %8347 = vst.msk [vmem:[%s11 + $0x88] sm:$0xf] %vm8311, %v8265
  %8348 = vst.msk [vmem:[%s11 + $0x8c] sm:$0xf] %vm8311, %v8266
  %8349 = vst.msk [vmem:[%s11 + $0x90] sm:$0xf] %vm8311, %v8267
  %8350 = vst.msk [vmem:[%s11 + $0x94] sm:$0xf] %vm8311, %v8268
  %8351 = vst.msk [vmem:[%s11 + $0x98] sm:$0xf] %vm8311, %v8269
  %8352 = vst.msk [vmem:[%s11 + $0x9c] sm:$0x1] %vm8331, %v8270
  // Predicated region
  $region42: #{hsi_branch_forward.2} parent=0 // pred_check
    _
  $region43: #{hsi_branch_forward.2} parent=0 // pred_check_branch
    %8354 = sbr.rel (0) target = $region45
  $region44: #{hsi_branch_forward.2} parent=0 // pred_region
    _
  $region45: #{hsi_branch_forward.2} parent=0 // pred_fallthru
    _
  // Predicated region
  $region46: #{hsi_branch_forward.2} parent=0 // pred_check
    _
  $region47: #{hsi_branch_forward.2} parent=0 // pred_check_branch
    %8356 = sbr.rel (0) target = $region49
  $region48: #{hsi_branch_forward.2} parent=0 // pred_region
    _
  $region49: #{hsi_branch_forward.2} parent=0 // pred_fallthru
    _
  // Predicated region
  $region50: #{hsi_branch_forward.2} parent=0 // pred_check
    _
  $region51: #{hsi_branch_forward.2} parent=0 // pred_check_branch
    %8358 = sbr.rel (0) target = $region53
  $region52: #{hsi_branch_forward.2} parent=0 // pred_region
    _
  $region53: #{hsi_branch_forward.2} parent=0 // pred_fallthru
    _
  // Predicated region
  $region54: #{hsi_branch_forward.2} parent=0 // pred_check
    _
  $region55: #{hsi_branch_forward.2} parent=0 // pred_check_branch
    %8360 = sbr.rel (0) target = $region57
  $region56: #{hsi_branch_forward.2} parent=0 // pred_region
    _
  $region57: #{hsi_branch_forward.2} parent=0 // pred_fallthru
    _

</llo_original>
